<compile_context>
chip_gen: v5e
topology: v5e:2x2
jax: 0.10.0
libtpu: 0.0.40
codegen_flags: <defaults>
</compile_context>

<pallas_src>
import math

import jax
import jax.numpy as jnp
from jax import lax
from jax.experimental import pallas as pl
from jax.experimental.pallas import tpu as pltpu


# ----------------------------------------------------------------------------
# Fused kernel
# ----------------------------------------------------------------------------
def _bag_pipeline_kernel(x_ref, wstem_hbm, pool_ref, wc_ref, bc_ref, w1_hbm, b1_ref,
                         w2_ref, b2_ref, w3_ref, b3_ref, w4_ref, b4_ref,
                         logit_ref, prob_ref,
                         wstem_vmem, w1_vmem, dma_sem):
    H, BP, W = x_ref.shape               # x is passed (H, BP, W): batch on sublanes
    NPC = wstem_vmem.shape[1]            # (H//2)*(W//2)*Cout

    # -- 0) kick off the big-weight DMAs; they land behind the attention math.
    stem_cp = pltpu.make_async_copy(wstem_hbm, wstem_vmem, dma_sem.at[0])
    w1_cp = pltpu.make_async_copy(w1_hbm, w1_vmem, dma_sem.at[1])
    stem_cp.start()
    w1_cp.start()

    # -- 1) scaled dot-product self-attention, lane-dense.
    #    (H, BP, W) -> (H*BP, W) is a free leading-dim merge; scores/softmax run
    #    on one (H*BP, H*BP) tile with a block mask keeping batches separate.
    x2 = x_ref[...].reshape(H * BP, W)                                   # (128, 16)
    scores = lax.dot_general(x2, x2, (((1,), (1,)), ((), ())),
                             preferred_element_type=jnp.float32)         # (128, 128)
    scores = scores * (1.0 / math.sqrt(W))
    ri = lax.broadcasted_iota(jnp.int32, scores.shape, 0)
    ci = lax.broadcasted_iota(jnp.int32, scores.shape, 1)
    scores = jnp.where((ri % BP) == (ci % BP), scores, -1e9)             # same-batch mask
    m = jnp.max(scores, axis=-1, keepdims=True)
    e = jnp.exp(scores - m)
    p = e * pl.reciprocal(jnp.sum(e, axis=-1, keepdims=True), approx=True)
    att = jnp.dot(p, x2, preferred_element_type=jnp.float32)             # (H*BP, W)
    att = att.astype(jnp.bfloat16)

    # -- 2) stem Conv2d(1, Cout, 3, stride=2, padding=1) + ReLU + global avg pool.
    #    The conv is a dense matmul against the host-side im2col'd weight matrix;
    #    accumulating over the H row-blocks keeps att in its natural layout
    #    (no in-kernel lane relayout, no padded plane, no keep mask).
    stem_cp.wait()
    stem = jnp.zeros((BP, NPC), jnp.float32)
    for i in range(H):                                                    # static, H steps
        stem = stem + jnp.dot(att[i * BP:(i + 1) * BP, :],                # (BP, W)
                              wstem_vmem[pl.ds(i * W, W), :],             # (W, NPC)
                              preferred_element_type=jnp.float32)
    stem = jnp.maximum(stem, 0.0).astype(jnp.bfloat16)                    # (BP, NPC)
    feats = jnp.dot(stem, pool_ref[...], preferred_element_type=jnp.float32)  # (BP, Cout)
    # TODO(synk): surrogate for the frozen EfficientNet-B0 backbone (MBConv/BN/
    # SiLU/SE stages not translated): stem conv -> ReLU -> GAP -> Linear(32->1000).

    # -- 3) surrogate base classifier + head MLP (Dropout = identity) + sigmoid.
    base = jnp.dot(feats.astype(jnp.bfloat16), wc_ref[...],
                   preferred_element_type=jnp.float32) + bc_ref[...]      # (BP, 1024)
    h = base.astype(jnp.bfloat16)
    w1_cp.wait()
    h = jnp.maximum(jnp.dot(h, w1_vmem[...], preferred_element_type=jnp.float32)
                    + b1_ref[...], 0.0).astype(jnp.bfloat16)              # (BP, 512)
    h = jnp.maximum(jnp.dot(h, w2_ref[...], preferred_element_type=jnp.float32)
                    + b2_ref[...], 0.0).astype(jnp.bfloat16)              # (BP, 128)
    h = jnp.maximum(jnp.dot(h, w3_ref[...], preferred_element_type=jnp.float32)
                    + b3_ref[...], 0.0)                                   # (BP, 64) f32
    logits = jnp.dot(h, w4_ref[...], preferred_element_type=jnp.float32) + b4_ref[...]
    logit_ref[...] = logits                                               # (BP, 128), lane 0 real
    prob_ref[...] = 1.0 / (1.0 + jnp.exp(-logits))


# ----------------------------------------------------------------------------
# Host-side (one-time) weight preparation
# ----------------------------------------------------------------------------
def _stem_conv_as_matmul(w_conv, H, W):
    """Lower Conv2d(1, Cout, 3, stride=2, padding=1, bias=False) on an HxW plane
    to a dense (H*W, Hout*Wout*Cout) matrix: column (oh*Wo+ow)*Cout+c holds the
    scattered 3x3 taps for output position (oh, ow), channel c."""
    Cout = w_conv.shape[0]
    Ho, Wo = H // 2, W // 2
    mat = jnp.zeros((H * W, Ho * Wo * Cout), jnp.float32)
    oh, ow, c = jnp.meshgrid(jnp.arange(Ho), jnp.arange(Wo), jnp.arange(Cout),
                             indexing="ij")
    col = (oh * Wo + ow) * Cout + c
    for kh in range(3):
        for kw in range(3):
            ih = 2 * oh + kh - 1
            iw = 2 * ow + kw - 1
            valid = (ih >= 0) & (ih < H) & (iw >= 0) & (iw < W)
            row = jnp.clip(ih, 0, H - 1) * W + jnp.clip(iw, 0, W - 1)
            val = jnp.where(valid, w_conv[c, 0, kh, kw], 0.0)
            mat = mat.at[row.ravel(), col.ravel()].add(val.ravel())
    return mat


def prepare_params(w_conv, head_params, H, W):
    """Pad/pack/cast the frozen weights once for the fused kernel."""
    wc, bc, w1, b1, w2, b2, w3, b3, w4, b4 = head_params
    Cout = w_conv.shape[0]
    NP = (H // 2) * (W // 2)
    KPAD = 1024                                   # 1000 padded to a lane multiple

    wstem = _stem_conv_as_matmul(w_conv, H, W).astype(jnp.bfloat16)        # (H*W, NP*Cout)
    pool = (jnp.tile(jnp.eye(Cout, dtype=jnp.float32), (NP, 1)) / NP).astype(jnp.bfloat16)

    wc_p = jnp.zeros((Cout, KPAD), jnp.float32).at[:, :wc.shape[1]].set(wc).astype(jnp.bfloat16)
    bc_p = jnp.zeros((1, KPAD), jnp.float32).at[0, :bc.shape[0]].set(bc)
    w1_p = jnp.zeros((KPAD, w1.shape[1]), jnp.float32).at[:w1.shape[0], :].set(w1).astype(jnp.bfloat16)
    w4_p = jnp.zeros((w4.shape[0], 128), jnp.float32).at[:, :1].set(w4)
    b4_p = jnp.zeros((1, 128), jnp.float32).at[0, :1].set(b4)
    return (wstem, pool, wc_p, bc_p, w1_p, b1.reshape(1, -1),
            w2.astype(jnp.bfloat16), b2.reshape(1, -1),
            w3.astype(jnp.bfloat16), b3.reshape(1, -1), w4_p, b4_p)


# ----------------------------------------------------------------------------
# Wrapper
# ----------------------------------------------------------------------------
def bag_pipeline_forward(x, params):
    wstem, pool, wc, bc, w1, b1, w2, b2, w3, b3, w4, b4 = params
    B, C, H, W = x.shape
    assert C == 1, "modified EfficientNet stem expects a single input channel"
    BP = max(8, ((B + 7) // 8) * 8)                     # pad batch to a sublane tile
    # Pass x as (H, BP, W): batch on the sublane-minor position so in-kernel the
    # row-block slices used by the stem accumulation are contiguous.
    xt = jnp.pad(x.reshape(B, H, W), ((0, BP - B), (0, 0), (0, 0))).transpose(1, 0, 2)

    OUT = 128
    Cout = pool.shape[1]
    NPC = wstem.shape[1]
    flops = int(4 * (BP * H) ** 2 * W                       # attention (scores + values)
                + 2 * BP * H * W * NPC                      # stem conv matmul
                + 2 * BP * NPC * Cout                       # global average pool matmul
                + 2 * BP * sum(m.shape[0] * m.shape[1] for m in (wc, w1, w2, w3, w4)))
    transcendentals = int((BP * H) ** 2 + BP * OUT)         # softmax exp + sigmoid exp
    args = (xt, wstem, pool, wc, bc, w1, b1, w2, b2, w3, b3, w4, b4)
    bytes_accessed = int(sum(a.size * a.dtype.itemsize for a in args) + 2 * BP * OUT * 4)

    vmem = lambda: pl.BlockSpec(memory_space=pltpu.MemorySpace.VMEM)
    hbm = lambda: pl.BlockSpec(memory_space=pl.ANY)         # manual DMA inside the kernel

    logits_slab, probs_slab = pl.pallas_call(
        _bag_pipeline_kernel,
        out_shape=(jax.ShapeDtypeStruct((BP, OUT), jnp.float32),
                   jax.ShapeDtypeStruct((BP, OUT), jnp.float32)),
        in_specs=[vmem(), hbm(), vmem(), vmem(), vmem(), hbm(), vmem(),
                  vmem(), vmem(), vmem(), vmem(), vmem(), vmem()],
        out_specs=(vmem(), vmem()),
        scratch_shapes=[pltpu.VMEM(wstem.shape, wstem.dtype),
                        pltpu.VMEM(w1.shape, w1.dtype),
                        pltpu.SemaphoreType.DMA((2,))],
        cost_estimate=pl.CostEstimate(flops=flops, transcendentals=transcendentals,
                                      bytes_accessed=bytes_accessed),
    )(*args)
    return logits_slab[:B, 0:1], probs_slab[:B, 0:1]


# ----------------------------------------------------------------------------
# Deterministic synthetic parameters (base is frozen in the original module)
# ----------------------------------------------------------------------------
def init_params(key):
    ks = jax.random.split(key, 11)

    def lin(k, fi, fo):
        return jax.random.normal(k, (fi, fo), jnp.float32) / math.sqrt(fi)

    def bias(k, n):
        return 0.1 * jax.random.normal(k, (n,), jnp.float32)

    w_conv = jax.random.normal(ks[0], (32, 1, 3, 3), jnp.float32) / 3.0
    wc, bc = lin(ks[1], 32, 1000), bias(ks[2], 1000)
    w1, b1 = lin(ks[3], 1000, 512), bias(ks[4], 512)
    w2, b2 = lin(ks[5], 512, 128), bias(ks[6], 128)
    w3, b3 = lin(ks[7], 128, 64), bias(ks[8], 64)
    w4, b4 = lin(ks[9], 64, 1), bias(ks[10], 1)
    return w_conv, (wc, bc, w1, b1, w2, b2, w3, b3, w4, b4)


def reference_forward(x, w_conv, head_params):
    """Pure-JAX (XLA) reference of the same surrogate forward, f32 throughout."""
    wc, bc, w1, b1, w2, b2, w3, b3, w4, b4 = head_params
    B, C, H, W = x.shape
    xq = x.reshape(B, H, W)
    scores = jnp.einsum("bqd,bkd->bqk", xq, xq) / math.sqrt(W)
    p = jax.nn.softmax(scores, axis=-1)
    att = jnp.einsum("bqk,bkd->bqd", p, xq)[:, None]                       # (B,1,H,W)
    conv = lax.conv_general_dilated(att, w_conv, (2, 2), ((1, 1), (1, 1)),
                                    dimension_numbers=("NCHW", "OIHW", "NCHW"))
    feats = jnp.mean(jnp.maximum(conv, 0.0), axis=(2, 3))                  # (B, 32)
    h = feats @ wc + bc
    h = jnp.maximum(h @ w1 + b1, 0.0)
    h = jnp.maximum(h @ w2 + b2, 0.0)
    h = jnp.maximum(h @ w3 + b3, 0.0)
    logits = h @ w4 + b4
    return logits, jax.nn.sigmoid(logits)


if __name__ == "__main__":
    key = jax.random.PRNGKey(0)
    k_x, k_p = jax.random.split(key)
    x = jax.random.normal(k_x, (2, 1, 16, 16), jnp.float32)   # NCHW, 1 channel
    w_conv, head = init_params(k_p)
    params = prepare_params(w_conv, head, H=16, W=16)

    logits, probs = jax.jit(bag_pipeline_forward)(x, params)
    jax.block_until_ready((logits, probs))

    assert logits.shape == (2, 1) and probs.shape == (2, 1)
    assert bool(jnp.all(jnp.isfinite(logits)))
    assert bool(jnp.all((probs >= 0) & (probs <= 1)))

    # bf16 matmul weights/activations + approx softmax reciprocal => loose tolerance.
    ref_logits, ref_probs = reference_forward(x, w_conv, head)
    assert bool(jnp.allclose(logits, ref_logits, rtol=5e-2, atol=5e-2))
    assert bool(jnp.allclose(probs, ref_probs, rtol=5e-2, atol=5e-2))
    print("KERNEL_OK")
</pallas_src>

<mosaic_0001>
module attributes {stable_mosaic.version = 11 : i64} {
  func.func @_bag_pipeline_kernel(%arg0: memref<16x8x16xf32, #tpu.memory_space<vmem>>, %arg1: memref<256x2048xbf16, #tpu.memory_space<any>>, %arg2: memref<2048x32xbf16, #tpu.memory_space<vmem>>, %arg3: memref<32x1024xbf16, #tpu.memory_space<vmem>>, %arg4: memref<1x1024xf32, #tpu.memory_space<vmem>>, %arg5: memref<1024x512xbf16, #tpu.memory_space<any>>, %arg6: memref<1x512xf32, #tpu.memory_space<vmem>>, %arg7: memref<512x128xbf16, #tpu.memory_space<vmem>>, %arg8: memref<1x128xf32, #tpu.memory_space<vmem>>, %arg9: memref<128x64xbf16, #tpu.memory_space<vmem>>, %arg10: memref<1x64xf32, #tpu.memory_space<vmem>>, %arg11: memref<64x128xf32, #tpu.memory_space<vmem>>, %arg12: memref<1x128xf32, #tpu.memory_space<vmem>>, %arg13: memref<8x128xf32, #tpu.memory_space<vmem>>, %arg14: memref<8x128xf32, #tpu.memory_space<vmem>>, %arg15: memref<256x2048xbf16, #tpu.memory_space<vmem>>, %arg16: memref<1024x512xbf16, #tpu.memory_space<vmem>>, %arg17: memref<2x!tpu.dma_semaphore, #tpu.memory_space<semaphore_mem>>) attributes {dimension_semantics = [], scalar_prefetch = 0 : i64, scratch_operands = 3 : i64, tpu.core_type = #tpu.core_type<tc>} {
    %c0_i32 = arith.constant 0 : i32
    %0 = tpu.memref_slice %arg17[%c0_i32] : memref<2x!tpu.dma_semaphore, #tpu.memory_space<semaphore_mem>> -> memref<1x!tpu.dma_semaphore, #tpu.memory_space<semaphore_mem>>
    %1 = tpu.memref_squeeze %0 : memref<1x!tpu.dma_semaphore, #tpu.memory_space<semaphore_mem>> -> memref<!tpu.dma_semaphore, #tpu.memory_space<semaphore_mem>>
    tpu.enqueue_dma source(%arg1 : memref<256x2048xbf16, #tpu.memory_space<any>>) target(%arg15 : memref<256x2048xbf16, #tpu.memory_space<vmem>>) target_semaphore(%1 : memref<!tpu.dma_semaphore, #tpu.memory_space<semaphore_mem>>)
    %c1_i32 = arith.constant 1 : i32
    %2 = tpu.memref_slice %arg17[%c1_i32] : memref<2x!tpu.dma_semaphore, #tpu.memory_space<semaphore_mem>> -> memref<1x!tpu.dma_semaphore, #tpu.memory_space<semaphore_mem>>
    %3 = tpu.memref_squeeze %2 : memref<1x!tpu.dma_semaphore, #tpu.memory_space<semaphore_mem>> -> memref<!tpu.dma_semaphore, #tpu.memory_space<semaphore_mem>>
    tpu.enqueue_dma source(%arg5 : memref<1024x512xbf16, #tpu.memory_space<any>>) target(%arg16 : memref<1024x512xbf16, #tpu.memory_space<vmem>>) target_semaphore(%3 : memref<!tpu.dma_semaphore, #tpu.memory_space<semaphore_mem>>)
    %c0 = arith.constant 0 : index
    %c0_0 = arith.constant 0 : index
    %c0_1 = arith.constant 0 : index
    %4 = vector.load %arg0[%c0, %c0_0, %c0_1] : memref<16x8x16xf32, #tpu.memory_space<vmem>>, vector<16x8x16xf32>
    %5 = vector.shape_cast %4 : vector<16x8x16xf32> to vector<128x16xf32>
    %cst = arith.constant dense<0.000000e+00> : vector<128x128xf32>
    %6 = tpu.matmul %5, %5, %cst {dimension_numbers = #tpu.dot_dimension_numbers<[1], [1], [0], [0], [0, 0, 1, 0], [], []>} : vector<128x16xf32>, vector<128x16xf32>, vector<128x128xf32> -> vector<128x128xf32>
    %cst_2 = arith.constant 2.500000e-01 : f32
    %7 = vector.broadcast %cst_2 : f32 to vector<128x128xf32>
    %8 = arith.mulf %6, %7 : vector<128x128xf32>
    %9 = tpu.iota {dimensions = array<i32: 0>} : vector<128x128xi32>
    %10 = tpu.iota {dimensions = array<i32: 1>} : vector<128x128xi32>
    %c8_i32 = arith.constant 8 : i32
    %c0_i32_3 = arith.constant 0 : i32
    %11 = arith.cmpi eq, %c8_i32, %c0_i32_3 : i32
    %c1_i32_4 = arith.constant 1 : i32
    %12 = arith.select %11, %c1_i32_4, %c8_i32 : i32
    %13 = vector.broadcast %12 : i32 to vector<128x128xi32>
    %14 = arith.remsi %9, %13 : vector<128x128xi32>
    %c0_i32_5 = arith.constant 0 : i32
    %15 = vector.broadcast %c0_i32_5 : i32 to vector<128x128xi32>
    %16 = arith.cmpi ne, %14, %15 : vector<128x128xi32>
    %c0_i32_6 = arith.constant 0 : i32
    %17 = vector.broadcast %c0_i32_6 : i32 to vector<128x128xi32>
    %18 = arith.cmpi slt, %14, %17 : vector<128x128xi32>
    %c0_i32_7 = arith.constant 0 : i32
    %19 = arith.cmpi slt, %12, %c0_i32_7 : i32
    %20 = vector.broadcast %19 : i1 to vector<128x128xi1>
    %21 = vector.broadcast %20 : vector<128x128xi1> to vector<128x128xi1>
    %22 = arith.xori %18, %21 : vector<128x128xi1>
    %23 = arith.andi %22, %16 : vector<128x128xi1>
    %24 = vector.broadcast %12 : i32 to vector<128x128xi32>
    %25 = arith.addi %14, %24 : vector<128x128xi32>
    %26 = arith.select %23, %25, %14 : vector<128x128xi1>, vector<128x128xi32>
    %c8_i32_8 = arith.constant 8 : i32
    %c0_i32_9 = arith.constant 0 : i32
    %27 = arith.cmpi eq, %c8_i32_8, %c0_i32_9 : i32
    %c1_i32_10 = arith.constant 1 : i32
    %28 = arith.select %27, %c1_i32_10, %c8_i32_8 : i32
    %29 = vector.broadcast %28 : i32 to vector<128x128xi32>
    %30 = arith.remsi %10, %29 : vector<128x128xi32>
    %c0_i32_11 = arith.constant 0 : i32
    %31 = vector.broadcast %c0_i32_11 : i32 to vector<128x128xi32>
    %32 = arith.cmpi ne, %30, %31 : vector<128x128xi32>
    %c0_i32_12 = arith.constant 0 : i32
    %33 = vector.broadcast %c0_i32_12 : i32 to vector<128x128xi32>
    %34 = arith.cmpi slt, %30, %33 : vector<128x128xi32>
    %c0_i32_13 = arith.constant 0 : i32
    %35 = arith.cmpi slt, %28, %c0_i32_13 : i32
    %36 = vector.broadcast %35 : i1 to vector<128x128xi1>
    %37 = vector.broadcast %36 : vector<128x128xi1> to vector<128x128xi1>
    %38 = arith.xori %34, %37 : vector<128x128xi1>
    %39 = arith.andi %38, %32 : vector<128x128xi1>
    %40 = vector.broadcast %28 : i32 to vector<128x128xi32>
    %41 = arith.addi %30, %40 : vector<128x128xi32>
    %42 = arith.select %39, %41, %30 : vector<128x128xi1>, vector<128x128xi32>
    %43 = arith.cmpi eq, %26, %42 : vector<128x128xi32>
    %cst_14 = arith.constant -1.000000e+09 : f32
    %44 = vector.broadcast %cst_14 : f32 to vector<128x128xf32>
    %45 = arith.select %43, %8, %44 : vector<128x128xi1>, vector<128x128xf32>
    %cst_15 = arith.constant dense<0xFF800000> : vector<128xf32>
    %46 = vector.multi_reduction <maximumf>, %45, %cst_15 [1] : vector<128x128xf32> to vector<128xf32>
    %47 = vector.shape_cast %46 : vector<128xf32> to vector<128x1xf32>
    %48 = vector.broadcast %47 : vector<128x1xf32> to vector<128x128xf32>
    %49 = arith.subf %45, %48 : vector<128x128xf32>
    %50 = math.exp %49 : vector<128x128xf32>
    %cst_16 = arith.constant dense<0.000000e+00> : vector<128xf32>
    %51 = vector.multi_reduction <add>, %50, %cst_16 [1] : vector<128x128xf32> to vector<128xf32>
    %52 = vector.shape_cast %51 : vector<128xf32> to vector<128x1xf32>
    %53 = tpu.reciprocal %52 {approx = true} : vector<128x1xf32> -> vector<128x1xf32>
    %54 = vector.broadcast %53 : vector<128x1xf32> to vector<128x128xf32>
    %55 = arith.mulf %50, %54 : vector<128x128xf32>
    %cst_17 = arith.constant dense<0.000000e+00> : vector<128x16xf32>
    %56 = tpu.matmul %55, %5, %cst_17 {dimension_numbers = #tpu.dot_dimension_numbers<[1], [0], [0], [1], [0, 0, 1, 1], [], []>} : vector<128x128xf32>, vector<128x16xf32>, vector<128x16xf32> -> vector<128x16xf32>
    %57 = arith.truncf %56 : vector<128x16xf32> to vector<128x16xbf16>
    %c0_i32_18 = arith.constant 0 : i32
    %58 = tpu.memref_slice %arg17[%c0_i32_18] : memref<2x!tpu.dma_semaphore, #tpu.memory_space<semaphore_mem>> -> memref<1x!tpu.dma_semaphore, #tpu.memory_space<semaphore_mem>>
    %59 = tpu.memref_squeeze %58 : memref<1x!tpu.dma_semaphore, #tpu.memory_space<semaphore_mem>> -> memref<!tpu.dma_semaphore, #tpu.memory_space<semaphore_mem>>
    tpu.wait_dma2 semaphore(%59 : memref<!tpu.dma_semaphore, #tpu.memory_space<semaphore_mem>>) src(%arg1 : memref<256x2048xbf16, #tpu.memory_space<any>>) dst(%arg15 : memref<256x2048xbf16, #tpu.memory_space<vmem>>)
    %cst_19 = arith.constant 0.000000e+00 : f32
    %60 = vector.broadcast %cst_19 : f32 to vector<8x2048xf32>
    %61 = vector.extract_strided_slice %57 {offsets = [0, 0], sizes = [8, 16], strides = [1, 1]} : vector<128x16xbf16> to vector<8x16xbf16>
    %c0_20 = arith.constant 0 : index
    %c0_21 = arith.constant 0 : index
    %62 = vector.load %arg15[%c0_20, %c0_21] : memref<256x2048xbf16, #tpu.memory_space<vmem>>, vector<16x2048xbf16>
    %cst_22 = arith.constant dense<0.000000e+00> : vector<8x2048xf32>
    %63 = tpu.matmul %61, %62, %cst_22 {dimension_numbers = #tpu.dot_dimension_numbers<[1], [0], [0], [1], [0, 0, 1, 1], [], []>} : vector<8x16xbf16>, vector<16x2048xbf16>, vector<8x2048xf32> -> vector<8x2048xf32>
    %64 = arith.addf %60, %63 : vector<8x2048xf32>
    %65 = vector.extract_strided_slice %57 {offsets = [8, 0], sizes = [8, 16], strides = [1, 1]} : vector<128x16xbf16> to vector<8x16xbf16>
    %c16 = arith.constant 16 : index
    %c0_23 = arith.constant 0 : index
    %66 = vector.load %arg15[%c16, %c0_23] : memref<256x2048xbf16, #tpu.memory_space<vmem>>, vector<16x2048xbf16>
    %cst_24 = arith.constant dense<0.000000e+00> : vector<8x2048xf32>
    %67 = tpu.matmul %65, %66, %cst_24 {dimension_numbers = #tpu.dot_dimension_numbers<[1], [0], [0], [1], [0, 0, 1, 1], [], []>} : vector<8x16xbf16>, vector<16x2048xbf16>, vector<8x2048xf32> -> vector<8x2048xf32>
    %68 = arith.addf %64, %67 : vector<8x2048xf32>
    %69 = vector.extract_strided_slice %57 {offsets = [16, 0], sizes = [8, 16], strides = [1, 1]} : vector<128x16xbf16> to vector<8x16xbf16>
    %c32 = arith.constant 32 : index
    %c0_25 = arith.constant 0 : index
    %70 = vector.load %arg15[%c32, %c0_25] : memref<256x2048xbf16, #tpu.memory_space<vmem>>, vector<16x2048xbf16>
    %cst_26 = arith.constant dense<0.000000e+00> : vector<8x2048xf32>
    %71 = tpu.matmul %69, %70, %cst_26 {dimension_numbers = #tpu.dot_dimension_numbers<[1], [0], [0], [1], [0, 0, 1, 1], [], []>} : vector<8x16xbf16>, vector<16x2048xbf16>, vector<8x2048xf32> -> vector<8x2048xf32>
    %72 = arith.addf %68, %71 : vector<8x2048xf32>
    %73 = vector.extract_strided_slice %57 {offsets = [24, 0], sizes = [8, 16], strides = [1, 1]} : vector<128x16xbf16> to vector<8x16xbf16>
    %c48 = arith.constant 48 : index
    %c0_27 = arith.constant 0 : index
    %74 = vector.load %arg15[%c48, %c0_27] : memref<256x2048xbf16, #tpu.memory_space<vmem>>, vector<16x2048xbf16>
    %cst_28 = arith.constant dense<0.000000e+00> : vector<8x2048xf32>
    %75 = tpu.matmul %73, %74, %cst_28 {dimension_numbers = #tpu.dot_dimension_numbers<[1], [0], [0], [1], [0, 0, 1, 1], [], []>} : vector<8x16xbf16>, vector<16x2048xbf16>, vector<8x2048xf32> -> vector<8x2048xf32>
    %76 = arith.addf %72, %75 : vector<8x2048xf32>
    %77 = vector.extract_strided_slice %57 {offsets = [32, 0], sizes = [8, 16], strides = [1, 1]} : vector<128x16xbf16> to vector<8x16xbf16>
    %c64 = arith.constant 64 : index
    %c0_29 = arith.constant 0 : index
    %78 = vector.load %arg15[%c64, %c0_29] : memref<256x2048xbf16, #tpu.memory_space<vmem>>, vector<16x2048xbf16>
    %cst_30 = arith.constant dense<0.000000e+00> : vector<8x2048xf32>
    %79 = tpu.matmul %77, %78, %cst_30 {dimension_numbers = #tpu.dot_dimension_numbers<[1], [0], [0], [1], [0, 0, 1, 1], [], []>} : vector<8x16xbf16>, vector<16x2048xbf16>, vector<8x2048xf32> -> vector<8x2048xf32>
    %80 = arith.addf %76, %79 : vector<8x2048xf32>
    %81 = vector.extract_strided_slice %57 {offsets = [40, 0], sizes = [8, 16], strides = [1, 1]} : vector<128x16xbf16> to vector<8x16xbf16>
    %c80 = arith.constant 80 : index
    %c0_31 = arith.constant 0 : index
    %82 = vector.load %arg15[%c80, %c0_31] : memref<256x2048xbf16, #tpu.memory_space<vmem>>, vector<16x2048xbf16>
    %cst_32 = arith.constant dense<0.000000e+00> : vector<8x2048xf32>
    %83 = tpu.matmul %81, %82, %cst_32 {dimension_numbers = #tpu.dot_dimension_numbers<[1], [0], [0], [1], [0, 0, 1, 1], [], []>} : vector<8x16xbf16>, vector<16x2048xbf16>, vector<8x2048xf32> -> vector<8x2048xf32>
    %84 = arith.addf %80, %83 : vector<8x2048xf32>
    %85 = vector.extract_strided_slice %57 {offsets = [48, 0], sizes = [8, 16], strides = [1, 1]} : vector<128x16xbf16> to vector<8x16xbf16>
    %c96 = arith.constant 96 : index
    %c0_33 = arith.constant 0 : index
    %86 = vector.load %arg15[%c96, %c0_33] : memref<256x2048xbf16, #tpu.memory_space<vmem>>, vector<16x2048xbf16>
    %cst_34 = arith.constant dense<0.000000e+00> : vector<8x2048xf32>
    %87 = tpu.matmul %85, %86, %cst_34 {dimension_numbers = #tpu.dot_dimension_numbers<[1], [0], [0], [1], [0, 0, 1, 1], [], []>} : vector<8x16xbf16>, vector<16x2048xbf16>, vector<8x2048xf32> -> vector<8x2048xf32>
    %88 = arith.addf %84, %87 : vector<8x2048xf32>
    %89 = vector.extract_strided_slice %57 {offsets = [56, 0], sizes = [8, 16], strides = [1, 1]} : vector<128x16xbf16> to vector<8x16xbf16>
    %c112 = arith.constant 112 : index
    %c0_35 = arith.constant 0 : index
    %90 = vector.load %arg15[%c112, %c0_35] : memref<256x2048xbf16, #tpu.memory_space<vmem>>, vector<16x2048xbf16>
    %cst_36 = arith.constant dense<0.000000e+00> : vector<8x2048xf32>
    %91 = tpu.matmul %89, %90, %cst_36 {dimension_numbers = #tpu.dot_dimension_numbers<[1], [0], [0], [1], [0, 0, 1, 1], [], []>} : vector<8x16xbf16>, vector<16x2048xbf16>, vector<8x2048xf32> -> vector<8x2048xf32>
    %92 = arith.addf %88, %91 : vector<8x2048xf32>
    %93 = vector.extract_strided_slice %57 {offsets = [64, 0], sizes = [8, 16], strides = [1, 1]} : vector<128x16xbf16> to vector<8x16xbf16>
    %c128 = arith.constant 128 : index
    %c0_37 = arith.constant 0 : index
    %94 = vector.load %arg15[%c128, %c0_37] : memref<256x2048xbf16, #tpu.memory_space<vmem>>, vector<16x2048xbf16>
    %cst_38 = arith.constant dense<0.000000e+00> : vector<8x2048xf32>
    %95 = tpu.matmul %93, %94, %cst_38 {dimension_numbers = #tpu.dot_dimension_numbers<[1], [0], [0], [1], [0, 0, 1, 1], [], []>} : vector<8x16xbf16>, vector<16x2048xbf16>, vector<8x2048xf32> -> vector<8x2048xf32>
    %96 = arith.addf %92, %95 : vector<8x2048xf32>
    %97 = vector.extract_strided_slice %57 {offsets = [72, 0], sizes = [8, 16], strides = [1, 1]} : vector<128x16xbf16> to vector<8x16xbf16>
    %c144 = arith.constant 144 : index
    %c0_39 = arith.constant 0 : index
    %98 = vector.load %arg15[%c144, %c0_39] : memref<256x2048xbf16, #tpu.memory_space<vmem>>, vector<16x2048xbf16>
    %cst_40 = arith.constant dense<0.000000e+00> : vector<8x2048xf32>
    %99 = tpu.matmul %97, %98, %cst_40 {dimension_numbers = #tpu.dot_dimension_numbers<[1], [0], [0], [1], [0, 0, 1, 1], [], []>} : vector<8x16xbf16>, vector<16x2048xbf16>, vector<8x2048xf32> -> vector<8x2048xf32>
    %100 = arith.addf %96, %99 : vector<8x2048xf32>
    %101 = vector.extract_strided_slice %57 {offsets = [80, 0], sizes = [8, 16], strides = [1, 1]} : vector<128x16xbf16> to vector<8x16xbf16>
    %c160 = arith.constant 160 : index
    %c0_41 = arith.constant 0 : index
    %102 = vector.load %arg15[%c160, %c0_41] : memref<256x2048xbf16, #tpu.memory_space<vmem>>, vector<16x2048xbf16>
    %cst_42 = arith.constant dense<0.000000e+00> : vector<8x2048xf32>
    %103 = tpu.matmul %101, %102, %cst_42 {dimension_numbers = #tpu.dot_dimension_numbers<[1], [0], [0], [1], [0, 0, 1, 1], [], []>} : vector<8x16xbf16>, vector<16x2048xbf16>, vector<8x2048xf32> -> vector<8x2048xf32>
    %104 = arith.addf %100, %103 : vector<8x2048xf32>
    %105 = vector.extract_strided_slice %57 {offsets = [88, 0], sizes = [8, 16], strides = [1, 1]} : vector<128x16xbf16> to vector<8x16xbf16>
    %c176 = arith.constant 176 : index
    %c0_43 = arith.constant 0 : index
    %106 = vector.load %arg15[%c176, %c0_43] : memref<256x2048xbf16, #tpu.memory_space<vmem>>, vector<16x2048xbf16>
    %cst_44 = arith.constant dense<0.000000e+00> : vector<8x2048xf32>
    %107 = tpu.matmul %105, %106, %cst_44 {dimension_numbers = #tpu.dot_dimension_numbers<[1], [0], [0], [1], [0, 0, 1, 1], [], []>} : vector<8x16xbf16>, vector<16x2048xbf16>, vector<8x2048xf32> -> vector<8x2048xf32>
    %108 = arith.addf %104, %107 : vector<8x2048xf32>
    %109 = vector.extract_strided_slice %57 {offsets = [96, 0], sizes = [8, 16], strides = [1, 1]} : vector<128x16xbf16> to vector<8x16xbf16>
    %c192 = arith.constant 192 : index
    %c0_45 = arith.constant 0 : index
    %110 = vector.load %arg15[%c192, %c0_45] : memref<256x2048xbf16, #tpu.memory_space<vmem>>, vector<16x2048xbf16>
    %cst_46 = arith.constant dense<0.000000e+00> : vector<8x2048xf32>
    %111 = tpu.matmul %109, %110, %cst_46 {dimension_numbers = #tpu.dot_dimension_numbers<[1], [0], [0], [1], [0, 0, 1, 1], [], []>} : vector<8x16xbf16>, vector<16x2048xbf16>, vector<8x2048xf32> -> vector<8x2048xf32>
    %112 = arith.addf %108, %111 : vector<8x2048xf32>
    %113 = vector.extract_strided_slice %57 {offsets = [104, 0], sizes = [8, 16], strides = [1, 1]} : vector<128x16xbf16> to vector<8x16xbf16>
    %c208 = arith.constant 208 : index
    %c0_47 = arith.constant 0 : index
    %114 = vector.load %arg15[%c208, %c0_47] : memref<256x2048xbf16, #tpu.memory_space<vmem>>, vector<16x2048xbf16>
    %cst_48 = arith.constant dense<0.000000e+00> : vector<8x2048xf32>
    %115 = tpu.matmul %113, %114, %cst_48 {dimension_numbers = #tpu.dot_dimension_numbers<[1], [0], [0], [1], [0, 0, 1, 1], [], []>} : vector<8x16xbf16>, vector<16x2048xbf16>, vector<8x2048xf32> -> vector<8x2048xf32>
    %116 = arith.addf %112, %115 : vector<8x2048xf32>
    %117 = vector.extract_strided_slice %57 {offsets = [112, 0], sizes = [8, 16], strides = [1, 1]} : vector<128x16xbf16> to vector<8x16xbf16>
    %c224 = arith.constant 224 : index
    %c0_49 = arith.constant 0 : index
    %118 = vector.load %arg15[%c224, %c0_49] : memref<256x2048xbf16, #tpu.memory_space<vmem>>, vector<16x2048xbf16>
    %cst_50 = arith.constant dense<0.000000e+00> : vector<8x2048xf32>
    %119 = tpu.matmul %117, %118, %cst_50 {dimension_numbers = #tpu.dot_dimension_numbers<[1], [0], [0], [1], [0, 0, 1, 1], [], []>} : vector<8x16xbf16>, vector<16x2048xbf16>, vector<8x2048xf32> -> vector<8x2048xf32>
    %120 = arith.addf %116, %119 : vector<8x2048xf32>
    %121 = vector.extract_strided_slice %57 {offsets = [120, 0], sizes = [8, 16], strides = [1, 1]} : vector<128x16xbf16> to vector<8x16xbf16>
    %c240 = arith.constant 240 : index
    %c0_51 = arith.constant 0 : index
    %122 = vector.load %arg15[%c240, %c0_51] : memref<256x2048xbf16, #tpu.memory_space<vmem>>, vector<16x2048xbf16>
    %cst_52 = arith.constant dense<0.000000e+00> : vector<8x2048xf32>
    %123 = tpu.matmul %121, %122, %cst_52 {dimension_numbers = #tpu.dot_dimension_numbers<[1], [0], [0], [1], [0, 0, 1, 1], [], []>} : vector<8x16xbf16>, vector<16x2048xbf16>, vector<8x2048xf32> -> vector<8x2048xf32>
    %124 = arith.addf %120, %123 : vector<8x2048xf32>
    %cst_53 = arith.constant 0.000000e+00 : f32
    %125 = vector.broadcast %cst_53 : f32 to vector<8x2048xf32>
    %126 = arith.maximumf %124, %125 : vector<8x2048xf32>
    %127 = arith.truncf %126 : vector<8x2048xf32> to vector<8x2048xbf16>
    %c0_54 = arith.constant 0 : index
    %c0_55 = arith.constant 0 : index
    %128 = vector.load %arg2[%c0_54, %c0_55] : memref<2048x32xbf16, #tpu.memory_space<vmem>>, vector<2048x32xbf16>
    %cst_56 = arith.constant dense<0.000000e+00> : vector<8x32xf32>
    %129 = tpu.matmul %127, %128, %cst_56 {dimension_numbers = #tpu.dot_dimension_numbers<[1], [0], [0], [1], [0, 0, 1, 1], [], []>} : vector<8x2048xbf16>, vector<2048x32xbf16>, vector<8x32xf32> -> vector<8x32xf32>
    %130 = arith.truncf %129 : vector<8x32xf32> to vector<8x32xbf16>
    %c0_57 = arith.constant 0 : index
    %c0_58 = arith.constant 0 : index
    %131 = vector.load %arg3[%c0_57, %c0_58] : memref<32x1024xbf16, #tpu.memory_space<vmem>>, vector<32x1024xbf16>
    %cst_59 = arith.constant dense<0.000000e+00> : vector<8x1024xf32>
    %132 = tpu.matmul %130, %131, %cst_59 {dimension_numbers = #tpu.dot_dimension_numbers<[1], [0], [0], [1], [0, 0, 1, 1], [], []>} : vector<8x32xbf16>, vector<32x1024xbf16>, vector<8x1024xf32> -> vector<8x1024xf32>
    %c0_60 = arith.constant 0 : index
    %c0_61 = arith.constant 0 : index
    %133 = vector.load %arg4[%c0_60, %c0_61] : memref<1x1024xf32, #tpu.memory_space<vmem>>, vector<1x1024xf32>
    %134 = vector.broadcast %133 : vector<1x1024xf32> to vector<8x1024xf32>
    %135 = arith.addf %132, %134 : vector<8x1024xf32>
    %136 = arith.truncf %135 : vector<8x1024xf32> to vector<8x1024xbf16>
    %c1_i32_62 = arith.constant 1 : i32
    %137 = tpu.memref_slice %arg17[%c1_i32_62] : memref<2x!tpu.dma_semaphore, #tpu.memory_space<semaphore_mem>> -> memref<1x!tpu.dma_semaphore, #tpu.memory_space<semaphore_mem>>
    %138 = tpu.memref_squeeze %137 : memref<1x!tpu.dma_semaphore, #tpu.memory_space<semaphore_mem>> -> memref<!tpu.dma_semaphore, #tpu.memory_space<semaphore_mem>>
    tpu.wait_dma2 semaphore(%138 : memref<!tpu.dma_semaphore, #tpu.memory_space<semaphore_mem>>) src(%arg5 : memref<1024x512xbf16, #tpu.memory_space<any>>) dst(%arg16 : memref<1024x512xbf16, #tpu.memory_space<vmem>>)
    %c0_63 = arith.constant 0 : index
    %c0_64 = arith.constant 0 : index
    %139 = vector.load %arg16[%c0_63, %c0_64] : memref<1024x512xbf16, #tpu.memory_space<vmem>>, vector<1024x512xbf16>
    %cst_65 = arith.constant dense<0.000000e+00> : vector<8x512xf32>
    %140 = tpu.matmul %136, %139, %cst_65 {dimension_numbers = #tpu.dot_dimension_numbers<[1], [0], [0], [1], [0, 0, 1, 1], [], []>} : vector<8x1024xbf16>, vector<1024x512xbf16>, vector<8x512xf32> -> vector<8x512xf32>
    %c0_66 = arith.constant 0 : index
    %c0_67 = arith.constant 0 : index
    %141 = vector.load %arg6[%c0_66, %c0_67] : memref<1x512xf32, #tpu.memory_space<vmem>>, vector<1x512xf32>
    %142 = vector.broadcast %141 : vector<1x512xf32> to vector<8x512xf32>
    %143 = arith.addf %140, %142 : vector<8x512xf32>
    %cst_68 = arith.constant 0.000000e+00 : f32
    %144 = vector.broadcast %cst_68 : f32 to vector<8x512xf32>
    %145 = arith.maximumf %143, %144 : vector<8x512xf32>
    %146 = arith.truncf %145 : vector<8x512xf32> to vector<8x512xbf16>
    %c0_69 = arith.constant 0 : index
    %c0_70 = arith.constant 0 : index
    %147 = vector.load %arg7[%c0_69, %c0_70] : memref<512x128xbf16, #tpu.memory_space<vmem>>, vector<512x128xbf16>
    %cst_71 = arith.constant dense<0.000000e+00> : vector<8x128xf32>
    %148 = tpu.matmul %146, %147, %cst_71 {dimension_numbers = #tpu.dot_dimension_numbers<[1], [0], [0], [1], [0, 0, 1, 1], [], []>} : vector<8x512xbf16>, vector<512x128xbf16>, vector<8x128xf32> -> vector<8x128xf32>
    %c0_72 = arith.constant 0 : index
    %c0_73 = arith.constant 0 : index
    %149 = vector.load %arg8[%c0_72, %c0_73] : memref<1x128xf32, #tpu.memory_space<vmem>>, vector<1x128xf32>
    %150 = vector.broadcast %149 : vector<1x128xf32> to vector<8x128xf32>
    %151 = arith.addf %148, %150 : vector<8x128xf32>
    %cst_74 = arith.constant 0.000000e+00 : f32
    %152 = vector.broadcast %cst_74 : f32 to vector<8x128xf32>
    %153 = arith.maximumf %151, %152 : vector<8x128xf32>
    %154 = arith.truncf %153 : vector<8x128xf32> to vector<8x128xbf16>
    %c0_75 = arith.constant 0 : index
    %c0_76 = arith.constant 0 : index
    %155 = vector.load %arg9[%c0_75, %c0_76] : memref<128x64xbf16, #tpu.memory_space<vmem>>, vector<128x64xbf16>
    %cst_77 = arith.constant dense<0.000000e+00> : vector<8x64xf32>
    %156 = tpu.matmul %154, %155, %cst_77 {dimension_numbers = #tpu.dot_dimension_numbers<[1], [0], [0], [1], [0, 0, 1, 1], [], []>} : vector<8x128xbf16>, vector<128x64xbf16>, vector<8x64xf32> -> vector<8x64xf32>
    %c0_78 = arith.constant 0 : index
    %c0_79 = arith.constant 0 : index
    %157 = vector.load %arg10[%c0_78, %c0_79] : memref<1x64xf32, #tpu.memory_space<vmem>>, vector<1x64xf32>
    %158 = vector.broadcast %157 : vector<1x64xf32> to vector<8x64xf32>
    %159 = arith.addf %156, %158 : vector<8x64xf32>
    %cst_80 = arith.constant 0.000000e+00 : f32
    %160 = vector.broadcast %cst_80 : f32 to vector<8x64xf32>
    %161 = arith.maximumf %159, %160 : vector<8x64xf32>
    %c0_81 = arith.constant 0 : index
    %c0_82 = arith.constant 0 : index
    %162 = vector.load %arg11[%c0_81, %c0_82] : memref<64x128xf32, #tpu.memory_space<vmem>>, vector<64x128xf32>
    %cst_83 = arith.constant dense<0.000000e+00> : vector<8x128xf32>
    %163 = tpu.matmul %161, %162, %cst_83 {dimension_numbers = #tpu.dot_dimension_numbers<[1], [0], [0], [1], [0, 0, 1, 1], [], []>} : vector<8x64xf32>, vector<64x128xf32>, vector<8x128xf32> -> vector<8x128xf32>
    %c0_84 = arith.constant 0 : index
    %c0_85 = arith.constant 0 : index
    %164 = vector.load %arg12[%c0_84, %c0_85] : memref<1x128xf32, #tpu.memory_space<vmem>>, vector<1x128xf32>
    %165 = vector.broadcast %164 : vector<1x128xf32> to vector<8x128xf32>
    %166 = arith.addf %163, %165 : vector<8x128xf32>
    %c0_86 = arith.constant 0 : index
    %c0_87 = arith.constant 0 : index
    %167 = vector.load %arg13[%c0_86, %c0_87] : memref<8x128xf32, #tpu.memory_space<vmem>>, vector<8x128xf32>
    tpu.vector_store %arg13[%c0_86, %c0_87], %166 {strides = array<i32>} : memref<8x128xf32, #tpu.memory_space<vmem>>, vector<8x128xf32>,
    %cst_88 = arith.constant 0.000000e+00 : f32
    %168 = vector.broadcast %cst_88 : f32 to vector<8x128xf32>
    %169 = arith.subf %168, %166 : vector<8x128xf32>
    %170 = math.exp %169 : vector<8x128xf32>
    %cst_89 = arith.constant 1.000000e+00 : f32
    %171 = vector.broadcast %cst_89 : f32 to vector<8x128xf32>
    %172 = arith.addf %171, %170 : vector<8x128xf32>
    %cst_90 = arith.constant 1.000000e+00 : f32
    %173 = vector.broadcast %cst_90 : f32 to vector<8x128xf32>
    %174 = arith.divf %173, %172 : vector<8x128xf32>
    %c0_91 = arith.constant 0 : index
    %c0_92 = arith.constant 0 : index
    %175 = vector.load %arg14[%c0_91, %c0_92] : memref<8x128xf32, #tpu.memory_space<vmem>>, vector<8x128xf32>
    tpu.vector_store %arg14[%c0_91, %c0_92], %174 {strides = array<i32>} : memref<8x128xf32, #tpu.memory_space<vmem>>, vector<8x128xf32>,
    return
  }
}

</mosaic_0001>

<llo_original>
// kernel: bag_pipeline_forward.1
$region0: #{bag_pipeline_forward.1}
  #allocation0 [shape = 'u32[]', space=smem, size = 0x4, offset = 0x4, fixed_abs, tag = 'smem constant byte address 0x4 - core index']
  #allocation1 [shape = 'u32[72,128]{1,0:T(1,128)}', space=vmem, size = 0x9000, scoped, tag = 'internal scratch']
  #allocation2 [shape = 'bf16[256,2048]{1,0:T(8,128)(2,1)}', space=vmem, size = 0x100000, scoped, tag = 'scratch operand']
  #allocation3 [shape = 'bf16[1024,512]{1,0:T(8,128)(2,1)}', space=vmem, size = 0x100000, scoped, tag = 'scratch operand']
  #allocation4 [shape = 's32[2]{0}', space=sflag, size = 0x8, scoped, tag = 'scratch operand']
  #allocation5 [shape = 's32[]', space=sflag, size = 0x4, offset = 0, fixed_abs, tag = 'sflag constant byte address 0x0 - dummy sync flag']
  #allocation6 [shape = 's32[]', space=sflag, size = 0x4, offset = 0, fixed_abs, tag = 'sflag constant byte address 0x0 - dummy sync flag']
  #allocation7 [shape = 'u32[]', space=smem, size = 0x4, offset = 0x44, fixed_abs, tag = 'smem constant byte address 0x44 - assertion arg 0']
  #allocation8 [shape = 'u32[]', space=smem, size = 0x4, offset = 0x48, fixed_abs, tag = 'smem constant byte address 0x48 - assertion arg 1']
  #allocation9 [shape = 's32[]', space=sflag, size = 0x4, offset = 0, fixed_abs, tag = 'sflag constant byte address 0x0 - dummy sync flag']
  #allocation10 [shape = 's32[]', space=sflag, size = 0x4, offset = 0, fixed_abs, tag = 'sflag constant byte address 0x0 - dummy sync flag']
  %s0 = inlined_call_operand.vmem [shape: f32[16,8,16], index: 0, kind: input, shape index: {}]
  %s1 = inlined_call_operand.hbm [shape: bf16[256,2048], index: 1, kind: input, shape index: {}]
  %s2 = inlined_call_operand.vmem [shape: bf16[2048,32], index: 2, kind: input, shape index: {}]
  %s3 = inlined_call_operand.vmem [shape: bf16[32,1024], index: 3, kind: input, shape index: {}]
  %s4 = inlined_call_operand.vmem [shape: f32[1,1024], index: 4, kind: input, shape index: {}]
  %s5 = inlined_call_operand.hbm [shape: bf16[1024,512], index: 5, kind: input, shape index: {}]
  %s6 = inlined_call_operand.vmem [shape: f32[1,512], index: 6, kind: input, shape index: {}]
  %s7 = inlined_call_operand.vmem [shape: bf16[512,128], index: 7, kind: input, shape index: {}]
  %s8 = inlined_call_operand.vmem [shape: f32[1,128], index: 8, kind: input, shape index: {}]
  %s9 = inlined_call_operand.vmem [shape: bf16[128,64], index: 9, kind: input, shape index: {}]
  %s10 = inlined_call_operand.vmem [shape: f32[1,64], index: 10, kind: input, shape index: {}]
  %s11 = inlined_call_operand.vmem [shape: f32[64,128], index: 11, kind: input, shape index: {}]
  %s12 = inlined_call_operand.vmem [shape: f32[1,128], index: 12, kind: input, shape index: {}]
  %s13 = inlined_call_operand.vmem [shape: f32[8,128], index: 13, kind: output, shape index: {0}]
  %s14 = inlined_call_operand.vmem [shape: f32[8,128], index: 14, kind: output, shape index: {1}]
  %15 = xla_tuple %s13, %s14
  %s16 = sld [smem:[#allocation0]]
  $region70: #{bag_pipeline_forward.1} parent=0
    _
  %s18 = ssub.s32 1, %s16
  %s19 = scalar_select 0, %s18, %s16
  // Predicated region
  $region2: #{bag_pipeline_forward.1} parent=0 // pred_check
    _
  $region3: #{bag_pipeline_forward.1} parent=0 // pred_check_branch
    %21 = sbr.rel (0) target = $region5
  $region4: #{bag_pipeline_forward.1} parent=0 // pred_region
    _
  $region5: #{bag_pipeline_forward.1} parent=0 // pred_fallthru
    _
  // Predicated region
  $region6: #{bag_pipeline_forward.1} parent=0 // pred_check
    _
  $region7: #{bag_pipeline_forward.1} parent=0 // pred_check_branch
    %23 = sbr.rel (0) target = $region9
  $region8: #{bag_pipeline_forward.1} parent=0 // pred_region
    _
  $region9: #{bag_pipeline_forward.1} parent=0 // pred_fallthru
    _
  // Predicated region
  $region10: #{bag_pipeline_forward.1} parent=0 // pred_check
    _
  $region11: #{bag_pipeline_forward.1} parent=0 // pred_check_branch
    %25 = sbr.rel (0) target = $region13
  $region12: #{bag_pipeline_forward.1} parent=0 // pred_region
    _
  $region13: #{bag_pipeline_forward.1} parent=0 // pred_fallthru
    _
  // Predicated region
  $region14: #{bag_pipeline_forward.1} parent=0 // pred_check
    _
  $region15: #{bag_pipeline_forward.1} parent=0 // pred_check_branch
    %27 = sbr.rel (0) target = $region17
  $region16: #{bag_pipeline_forward.1} parent=0 // pred_region
    _
  $region17: #{bag_pipeline_forward.1} parent=0 // pred_fallthru
    _
  // Predicated region
  $region18: #{bag_pipeline_forward.1} parent=0 // pred_check
    _
  $region19: #{bag_pipeline_forward.1} parent=0 // pred_check_branch
    %29 = sbr.rel (0) target = $region21
  $region20: #{bag_pipeline_forward.1} parent=0 // pred_region
    _
  $region21: #{bag_pipeline_forward.1} parent=0 // pred_fallthru
    _
  // Predicated region
  $region22: #{bag_pipeline_forward.1} parent=0 // pred_check
    _
  $region23: #{bag_pipeline_forward.1} parent=0 // pred_check_branch
    %31 = sbr.rel (0) target = $region25
  $region24: #{bag_pipeline_forward.1} parent=0 // pred_region
    _
  $region25: #{bag_pipeline_forward.1} parent=0 // pred_fallthru
    _
  // Predicated region
  $region26: #{bag_pipeline_forward.1} parent=0 // pred_check
    _
  $region27: #{bag_pipeline_forward.1} parent=0 // pred_check_branch
    %33 = sbr.rel (0) target = $region29
  $region28: #{bag_pipeline_forward.1} parent=0 // pred_region
    _
  $region29: #{bag_pipeline_forward.1} parent=0 // pred_fallthru
    _
  // Predicated region
  $region30: #{bag_pipeline_forward.1} parent=0 // pred_check
    _
  $region31: #{bag_pipeline_forward.1} parent=0 // pred_check_branch
    %35 = sbr.rel (0) target = $region33
  $region32: #{bag_pipeline_forward.1} parent=0 // pred_region
    _
  $region33: #{bag_pipeline_forward.1} parent=0 // pred_fallthru
    _
  // Predicated region
  $region34: #{bag_pipeline_forward.1} parent=0 // pred_check
    _
  $region35: #{bag_pipeline_forward.1} parent=0 // pred_check_branch
    %37 = sbr.rel (0) target = $region37
  $region36: #{bag_pipeline_forward.1} parent=0 // pred_region
    _
  $region37: #{bag_pipeline_forward.1} parent=0 // pred_fallthru
    _
  // Predicated region
  $region38: #{bag_pipeline_forward.1} parent=0 // pred_check
    _
  $region39: #{bag_pipeline_forward.1} parent=0 // pred_check_branch
    %39 = sbr.rel (0) target = $region41
  $region40: #{bag_pipeline_forward.1} parent=0 // pred_region
    _
  $region41: #{bag_pipeline_forward.1} parent=0 // pred_fallthru
    _
  // Predicated region
  $region42: #{bag_pipeline_forward.1} parent=0 // pred_check
    _
  $region43: #{bag_pipeline_forward.1} parent=0 // pred_check_branch
    %41 = sbr.rel (0) target = $region45
  $region44: #{bag_pipeline_forward.1} parent=0 // pred_region
    _
  $region45: #{bag_pipeline_forward.1} parent=0 // pred_fallthru
    _
  // Predicated region
  $region46: #{bag_pipeline_forward.1} parent=0 // pred_check
    _
  $region47: #{bag_pipeline_forward.1} parent=0 // pred_check_branch
    %44 = sbr.rel target = $region49
  $region48: #{bag_pipeline_forward.1} parent=0 // pred_region
    %45 = sst [smem:[#allocation7]] [#allocation6]
    %46 = sst [smem:[#allocation8]] [#allocation5]
  $region49: #{bag_pipeline_forward.1} parent=0 // pred_fallthru
    _
  %48 = shalt.err (0)
  %s50 = sshll.u32 %s1, 4
  %s51 = int_to_ptr.hbm [resolvable:$true] %s50
  %s52 = sshll.u32 [#allocation2], 4
  %s53 = int_to_ptr.vmem [resolvable:$true] %s52
  %55 = dma.hbm_to_vmem [thread:$0]  %s51, 32768, %s53, [#allocation4]
  %s56 = scalar_lea.sflag [#allocation4], 1
  // Predicated region
  $region50: #{bag_pipeline_forward.1} parent=0 // pred_check
    _
  $region51: #{bag_pipeline_forward.1} parent=0 // pred_check_branch
    %58 = sbr.rel target = $region53
  $region52: #{bag_pipeline_forward.1} parent=0 // pred_region
    %59 = sst [smem:[#allocation7]] [#allocation10]
    %60 = sst [smem:[#allocation8]] [#allocation9]
  $region53: #{bag_pipeline_forward.1} parent=0 // pred_fallthru
    _
  %62 = shalt.err (0)
  %s64 = sshll.u32 %s5, 4
  %s65 = int_to_ptr.hbm [resolvable:$true] %s64
  %s66 = sshll.u32 [#allocation3], 4
  %s67 = int_to_ptr.vmem [resolvable:$true] %s66
  %69 = dma.hbm_to_vmem [thread:$0]  %s65, 32768, %s67, %s56
  %v70 = vld [vmem:[%s0] sm:$0xff]
  %v71 = vld [vmem:[%s0 + $0x8] sm:$0xff]
  %v72 = vld [vmem:[%s0 + $0x10] sm:$0xff]
  %v73 = vld [vmem:[%s0 + $0x18] sm:$0xff]
  %v74 = vld [vmem:[%s0 + $0x20] sm:$0xff]
  %v75 = vld [vmem:[%s0 + $0x28] sm:$0xff]
  %v76 = vld [vmem:[%s0 + $0x30] sm:$0xff]
  %v77 = vld [vmem:[%s0 + $0x38] sm:$0xff]
  %v78 = vld [vmem:[%s0 + $0x40] sm:$0xff]
  %v79 = vld [vmem:[%s0 + $0x48] sm:$0xff]
  %v80 = vld [vmem:[%s0 + $0x50] sm:$0xff]
  %v81 = vld [vmem:[%s0 + $0x58] sm:$0xff]
  %v82 = vld [vmem:[%s0 + $0x60] sm:$0xff]
  %v83 = vld [vmem:[%s0 + $0x68] sm:$0xff]
  %v84 = vld [vmem:[%s0 + $0x70] sm:$0xff]
  %v85 = vld [vmem:[%s0 + $0x78] sm:$0xff]
  %vm86 = vcmask 130048
  %v88 = vsel %vm86, %v70, 0
  %v91 = vsel %vm86, %v71, 0
  %v94 = vsel %vm86, %v72, 0
  %v97 = vsel %vm86, %v73, 0
  %v100 = vsel %vm86, %v74, 0
  %v103 = vsel %vm86, %v75, 0
  %v106 = vsel %vm86, %v76, 0
  %v109 = vsel %vm86, %v77, 0
  %v112 = vsel %vm86, %v78, 0
  %v115 = vsel %vm86, %v79, 0
  %v118 = vsel %vm86, %v80, 0
  %v121 = vsel %vm86, %v81, 0
  %v124 = vsel %vm86, %v82, 0
  %v127 = vsel %vm86, %v83, 0
  %v130 = vsel %vm86, %v84, 0
  %v133 = vsel %vm86, %v85, 0
  %135 = vmatpush.xpose.msra.mxu0 %v133
  %136 = vmatpush.xpose.msra.mxu0 %v130
  %137 = vmatpush.xpose.msra.mxu0 %v127
  %138 = vmatpush.xpose.msra.mxu0 %v124
  %139 = vmatpush.xpose.msra.mxu0 %v121
  %140 = vmatpush.xpose.msra.mxu0 %v118
  %141 = vmatpush.xpose.msra.mxu0 %v115
  %142 = vmatpush.xpose.msra.mxu0 %v112
  %143 = vmatpush.xpose.msra.mxu0 %v109
  %144 = vmatpush.xpose.msra.mxu0 %v106
  %145 = vmatpush.xpose.msra.mxu0 %v103
  %146 = vmatpush.xpose.msra.mxu0 %v100
  %147 = vmatpush.xpose.msra.mxu0 %v97
  %148 = vmatpush.xpose.msra.mxu0 %v94
  %149 = vmatpush.xpose.msra.mxu0 %v91
  %150 = vmatpush.xpose.msra.mxu0 %v88
  %151 = vmatmul.f32.gmra.mxu0 %v88
  %v152 = vpop.f32.mrf.mxu0
  %v153 = vadd.f32 0.0, %v152
  %154 = vmatmul.f32.gmra.mxu0 %v91
  %v155 = vpop.f32.mrf.mxu0
  %v156 = vadd.f32 0.0, %v155
  %157 = vmatmul.f32.gmra.mxu0 %v94
  %v158 = vpop.f32.mrf.mxu0
  %v159 = vadd.f32 0.0, %v158
  %160 = vmatmul.f32.gmra.mxu0 %v97
  %v161 = vpop.f32.mrf.mxu0
  %v162 = vadd.f32 0.0, %v161
  %163 = vmatmul.f32.gmra.mxu0 %v100
  %v164 = vpop.f32.mrf.mxu0
  %v165 = vadd.f32 0.0, %v164
  %166 = vmatmul.f32.gmra.mxu0 %v103
  %v167 = vpop.f32.mrf.mxu0
  %v168 = vadd.f32 0.0, %v167
  %169 = vmatmul.f32.gmra.mxu0 %v106
  %v170 = vpop.f32.mrf.mxu0
  %v171 = vadd.f32 0.0, %v170
  %172 = vmatmul.f32.gmra.mxu0 %v109
  %v173 = vpop.f32.mrf.mxu0
  %v174 = vadd.f32 0.0, %v173
  %175 = vmatmul.f32.gmra.mxu0 %v112
  %v176 = vpop.f32.mrf.mxu0
  %v177 = vadd.f32 0.0, %v176
  %178 = vmatmul.f32.gmra.mxu0 %v115
  %v179 = vpop.f32.mrf.mxu0
  %v180 = vadd.f32 0.0, %v179
  %181 = vmatmul.f32.gmra.mxu0 %v118
  %v182 = vpop.f32.mrf.mxu0
  %v183 = vadd.f32 0.0, %v182
  %184 = vmatmul.f32.gmra.mxu0 %v121
  %v185 = vpop.f32.mrf.mxu0
  %v186 = vadd.f32 0.0, %v185
  %187 = vmatmul.f32.gmra.mxu0 %v124
  %v188 = vpop.f32.mrf.mxu0
  %v189 = vadd.f32 0.0, %v188
  %190 = vmatmul.f32.gmra.mxu0 %v127
  %v191 = vpop.f32.mrf.mxu0
  %v192 = vadd.f32 0.0, %v191
  %193 = vmatmul.f32.gmra.mxu0 %v130
  %v194 = vpop.f32.mrf.mxu0
  %v195 = vadd.f32 0.0, %v194
  %196 = vmatmul.f32.gmra.mxu0 %v133
  %v197 = vpop.f32.mrf.mxu0
  %v198 = vadd.f32 0.0, %v197
  %199 = vdwg.mxu0
  %v200 = vmul.f32 %v153, 0.25
  %v201 = vmul.f32 %v156, 0.25
  %v202 = vmul.f32 %v159, 0.25
  %v203 = vmul.f32 %v162, 0.25
  %v204 = vmul.f32 %v165, 0.25
  %v205 = vmul.f32 %v168, 0.25
  %v206 = vmul.f32 %v171, 0.25
  %v207 = vmul.f32 %v174, 0.25
  %v208 = vmul.f32 %v177, 0.25
  %v209 = vmul.f32 %v180, 0.25
  %v210 = vmul.f32 %v183, 0.25
  %v211 = vmul.f32 %v186, 0.25
  %v212 = vmul.f32 %v189, 0.25
  %v213 = vmul.f32 %v192, 0.25
  %v214 = vmul.f32 %v195, 0.25
  %v215 = vmul.f32 %v198, 0.25
  %v216 = vlaneseq
  %v217 = vshrl.u32 %v216, 7
  %v218 = vadd.s32 %v217, 8
  %v219 = vadd.s32 %v217, 16
  %v220 = vadd.s32 %v217, 24
  %v221 = vadd.s32 %v217, 32
  %v222 = vadd.s32 %v217, 40
  %v223 = vadd.s32 %v217, 48
  %v224 = vadd.s32 %v217, 56
  %v225 = vadd.s32 %v217, 64
  %v226 = vadd.s32 %v217, 72
  %v227 = vadd.s32 %v217, 80
  %v228 = vadd.s32 %v217, 88
  %v229 = vadd.s32 %v217, 96
  %v230 = vadd.s32 %v217, 104
  %v231 = vadd.s32 %v217, 112
  %v232 = vadd.s32 %v217, 120
  %v233 = vlaneseq
  %v234 = vand.u32 %v233, 127
  %vm235 = vcmp.lt.s32.totalorder %v217, 0
  %v236 = vsub.s32 0, %v217
  %v237 = vsel %vm235, %v236, %v217
  %v238 = vshrl.u32 %v237, 3
  %v239 = vand.u32 %v237, 7
  %v240 = vsub.s32 0, %v239
  %v241 = vsel %vm235, %v240, %v239
  %vm242 = vcmp.lt.s32.totalorder %v218, 0
  %v243 = vsub.s32 0, %v218
  %v244 = vsel %vm242, %v243, %v218
  %v245 = vshrl.u32 %v244, 3
  %v246 = vand.u32 %v244, 7
  %v247 = vsub.s32 0, %v246
  %v248 = vsel %vm242, %v247, %v246
  %vm249 = vcmp.lt.s32.totalorder %v219, 0
  %v250 = vsub.s32 0, %v219
  %v251 = vsel %vm249, %v250, %v219
  %v252 = vshrl.u32 %v251, 3
  %v253 = vand.u32 %v251, 7
  %v254 = vsub.s32 0, %v253
  %v255 = vsel %vm249, %v254, %v253
  %vm256 = vcmp.lt.s32.totalorder %v220, 0
  %v257 = vsub.s32 0, %v220
  %v258 = vsel %vm256, %v257, %v220
  %v259 = vshrl.u32 %v258, 3
  %v260 = vand.u32 %v258, 7
  %v261 = vsub.s32 0, %v260
  %v262 = vsel %vm256, %v261, %v260
  %vm263 = vcmp.lt.s32.totalorder %v221, 0
  %v264 = vsub.s32 0, %v221
  %v265 = vsel %vm263, %v264, %v221
  %v266 = vshrl.u32 %v265, 3
  %v267 = vand.u32 %v265, 7
  %v268 = vsub.s32 0, %v267
  %v269 = vsel %vm263, %v268, %v267
  %vm270 = vcmp.lt.s32.totalorder %v222, 0
  %v271 = vsub.s32 0, %v222
  %v272 = vsel %vm270, %v271, %v222
  %v273 = vshrl.u32 %v272, 3
  %v274 = vand.u32 %v272, 7
  %v275 = vsub.s32 0, %v274
  %v276 = vsel %vm270, %v275, %v274
  %vm277 = vcmp.lt.s32.totalorder %v223, 0
  %v278 = vsub.s32 0, %v223
  %v279 = vsel %vm277, %v278, %v223
  %v280 = vshrl.u32 %v279, 3
  %v281 = vand.u32 %v279, 7
  %v282 = vsub.s32 0, %v281
  %v283 = vsel %vm277, %v282, %v281
  %vm284 = vcmp.lt.s32.totalorder %v224, 0
  %v285 = vsub.s32 0, %v224
  %v286 = vsel %vm284, %v285, %v224
  %v287 = vshrl.u32 %v286, 3
  %v288 = vand.u32 %v286, 7
  %v289 = vsub.s32 0, %v288
  %v290 = vsel %vm284, %v289, %v288
  %vm291 = vcmp.lt.s32.totalorder %v225, 0
  %v292 = vsub.s32 0, %v225
  %v293 = vsel %vm291, %v292, %v225
  %v294 = vshrl.u32 %v293, 3
  %v295 = vand.u32 %v293, 7
  %v296 = vsub.s32 0, %v295
  %v297 = vsel %vm291, %v296, %v295
  %vm298 = vcmp.lt.s32.totalorder %v226, 0
  %v299 = vsub.s32 0, %v226
  %v300 = vsel %vm298, %v299, %v226
  %v301 = vshrl.u32 %v300, 3
  %v302 = vand.u32 %v300, 7
  %v303 = vsub.s32 0, %v302
  %v304 = vsel %vm298, %v303, %v302
  %vm305 = vcmp.lt.s32.totalorder %v227, 0
  %v306 = vsub.s32 0, %v227
  %v307 = vsel %vm305, %v306, %v227
  %v308 = vshrl.u32 %v307, 3
  %v309 = vand.u32 %v307, 7
  %v310 = vsub.s32 0, %v309
  %v311 = vsel %vm305, %v310, %v309
  %vm312 = vcmp.lt.s32.totalorder %v228, 0
  %v313 = vsub.s32 0, %v228
  %v314 = vsel %vm312, %v313, %v228
  %v315 = vshrl.u32 %v314, 3
  %v316 = vand.u32 %v314, 7
  %v317 = vsub.s32 0, %v316
  %v318 = vsel %vm312, %v317, %v316
  %vm319 = vcmp.lt.s32.totalorder %v229, 0
  %v320 = vsub.s32 0, %v229
  %v321 = vsel %vm319, %v320, %v229
  %v322 = vshrl.u32 %v321, 3
  %v323 = vand.u32 %v321, 7
  %v324 = vsub.s32 0, %v323
  %v325 = vsel %vm319, %v324, %v323
  %vm326 = vcmp.lt.s32.totalorder %v230, 0
  %v327 = vsub.s32 0, %v230
  %v328 = vsel %vm326, %v327, %v230
  %v329 = vshrl.u32 %v328, 3
  %v330 = vand.u32 %v328, 7
  %v331 = vsub.s32 0, %v330
  %v332 = vsel %vm326, %v331, %v330
  %vm333 = vcmp.lt.s32.totalorder %v231, 0
  %v334 = vsub.s32 0, %v231
  %v335 = vsel %vm333, %v334, %v231
  %v336 = vshrl.u32 %v335, 3
  %v337 = vand.u32 %v335, 7
  %v338 = vsub.s32 0, %v337
  %v339 = vsel %vm333, %v338, %v337
  %vm340 = vcmp.lt.s32.totalorder %v232, 0
  %v341 = vsub.s32 0, %v232
  %v342 = vsel %vm340, %v341, %v232
  %v343 = vshrl.u32 %v342, 3
  %v344 = vand.u32 %v342, 7
  %v345 = vsub.s32 0, %v344
  %v346 = vsel %vm340, %v345, %v344
  %vm347 = vcmp.ne.s32.totalorder %v241, 0
  %vm348 = vcmp.ne.s32.totalorder %v248, 0
  %vm349 = vcmp.ne.s32.totalorder %v255, 0
  %vm350 = vcmp.ne.s32.totalorder %v262, 0
  %vm351 = vcmp.ne.s32.totalorder %v269, 0
  %vm352 = vcmp.ne.s32.totalorder %v276, 0
  %vm353 = vcmp.ne.s32.totalorder %v283, 0
  %vm354 = vcmp.ne.s32.totalorder %v290, 0
  %vm355 = vcmp.ne.s32.totalorder %v297, 0
  %vm356 = vcmp.ne.s32.totalorder %v304, 0
  %vm357 = vcmp.ne.s32.totalorder %v311, 0
  %vm358 = vcmp.ne.s32.totalorder %v318, 0
  %vm359 = vcmp.ne.s32.totalorder %v325, 0
  %vm360 = vcmp.ne.s32.totalorder %v332, 0
  %vm361 = vcmp.ne.s32.totalorder %v339, 0
  %vm362 = vcmp.ne.s32.totalorder %v346, 0
  %vm363 = vcmp.lt.s32.totalorder %v241, 0
  %vm364 = vcmp.lt.s32.totalorder %v248, 0
  %vm365 = vcmp.lt.s32.totalorder %v255, 0
  %vm366 = vcmp.lt.s32.totalorder %v262, 0
  %vm367 = vcmp.lt.s32.totalorder %v269, 0
  %vm368 = vcmp.lt.s32.totalorder %v276, 0
  %vm369 = vcmp.lt.s32.totalorder %v283, 0
  %vm370 = vcmp.lt.s32.totalorder %v290, 0
  %vm371 = vcmp.lt.s32.totalorder %v297, 0
  %vm372 = vcmp.lt.s32.totalorder %v304, 0
  %vm373 = vcmp.lt.s32.totalorder %v311, 0
  %vm374 = vcmp.lt.s32.totalorder %v318, 0
  %vm375 = vcmp.lt.s32.totalorder %v325, 0
  %vm376 = vcmp.lt.s32.totalorder %v332, 0
  %vm377 = vcmp.lt.s32.totalorder %v339, 0
  %vm378 = vcmp.lt.s32.totalorder %v346, 0
  %vm379 = vmand %vm363, %vm347
  %vm380 = vmand %vm364, %vm348
  %vm381 = vmand %vm365, %vm349
  %vm382 = vmand %vm366, %vm350
  %vm383 = vmand %vm367, %vm351
  %vm384 = vmand %vm368, %vm352
  %vm385 = vmand %vm369, %vm353
  %vm386 = vmand %vm370, %vm354
  %vm387 = vmand %vm371, %vm355
  %vm388 = vmand %vm372, %vm356
  %vm389 = vmand %vm373, %vm357
  %vm390 = vmand %vm374, %vm358
  %vm391 = vmand %vm375, %vm359
  %vm392 = vmand %vm376, %vm360
  %vm393 = vmand %vm377, %vm361
  %vm394 = vmand %vm378, %vm362
  %v395 = vadd.s32 %v241, 8
  %v396 = vadd.s32 %v248, 8
  %v397 = vadd.s32 %v255, 8
  %v398 = vadd.s32 %v262, 8
  %v399 = vadd.s32 %v269, 8
  %v400 = vadd.s32 %v276, 8
  %v401 = vadd.s32 %v283, 8
  %v402 = vadd.s32 %v290, 8
  %v403 = vadd.s32 %v297, 8
  %v404 = vadd.s32 %v304, 8
  %v405 = vadd.s32 %v311, 8
  %v406 = vadd.s32 %v318, 8
  %v407 = vadd.s32 %v325, 8
  %v408 = vadd.s32 %v332, 8
  %v409 = vadd.s32 %v339, 8
  %v410 = vadd.s32 %v346, 8
  %v411 = vsel %vm379, %v395, %v241
  %v412 = vsel %vm380, %v396, %v248
  %v413 = vsel %vm381, %v397, %v255
  %v414 = vsel %vm382, %v398, %v262
  %v415 = vsel %vm383, %v399, %v269
  %v416 = vsel %vm384, %v400, %v276
  %v417 = vsel %vm385, %v401, %v283
  %v418 = vsel %vm386, %v402, %v290
  %v419 = vsel %vm387, %v403, %v297
  %v420 = vsel %vm388, %v404, %v304
  %v421 = vsel %vm389, %v405, %v311
  %v422 = vsel %vm390, %v406, %v318
  %v423 = vsel %vm391, %v407, %v325
  %v424 = vsel %vm392, %v408, %v332
  %v425 = vsel %vm393, %v409, %v339
  %v426 = vsel %vm394, %v410, %v346
  %vm427 = vcmp.lt.s32.totalorder %v234, 0
  %v428 = vsub.s32 0, %v234
  %v429 = vsel %vm427, %v428, %v234
  %v430 = vshrl.u32 %v429, 3
  %v431 = vand.u32 %v429, 7
  %v432 = vsub.s32 0, %v431
  %v433 = vsel %vm427, %v432, %v431
  %vm434 = vcmp.ne.s32.totalorder %v433, 0
  %vm435 = vcmp.lt.s32.totalorder %v433, 0
  %vm436 = vmand %vm435, %vm434
  %v437 = vadd.s32 %v433, 8
  %v438 = vsel %vm436, %v437, %v433
  %vm439 = vcmp.eq.s32.totalorder %v411, %v438
  %vm440 = vcmp.eq.s32.totalorder %v412, %v438
  %vm441 = vcmp.eq.s32.totalorder %v413, %v438
  %vm442 = vcmp.eq.s32.totalorder %v414, %v438
  %vm443 = vcmp.eq.s32.totalorder %v415, %v438
  %vm444 = vcmp.eq.s32.totalorder %v416, %v438
  %vm445 = vcmp.eq.s32.totalorder %v417, %v438
  %vm446 = vcmp.eq.s32.totalorder %v418, %v438
  %vm447 = vcmp.eq.s32.totalorder %v419, %v438
  %vm448 = vcmp.eq.s32.totalorder %v420, %v438
  %vm449 = vcmp.eq.s32.totalorder %v421, %v438
  %vm450 = vcmp.eq.s32.totalorder %v422, %v438
  %vm451 = vcmp.eq.s32.totalorder %v423, %v438
  %vm452 = vcmp.eq.s32.totalorder %v424, %v438
  %vm453 = vcmp.eq.s32.totalorder %v425, %v438
  %vm454 = vcmp.eq.s32.totalorder %v426, %v438
  %v455 = vsel %vm439, %v200, -1e+09
  %v456 = vsel %vm440, %v201, -1e+09
  %v457 = vsel %vm441, %v202, -1e+09
  %v458 = vsel %vm442, %v203, -1e+09
  %v459 = vsel %vm443, %v204, -1e+09
  %v460 = vsel %vm444, %v205, -1e+09
  %v461 = vsel %vm445, %v206, -1e+09
  %v462 = vsel %vm446, %v207, -1e+09
  %v463 = vsel %vm447, %v208, -1e+09
  %v464 = vsel %vm448, %v209, -1e+09
  %v465 = vsel %vm449, %v210, -1e+09
  %v466 = vsel %vm450, %v211, -1e+09
  %v467 = vsel %vm451, %v212, -1e+09
  %v468 = vsel %vm452, %v213, -1e+09
  %v469 = vsel %vm453, %v214, -1e+09
  %v470 = vsel %vm454, %v215, -1e+09
  %471 = vmax.xlane.f32.xlu0 %v455
  %v472 = vpop.xlane.xlu0 %471
  %473 = vmax.xlane.f32.xlu0 %v456
  %v474 = vpop.xlane.xlu0 %473
  %475 = vmax.xlane.f32.xlu0 %v457
  %v476 = vpop.xlane.xlu0 %475
  %477 = vmax.xlane.f32.xlu0 %v458
  %v478 = vpop.xlane.xlu0 %477
  %479 = vmax.xlane.f32.xlu0 %v459
  %v480 = vpop.xlane.xlu0 %479
  %481 = vmax.xlane.f32.xlu0 %v460
  %v482 = vpop.xlane.xlu0 %481
  %483 = vmax.xlane.f32.xlu0 %v461
  %v484 = vpop.xlane.xlu0 %483
  %485 = vmax.xlane.f32.xlu0 %v462
  %v486 = vpop.xlane.xlu0 %485
  %487 = vmax.xlane.f32.xlu0 %v463
  %v488 = vpop.xlane.xlu0 %487
  %489 = vmax.xlane.f32.xlu0 %v464
  %v490 = vpop.xlane.xlu0 %489
  %491 = vmax.xlane.f32.xlu0 %v465
  %v492 = vpop.xlane.xlu0 %491
  %493 = vmax.xlane.f32.xlu0 %v466
  %v494 = vpop.xlane.xlu0 %493
  %495 = vmax.xlane.f32.xlu0 %v467
  %v496 = vpop.xlane.xlu0 %495
  %497 = vmax.xlane.f32.xlu0 %v468
  %v498 = vpop.xlane.xlu0 %497
  %499 = vmax.xlane.f32.xlu0 %v469
  %v500 = vpop.xlane.xlu0 %499
  %501 = vmax.xlane.f32.xlu0 %v470
  %v502 = vpop.xlane.xlu0 %501
  %v503 = vsub.f32 %v455, %v472
  %v504 = vsub.f32 %v456, %v474
  %v505 = vsub.f32 %v457, %v476
  %v506 = vsub.f32 %v458, %v478
  %v507 = vsub.f32 %v459, %v480
  %v508 = vsub.f32 %v460, %v482
  %v509 = vsub.f32 %v461, %v484
  %v510 = vsub.f32 %v462, %v486
  %v511 = vsub.f32 %v463, %v488
  %v512 = vsub.f32 %v464, %v490
  %v513 = vsub.f32 %v465, %v492
  %v514 = vsub.f32 %v466, %v494
  %v515 = vsub.f32 %v467, %v496
  %v516 = vsub.f32 %v468, %v498
  %v517 = vsub.f32 %v469, %v500
  %v518 = vsub.f32 %v470, %v502
  %v519 = vmul.f32 %v503, 1.442695
  %v520 = vpow.pop %v519
  %v521 = vmul.f32 %v504, 1.442695
  %v522 = vpow.pop %v521
  %v523 = vmul.f32 %v505, 1.442695
  %v524 = vpow.pop %v523
  %v525 = vmul.f32 %v506, 1.442695
  %v526 = vpow.pop %v525
  %v527 = vmul.f32 %v507, 1.442695
  %v528 = vpow.pop %v527
  %v529 = vmul.f32 %v508, 1.442695
  %v530 = vpow.pop %v529
  %v531 = vmul.f32 %v509, 1.442695
  %v532 = vpow.pop %v531
  %v533 = vmul.f32 %v510, 1.442695
  %v534 = vpow.pop %v533
  %v535 = vmul.f32 %v511, 1.442695
  %v536 = vpow.pop %v535
  %v537 = vmul.f32 %v512, 1.442695
  %v538 = vpow.pop %v537
  %v539 = vmul.f32 %v513, 1.442695
  %v540 = vpow.pop %v539
  %v541 = vmul.f32 %v514, 1.442695
  %v542 = vpow.pop %v541
  %v543 = vmul.f32 %v515, 1.442695
  %v544 = vpow.pop %v543
  %v545 = vmul.f32 %v516, 1.442695
  %v546 = vpow.pop %v545
  %v547 = vmul.f32 %v517, 1.442695
  %v548 = vpow.pop %v547
  %v549 = vmul.f32 %v518, 1.442695
  %v550 = vpow.pop %v549
  %551 = vadd.xlane.f32.xlu0 %v520
  %v552 = vpop.xlane.xlu0 %551
  %553 = vadd.xlane.f32.xlu0 %v522
  %v554 = vpop.xlane.xlu0 %553
  %555 = vadd.xlane.f32.xlu0 %v524
  %v556 = vpop.xlane.xlu0 %555
  %557 = vadd.xlane.f32.xlu0 %v526
  %v558 = vpop.xlane.xlu0 %557
  %559 = vadd.xlane.f32.xlu0 %v528
  %v560 = vpop.xlane.xlu0 %559
  %561 = vadd.xlane.f32.xlu0 %v530
  %v562 = vpop.xlane.xlu0 %561
  %563 = vadd.xlane.f32.xlu0 %v532
  %v564 = vpop.xlane.xlu0 %563
  %565 = vadd.xlane.f32.xlu0 %v534
  %v566 = vpop.xlane.xlu0 %565
  %567 = vadd.xlane.f32.xlu0 %v536
  %v568 = vpop.xlane.xlu0 %567
  %569 = vadd.xlane.f32.xlu0 %v538
  %v570 = vpop.xlane.xlu0 %569
  %571 = vadd.xlane.f32.xlu0 %v540
  %v572 = vpop.xlane.xlu0 %571
  %573 = vadd.xlane.f32.xlu0 %v542
  %v574 = vpop.xlane.xlu0 %573
  %575 = vadd.xlane.f32.xlu0 %v544
  %v576 = vpop.xlane.xlu0 %575
  %577 = vadd.xlane.f32.xlu0 %v546
  %v578 = vpop.xlane.xlu0 %577
  %579 = vadd.xlane.f32.xlu0 %v548
  %v580 = vpop.xlane.xlu0 %579
  %581 = vadd.xlane.f32.xlu0 %v550
  %v582 = vpop.xlane.xlu0 %581
  %v583 = vrcp.pop %v552
  %v584 = vrcp.pop %v554
  %v585 = vrcp.pop %v556
  %v586 = vrcp.pop %v558
  %v587 = vrcp.pop %v560
  %v588 = vrcp.pop %v562
  %v589 = vrcp.pop %v564
  %v590 = vrcp.pop %v566
  %v591 = vrcp.pop %v568
  %v592 = vrcp.pop %v570
  %v593 = vrcp.pop %v572
  %v594 = vrcp.pop %v574
  %v595 = vrcp.pop %v576
  %v596 = vrcp.pop %v578
  %v597 = vrcp.pop %v580
  %v598 = vrcp.pop %v582
  %v599 = vmul.f32 %v520, %v583
  %v600 = vmul.f32 %v522, %v584
  %v601 = vmul.f32 %v524, %v585
  %v602 = vmul.f32 %v526, %v586
  %v603 = vmul.f32 %v528, %v587
  %v604 = vmul.f32 %v530, %v588
  %v605 = vmul.f32 %v532, %v589
  %v606 = vmul.f32 %v534, %v590
  %v607 = vmul.f32 %v536, %v591
  %v608 = vmul.f32 %v538, %v592
  %v609 = vmul.f32 %v540, %v593
  %v610 = vmul.f32 %v542, %v594
  %v611 = vmul.f32 %v544, %v595
  %v612 = vmul.f32 %v546, %v596
  %v613 = vmul.f32 %v548, %v597
  %v614 = vmul.f32 %v550, %v598
  %615 = vmatpush.msra.mxu0 %v85
  %616 = vmatpush.msra.mxu0 %v84
  %617 = vmatpush.msra.mxu0 %v83
  %618 = vmatpush.msra.mxu0 %v82
  %619 = vmatpush.msra.mxu0 %v81
  %620 = vmatpush.msra.mxu0 %v80
  %621 = vmatpush.msra.mxu0 %v79
  %622 = vmatpush.msra.mxu0 %v78
  %623 = vmatpush.msra.mxu0 %v77
  %624 = vmatpush.msra.mxu0 %v76
  %625 = vmatpush.msra.mxu0 %v75
  %626 = vmatpush.msra.mxu0 %v74
  %627 = vmatpush.msra.mxu0 %v73
  %628 = vmatpush.msra.mxu0 %v72
  %629 = vmatpush.msra.mxu0 %v71
  %630 = vmatpush.msra.mxu0 %v70
  %631 = vmatmul.f32.gmra.mxu0 %v599
  %v632 = vpop.f32.mrf.mxu0
  %v633 = vadd.f32 0.0, %v632
  %634 = vmatmul.f32.gmra.mxu0 %v600
  %v635 = vpop.f32.mrf.mxu0
  %v636 = vadd.f32 0.0, %v635
  %637 = vmatmul.f32.gmra.mxu0 %v601
  %v638 = vpop.f32.mrf.mxu0
  %v639 = vadd.f32 0.0, %v638
  %640 = vmatmul.f32.gmra.mxu0 %v602
  %v641 = vpop.f32.mrf.mxu0
  %v642 = vadd.f32 0.0, %v641
  %643 = vmatmul.f32.gmra.mxu0 %v603
  %v644 = vpop.f32.mrf.mxu0
  %v645 = vadd.f32 0.0, %v644
  %646 = vmatmul.f32.gmra.mxu0 %v604
  %v647 = vpop.f32.mrf.mxu0
  %v648 = vadd.f32 0.0, %v647
  %649 = vmatmul.f32.gmra.mxu0 %v605
  %v650 = vpop.f32.mrf.mxu0
  %v651 = vadd.f32 0.0, %v650
  %652 = vmatmul.f32.gmra.mxu0 %v606
  %v653 = vpop.f32.mrf.mxu0
  %v654 = vadd.f32 0.0, %v653
  %655 = vmatmul.f32.gmra.mxu0 %v607
  %v656 = vpop.f32.mrf.mxu0
  %v657 = vadd.f32 0.0, %v656
  %658 = vmatmul.f32.gmra.mxu0 %v608
  %v659 = vpop.f32.mrf.mxu0
  %v660 = vadd.f32 0.0, %v659
  %661 = vmatmul.f32.gmra.mxu0 %v609
  %v662 = vpop.f32.mrf.mxu0
  %v663 = vadd.f32 0.0, %v662
  %664 = vmatmul.f32.gmra.mxu0 %v610
  %v665 = vpop.f32.mrf.mxu0
  %v666 = vadd.f32 0.0, %v665
  %667 = vmatmul.f32.gmra.mxu0 %v611
  %v668 = vpop.f32.mrf.mxu0
  %v669 = vadd.f32 0.0, %v668
  %670 = vmatmul.f32.gmra.mxu0 %v612
  %v671 = vpop.f32.mrf.mxu0
  %v672 = vadd.f32 0.0, %v671
  %673 = vmatmul.f32.gmra.mxu0 %v613
  %v674 = vpop.f32.mrf.mxu0
  %v675 = vadd.f32 0.0, %v674
  %676 = vmatmul.f32.gmra.mxu0 %v614
  %v677 = vpop.f32.mrf.mxu0
  %v678 = vadd.f32 0.0, %v677
  %679 = vdwg.mxu0
  %v680 = vpack.c.bf16 %v633, %v633
  %v681 = vpack.c.bf16 %v636, %v636
  %v682 = vpack.c.bf16 %v639, %v639
  %v683 = vpack.c.bf16 %v642, %v642
  %v684 = vpack.c.bf16 %v645, %v645
  %v685 = vpack.c.bf16 %v648, %v648
  %v686 = vpack.c.bf16 %v651, %v651
  %v687 = vpack.c.bf16 %v654, %v654
  %v688 = vpack.c.bf16 %v657, %v657
  %v689 = vpack.c.bf16 %v660, %v660
  %v690 = vpack.c.bf16 %v663, %v663
  %v691 = vpack.c.bf16 %v666, %v666
  %v692 = vpack.c.bf16 %v669, %v669
  %v693 = vpack.c.bf16 %v672, %v672
  %v694 = vpack.c.bf16 %v675, %v675
  %v695 = vpack.c.bf16 %v678, %v678
  %s696 = smul.u32 4, 32
  %s697 = smul.u32 %s696, 16
  %s698 = sshll.u32 %s697, 4
  %699 = dma.done [#allocation4], %s698
  %v700 = vld [vmem:[#allocation2] sm:$0xff]
  %v701 = vld [vmem:[#allocation2 + $0x8] sm:$0xff]
  %v702 = vld [vmem:[#allocation2 + $0x10] sm:$0xff]
  %v703 = vld [vmem:[#allocation2 + $0x18] sm:$0xff]
  %v704 = vld [vmem:[#allocation2 + $0x20] sm:$0xff]
  %v705 = vld [vmem:[#allocation2 + $0x28] sm:$0xff]
  %v706 = vld [vmem:[#allocation2 + $0x30] sm:$0xff]
  %v707 = vld [vmem:[#allocation2 + $0x38] sm:$0xff]
  %v708 = vld [vmem:[#allocation2 + $0x40] sm:$0xff]
  %v709 = vld [vmem:[#allocation2 + $0x48] sm:$0xff]
  %v710 = vld [vmem:[#allocation2 + $0x50] sm:$0xff]
  %v711 = vld [vmem:[#allocation2 + $0x58] sm:$0xff]
  %v712 = vld [vmem:[#allocation2 + $0x60] sm:$0xff]
  %v713 = vld [vmem:[#allocation2 + $0x68] sm:$0xff]
  %v714 = vld [vmem:[#allocation2 + $0x70] sm:$0xff]
  %v715 = vld [vmem:[#allocation2 + $0x78] sm:$0xff]
  %v716 = vld [vmem:[#allocation2 + $0x80] sm:$0xff]
  %v717 = vld [vmem:[#allocation2 + $0x88] sm:$0xff]
  %v718 = vld [vmem:[#allocation2 + $0x90] sm:$0xff]
  %v719 = vld [vmem:[#allocation2 + $0x98] sm:$0xff]
  %v720 = vld [vmem:[#allocation2 + $0xa0] sm:$0xff]
  %v721 = vld [vmem:[#allocation2 + $0xa8] sm:$0xff]
  %v722 = vld [vmem:[#allocation2 + $0xb0] sm:$0xff]
  %v723 = vld [vmem:[#allocation2 + $0xb8] sm:$0xff]
  %v724 = vld [vmem:[#allocation2 + $0xc0] sm:$0xff]
  %v725 = vld [vmem:[#allocation2 + $0xc8] sm:$0xff]
  %v726 = vld [vmem:[#allocation2 + $0xd0] sm:$0xff]
  %v727 = vld [vmem:[#allocation2 + $0xd8] sm:$0xff]
  %v728 = vld [vmem:[#allocation2 + $0xe0] sm:$0xff]
  %v729 = vld [vmem:[#allocation2 + $0xe8] sm:$0xff]
  %v730 = vld [vmem:[#allocation2 + $0xf0] sm:$0xff]
  %v731 = vld [vmem:[#allocation2 + $0xf8] sm:$0xff]
  %v748 = vunpack.c.l.b16 %v716
  %v749 = vunpack.c.h.b16 %v716
  %v750 = vunpack.c.l.b16 %v717
  %v751 = vunpack.c.h.b16 %v717
  %v752 = vunpack.c.l.b16 %v718
  %v753 = vunpack.c.h.b16 %v718
  %v754 = vunpack.c.l.b16 %v719
  %v755 = vunpack.c.h.b16 %v719
  %v756 = vunpack.c.l.b16 %v720
  %v757 = vunpack.c.h.b16 %v720
  %v758 = vunpack.c.l.b16 %v721
  %v759 = vunpack.c.h.b16 %v721
  %v760 = vunpack.c.l.b16 %v722
  %v761 = vunpack.c.h.b16 %v722
  %v762 = vunpack.c.l.b16 %v723
  %v763 = vunpack.c.h.b16 %v723
  %v764 = vunpack.c.l.b16 %v724
  %v765 = vunpack.c.h.b16 %v724
  %v766 = vunpack.c.l.b16 %v725
  %v767 = vunpack.c.h.b16 %v725
  %v768 = vunpack.c.l.b16 %v726
  %v769 = vunpack.c.h.b16 %v726
  %v770 = vunpack.c.l.b16 %v727
  %v771 = vunpack.c.h.b16 %v727
  %v772 = vunpack.c.l.b16 %v728
  %v773 = vunpack.c.h.b16 %v728
  %v774 = vunpack.c.l.b16 %v729
  %v775 = vunpack.c.h.b16 %v729
  %v776 = vunpack.c.l.b16 %v730
  %v777 = vunpack.c.h.b16 %v730
  %v778 = vunpack.c.l.b16 %v731
  %v779 = vunpack.c.h.b16 %v731
  %v780 = vpack.c.b16 %v764, %v748
  %v781 = vpack.c.b16 %v765, %v749
  %v782 = vpack.c.b16 %v766, %v750
  %v783 = vpack.c.b16 %v767, %v751
  %v784 = vpack.c.b16 %v768, %v752
  %v785 = vpack.c.b16 %v769, %v753
  %v786 = vpack.c.b16 %v770, %v754
  %v787 = vpack.c.b16 %v771, %v755
  %v788 = vpack.c.b16 %v772, %v756
  %v789 = vpack.c.b16 %v773, %v757
  %v790 = vpack.c.b16 %v774, %v758
  %v791 = vpack.c.b16 %v775, %v759
  %v792 = vpack.c.b16 %v776, %v760
  %v793 = vpack.c.b16 %v777, %v761
  %v794 = vpack.c.b16 %v778, %v762
  %v795 = vpack.c.b16 %v779, %v763
  %v813 = vsel %vm86, %v681, 0
  %815 = vmatpush.bf16.msra.mxu0 0
  %816 = vmatpush.bf16.msra.mxu0 0
  %817 = vmatpush.bf16.msra.mxu0 0
  %818 = vmatpush.bf16.msra.mxu0 0
  %819 = vmatpush.bf16.msra.mxu0 0
  %820 = vmatpush.bf16.msra.mxu0 0
  %821 = vmatpush.bf16.msra.mxu0 0
  %822 = vmatpush.bf16.msra.mxu0 %v780
  %823 = vmatmul.bf16.gmra.mxu0 %v813
  %v824 = vpop.f32.mrf.mxu0
  %v825 = vadd.f32 0.0, %v824
  %v826 = vpop.f32.mrf.mxu0
  %827 = vdwg.mxu0
  %828 = vmatpush.bf16.msra.mxu0 0
  %829 = vmatpush.bf16.msra.mxu0 0
  %830 = vmatpush.bf16.msra.mxu0 0
  %831 = vmatpush.bf16.msra.mxu0 0
  %832 = vmatpush.bf16.msra.mxu0 0
  %833 = vmatpush.bf16.msra.mxu0 0
  %834 = vmatpush.bf16.msra.mxu0 0
  %835 = vmatpush.bf16.msra.mxu0 %v781
  %836 = vmatmul.bf16.gmra.mxu0 %v813
  %v837 = vpop.f32.mrf.mxu0
  %v838 = vadd.f32 0.0, %v837
  %v839 = vpop.f32.mrf.mxu0
  %840 = vdwg.mxu0
  %841 = vmatpush.bf16.msra.mxu0 0
  %842 = vmatpush.bf16.msra.mxu0 0
  %843 = vmatpush.bf16.msra.mxu0 0
  %844 = vmatpush.bf16.msra.mxu0 0
  %845 = vmatpush.bf16.msra.mxu0 0
  %846 = vmatpush.bf16.msra.mxu0 0
  %847 = vmatpush.bf16.msra.mxu0 0
  %848 = vmatpush.bf16.msra.mxu0 %v782
  %849 = vmatmul.bf16.gmra.mxu0 %v813
  %v850 = vpop.f32.mrf.mxu0
  %v851 = vadd.f32 0.0, %v850
  %v852 = vpop.f32.mrf.mxu0
  %853 = vdwg.mxu0
  %854 = vmatpush.bf16.msra.mxu0 0
  %855 = vmatpush.bf16.msra.mxu0 0
  %856 = vmatpush.bf16.msra.mxu0 0
  %857 = vmatpush.bf16.msra.mxu0 0
  %858 = vmatpush.bf16.msra.mxu0 0
  %859 = vmatpush.bf16.msra.mxu0 0
  %860 = vmatpush.bf16.msra.mxu0 0
  %861 = vmatpush.bf16.msra.mxu0 %v783
  %862 = vmatmul.bf16.gmra.mxu0 %v813
  %v863 = vpop.f32.mrf.mxu0
  %v864 = vadd.f32 0.0, %v863
  %v865 = vpop.f32.mrf.mxu0
  %866 = vdwg.mxu0
  %867 = vmatpush.bf16.msra.mxu0 0
  %868 = vmatpush.bf16.msra.mxu0 0
  %869 = vmatpush.bf16.msra.mxu0 0
  %870 = vmatpush.bf16.msra.mxu0 0
  %871 = vmatpush.bf16.msra.mxu0 0
  %872 = vmatpush.bf16.msra.mxu0 0
  %873 = vmatpush.bf16.msra.mxu0 0
  %874 = vmatpush.bf16.msra.mxu0 %v784
  %875 = vmatmul.bf16.gmra.mxu0 %v813
  %v876 = vpop.f32.mrf.mxu0
  %v877 = vadd.f32 0.0, %v876
  %v878 = vpop.f32.mrf.mxu0
  %879 = vdwg.mxu0
  %880 = vmatpush.bf16.msra.mxu0 0
  %881 = vmatpush.bf16.msra.mxu0 0
  %882 = vmatpush.bf16.msra.mxu0 0
  %883 = vmatpush.bf16.msra.mxu0 0
  %884 = vmatpush.bf16.msra.mxu0 0
  %885 = vmatpush.bf16.msra.mxu0 0
  %886 = vmatpush.bf16.msra.mxu0 0
  %887 = vmatpush.bf16.msra.mxu0 %v785
  %888 = vmatmul.bf16.gmra.mxu0 %v813
  %v889 = vpop.f32.mrf.mxu0
  %v890 = vadd.f32 0.0, %v889
  %v891 = vpop.f32.mrf.mxu0
  %892 = vdwg.mxu0
  %893 = vmatpush.bf16.msra.mxu0 0
  %894 = vmatpush.bf16.msra.mxu0 0
  %895 = vmatpush.bf16.msra.mxu0 0
  %896 = vmatpush.bf16.msra.mxu0 0
  %897 = vmatpush.bf16.msra.mxu0 0
  %898 = vmatpush.bf16.msra.mxu0 0
  %899 = vmatpush.bf16.msra.mxu0 0
  %900 = vmatpush.bf16.msra.mxu0 %v786
  %901 = vmatmul.bf16.gmra.mxu0 %v813
  %v902 = vpop.f32.mrf.mxu0
  %v903 = vadd.f32 0.0, %v902
  %v904 = vpop.f32.mrf.mxu0
  %905 = vdwg.mxu0
  %906 = vmatpush.bf16.msra.mxu0 0
  %907 = vmatpush.bf16.msra.mxu0 0
  %908 = vmatpush.bf16.msra.mxu0 0
  %909 = vmatpush.bf16.msra.mxu0 0
  %910 = vmatpush.bf16.msra.mxu0 0
  %911 = vmatpush.bf16.msra.mxu0 0
  %912 = vmatpush.bf16.msra.mxu0 0
  %913 = vmatpush.bf16.msra.mxu0 %v787
  %914 = vmatmul.bf16.gmra.mxu0 %v813
  %v915 = vpop.f32.mrf.mxu0
  %v916 = vadd.f32 0.0, %v915
  %v917 = vpop.f32.mrf.mxu0
  %918 = vdwg.mxu0
  %919 = vmatpush.bf16.msra.mxu0 0
  %920 = vmatpush.bf16.msra.mxu0 0
  %921 = vmatpush.bf16.msra.mxu0 0
  %922 = vmatpush.bf16.msra.mxu0 0
  %923 = vmatpush.bf16.msra.mxu0 0
  %924 = vmatpush.bf16.msra.mxu0 0
  %925 = vmatpush.bf16.msra.mxu0 0
  %926 = vmatpush.bf16.msra.mxu0 %v788
  %927 = vmatmul.bf16.gmra.mxu0 %v813
  %v928 = vpop.f32.mrf.mxu0
  %v929 = vadd.f32 0.0, %v928
  %v930 = vpop.f32.mrf.mxu0
  %931 = vdwg.mxu0
  %932 = vmatpush.bf16.msra.mxu0 0
  %933 = vmatpush.bf16.msra.mxu0 0
  %934 = vmatpush.bf16.msra.mxu0 0
  %935 = vmatpush.bf16.msra.mxu0 0
  %936 = vmatpush.bf16.msra.mxu0 0
  %937 = vmatpush.bf16.msra.mxu0 0
  %938 = vmatpush.bf16.msra.mxu0 0
  %939 = vmatpush.bf16.msra.mxu0 %v789
  %940 = vmatmul.bf16.gmra.mxu0 %v813
  %v941 = vpop.f32.mrf.mxu0
  %v942 = vadd.f32 0.0, %v941
  %v943 = vpop.f32.mrf.mxu0
  %944 = vdwg.mxu0
  %945 = vmatpush.bf16.msra.mxu0 0
  %946 = vmatpush.bf16.msra.mxu0 0
  %947 = vmatpush.bf16.msra.mxu0 0
  %948 = vmatpush.bf16.msra.mxu0 0
  %949 = vmatpush.bf16.msra.mxu0 0
  %950 = vmatpush.bf16.msra.mxu0 0
  %951 = vmatpush.bf16.msra.mxu0 0
  %952 = vmatpush.bf16.msra.mxu0 %v790
  %953 = vmatmul.bf16.gmra.mxu0 %v813
  %v954 = vpop.f32.mrf.mxu0
  %v955 = vadd.f32 0.0, %v954
  %v956 = vpop.f32.mrf.mxu0
  %957 = vdwg.mxu0
  %958 = vmatpush.bf16.msra.mxu0 0
  %959 = vmatpush.bf16.msra.mxu0 0
  %960 = vmatpush.bf16.msra.mxu0 0
  %961 = vmatpush.bf16.msra.mxu0 0
  %962 = vmatpush.bf16.msra.mxu0 0
  %963 = vmatpush.bf16.msra.mxu0 0
  %964 = vmatpush.bf16.msra.mxu0 0
  %965 = vmatpush.bf16.msra.mxu0 %v791
  %966 = vmatmul.bf16.gmra.mxu0 %v813
  %v967 = vpop.f32.mrf.mxu0
  %v968 = vadd.f32 0.0, %v967
  %v969 = vpop.f32.mrf.mxu0
  %970 = vdwg.mxu0
  %971 = vmatpush.bf16.msra.mxu0 0
  %972 = vmatpush.bf16.msra.mxu0 0
  %973 = vmatpush.bf16.msra.mxu0 0
  %974 = vmatpush.bf16.msra.mxu0 0
  %975 = vmatpush.bf16.msra.mxu0 0
  %976 = vmatpush.bf16.msra.mxu0 0
  %977 = vmatpush.bf16.msra.mxu0 0
  %978 = vmatpush.bf16.msra.mxu0 %v792
  %979 = vmatmul.bf16.gmra.mxu0 %v813
  %v980 = vpop.f32.mrf.mxu0
  %v981 = vadd.f32 0.0, %v980
  %v982 = vpop.f32.mrf.mxu0
  %983 = vdwg.mxu0
  %984 = vmatpush.bf16.msra.mxu0 0
  %985 = vmatpush.bf16.msra.mxu0 0
  %986 = vmatpush.bf16.msra.mxu0 0
  %987 = vmatpush.bf16.msra.mxu0 0
  %988 = vmatpush.bf16.msra.mxu0 0
  %989 = vmatpush.bf16.msra.mxu0 0
  %990 = vmatpush.bf16.msra.mxu0 0
  %991 = vmatpush.bf16.msra.mxu0 %v793
  %992 = vmatmul.bf16.gmra.mxu0 %v813
  %v993 = vpop.f32.mrf.mxu0
  %v994 = vadd.f32 0.0, %v993
  %v995 = vpop.f32.mrf.mxu0
  %996 = vdwg.mxu0
  %997 = vmatpush.bf16.msra.mxu0 0
  %998 = vmatpush.bf16.msra.mxu0 0
  %999 = vmatpush.bf16.msra.mxu0 0
  %1000 = vmatpush.bf16.msra.mxu0 0
  %1001 = vmatpush.bf16.msra.mxu0 0
  %1002 = vmatpush.bf16.msra.mxu0 0
  %1003 = vmatpush.bf16.msra.mxu0 0
  %1004 = vmatpush.bf16.msra.mxu0 %v794
  %1005 = vmatmul.bf16.gmra.mxu0 %v813
  %v1006 = vpop.f32.mrf.mxu0
  %v1007 = vadd.f32 0.0, %v1006
  %v1008 = vpop.f32.mrf.mxu0
  %1009 = vdwg.mxu0
  %1010 = vmatpush.bf16.msra.mxu0 0
  %1011 = vmatpush.bf16.msra.mxu0 0
  %1012 = vmatpush.bf16.msra.mxu0 0
  %1013 = vmatpush.bf16.msra.mxu0 0
  %1014 = vmatpush.bf16.msra.mxu0 0
  %1015 = vmatpush.bf16.msra.mxu0 0
  %1016 = vmatpush.bf16.msra.mxu0 0
  %1017 = vmatpush.bf16.msra.mxu0 %v795
  %1018 = vmatmul.bf16.gmra.mxu0 %v813
  %v1019 = vpop.f32.mrf.mxu0
  %v1020 = vadd.f32 0.0, %v1019
  %v1021 = vpop.f32.mrf.mxu0
  %1022 = vdwg.mxu0
  %v1039 = vunpack.c.l.b16 %v700
  %v1040 = vunpack.c.h.b16 %v700
  %v1041 = vunpack.c.l.b16 %v701
  %v1042 = vunpack.c.h.b16 %v701
  %v1043 = vunpack.c.l.b16 %v702
  %v1044 = vunpack.c.h.b16 %v702
  %v1045 = vunpack.c.l.b16 %v703
  %v1046 = vunpack.c.h.b16 %v703
  %v1047 = vunpack.c.l.b16 %v704
  %v1048 = vunpack.c.h.b16 %v704
  %v1049 = vunpack.c.l.b16 %v705
  %v1050 = vunpack.c.h.b16 %v705
  %v1051 = vunpack.c.l.b16 %v706
  %v1052 = vunpack.c.h.b16 %v706
  %v1053 = vunpack.c.l.b16 %v707
  %v1054 = vunpack.c.h.b16 %v707
  %v1055 = vunpack.c.l.b16 %v708
  %v1056 = vunpack.c.h.b16 %v708
  %v1057 = vunpack.c.l.b16 %v709
  %v1058 = vunpack.c.h.b16 %v709
  %v1059 = vunpack.c.l.b16 %v710
  %v1060 = vunpack.c.h.b16 %v710
  %v1061 = vunpack.c.l.b16 %v711
  %v1062 = vunpack.c.h.b16 %v711
  %v1063 = vunpack.c.l.b16 %v712
  %v1064 = vunpack.c.h.b16 %v712
  %v1065 = vunpack.c.l.b16 %v713
  %v1066 = vunpack.c.h.b16 %v713
  %v1067 = vunpack.c.l.b16 %v714
  %v1068 = vunpack.c.h.b16 %v714
  %v1069 = vunpack.c.l.b16 %v715
  %v1070 = vunpack.c.h.b16 %v715
  %v1071 = vpack.c.b16 %v1055, %v1039
  %v1072 = vpack.c.b16 %v1056, %v1040
  %v1073 = vpack.c.b16 %v1057, %v1041
  %v1074 = vpack.c.b16 %v1058, %v1042
  %v1075 = vpack.c.b16 %v1059, %v1043
  %v1076 = vpack.c.b16 %v1060, %v1044
  %v1077 = vpack.c.b16 %v1061, %v1045
  %v1078 = vpack.c.b16 %v1062, %v1046
  %v1079 = vpack.c.b16 %v1063, %v1047
  %v1080 = vpack.c.b16 %v1064, %v1048
  %v1081 = vpack.c.b16 %v1065, %v1049
  %v1082 = vpack.c.b16 %v1066, %v1050
  %v1083 = vpack.c.b16 %v1067, %v1051
  %v1084 = vpack.c.b16 %v1068, %v1052
  %v1085 = vpack.c.b16 %v1069, %v1053
  %v1086 = vpack.c.b16 %v1070, %v1054
  %v1104 = vsel %vm86, %v680, 0
  %1106 = vmatpush.bf16.msra.mxu0 0
  %1107 = vmatpush.bf16.msra.mxu0 0
  %1108 = vmatpush.bf16.msra.mxu0 0
  %1109 = vmatpush.bf16.msra.mxu0 0
  %1110 = vmatpush.bf16.msra.mxu0 0
  %1111 = vmatpush.bf16.msra.mxu0 0
  %1112 = vmatpush.bf16.msra.mxu0 0
  %1113 = vmatpush.bf16.msra.mxu0 %v1071
  %1114 = vmatmul.bf16.gmra.mxu0 %v1104
  %v1115 = vpop.f32.mrf.mxu0
  %v1116 = vadd.f32 %v825, %v1115
  %v1117 = vpop.f32.mrf.mxu0
  %1118 = vdwg.mxu0
  %1119 = vmatpush.bf16.msra.mxu0 0
  %1120 = vmatpush.bf16.msra.mxu0 0
  %1121 = vmatpush.bf16.msra.mxu0 0
  %1122 = vmatpush.bf16.msra.mxu0 0
  %1123 = vmatpush.bf16.msra.mxu0 0
  %1124 = vmatpush.bf16.msra.mxu0 0
  %1125 = vmatpush.bf16.msra.mxu0 0
  %1126 = vmatpush.bf16.msra.mxu0 %v1072
  %1127 = vmatmul.bf16.gmra.mxu0 %v1104
  %v1128 = vpop.f32.mrf.mxu0
  %v1129 = vadd.f32 %v838, %v1128
  %v1130 = vpop.f32.mrf.mxu0
  %1131 = vdwg.mxu0
  %1132 = vmatpush.bf16.msra.mxu0 0
  %1133 = vmatpush.bf16.msra.mxu0 0
  %1134 = vmatpush.bf16.msra.mxu0 0
  %1135 = vmatpush.bf16.msra.mxu0 0
  %1136 = vmatpush.bf16.msra.mxu0 0
  %1137 = vmatpush.bf16.msra.mxu0 0
  %1138 = vmatpush.bf16.msra.mxu0 0
  %1139 = vmatpush.bf16.msra.mxu0 %v1073
  %1140 = vmatmul.bf16.gmra.mxu0 %v1104
  %v1141 = vpop.f32.mrf.mxu0
  %v1142 = vadd.f32 %v851, %v1141
  %v1143 = vpop.f32.mrf.mxu0
  %1144 = vdwg.mxu0
  %1145 = vmatpush.bf16.msra.mxu0 0
  %1146 = vmatpush.bf16.msra.mxu0 0
  %1147 = vmatpush.bf16.msra.mxu0 0
  %1148 = vmatpush.bf16.msra.mxu0 0
  %1149 = vmatpush.bf16.msra.mxu0 0
  %1150 = vmatpush.bf16.msra.mxu0 0
  %1151 = vmatpush.bf16.msra.mxu0 0
  %1152 = vmatpush.bf16.msra.mxu0 %v1074
  %1153 = vmatmul.bf16.gmra.mxu0 %v1104
  %v1154 = vpop.f32.mrf.mxu0
  %v1155 = vadd.f32 %v864, %v1154
  %v1156 = vpop.f32.mrf.mxu0
  %1157 = vdwg.mxu0
  %1158 = vmatpush.bf16.msra.mxu0 0
  %1159 = vmatpush.bf16.msra.mxu0 0
  %1160 = vmatpush.bf16.msra.mxu0 0
  %1161 = vmatpush.bf16.msra.mxu0 0
  %1162 = vmatpush.bf16.msra.mxu0 0
  %1163 = vmatpush.bf16.msra.mxu0 0
  %1164 = vmatpush.bf16.msra.mxu0 0
  %1165 = vmatpush.bf16.msra.mxu0 %v1075
  %1166 = vmatmul.bf16.gmra.mxu0 %v1104
  %v1167 = vpop.f32.mrf.mxu0
  %v1168 = vadd.f32 %v877, %v1167
  %v1169 = vpop.f32.mrf.mxu0
  %1170 = vdwg.mxu0
  %1171 = vmatpush.bf16.msra.mxu0 0
  %1172 = vmatpush.bf16.msra.mxu0 0
  %1173 = vmatpush.bf16.msra.mxu0 0
  %1174 = vmatpush.bf16.msra.mxu0 0
  %1175 = vmatpush.bf16.msra.mxu0 0
  %1176 = vmatpush.bf16.msra.mxu0 0
  %1177 = vmatpush.bf16.msra.mxu0 0
  %1178 = vmatpush.bf16.msra.mxu0 %v1076
  %1179 = vmatmul.bf16.gmra.mxu0 %v1104
  %v1180 = vpop.f32.mrf.mxu0
  %v1181 = vadd.f32 %v890, %v1180
  %v1182 = vpop.f32.mrf.mxu0
  %1183 = vdwg.mxu0
  %1184 = vmatpush.bf16.msra.mxu0 0
  %1185 = vmatpush.bf16.msra.mxu0 0
  %1186 = vmatpush.bf16.msra.mxu0 0
  %1187 = vmatpush.bf16.msra.mxu0 0
  %1188 = vmatpush.bf16.msra.mxu0 0
  %1189 = vmatpush.bf16.msra.mxu0 0
  %1190 = vmatpush.bf16.msra.mxu0 0
  %1191 = vmatpush.bf16.msra.mxu0 %v1077
  %1192 = vmatmul.bf16.gmra.mxu0 %v1104
  %v1193 = vpop.f32.mrf.mxu0
  %v1194 = vadd.f32 %v903, %v1193
  %v1195 = vpop.f32.mrf.mxu0
  %1196 = vdwg.mxu0
  %1197 = vmatpush.bf16.msra.mxu0 0
  %1198 = vmatpush.bf16.msra.mxu0 0
  %1199 = vmatpush.bf16.msra.mxu0 0
  %1200 = vmatpush.bf16.msra.mxu0 0
  %1201 = vmatpush.bf16.msra.mxu0 0
  %1202 = vmatpush.bf16.msra.mxu0 0
  %1203 = vmatpush.bf16.msra.mxu0 0
  %1204 = vmatpush.bf16.msra.mxu0 %v1078
  %1205 = vmatmul.bf16.gmra.mxu0 %v1104
  %v1206 = vpop.f32.mrf.mxu0
  %v1207 = vadd.f32 %v916, %v1206
  %v1208 = vpop.f32.mrf.mxu0
  %1209 = vdwg.mxu0
  %1210 = vmatpush.bf16.msra.mxu0 0
  %1211 = vmatpush.bf16.msra.mxu0 0
  %1212 = vmatpush.bf16.msra.mxu0 0
  %1213 = vmatpush.bf16.msra.mxu0 0
  %1214 = vmatpush.bf16.msra.mxu0 0
  %1215 = vmatpush.bf16.msra.mxu0 0
  %1216 = vmatpush.bf16.msra.mxu0 0
  %1217 = vmatpush.bf16.msra.mxu0 %v1079
  %1218 = vmatmul.bf16.gmra.mxu0 %v1104
  %v1219 = vpop.f32.mrf.mxu0
  %v1220 = vadd.f32 %v929, %v1219
  %v1221 = vpop.f32.mrf.mxu0
  %1222 = vdwg.mxu0
  %1223 = vmatpush.bf16.msra.mxu0 0
  %1224 = vmatpush.bf16.msra.mxu0 0
  %1225 = vmatpush.bf16.msra.mxu0 0
  %1226 = vmatpush.bf16.msra.mxu0 0
  %1227 = vmatpush.bf16.msra.mxu0 0
  %1228 = vmatpush.bf16.msra.mxu0 0
  %1229 = vmatpush.bf16.msra.mxu0 0
  %1230 = vmatpush.bf16.msra.mxu0 %v1080
  %1231 = vmatmul.bf16.gmra.mxu0 %v1104
  %v1232 = vpop.f32.mrf.mxu0
  %v1233 = vadd.f32 %v942, %v1232
  %v1234 = vpop.f32.mrf.mxu0
  %1235 = vdwg.mxu0
  %1236 = vmatpush.bf16.msra.mxu0 0
  %1237 = vmatpush.bf16.msra.mxu0 0
  %1238 = vmatpush.bf16.msra.mxu0 0
  %1239 = vmatpush.bf16.msra.mxu0 0
  %1240 = vmatpush.bf16.msra.mxu0 0
  %1241 = vmatpush.bf16.msra.mxu0 0
  %1242 = vmatpush.bf16.msra.mxu0 0
  %1243 = vmatpush.bf16.msra.mxu0 %v1081
  %1244 = vmatmul.bf16.gmra.mxu0 %v1104
  %v1245 = vpop.f32.mrf.mxu0
  %v1246 = vadd.f32 %v955, %v1245
  %v1247 = vpop.f32.mrf.mxu0
  %1248 = vdwg.mxu0
  %1249 = vmatpush.bf16.msra.mxu0 0
  %1250 = vmatpush.bf16.msra.mxu0 0
  %1251 = vmatpush.bf16.msra.mxu0 0
  %1252 = vmatpush.bf16.msra.mxu0 0
  %1253 = vmatpush.bf16.msra.mxu0 0
  %1254 = vmatpush.bf16.msra.mxu0 0
  %1255 = vmatpush.bf16.msra.mxu0 0
  %1256 = vmatpush.bf16.msra.mxu0 %v1082
  %1257 = vmatmul.bf16.gmra.mxu0 %v1104
  %v1258 = vpop.f32.mrf.mxu0
  %v1259 = vadd.f32 %v968, %v1258
  %v1260 = vpop.f32.mrf.mxu0
  %1261 = vdwg.mxu0
  %1262 = vmatpush.bf16.msra.mxu0 0
  %1263 = vmatpush.bf16.msra.mxu0 0
  %1264 = vmatpush.bf16.msra.mxu0 0
  %1265 = vmatpush.bf16.msra.mxu0 0
  %1266 = vmatpush.bf16.msra.mxu0 0
  %1267 = vmatpush.bf16.msra.mxu0 0
  %1268 = vmatpush.bf16.msra.mxu0 0
  %1269 = vmatpush.bf16.msra.mxu0 %v1083
  %1270 = vmatmul.bf16.gmra.mxu0 %v1104
  %v1271 = vpop.f32.mrf.mxu0
  %v1272 = vadd.f32 %v981, %v1271
  %v1273 = vpop.f32.mrf.mxu0
  %1274 = vdwg.mxu0
  %1275 = vmatpush.bf16.msra.mxu0 0
  %1276 = vmatpush.bf16.msra.mxu0 0
  %1277 = vmatpush.bf16.msra.mxu0 0
  %1278 = vmatpush.bf16.msra.mxu0 0
  %1279 = vmatpush.bf16.msra.mxu0 0
  %1280 = vmatpush.bf16.msra.mxu0 0
  %1281 = vmatpush.bf16.msra.mxu0 0
  %1282 = vmatpush.bf16.msra.mxu0 %v1084
  %1283 = vmatmul.bf16.gmra.mxu0 %v1104
  %v1284 = vpop.f32.mrf.mxu0
  %v1285 = vadd.f32 %v994, %v1284
  %v1286 = vpop.f32.mrf.mxu0
  %1287 = vdwg.mxu0
  %1288 = vmatpush.bf16.msra.mxu0 0
  %1289 = vmatpush.bf16.msra.mxu0 0
  %1290 = vmatpush.bf16.msra.mxu0 0
  %1291 = vmatpush.bf16.msra.mxu0 0
  %1292 = vmatpush.bf16.msra.mxu0 0
  %1293 = vmatpush.bf16.msra.mxu0 0
  %1294 = vmatpush.bf16.msra.mxu0 0
  %1295 = vmatpush.bf16.msra.mxu0 %v1085
  %1296 = vmatmul.bf16.gmra.mxu0 %v1104
  %v1297 = vpop.f32.mrf.mxu0
  %v1298 = vadd.f32 %v1007, %v1297
  %v1299 = vpop.f32.mrf.mxu0
  %1300 = vdwg.mxu0
  %1301 = vmatpush.bf16.msra.mxu0 0
  %1302 = vmatpush.bf16.msra.mxu0 0
  %1303 = vmatpush.bf16.msra.mxu0 0
  %1304 = vmatpush.bf16.msra.mxu0 0
  %1305 = vmatpush.bf16.msra.mxu0 0
  %1306 = vmatpush.bf16.msra.mxu0 0
  %1307 = vmatpush.bf16.msra.mxu0 0
  %1308 = vmatpush.bf16.msra.mxu0 %v1086
  %1309 = vmatmul.bf16.gmra.mxu0 %v1104
  %v1310 = vpop.f32.mrf.mxu0
  %v1311 = vadd.f32 %v1020, %v1310
  %v1312 = vpop.f32.mrf.mxu0
  %1313 = vdwg.mxu0
  %v1314 = vld [vmem:[#allocation2 + $0x100] sm:$0xff]
  %v1315 = vld [vmem:[#allocation2 + $0x108] sm:$0xff]
  %v1316 = vld [vmem:[#allocation2 + $0x110] sm:$0xff]
  %v1317 = vld [vmem:[#allocation2 + $0x118] sm:$0xff]
  %v1318 = vld [vmem:[#allocation2 + $0x120] sm:$0xff]
  %v1319 = vld [vmem:[#allocation2 + $0x128] sm:$0xff]
  %v1320 = vld [vmem:[#allocation2 + $0x130] sm:$0xff]
  %v1321 = vld [vmem:[#allocation2 + $0x138] sm:$0xff]
  %v1322 = vld [vmem:[#allocation2 + $0x140] sm:$0xff]
  %v1323 = vld [vmem:[#allocation2 + $0x148] sm:$0xff]
  %v1324 = vld [vmem:[#allocation2 + $0x150] sm:$0xff]
  %v1325 = vld [vmem:[#allocation2 + $0x158] sm:$0xff]
  %v1326 = vld [vmem:[#allocation2 + $0x160] sm:$0xff]
  %v1327 = vld [vmem:[#allocation2 + $0x168] sm:$0xff]
  %v1328 = vld [vmem:[#allocation2 + $0x170] sm:$0xff]
  %v1329 = vld [vmem:[#allocation2 + $0x178] sm:$0xff]
  %v1346 = vunpack.c.l.b16 %v1314
  %v1347 = vunpack.c.h.b16 %v1314
  %v1348 = vunpack.c.l.b16 %v1315
  %v1349 = vunpack.c.h.b16 %v1315
  %v1350 = vunpack.c.l.b16 %v1316
  %v1351 = vunpack.c.h.b16 %v1316
  %v1352 = vunpack.c.l.b16 %v1317
  %v1353 = vunpack.c.h.b16 %v1317
  %v1354 = vunpack.c.l.b16 %v1318
  %v1355 = vunpack.c.h.b16 %v1318
  %v1356 = vunpack.c.l.b16 %v1319
  %v1357 = vunpack.c.h.b16 %v1319
  %v1358 = vunpack.c.l.b16 %v1320
  %v1359 = vunpack.c.h.b16 %v1320
  %v1360 = vunpack.c.l.b16 %v1321
  %v1361 = vunpack.c.h.b16 %v1321
  %v1362 = vunpack.c.l.b16 %v1322
  %v1363 = vunpack.c.h.b16 %v1322
  %v1364 = vunpack.c.l.b16 %v1323
  %v1365 = vunpack.c.h.b16 %v1323
  %v1366 = vunpack.c.l.b16 %v1324
  %v1367 = vunpack.c.h.b16 %v1324
  %v1368 = vunpack.c.l.b16 %v1325
  %v1369 = vunpack.c.h.b16 %v1325
  %v1370 = vunpack.c.l.b16 %v1326
  %v1371 = vunpack.c.h.b16 %v1326
  %v1372 = vunpack.c.l.b16 %v1327
  %v1373 = vunpack.c.h.b16 %v1327
  %v1374 = vunpack.c.l.b16 %v1328
  %v1375 = vunpack.c.h.b16 %v1328
  %v1376 = vunpack.c.l.b16 %v1329
  %v1377 = vunpack.c.h.b16 %v1329
  %v1378 = vpack.c.b16 %v1362, %v1346
  %v1379 = vpack.c.b16 %v1363, %v1347
  %v1380 = vpack.c.b16 %v1364, %v1348
  %v1381 = vpack.c.b16 %v1365, %v1349
  %v1382 = vpack.c.b16 %v1366, %v1350
  %v1383 = vpack.c.b16 %v1367, %v1351
  %v1384 = vpack.c.b16 %v1368, %v1352
  %v1385 = vpack.c.b16 %v1369, %v1353
  %v1386 = vpack.c.b16 %v1370, %v1354
  %v1387 = vpack.c.b16 %v1371, %v1355
  %v1388 = vpack.c.b16 %v1372, %v1356
  %v1389 = vpack.c.b16 %v1373, %v1357
  %v1390 = vpack.c.b16 %v1374, %v1358
  %v1391 = vpack.c.b16 %v1375, %v1359
  %v1392 = vpack.c.b16 %v1376, %v1360
  %v1393 = vpack.c.b16 %v1377, %v1361
  %v1411 = vsel %vm86, %v682, 0
  %1413 = vmatpush.bf16.msra.mxu0 0
  %1414 = vmatpush.bf16.msra.mxu0 0
  %1415 = vmatpush.bf16.msra.mxu0 0
  %1416 = vmatpush.bf16.msra.mxu0 0
  %1417 = vmatpush.bf16.msra.mxu0 0
  %1418 = vmatpush.bf16.msra.mxu0 0
  %1419 = vmatpush.bf16.msra.mxu0 0
  %1420 = vmatpush.bf16.msra.mxu0 %v1378
  %1421 = vmatmul.bf16.gmra.mxu0 %v1411
  %v1422 = vpop.f32.mrf.mxu0
  %v1423 = vadd.f32 0.0, %v1422
  %v1424 = vpop.f32.mrf.mxu0
  %1425 = vdwg.mxu0
  %1426 = vmatpush.bf16.msra.mxu0 0
  %1427 = vmatpush.bf16.msra.mxu0 0
  %1428 = vmatpush.bf16.msra.mxu0 0
  %1429 = vmatpush.bf16.msra.mxu0 0
  %1430 = vmatpush.bf16.msra.mxu0 0
  %1431 = vmatpush.bf16.msra.mxu0 0
  %1432 = vmatpush.bf16.msra.mxu0 0
  %1433 = vmatpush.bf16.msra.mxu0 %v1379
  %1434 = vmatmul.bf16.gmra.mxu0 %v1411
  %v1435 = vpop.f32.mrf.mxu0
  %v1436 = vadd.f32 0.0, %v1435
  %v1437 = vpop.f32.mrf.mxu0
  %1438 = vdwg.mxu0
  %1439 = vmatpush.bf16.msra.mxu0 0
  %1440 = vmatpush.bf16.msra.mxu0 0
  %1441 = vmatpush.bf16.msra.mxu0 0
  %1442 = vmatpush.bf16.msra.mxu0 0
  %1443 = vmatpush.bf16.msra.mxu0 0
  %1444 = vmatpush.bf16.msra.mxu0 0
  %1445 = vmatpush.bf16.msra.mxu0 0
  %1446 = vmatpush.bf16.msra.mxu0 %v1380
  %1447 = vmatmul.bf16.gmra.mxu0 %v1411
  %v1448 = vpop.f32.mrf.mxu0
  %v1449 = vadd.f32 0.0, %v1448
  %v1450 = vpop.f32.mrf.mxu0
  %1451 = vdwg.mxu0
  %1452 = vmatpush.bf16.msra.mxu0 0
  %1453 = vmatpush.bf16.msra.mxu0 0
  %1454 = vmatpush.bf16.msra.mxu0 0
  %1455 = vmatpush.bf16.msra.mxu0 0
  %1456 = vmatpush.bf16.msra.mxu0 0
  %1457 = vmatpush.bf16.msra.mxu0 0
  %1458 = vmatpush.bf16.msra.mxu0 0
  %1459 = vmatpush.bf16.msra.mxu0 %v1381
  %1460 = vmatmul.bf16.gmra.mxu0 %v1411
  %v1461 = vpop.f32.mrf.mxu0
  %v1462 = vadd.f32 0.0, %v1461
  %v1463 = vpop.f32.mrf.mxu0
  %1464 = vdwg.mxu0
  %1465 = vmatpush.bf16.msra.mxu0 0
  %1466 = vmatpush.bf16.msra.mxu0 0
  %1467 = vmatpush.bf16.msra.mxu0 0
  %1468 = vmatpush.bf16.msra.mxu0 0
  %1469 = vmatpush.bf16.msra.mxu0 0
  %1470 = vmatpush.bf16.msra.mxu0 0
  %1471 = vmatpush.bf16.msra.mxu0 0
  %1472 = vmatpush.bf16.msra.mxu0 %v1382
  %1473 = vmatmul.bf16.gmra.mxu0 %v1411
  %v1474 = vpop.f32.mrf.mxu0
  %v1475 = vadd.f32 0.0, %v1474
  %v1476 = vpop.f32.mrf.mxu0
  %1477 = vdwg.mxu0
  %1478 = vmatpush.bf16.msra.mxu0 0
  %1479 = vmatpush.bf16.msra.mxu0 0
  %1480 = vmatpush.bf16.msra.mxu0 0
  %1481 = vmatpush.bf16.msra.mxu0 0
  %1482 = vmatpush.bf16.msra.mxu0 0
  %1483 = vmatpush.bf16.msra.mxu0 0
  %1484 = vmatpush.bf16.msra.mxu0 0
  %1485 = vmatpush.bf16.msra.mxu0 %v1383
  %1486 = vmatmul.bf16.gmra.mxu0 %v1411
  %v1487 = vpop.f32.mrf.mxu0
  %v1488 = vadd.f32 0.0, %v1487
  %v1489 = vpop.f32.mrf.mxu0
  %1490 = vdwg.mxu0
  %1491 = vmatpush.bf16.msra.mxu0 0
  %1492 = vmatpush.bf16.msra.mxu0 0
  %1493 = vmatpush.bf16.msra.mxu0 0
  %1494 = vmatpush.bf16.msra.mxu0 0
  %1495 = vmatpush.bf16.msra.mxu0 0
  %1496 = vmatpush.bf16.msra.mxu0 0
  %1497 = vmatpush.bf16.msra.mxu0 0
  %1498 = vmatpush.bf16.msra.mxu0 %v1384
  %1499 = vmatmul.bf16.gmra.mxu0 %v1411
  %v1500 = vpop.f32.mrf.mxu0
  %v1501 = vadd.f32 0.0, %v1500
  %v1502 = vpop.f32.mrf.mxu0
  %1503 = vdwg.mxu0
  %1504 = vmatpush.bf16.msra.mxu0 0
  %1505 = vmatpush.bf16.msra.mxu0 0
  %1506 = vmatpush.bf16.msra.mxu0 0
  %1507 = vmatpush.bf16.msra.mxu0 0
  %1508 = vmatpush.bf16.msra.mxu0 0
  %1509 = vmatpush.bf16.msra.mxu0 0
  %1510 = vmatpush.bf16.msra.mxu0 0
  %1511 = vmatpush.bf16.msra.mxu0 %v1385
  %1512 = vmatmul.bf16.gmra.mxu0 %v1411
  %v1513 = vpop.f32.mrf.mxu0
  %v1514 = vadd.f32 0.0, %v1513
  %v1515 = vpop.f32.mrf.mxu0
  %1516 = vdwg.mxu0
  %1517 = vmatpush.bf16.msra.mxu0 0
  %1518 = vmatpush.bf16.msra.mxu0 0
  %1519 = vmatpush.bf16.msra.mxu0 0
  %1520 = vmatpush.bf16.msra.mxu0 0
  %1521 = vmatpush.bf16.msra.mxu0 0
  %1522 = vmatpush.bf16.msra.mxu0 0
  %1523 = vmatpush.bf16.msra.mxu0 0
  %1524 = vmatpush.bf16.msra.mxu0 %v1386
  %1525 = vmatmul.bf16.gmra.mxu0 %v1411
  %v1526 = vpop.f32.mrf.mxu0
  %v1527 = vadd.f32 0.0, %v1526
  %v1528 = vpop.f32.mrf.mxu0
  %1529 = vdwg.mxu0
  %1530 = vmatpush.bf16.msra.mxu0 0
  %1531 = vmatpush.bf16.msra.mxu0 0
  %1532 = vmatpush.bf16.msra.mxu0 0
  %1533 = vmatpush.bf16.msra.mxu0 0
  %1534 = vmatpush.bf16.msra.mxu0 0
  %1535 = vmatpush.bf16.msra.mxu0 0
  %1536 = vmatpush.bf16.msra.mxu0 0
  %1537 = vmatpush.bf16.msra.mxu0 %v1387
  %1538 = vmatmul.bf16.gmra.mxu0 %v1411
  %v1539 = vpop.f32.mrf.mxu0
  %v1540 = vadd.f32 0.0, %v1539
  %v1541 = vpop.f32.mrf.mxu0
  %1542 = vdwg.mxu0
  %1543 = vmatpush.bf16.msra.mxu0 0
  %1544 = vmatpush.bf16.msra.mxu0 0
  %1545 = vmatpush.bf16.msra.mxu0 0
  %1546 = vmatpush.bf16.msra.mxu0 0
  %1547 = vmatpush.bf16.msra.mxu0 0
  %1548 = vmatpush.bf16.msra.mxu0 0
  %1549 = vmatpush.bf16.msra.mxu0 0
  %1550 = vmatpush.bf16.msra.mxu0 %v1388
  %1551 = vmatmul.bf16.gmra.mxu0 %v1411
  %v1552 = vpop.f32.mrf.mxu0
  %v1553 = vadd.f32 0.0, %v1552
  %v1554 = vpop.f32.mrf.mxu0
  %1555 = vdwg.mxu0
  %1556 = vmatpush.bf16.msra.mxu0 0
  %1557 = vmatpush.bf16.msra.mxu0 0
  %1558 = vmatpush.bf16.msra.mxu0 0
  %1559 = vmatpush.bf16.msra.mxu0 0
  %1560 = vmatpush.bf16.msra.mxu0 0
  %1561 = vmatpush.bf16.msra.mxu0 0
  %1562 = vmatpush.bf16.msra.mxu0 0
  %1563 = vmatpush.bf16.msra.mxu0 %v1389
  %1564 = vmatmul.bf16.gmra.mxu0 %v1411
  %v1565 = vpop.f32.mrf.mxu0
  %v1566 = vadd.f32 0.0, %v1565
  %v1567 = vpop.f32.mrf.mxu0
  %1568 = vdwg.mxu0
  %1569 = vmatpush.bf16.msra.mxu0 0
  %1570 = vmatpush.bf16.msra.mxu0 0
  %1571 = vmatpush.bf16.msra.mxu0 0
  %1572 = vmatpush.bf16.msra.mxu0 0
  %1573 = vmatpush.bf16.msra.mxu0 0
  %1574 = vmatpush.bf16.msra.mxu0 0
  %1575 = vmatpush.bf16.msra.mxu0 0
  %1576 = vmatpush.bf16.msra.mxu0 %v1390
  %1577 = vmatmul.bf16.gmra.mxu0 %v1411
  %v1578 = vpop.f32.mrf.mxu0
  %v1579 = vadd.f32 0.0, %v1578
  %v1580 = vpop.f32.mrf.mxu0
  %1581 = vdwg.mxu0
  %1582 = vmatpush.bf16.msra.mxu0 0
  %1583 = vmatpush.bf16.msra.mxu0 0
  %1584 = vmatpush.bf16.msra.mxu0 0
  %1585 = vmatpush.bf16.msra.mxu0 0
  %1586 = vmatpush.bf16.msra.mxu0 0
  %1587 = vmatpush.bf16.msra.mxu0 0
  %1588 = vmatpush.bf16.msra.mxu0 0
  %1589 = vmatpush.bf16.msra.mxu0 %v1391
  %1590 = vmatmul.bf16.gmra.mxu0 %v1411
  %v1591 = vpop.f32.mrf.mxu0
  %v1592 = vadd.f32 0.0, %v1591
  %v1593 = vpop.f32.mrf.mxu0
  %1594 = vdwg.mxu0
  %1595 = vmatpush.bf16.msra.mxu0 0
  %1596 = vmatpush.bf16.msra.mxu0 0
  %1597 = vmatpush.bf16.msra.mxu0 0
  %1598 = vmatpush.bf16.msra.mxu0 0
  %1599 = vmatpush.bf16.msra.mxu0 0
  %1600 = vmatpush.bf16.msra.mxu0 0
  %1601 = vmatpush.bf16.msra.mxu0 0
  %1602 = vmatpush.bf16.msra.mxu0 %v1392
  %1603 = vmatmul.bf16.gmra.mxu0 %v1411
  %v1604 = vpop.f32.mrf.mxu0
  %v1605 = vadd.f32 0.0, %v1604
  %v1606 = vpop.f32.mrf.mxu0
  %1607 = vdwg.mxu0
  %1608 = vmatpush.bf16.msra.mxu0 0
  %1609 = vmatpush.bf16.msra.mxu0 0
  %1610 = vmatpush.bf16.msra.mxu0 0
  %1611 = vmatpush.bf16.msra.mxu0 0
  %1612 = vmatpush.bf16.msra.mxu0 0
  %1613 = vmatpush.bf16.msra.mxu0 0
  %1614 = vmatpush.bf16.msra.mxu0 0
  %1615 = vmatpush.bf16.msra.mxu0 %v1393
  %1616 = vmatmul.bf16.gmra.mxu0 %v1411
  %v1617 = vpop.f32.mrf.mxu0
  %v1618 = vadd.f32 0.0, %v1617
  %v1619 = vpop.f32.mrf.mxu0
  %1620 = vdwg.mxu0
  %v1621 = vadd.f32 %v1116, %v1423
  %v1622 = vadd.f32 %v1129, %v1436
  %v1623 = vadd.f32 %v1142, %v1449
  %v1624 = vadd.f32 %v1155, %v1462
  %v1625 = vadd.f32 %v1168, %v1475
  %v1626 = vadd.f32 %v1181, %v1488
  %v1627 = vadd.f32 %v1194, %v1501
  %v1628 = vadd.f32 %v1207, %v1514
  %v1629 = vadd.f32 %v1220, %v1527
  %v1630 = vadd.f32 %v1233, %v1540
  %v1631 = vadd.f32 %v1246, %v1553
  %v1632 = vadd.f32 %v1259, %v1566
  %v1633 = vadd.f32 %v1272, %v1579
  %v1634 = vadd.f32 %v1285, %v1592
  %v1635 = vadd.f32 %v1298, %v1605
  %v1636 = vadd.f32 %v1311, %v1618
  %v1637 = vld [vmem:[#allocation2 + $0x180] sm:$0xff]
  %v1638 = vld [vmem:[#allocation2 + $0x188] sm:$0xff]
  %v1639 = vld [vmem:[#allocation2 + $0x190] sm:$0xff]
  %v1640 = vld [vmem:[#allocation2 + $0x198] sm:$0xff]
  %v1641 = vld [vmem:[#allocation2 + $0x1a0] sm:$0xff]
  %v1642 = vld [vmem:[#allocation2 + $0x1a8] sm:$0xff]
  %v1643 = vld [vmem:[#allocation2 + $0x1b0] sm:$0xff]
  %v1644 = vld [vmem:[#allocation2 + $0x1b8] sm:$0xff]
  %v1645 = vld [vmem:[#allocation2 + $0x1c0] sm:$0xff]
  %v1646 = vld [vmem:[#allocation2 + $0x1c8] sm:$0xff]
  %v1647 = vld [vmem:[#allocation2 + $0x1d0] sm:$0xff]
  %v1648 = vld [vmem:[#allocation2 + $0x1d8] sm:$0xff]
  %v1649 = vld [vmem:[#allocation2 + $0x1e0] sm:$0xff]
  %v1650 = vld [vmem:[#allocation2 + $0x1e8] sm:$0xff]
  %v1651 = vld [vmem:[#allocation2 + $0x1f0] sm:$0xff]
  %v1652 = vld [vmem:[#allocation2 + $0x1f8] sm:$0xff]
  %v1669 = vunpack.c.l.b16 %v1637
  %v1670 = vunpack.c.h.b16 %v1637
  %v1671 = vunpack.c.l.b16 %v1638
  %v1672 = vunpack.c.h.b16 %v1638
  %v1673 = vunpack.c.l.b16 %v1639
  %v1674 = vunpack.c.h.b16 %v1639
  %v1675 = vunpack.c.l.b16 %v1640
  %v1676 = vunpack.c.h.b16 %v1640
  %v1677 = vunpack.c.l.b16 %v1641
  %v1678 = vunpack.c.h.b16 %v1641
  %v1679 = vunpack.c.l.b16 %v1642
  %v1680 = vunpack.c.h.b16 %v1642
  %v1681 = vunpack.c.l.b16 %v1643
  %v1682 = vunpack.c.h.b16 %v1643
  %v1683 = vunpack.c.l.b16 %v1644
  %v1684 = vunpack.c.h.b16 %v1644
  %v1685 = vunpack.c.l.b16 %v1645
  %v1686 = vunpack.c.h.b16 %v1645
  %v1687 = vunpack.c.l.b16 %v1646
  %v1688 = vunpack.c.h.b16 %v1646
  %v1689 = vunpack.c.l.b16 %v1647
  %v1690 = vunpack.c.h.b16 %v1647
  %v1691 = vunpack.c.l.b16 %v1648
  %v1692 = vunpack.c.h.b16 %v1648
  %v1693 = vunpack.c.l.b16 %v1649
  %v1694 = vunpack.c.h.b16 %v1649
  %v1695 = vunpack.c.l.b16 %v1650
  %v1696 = vunpack.c.h.b16 %v1650
  %v1697 = vunpack.c.l.b16 %v1651
  %v1698 = vunpack.c.h.b16 %v1651
  %v1699 = vunpack.c.l.b16 %v1652
  %v1700 = vunpack.c.h.b16 %v1652
  %v1701 = vpack.c.b16 %v1685, %v1669
  %v1702 = vpack.c.b16 %v1686, %v1670
  %v1703 = vpack.c.b16 %v1687, %v1671
  %v1704 = vpack.c.b16 %v1688, %v1672
  %v1705 = vpack.c.b16 %v1689, %v1673
  %v1706 = vpack.c.b16 %v1690, %v1674
  %v1707 = vpack.c.b16 %v1691, %v1675
  %v1708 = vpack.c.b16 %v1692, %v1676
  %v1709 = vpack.c.b16 %v1693, %v1677
  %v1710 = vpack.c.b16 %v1694, %v1678
  %v1711 = vpack.c.b16 %v1695, %v1679
  %v1712 = vpack.c.b16 %v1696, %v1680
  %v1713 = vpack.c.b16 %v1697, %v1681
  %v1714 = vpack.c.b16 %v1698, %v1682
  %v1715 = vpack.c.b16 %v1699, %v1683
  %v1716 = vpack.c.b16 %v1700, %v1684
  %v1734 = vsel %vm86, %v683, 0
  %1736 = vmatpush.bf16.msra.mxu0 0
  %1737 = vmatpush.bf16.msra.mxu0 0
  %1738 = vmatpush.bf16.msra.mxu0 0
  %1739 = vmatpush.bf16.msra.mxu0 0
  %1740 = vmatpush.bf16.msra.mxu0 0
  %1741 = vmatpush.bf16.msra.mxu0 0
  %1742 = vmatpush.bf16.msra.mxu0 0
  %1743 = vmatpush.bf16.msra.mxu0 %v1701
  %1744 = vmatmul.bf16.gmra.mxu0 %v1734
  %v1745 = vpop.f32.mrf.mxu0
  %v1746 = vadd.f32 0.0, %v1745
  %v1747 = vpop.f32.mrf.mxu0
  %1748 = vdwg.mxu0
  %1749 = vmatpush.bf16.msra.mxu0 0
  %1750 = vmatpush.bf16.msra.mxu0 0
  %1751 = vmatpush.bf16.msra.mxu0 0
  %1752 = vmatpush.bf16.msra.mxu0 0
  %1753 = vmatpush.bf16.msra.mxu0 0
  %1754 = vmatpush.bf16.msra.mxu0 0
  %1755 = vmatpush.bf16.msra.mxu0 0
  %1756 = vmatpush.bf16.msra.mxu0 %v1702
  %1757 = vmatmul.bf16.gmra.mxu0 %v1734
  %v1758 = vpop.f32.mrf.mxu0
  %v1759 = vadd.f32 0.0, %v1758
  %v1760 = vpop.f32.mrf.mxu0
  %1761 = vdwg.mxu0
  %1762 = vmatpush.bf16.msra.mxu0 0
  %1763 = vmatpush.bf16.msra.mxu0 0
  %1764 = vmatpush.bf16.msra.mxu0 0
  %1765 = vmatpush.bf16.msra.mxu0 0
  %1766 = vmatpush.bf16.msra.mxu0 0
  %1767 = vmatpush.bf16.msra.mxu0 0
  %1768 = vmatpush.bf16.msra.mxu0 0
  %1769 = vmatpush.bf16.msra.mxu0 %v1703
  %1770 = vmatmul.bf16.gmra.mxu0 %v1734
  %v1771 = vpop.f32.mrf.mxu0
  %v1772 = vadd.f32 0.0, %v1771
  %v1773 = vpop.f32.mrf.mxu0
  %1774 = vdwg.mxu0
  %1775 = vmatpush.bf16.msra.mxu0 0
  %1776 = vmatpush.bf16.msra.mxu0 0
  %1777 = vmatpush.bf16.msra.mxu0 0
  %1778 = vmatpush.bf16.msra.mxu0 0
  %1779 = vmatpush.bf16.msra.mxu0 0
  %1780 = vmatpush.bf16.msra.mxu0 0
  %1781 = vmatpush.bf16.msra.mxu0 0
  %1782 = vmatpush.bf16.msra.mxu0 %v1704
  %1783 = vmatmul.bf16.gmra.mxu0 %v1734
  %v1784 = vpop.f32.mrf.mxu0
  %v1785 = vadd.f32 0.0, %v1784
  %v1786 = vpop.f32.mrf.mxu0
  %1787 = vdwg.mxu0
  %1788 = vmatpush.bf16.msra.mxu0 0
  %1789 = vmatpush.bf16.msra.mxu0 0
  %1790 = vmatpush.bf16.msra.mxu0 0
  %1791 = vmatpush.bf16.msra.mxu0 0
  %1792 = vmatpush.bf16.msra.mxu0 0
  %1793 = vmatpush.bf16.msra.mxu0 0
  %1794 = vmatpush.bf16.msra.mxu0 0
  %1795 = vmatpush.bf16.msra.mxu0 %v1705
  %1796 = vmatmul.bf16.gmra.mxu0 %v1734
  %v1797 = vpop.f32.mrf.mxu0
  %v1798 = vadd.f32 0.0, %v1797
  %v1799 = vpop.f32.mrf.mxu0
  %1800 = vdwg.mxu0
  %1801 = vmatpush.bf16.msra.mxu0 0
  %1802 = vmatpush.bf16.msra.mxu0 0
  %1803 = vmatpush.bf16.msra.mxu0 0
  %1804 = vmatpush.bf16.msra.mxu0 0
  %1805 = vmatpush.bf16.msra.mxu0 0
  %1806 = vmatpush.bf16.msra.mxu0 0
  %1807 = vmatpush.bf16.msra.mxu0 0
  %1808 = vmatpush.bf16.msra.mxu0 %v1706
  %1809 = vmatmul.bf16.gmra.mxu0 %v1734
  %v1810 = vpop.f32.mrf.mxu0
  %v1811 = vadd.f32 0.0, %v1810
  %v1812 = vpop.f32.mrf.mxu0
  %1813 = vdwg.mxu0
  %1814 = vmatpush.bf16.msra.mxu0 0
  %1815 = vmatpush.bf16.msra.mxu0 0
  %1816 = vmatpush.bf16.msra.mxu0 0
  %1817 = vmatpush.bf16.msra.mxu0 0
  %1818 = vmatpush.bf16.msra.mxu0 0
  %1819 = vmatpush.bf16.msra.mxu0 0
  %1820 = vmatpush.bf16.msra.mxu0 0
  %1821 = vmatpush.bf16.msra.mxu0 %v1707
  %1822 = vmatmul.bf16.gmra.mxu0 %v1734
  %v1823 = vpop.f32.mrf.mxu0
  %v1824 = vadd.f32 0.0, %v1823
  %v1825 = vpop.f32.mrf.mxu0
  %1826 = vdwg.mxu0
  %1827 = vmatpush.bf16.msra.mxu0 0
  %1828 = vmatpush.bf16.msra.mxu0 0
  %1829 = vmatpush.bf16.msra.mxu0 0
  %1830 = vmatpush.bf16.msra.mxu0 0
  %1831 = vmatpush.bf16.msra.mxu0 0
  %1832 = vmatpush.bf16.msra.mxu0 0
  %1833 = vmatpush.bf16.msra.mxu0 0
  %1834 = vmatpush.bf16.msra.mxu0 %v1708
  %1835 = vmatmul.bf16.gmra.mxu0 %v1734
  %v1836 = vpop.f32.mrf.mxu0
  %v1837 = vadd.f32 0.0, %v1836
  %v1838 = vpop.f32.mrf.mxu0
  %1839 = vdwg.mxu0
  %1840 = vmatpush.bf16.msra.mxu0 0
  %1841 = vmatpush.bf16.msra.mxu0 0
  %1842 = vmatpush.bf16.msra.mxu0 0
  %1843 = vmatpush.bf16.msra.mxu0 0
  %1844 = vmatpush.bf16.msra.mxu0 0
  %1845 = vmatpush.bf16.msra.mxu0 0
  %1846 = vmatpush.bf16.msra.mxu0 0
  %1847 = vmatpush.bf16.msra.mxu0 %v1709
  %1848 = vmatmul.bf16.gmra.mxu0 %v1734
  %v1849 = vpop.f32.mrf.mxu0
  %v1850 = vadd.f32 0.0, %v1849
  %v1851 = vpop.f32.mrf.mxu0
  %1852 = vdwg.mxu0
  %1853 = vmatpush.bf16.msra.mxu0 0
  %1854 = vmatpush.bf16.msra.mxu0 0
  %1855 = vmatpush.bf16.msra.mxu0 0
  %1856 = vmatpush.bf16.msra.mxu0 0
  %1857 = vmatpush.bf16.msra.mxu0 0
  %1858 = vmatpush.bf16.msra.mxu0 0
  %1859 = vmatpush.bf16.msra.mxu0 0
  %1860 = vmatpush.bf16.msra.mxu0 %v1710
  %1861 = vmatmul.bf16.gmra.mxu0 %v1734
  %v1862 = vpop.f32.mrf.mxu0
  %v1863 = vadd.f32 0.0, %v1862
  %v1864 = vpop.f32.mrf.mxu0
  %1865 = vdwg.mxu0
  %1866 = vmatpush.bf16.msra.mxu0 0
  %1867 = vmatpush.bf16.msra.mxu0 0
  %1868 = vmatpush.bf16.msra.mxu0 0
  %1869 = vmatpush.bf16.msra.mxu0 0
  %1870 = vmatpush.bf16.msra.mxu0 0
  %1871 = vmatpush.bf16.msra.mxu0 0
  %1872 = vmatpush.bf16.msra.mxu0 0
  %1873 = vmatpush.bf16.msra.mxu0 %v1711
  %1874 = vmatmul.bf16.gmra.mxu0 %v1734
  %v1875 = vpop.f32.mrf.mxu0
  %v1876 = vadd.f32 0.0, %v1875
  %v1877 = vpop.f32.mrf.mxu0
  %1878 = vdwg.mxu0
  %1879 = vmatpush.bf16.msra.mxu0 0
  %1880 = vmatpush.bf16.msra.mxu0 0
  %1881 = vmatpush.bf16.msra.mxu0 0
  %1882 = vmatpush.bf16.msra.mxu0 0
  %1883 = vmatpush.bf16.msra.mxu0 0
  %1884 = vmatpush.bf16.msra.mxu0 0
  %1885 = vmatpush.bf16.msra.mxu0 0
  %1886 = vmatpush.bf16.msra.mxu0 %v1712
  %1887 = vmatmul.bf16.gmra.mxu0 %v1734
  %v1888 = vpop.f32.mrf.mxu0
  %v1889 = vadd.f32 0.0, %v1888
  %v1890 = vpop.f32.mrf.mxu0
  %1891 = vdwg.mxu0
  %1892 = vmatpush.bf16.msra.mxu0 0
  %1893 = vmatpush.bf16.msra.mxu0 0
  %1894 = vmatpush.bf16.msra.mxu0 0
  %1895 = vmatpush.bf16.msra.mxu0 0
  %1896 = vmatpush.bf16.msra.mxu0 0
  %1897 = vmatpush.bf16.msra.mxu0 0
  %1898 = vmatpush.bf16.msra.mxu0 0
  %1899 = vmatpush.bf16.msra.mxu0 %v1713
  %1900 = vmatmul.bf16.gmra.mxu0 %v1734
  %v1901 = vpop.f32.mrf.mxu0
  %v1902 = vadd.f32 0.0, %v1901
  %v1903 = vpop.f32.mrf.mxu0
  %1904 = vdwg.mxu0
  %1905 = vmatpush.bf16.msra.mxu0 0
  %1906 = vmatpush.bf16.msra.mxu0 0
  %1907 = vmatpush.bf16.msra.mxu0 0
  %1908 = vmatpush.bf16.msra.mxu0 0
  %1909 = vmatpush.bf16.msra.mxu0 0
  %1910 = vmatpush.bf16.msra.mxu0 0
  %1911 = vmatpush.bf16.msra.mxu0 0
  %1912 = vmatpush.bf16.msra.mxu0 %v1714
  %1913 = vmatmul.bf16.gmra.mxu0 %v1734
  %v1914 = vpop.f32.mrf.mxu0
  %v1915 = vadd.f32 0.0, %v1914
  %v1916 = vpop.f32.mrf.mxu0
  %1917 = vdwg.mxu0
  %1918 = vmatpush.bf16.msra.mxu0 0
  %1919 = vmatpush.bf16.msra.mxu0 0
  %1920 = vmatpush.bf16.msra.mxu0 0
  %1921 = vmatpush.bf16.msra.mxu0 0
  %1922 = vmatpush.bf16.msra.mxu0 0
  %1923 = vmatpush.bf16.msra.mxu0 0
  %1924 = vmatpush.bf16.msra.mxu0 0
  %1925 = vmatpush.bf16.msra.mxu0 %v1715
  %1926 = vmatmul.bf16.gmra.mxu0 %v1734
  %v1927 = vpop.f32.mrf.mxu0
  %v1928 = vadd.f32 0.0, %v1927
  %v1929 = vpop.f32.mrf.mxu0
  %1930 = vdwg.mxu0
  %1931 = vmatpush.bf16.msra.mxu0 0
  %1932 = vmatpush.bf16.msra.mxu0 0
  %1933 = vmatpush.bf16.msra.mxu0 0
  %1934 = vmatpush.bf16.msra.mxu0 0
  %1935 = vmatpush.bf16.msra.mxu0 0
  %1936 = vmatpush.bf16.msra.mxu0 0
  %1937 = vmatpush.bf16.msra.mxu0 0
  %1938 = vmatpush.bf16.msra.mxu0 %v1716
  %1939 = vmatmul.bf16.gmra.mxu0 %v1734
  %v1940 = vpop.f32.mrf.mxu0
  %v1941 = vadd.f32 0.0, %v1940
  %v1942 = vpop.f32.mrf.mxu0
  %1943 = vdwg.mxu0
  %v1944 = vadd.f32 %v1621, %v1746
  %v1945 = vadd.f32 %v1622, %v1759
  %v1946 = vadd.f32 %v1623, %v1772
  %v1947 = vadd.f32 %v1624, %v1785
  %v1948 = vadd.f32 %v1625, %v1798
  %v1949 = vadd.f32 %v1626, %v1811
  %v1950 = vadd.f32 %v1627, %v1824
  %v1951 = vadd.f32 %v1628, %v1837
  %v1952 = vadd.f32 %v1629, %v1850
  %v1953 = vadd.f32 %v1630, %v1863
  %v1954 = vadd.f32 %v1631, %v1876
  %v1955 = vadd.f32 %v1632, %v1889
  %v1956 = vadd.f32 %v1633, %v1902
  %v1957 = vadd.f32 %v1634, %v1915
  %v1958 = vadd.f32 %v1635, %v1928
  %v1959 = vadd.f32 %v1636, %v1941
  %v1960 = vld [vmem:[#allocation2 + $0x200] sm:$0xff]
  %v1961 = vld [vmem:[#allocation2 + $0x208] sm:$0xff]
  %v1962 = vld [vmem:[#allocation2 + $0x210] sm:$0xff]
  %v1963 = vld [vmem:[#allocation2 + $0x218] sm:$0xff]
  %v1964 = vld [vmem:[#allocation2 + $0x220] sm:$0xff]
  %v1965 = vld [vmem:[#allocation2 + $0x228] sm:$0xff]
  %v1966 = vld [vmem:[#allocation2 + $0x230] sm:$0xff]
  %v1967 = vld [vmem:[#allocation2 + $0x238] sm:$0xff]
  %v1968 = vld [vmem:[#allocation2 + $0x240] sm:$0xff]
  %v1969 = vld [vmem:[#allocation2 + $0x248] sm:$0xff]
  %v1970 = vld [vmem:[#allocation2 + $0x250] sm:$0xff]
  %v1971 = vld [vmem:[#allocation2 + $0x258] sm:$0xff]
  %v1972 = vld [vmem:[#allocation2 + $0x260] sm:$0xff]
  %v1973 = vld [vmem:[#allocation2 + $0x268] sm:$0xff]
  %v1974 = vld [vmem:[#allocation2 + $0x270] sm:$0xff]
  %v1975 = vld [vmem:[#allocation2 + $0x278] sm:$0xff]
  %v1992 = vunpack.c.l.b16 %v1960
  %v1993 = vunpack.c.h.b16 %v1960
  %v1994 = vunpack.c.l.b16 %v1961
  %v1995 = vunpack.c.h.b16 %v1961
  %v1996 = vunpack.c.l.b16 %v1962
  %v1997 = vunpack.c.h.b16 %v1962
  %v1998 = vunpack.c.l.b16 %v1963
  %v1999 = vunpack.c.h.b16 %v1963
  %v2000 = vunpack.c.l.b16 %v1964
  %v2001 = vunpack.c.h.b16 %v1964
  %v2002 = vunpack.c.l.b16 %v1965
  %v2003 = vunpack.c.h.b16 %v1965
  %v2004 = vunpack.c.l.b16 %v1966
  %v2005 = vunpack.c.h.b16 %v1966
  %v2006 = vunpack.c.l.b16 %v1967
  %v2007 = vunpack.c.h.b16 %v1967
  %v2008 = vunpack.c.l.b16 %v1968
  %v2009 = vunpack.c.h.b16 %v1968
  %v2010 = vunpack.c.l.b16 %v1969
  %v2011 = vunpack.c.h.b16 %v1969
  %v2012 = vunpack.c.l.b16 %v1970
  %v2013 = vunpack.c.h.b16 %v1970
  %v2014 = vunpack.c.l.b16 %v1971
  %v2015 = vunpack.c.h.b16 %v1971
  %v2016 = vunpack.c.l.b16 %v1972
  %v2017 = vunpack.c.h.b16 %v1972
  %v2018 = vunpack.c.l.b16 %v1973
  %v2019 = vunpack.c.h.b16 %v1973
  %v2020 = vunpack.c.l.b16 %v1974
  %v2021 = vunpack.c.h.b16 %v1974
  %v2022 = vunpack.c.l.b16 %v1975
  %v2023 = vunpack.c.h.b16 %v1975
  %v2024 = vpack.c.b16 %v2008, %v1992
  %v2025 = vpack.c.b16 %v2009, %v1993
  %v2026 = vpack.c.b16 %v2010, %v1994
  %v2027 = vpack.c.b16 %v2011, %v1995
  %v2028 = vpack.c.b16 %v2012, %v1996
  %v2029 = vpack.c.b16 %v2013, %v1997
  %v2030 = vpack.c.b16 %v2014, %v1998
  %v2031 = vpack.c.b16 %v2015, %v1999
  %v2032 = vpack.c.b16 %v2016, %v2000
  %v2033 = vpack.c.b16 %v2017, %v2001
  %v2034 = vpack.c.b16 %v2018, %v2002
  %v2035 = vpack.c.b16 %v2019, %v2003
  %v2036 = vpack.c.b16 %v2020, %v2004
  %v2037 = vpack.c.b16 %v2021, %v2005
  %v2038 = vpack.c.b16 %v2022, %v2006
  %v2039 = vpack.c.b16 %v2023, %v2007
  %v2057 = vsel %vm86, %v684, 0
  %2059 = vmatpush.bf16.msra.mxu0 0
  %2060 = vmatpush.bf16.msra.mxu0 0
  %2061 = vmatpush.bf16.msra.mxu0 0
  %2062 = vmatpush.bf16.msra.mxu0 0
  %2063 = vmatpush.bf16.msra.mxu0 0
  %2064 = vmatpush.bf16.msra.mxu0 0
  %2065 = vmatpush.bf16.msra.mxu0 0
  %2066 = vmatpush.bf16.msra.mxu0 %v2024
  %2067 = vmatmul.bf16.gmra.mxu0 %v2057
  %v2068 = vpop.f32.mrf.mxu0
  %v2069 = vadd.f32 0.0, %v2068
  %v2070 = vpop.f32.mrf.mxu0
  %2071 = vdwg.mxu0
  %2072 = vmatpush.bf16.msra.mxu0 0
  %2073 = vmatpush.bf16.msra.mxu0 0
  %2074 = vmatpush.bf16.msra.mxu0 0
  %2075 = vmatpush.bf16.msra.mxu0 0
  %2076 = vmatpush.bf16.msra.mxu0 0
  %2077 = vmatpush.bf16.msra.mxu0 0
  %2078 = vmatpush.bf16.msra.mxu0 0
  %2079 = vmatpush.bf16.msra.mxu0 %v2025
  %2080 = vmatmul.bf16.gmra.mxu0 %v2057
  %v2081 = vpop.f32.mrf.mxu0
  %v2082 = vadd.f32 0.0, %v2081
  %v2083 = vpop.f32.mrf.mxu0
  %2084 = vdwg.mxu0
  %2085 = vmatpush.bf16.msra.mxu0 0
  %2086 = vmatpush.bf16.msra.mxu0 0
  %2087 = vmatpush.bf16.msra.mxu0 0
  %2088 = vmatpush.bf16.msra.mxu0 0
  %2089 = vmatpush.bf16.msra.mxu0 0
  %2090 = vmatpush.bf16.msra.mxu0 0
  %2091 = vmatpush.bf16.msra.mxu0 0
  %2092 = vmatpush.bf16.msra.mxu0 %v2026
  %2093 = vmatmul.bf16.gmra.mxu0 %v2057
  %v2094 = vpop.f32.mrf.mxu0
  %v2095 = vadd.f32 0.0, %v2094
  %v2096 = vpop.f32.mrf.mxu0
  %2097 = vdwg.mxu0
  %2098 = vmatpush.bf16.msra.mxu0 0
  %2099 = vmatpush.bf16.msra.mxu0 0
  %2100 = vmatpush.bf16.msra.mxu0 0
  %2101 = vmatpush.bf16.msra.mxu0 0
  %2102 = vmatpush.bf16.msra.mxu0 0
  %2103 = vmatpush.bf16.msra.mxu0 0
  %2104 = vmatpush.bf16.msra.mxu0 0
  %2105 = vmatpush.bf16.msra.mxu0 %v2027
  %2106 = vmatmul.bf16.gmra.mxu0 %v2057
  %v2107 = vpop.f32.mrf.mxu0
  %v2108 = vadd.f32 0.0, %v2107
  %v2109 = vpop.f32.mrf.mxu0
  %2110 = vdwg.mxu0
  %2111 = vmatpush.bf16.msra.mxu0 0
  %2112 = vmatpush.bf16.msra.mxu0 0
  %2113 = vmatpush.bf16.msra.mxu0 0
  %2114 = vmatpush.bf16.msra.mxu0 0
  %2115 = vmatpush.bf16.msra.mxu0 0
  %2116 = vmatpush.bf16.msra.mxu0 0
  %2117 = vmatpush.bf16.msra.mxu0 0
  %2118 = vmatpush.bf16.msra.mxu0 %v2028
  %2119 = vmatmul.bf16.gmra.mxu0 %v2057
  %v2120 = vpop.f32.mrf.mxu0
  %v2121 = vadd.f32 0.0, %v2120
  %v2122 = vpop.f32.mrf.mxu0
  %2123 = vdwg.mxu0
  %2124 = vmatpush.bf16.msra.mxu0 0
  %2125 = vmatpush.bf16.msra.mxu0 0
  %2126 = vmatpush.bf16.msra.mxu0 0
  %2127 = vmatpush.bf16.msra.mxu0 0
  %2128 = vmatpush.bf16.msra.mxu0 0
  %2129 = vmatpush.bf16.msra.mxu0 0
  %2130 = vmatpush.bf16.msra.mxu0 0
  %2131 = vmatpush.bf16.msra.mxu0 %v2029
  %2132 = vmatmul.bf16.gmra.mxu0 %v2057
  %v2133 = vpop.f32.mrf.mxu0
  %v2134 = vadd.f32 0.0, %v2133
  %v2135 = vpop.f32.mrf.mxu0
  %2136 = vdwg.mxu0
  %2137 = vmatpush.bf16.msra.mxu0 0
  %2138 = vmatpush.bf16.msra.mxu0 0
  %2139 = vmatpush.bf16.msra.mxu0 0
  %2140 = vmatpush.bf16.msra.mxu0 0
  %2141 = vmatpush.bf16.msra.mxu0 0
  %2142 = vmatpush.bf16.msra.mxu0 0
  %2143 = vmatpush.bf16.msra.mxu0 0
  %2144 = vmatpush.bf16.msra.mxu0 %v2030
  %2145 = vmatmul.bf16.gmra.mxu0 %v2057
  %v2146 = vpop.f32.mrf.mxu0
  %v2147 = vadd.f32 0.0, %v2146
  %v2148 = vpop.f32.mrf.mxu0
  %2149 = vdwg.mxu0
  %2150 = vmatpush.bf16.msra.mxu0 0
  %2151 = vmatpush.bf16.msra.mxu0 0
  %2152 = vmatpush.bf16.msra.mxu0 0
  %2153 = vmatpush.bf16.msra.mxu0 0
  %2154 = vmatpush.bf16.msra.mxu0 0
  %2155 = vmatpush.bf16.msra.mxu0 0
  %2156 = vmatpush.bf16.msra.mxu0 0
  %2157 = vmatpush.bf16.msra.mxu0 %v2031
  %2158 = vmatmul.bf16.gmra.mxu0 %v2057
  %v2159 = vpop.f32.mrf.mxu0
  %v2160 = vadd.f32 0.0, %v2159
  %v2161 = vpop.f32.mrf.mxu0
  %2162 = vdwg.mxu0
  %2163 = vmatpush.bf16.msra.mxu0 0
  %2164 = vmatpush.bf16.msra.mxu0 0
  %2165 = vmatpush.bf16.msra.mxu0 0
  %2166 = vmatpush.bf16.msra.mxu0 0
  %2167 = vmatpush.bf16.msra.mxu0 0
  %2168 = vmatpush.bf16.msra.mxu0 0
  %2169 = vmatpush.bf16.msra.mxu0 0
  %2170 = vmatpush.bf16.msra.mxu0 %v2032
  %2171 = vmatmul.bf16.gmra.mxu0 %v2057
  %v2172 = vpop.f32.mrf.mxu0
  %v2173 = vadd.f32 0.0, %v2172
  %v2174 = vpop.f32.mrf.mxu0
  %2175 = vdwg.mxu0
  %2176 = vmatpush.bf16.msra.mxu0 0
  %2177 = vmatpush.bf16.msra.mxu0 0
  %2178 = vmatpush.bf16.msra.mxu0 0
  %2179 = vmatpush.bf16.msra.mxu0 0
  %2180 = vmatpush.bf16.msra.mxu0 0
  %2181 = vmatpush.bf16.msra.mxu0 0
  %2182 = vmatpush.bf16.msra.mxu0 0
  %2183 = vmatpush.bf16.msra.mxu0 %v2033
  %2184 = vmatmul.bf16.gmra.mxu0 %v2057
  %v2185 = vpop.f32.mrf.mxu0
  %v2186 = vadd.f32 0.0, %v2185
  %v2187 = vpop.f32.mrf.mxu0
  %2188 = vdwg.mxu0
  %2189 = vmatpush.bf16.msra.mxu0 0
  %2190 = vmatpush.bf16.msra.mxu0 0
  %2191 = vmatpush.bf16.msra.mxu0 0
  %2192 = vmatpush.bf16.msra.mxu0 0
  %2193 = vmatpush.bf16.msra.mxu0 0
  %2194 = vmatpush.bf16.msra.mxu0 0
  %2195 = vmatpush.bf16.msra.mxu0 0
  %2196 = vmatpush.bf16.msra.mxu0 %v2034
  %2197 = vmatmul.bf16.gmra.mxu0 %v2057
  %v2198 = vpop.f32.mrf.mxu0
  %v2199 = vadd.f32 0.0, %v2198
  %v2200 = vpop.f32.mrf.mxu0
  %2201 = vdwg.mxu0
  %2202 = vmatpush.bf16.msra.mxu0 0
  %2203 = vmatpush.bf16.msra.mxu0 0
  %2204 = vmatpush.bf16.msra.mxu0 0
  %2205 = vmatpush.bf16.msra.mxu0 0
  %2206 = vmatpush.bf16.msra.mxu0 0
  %2207 = vmatpush.bf16.msra.mxu0 0
  %2208 = vmatpush.bf16.msra.mxu0 0
  %2209 = vmatpush.bf16.msra.mxu0 %v2035
  %2210 = vmatmul.bf16.gmra.mxu0 %v2057
  %v2211 = vpop.f32.mrf.mxu0
  %v2212 = vadd.f32 0.0, %v2211
  %v2213 = vpop.f32.mrf.mxu0
  %2214 = vdwg.mxu0
  %2215 = vmatpush.bf16.msra.mxu0 0
  %2216 = vmatpush.bf16.msra.mxu0 0
  %2217 = vmatpush.bf16.msra.mxu0 0
  %2218 = vmatpush.bf16.msra.mxu0 0
  %2219 = vmatpush.bf16.msra.mxu0 0
  %2220 = vmatpush.bf16.msra.mxu0 0
  %2221 = vmatpush.bf16.msra.mxu0 0
  %2222 = vmatpush.bf16.msra.mxu0 %v2036
  %2223 = vmatmul.bf16.gmra.mxu0 %v2057
  %v2224 = vpop.f32.mrf.mxu0
  %v2225 = vadd.f32 0.0, %v2224
  %v2226 = vpop.f32.mrf.mxu0
  %2227 = vdwg.mxu0
  %2228 = vmatpush.bf16.msra.mxu0 0
  %2229 = vmatpush.bf16.msra.mxu0 0
  %2230 = vmatpush.bf16.msra.mxu0 0
  %2231 = vmatpush.bf16.msra.mxu0 0
  %2232 = vmatpush.bf16.msra.mxu0 0
  %2233 = vmatpush.bf16.msra.mxu0 0
  %2234 = vmatpush.bf16.msra.mxu0 0
  %2235 = vmatpush.bf16.msra.mxu0 %v2037
  %2236 = vmatmul.bf16.gmra.mxu0 %v2057
  %v2237 = vpop.f32.mrf.mxu0
  %v2238 = vadd.f32 0.0, %v2237
  %v2239 = vpop.f32.mrf.mxu0
  %2240 = vdwg.mxu0
  %2241 = vmatpush.bf16.msra.mxu0 0
  %2242 = vmatpush.bf16.msra.mxu0 0
  %2243 = vmatpush.bf16.msra.mxu0 0
  %2244 = vmatpush.bf16.msra.mxu0 0
  %2245 = vmatpush.bf16.msra.mxu0 0
  %2246 = vmatpush.bf16.msra.mxu0 0
  %2247 = vmatpush.bf16.msra.mxu0 0
  %2248 = vmatpush.bf16.msra.mxu0 %v2038
  %2249 = vmatmul.bf16.gmra.mxu0 %v2057
  %v2250 = vpop.f32.mrf.mxu0
  %v2251 = vadd.f32 0.0, %v2250
  %v2252 = vpop.f32.mrf.mxu0
  %2253 = vdwg.mxu0
  %2254 = vmatpush.bf16.msra.mxu0 0
  %2255 = vmatpush.bf16.msra.mxu0 0
  %2256 = vmatpush.bf16.msra.mxu0 0
  %2257 = vmatpush.bf16.msra.mxu0 0
  %2258 = vmatpush.bf16.msra.mxu0 0
  %2259 = vmatpush.bf16.msra.mxu0 0
  %2260 = vmatpush.bf16.msra.mxu0 0
  %2261 = vmatpush.bf16.msra.mxu0 %v2039
  %2262 = vmatmul.bf16.gmra.mxu0 %v2057
  %v2263 = vpop.f32.mrf.mxu0
  %v2264 = vadd.f32 0.0, %v2263
  %v2265 = vpop.f32.mrf.mxu0
  %2266 = vdwg.mxu0
  %v2267 = vadd.f32 %v1944, %v2069
  %v2268 = vadd.f32 %v1945, %v2082
  %v2269 = vadd.f32 %v1946, %v2095
  %v2270 = vadd.f32 %v1947, %v2108
  %v2271 = vadd.f32 %v1948, %v2121
  %v2272 = vadd.f32 %v1949, %v2134
  %v2273 = vadd.f32 %v1950, %v2147
  %v2274 = vadd.f32 %v1951, %v2160
  %v2275 = vadd.f32 %v1952, %v2173
  %v2276 = vadd.f32 %v1953, %v2186
  %v2277 = vadd.f32 %v1954, %v2199
  %v2278 = vadd.f32 %v1955, %v2212
  %v2279 = vadd.f32 %v1956, %v2225
  %v2280 = vadd.f32 %v1957, %v2238
  %v2281 = vadd.f32 %v1958, %v2251
  %v2282 = vadd.f32 %v1959, %v2264
  %v2283 = vld [vmem:[#allocation2 + $0x280] sm:$0xff]
  %v2284 = vld [vmem:[#allocation2 + $0x288] sm:$0xff]
  %v2285 = vld [vmem:[#allocation2 + $0x290] sm:$0xff]
  %v2286 = vld [vmem:[#allocation2 + $0x298] sm:$0xff]
  %v2287 = vld [vmem:[#allocation2 + $0x2a0] sm:$0xff]
  %v2288 = vld [vmem:[#allocation2 + $0x2a8] sm:$0xff]
  %v2289 = vld [vmem:[#allocation2 + $0x2b0] sm:$0xff]
  %v2290 = vld [vmem:[#allocation2 + $0x2b8] sm:$0xff]
  %v2291 = vld [vmem:[#allocation2 + $0x2c0] sm:$0xff]
  %v2292 = vld [vmem:[#allocation2 + $0x2c8] sm:$0xff]
  %v2293 = vld [vmem:[#allocation2 + $0x2d0] sm:$0xff]
  %v2294 = vld [vmem:[#allocation2 + $0x2d8] sm:$0xff]
  %v2295 = vld [vmem:[#allocation2 + $0x2e0] sm:$0xff]
  %v2296 = vld [vmem:[#allocation2 + $0x2e8] sm:$0xff]
  %v2297 = vld [vmem:[#allocation2 + $0x2f0] sm:$0xff]
  %v2298 = vld [vmem:[#allocation2 + $0x2f8] sm:$0xff]
  %v2315 = vunpack.c.l.b16 %v2283
  %v2316 = vunpack.c.h.b16 %v2283
  %v2317 = vunpack.c.l.b16 %v2284
  %v2318 = vunpack.c.h.b16 %v2284
  %v2319 = vunpack.c.l.b16 %v2285
  %v2320 = vunpack.c.h.b16 %v2285
  %v2321 = vunpack.c.l.b16 %v2286
  %v2322 = vunpack.c.h.b16 %v2286
  %v2323 = vunpack.c.l.b16 %v2287
  %v2324 = vunpack.c.h.b16 %v2287
  %v2325 = vunpack.c.l.b16 %v2288
  %v2326 = vunpack.c.h.b16 %v2288
  %v2327 = vunpack.c.l.b16 %v2289
  %v2328 = vunpack.c.h.b16 %v2289
  %v2329 = vunpack.c.l.b16 %v2290
  %v2330 = vunpack.c.h.b16 %v2290
  %v2331 = vunpack.c.l.b16 %v2291
  %v2332 = vunpack.c.h.b16 %v2291
  %v2333 = vunpack.c.l.b16 %v2292
  %v2334 = vunpack.c.h.b16 %v2292
  %v2335 = vunpack.c.l.b16 %v2293
  %v2336 = vunpack.c.h.b16 %v2293
  %v2337 = vunpack.c.l.b16 %v2294
  %v2338 = vunpack.c.h.b16 %v2294
  %v2339 = vunpack.c.l.b16 %v2295
  %v2340 = vunpack.c.h.b16 %v2295
  %v2341 = vunpack.c.l.b16 %v2296
  %v2342 = vunpack.c.h.b16 %v2296
  %v2343 = vunpack.c.l.b16 %v2297
  %v2344 = vunpack.c.h.b16 %v2297
  %v2345 = vunpack.c.l.b16 %v2298
  %v2346 = vunpack.c.h.b16 %v2298
  %v2347 = vpack.c.b16 %v2331, %v2315
  %v2348 = vpack.c.b16 %v2332, %v2316
  %v2349 = vpack.c.b16 %v2333, %v2317
  %v2350 = vpack.c.b16 %v2334, %v2318
  %v2351 = vpack.c.b16 %v2335, %v2319
  %v2352 = vpack.c.b16 %v2336, %v2320
  %v2353 = vpack.c.b16 %v2337, %v2321
  %v2354 = vpack.c.b16 %v2338, %v2322
  %v2355 = vpack.c.b16 %v2339, %v2323
  %v2356 = vpack.c.b16 %v2340, %v2324
  %v2357 = vpack.c.b16 %v2341, %v2325
  %v2358 = vpack.c.b16 %v2342, %v2326
  %v2359 = vpack.c.b16 %v2343, %v2327
  %v2360 = vpack.c.b16 %v2344, %v2328
  %v2361 = vpack.c.b16 %v2345, %v2329
  %v2362 = vpack.c.b16 %v2346, %v2330
  %v2380 = vsel %vm86, %v685, 0
  %2382 = vmatpush.bf16.msra.mxu0 0
  %2383 = vmatpush.bf16.msra.mxu0 0
  %2384 = vmatpush.bf16.msra.mxu0 0
  %2385 = vmatpush.bf16.msra.mxu0 0
  %2386 = vmatpush.bf16.msra.mxu0 0
  %2387 = vmatpush.bf16.msra.mxu0 0
  %2388 = vmatpush.bf16.msra.mxu0 0
  %2389 = vmatpush.bf16.msra.mxu0 %v2347
  %2390 = vmatmul.bf16.gmra.mxu0 %v2380
  %v2391 = vpop.f32.mrf.mxu0
  %v2392 = vadd.f32 0.0, %v2391
  %v2393 = vpop.f32.mrf.mxu0
  %2394 = vdwg.mxu0
  %2395 = vmatpush.bf16.msra.mxu0 0
  %2396 = vmatpush.bf16.msra.mxu0 0
  %2397 = vmatpush.bf16.msra.mxu0 0
  %2398 = vmatpush.bf16.msra.mxu0 0
  %2399 = vmatpush.bf16.msra.mxu0 0
  %2400 = vmatpush.bf16.msra.mxu0 0
  %2401 = vmatpush.bf16.msra.mxu0 0
  %2402 = vmatpush.bf16.msra.mxu0 %v2348
  %2403 = vmatmul.bf16.gmra.mxu0 %v2380
  %v2404 = vpop.f32.mrf.mxu0
  %v2405 = vadd.f32 0.0, %v2404
  %v2406 = vpop.f32.mrf.mxu0
  %2407 = vdwg.mxu0
  %2408 = vmatpush.bf16.msra.mxu0 0
  %2409 = vmatpush.bf16.msra.mxu0 0
  %2410 = vmatpush.bf16.msra.mxu0 0
  %2411 = vmatpush.bf16.msra.mxu0 0
  %2412 = vmatpush.bf16.msra.mxu0 0
  %2413 = vmatpush.bf16.msra.mxu0 0
  %2414 = vmatpush.bf16.msra.mxu0 0
  %2415 = vmatpush.bf16.msra.mxu0 %v2349
  %2416 = vmatmul.bf16.gmra.mxu0 %v2380
  %v2417 = vpop.f32.mrf.mxu0
  %v2418 = vadd.f32 0.0, %v2417
  %v2419 = vpop.f32.mrf.mxu0
  %2420 = vdwg.mxu0
  %2421 = vmatpush.bf16.msra.mxu0 0
  %2422 = vmatpush.bf16.msra.mxu0 0
  %2423 = vmatpush.bf16.msra.mxu0 0
  %2424 = vmatpush.bf16.msra.mxu0 0
  %2425 = vmatpush.bf16.msra.mxu0 0
  %2426 = vmatpush.bf16.msra.mxu0 0
  %2427 = vmatpush.bf16.msra.mxu0 0
  %2428 = vmatpush.bf16.msra.mxu0 %v2350
  %2429 = vmatmul.bf16.gmra.mxu0 %v2380
  %v2430 = vpop.f32.mrf.mxu0
  %v2431 = vadd.f32 0.0, %v2430
  %v2432 = vpop.f32.mrf.mxu0
  %2433 = vdwg.mxu0
  %2434 = vmatpush.bf16.msra.mxu0 0
  %2435 = vmatpush.bf16.msra.mxu0 0
  %2436 = vmatpush.bf16.msra.mxu0 0
  %2437 = vmatpush.bf16.msra.mxu0 0
  %2438 = vmatpush.bf16.msra.mxu0 0
  %2439 = vmatpush.bf16.msra.mxu0 0
  %2440 = vmatpush.bf16.msra.mxu0 0
  %2441 = vmatpush.bf16.msra.mxu0 %v2351
  %2442 = vmatmul.bf16.gmra.mxu0 %v2380
  %v2443 = vpop.f32.mrf.mxu0
  %v2444 = vadd.f32 0.0, %v2443
  %v2445 = vpop.f32.mrf.mxu0
  %2446 = vdwg.mxu0
  %2447 = vmatpush.bf16.msra.mxu0 0
  %2448 = vmatpush.bf16.msra.mxu0 0
  %2449 = vmatpush.bf16.msra.mxu0 0
  %2450 = vmatpush.bf16.msra.mxu0 0
  %2451 = vmatpush.bf16.msra.mxu0 0
  %2452 = vmatpush.bf16.msra.mxu0 0
  %2453 = vmatpush.bf16.msra.mxu0 0
  %2454 = vmatpush.bf16.msra.mxu0 %v2352
  %2455 = vmatmul.bf16.gmra.mxu0 %v2380
  %v2456 = vpop.f32.mrf.mxu0
  %v2457 = vadd.f32 0.0, %v2456
  %v2458 = vpop.f32.mrf.mxu0
  %2459 = vdwg.mxu0
  %2460 = vmatpush.bf16.msra.mxu0 0
  %2461 = vmatpush.bf16.msra.mxu0 0
  %2462 = vmatpush.bf16.msra.mxu0 0
  %2463 = vmatpush.bf16.msra.mxu0 0
  %2464 = vmatpush.bf16.msra.mxu0 0
  %2465 = vmatpush.bf16.msra.mxu0 0
  %2466 = vmatpush.bf16.msra.mxu0 0
  %2467 = vmatpush.bf16.msra.mxu0 %v2353
  %2468 = vmatmul.bf16.gmra.mxu0 %v2380
  %v2469 = vpop.f32.mrf.mxu0
  %v2470 = vadd.f32 0.0, %v2469
  %v2471 = vpop.f32.mrf.mxu0
  %2472 = vdwg.mxu0
  %2473 = vmatpush.bf16.msra.mxu0 0
  %2474 = vmatpush.bf16.msra.mxu0 0
  %2475 = vmatpush.bf16.msra.mxu0 0
  %2476 = vmatpush.bf16.msra.mxu0 0
  %2477 = vmatpush.bf16.msra.mxu0 0
  %2478 = vmatpush.bf16.msra.mxu0 0
  %2479 = vmatpush.bf16.msra.mxu0 0
  %2480 = vmatpush.bf16.msra.mxu0 %v2354
  %2481 = vmatmul.bf16.gmra.mxu0 %v2380
  %v2482 = vpop.f32.mrf.mxu0
  %v2483 = vadd.f32 0.0, %v2482
  %v2484 = vpop.f32.mrf.mxu0
  %2485 = vdwg.mxu0
  %2486 = vmatpush.bf16.msra.mxu0 0
  %2487 = vmatpush.bf16.msra.mxu0 0
  %2488 = vmatpush.bf16.msra.mxu0 0
  %2489 = vmatpush.bf16.msra.mxu0 0
  %2490 = vmatpush.bf16.msra.mxu0 0
  %2491 = vmatpush.bf16.msra.mxu0 0
  %2492 = vmatpush.bf16.msra.mxu0 0
  %2493 = vmatpush.bf16.msra.mxu0 %v2355
  %2494 = vmatmul.bf16.gmra.mxu0 %v2380
  %v2495 = vpop.f32.mrf.mxu0
  %v2496 = vadd.f32 0.0, %v2495
  %v2497 = vpop.f32.mrf.mxu0
  %2498 = vdwg.mxu0
  %2499 = vmatpush.bf16.msra.mxu0 0
  %2500 = vmatpush.bf16.msra.mxu0 0
  %2501 = vmatpush.bf16.msra.mxu0 0
  %2502 = vmatpush.bf16.msra.mxu0 0
  %2503 = vmatpush.bf16.msra.mxu0 0
  %2504 = vmatpush.bf16.msra.mxu0 0
  %2505 = vmatpush.bf16.msra.mxu0 0
  %2506 = vmatpush.bf16.msra.mxu0 %v2356
  %2507 = vmatmul.bf16.gmra.mxu0 %v2380
  %v2508 = vpop.f32.mrf.mxu0
  %v2509 = vadd.f32 0.0, %v2508
  %v2510 = vpop.f32.mrf.mxu0
  %2511 = vdwg.mxu0
  %2512 = vmatpush.bf16.msra.mxu0 0
  %2513 = vmatpush.bf16.msra.mxu0 0
  %2514 = vmatpush.bf16.msra.mxu0 0
  %2515 = vmatpush.bf16.msra.mxu0 0
  %2516 = vmatpush.bf16.msra.mxu0 0
  %2517 = vmatpush.bf16.msra.mxu0 0
  %2518 = vmatpush.bf16.msra.mxu0 0
  %2519 = vmatpush.bf16.msra.mxu0 %v2357
  %2520 = vmatmul.bf16.gmra.mxu0 %v2380
  %v2521 = vpop.f32.mrf.mxu0
  %v2522 = vadd.f32 0.0, %v2521
  %v2523 = vpop.f32.mrf.mxu0
  %2524 = vdwg.mxu0
  %2525 = vmatpush.bf16.msra.mxu0 0
  %2526 = vmatpush.bf16.msra.mxu0 0
  %2527 = vmatpush.bf16.msra.mxu0 0
  %2528 = vmatpush.bf16.msra.mxu0 0
  %2529 = vmatpush.bf16.msra.mxu0 0
  %2530 = vmatpush.bf16.msra.mxu0 0
  %2531 = vmatpush.bf16.msra.mxu0 0
  %2532 = vmatpush.bf16.msra.mxu0 %v2358
  %2533 = vmatmul.bf16.gmra.mxu0 %v2380
  %v2534 = vpop.f32.mrf.mxu0
  %v2535 = vadd.f32 0.0, %v2534
  %v2536 = vpop.f32.mrf.mxu0
  %2537 = vdwg.mxu0
  %2538 = vmatpush.bf16.msra.mxu0 0
  %2539 = vmatpush.bf16.msra.mxu0 0
  %2540 = vmatpush.bf16.msra.mxu0 0
  %2541 = vmatpush.bf16.msra.mxu0 0
  %2542 = vmatpush.bf16.msra.mxu0 0
  %2543 = vmatpush.bf16.msra.mxu0 0
  %2544 = vmatpush.bf16.msra.mxu0 0
  %2545 = vmatpush.bf16.msra.mxu0 %v2359
  %2546 = vmatmul.bf16.gmra.mxu0 %v2380
  %v2547 = vpop.f32.mrf.mxu0
  %v2548 = vadd.f32 0.0, %v2547
  %v2549 = vpop.f32.mrf.mxu0
  %2550 = vdwg.mxu0
  %2551 = vmatpush.bf16.msra.mxu0 0
  %2552 = vmatpush.bf16.msra.mxu0 0
  %2553 = vmatpush.bf16.msra.mxu0 0
  %2554 = vmatpush.bf16.msra.mxu0 0
  %2555 = vmatpush.bf16.msra.mxu0 0
  %2556 = vmatpush.bf16.msra.mxu0 0
  %2557 = vmatpush.bf16.msra.mxu0 0
  %2558 = vmatpush.bf16.msra.mxu0 %v2360
  %2559 = vmatmul.bf16.gmra.mxu0 %v2380
  %v2560 = vpop.f32.mrf.mxu0
  %v2561 = vadd.f32 0.0, %v2560
  %v2562 = vpop.f32.mrf.mxu0
  %2563 = vdwg.mxu0
  %2564 = vmatpush.bf16.msra.mxu0 0
  %2565 = vmatpush.bf16.msra.mxu0 0
  %2566 = vmatpush.bf16.msra.mxu0 0
  %2567 = vmatpush.bf16.msra.mxu0 0
  %2568 = vmatpush.bf16.msra.mxu0 0
  %2569 = vmatpush.bf16.msra.mxu0 0
  %2570 = vmatpush.bf16.msra.mxu0 0
  %2571 = vmatpush.bf16.msra.mxu0 %v2361
  %2572 = vmatmul.bf16.gmra.mxu0 %v2380
  %v2573 = vpop.f32.mrf.mxu0
  %v2574 = vadd.f32 0.0, %v2573
  %v2575 = vpop.f32.mrf.mxu0
  %2576 = vdwg.mxu0
  %2577 = vmatpush.bf16.msra.mxu0 0
  %2578 = vmatpush.bf16.msra.mxu0 0
  %2579 = vmatpush.bf16.msra.mxu0 0
  %2580 = vmatpush.bf16.msra.mxu0 0
  %2581 = vmatpush.bf16.msra.mxu0 0
  %2582 = vmatpush.bf16.msra.mxu0 0
  %2583 = vmatpush.bf16.msra.mxu0 0
  %2584 = vmatpush.bf16.msra.mxu0 %v2362
  %2585 = vmatmul.bf16.gmra.mxu0 %v2380
  %v2586 = vpop.f32.mrf.mxu0
  %v2587 = vadd.f32 0.0, %v2586
  %v2588 = vpop.f32.mrf.mxu0
  %2589 = vdwg.mxu0
  %v2590 = vadd.f32 %v2267, %v2392
  %v2591 = vadd.f32 %v2268, %v2405
  %v2592 = vadd.f32 %v2269, %v2418
  %v2593 = vadd.f32 %v2270, %v2431
  %v2594 = vadd.f32 %v2271, %v2444
  %v2595 = vadd.f32 %v2272, %v2457
  %v2596 = vadd.f32 %v2273, %v2470
  %v2597 = vadd.f32 %v2274, %v2483
  %v2598 = vadd.f32 %v2275, %v2496
  %v2599 = vadd.f32 %v2276, %v2509
  %v2600 = vadd.f32 %v2277, %v2522
  %v2601 = vadd.f32 %v2278, %v2535
  %v2602 = vadd.f32 %v2279, %v2548
  %v2603 = vadd.f32 %v2280, %v2561
  %v2604 = vadd.f32 %v2281, %v2574
  %v2605 = vadd.f32 %v2282, %v2587
  %v2606 = vld [vmem:[#allocation2 + $0x300] sm:$0xff]
  %v2607 = vld [vmem:[#allocation2 + $0x308] sm:$0xff]
  %v2608 = vld [vmem:[#allocation2 + $0x310] sm:$0xff]
  %v2609 = vld [vmem:[#allocation2 + $0x318] sm:$0xff]
  %v2610 = vld [vmem:[#allocation2 + $0x320] sm:$0xff]
  %v2611 = vld [vmem:[#allocation2 + $0x328] sm:$0xff]
  %v2612 = vld [vmem:[#allocation2 + $0x330] sm:$0xff]
  %v2613 = vld [vmem:[#allocation2 + $0x338] sm:$0xff]
  %v2614 = vld [vmem:[#allocation2 + $0x340] sm:$0xff]
  %v2615 = vld [vmem:[#allocation2 + $0x348] sm:$0xff]
  %v2616 = vld [vmem:[#allocation2 + $0x350] sm:$0xff]
  %v2617 = vld [vmem:[#allocation2 + $0x358] sm:$0xff]
  %v2618 = vld [vmem:[#allocation2 + $0x360] sm:$0xff]
  %v2619 = vld [vmem:[#allocation2 + $0x368] sm:$0xff]
  %v2620 = vld [vmem:[#allocation2 + $0x370] sm:$0xff]
  %v2621 = vld [vmem:[#allocation2 + $0x378] sm:$0xff]
  %v2638 = vunpack.c.l.b16 %v2606
  %v2639 = vunpack.c.h.b16 %v2606
  %v2640 = vunpack.c.l.b16 %v2607
  %v2641 = vunpack.c.h.b16 %v2607
  %v2642 = vunpack.c.l.b16 %v2608
  %v2643 = vunpack.c.h.b16 %v2608
  %v2644 = vunpack.c.l.b16 %v2609
  %v2645 = vunpack.c.h.b16 %v2609
  %v2646 = vunpack.c.l.b16 %v2610
  %v2647 = vunpack.c.h.b16 %v2610
  %v2648 = vunpack.c.l.b16 %v2611
  %v2649 = vunpack.c.h.b16 %v2611
  %v2650 = vunpack.c.l.b16 %v2612
  %v2651 = vunpack.c.h.b16 %v2612
  %v2652 = vunpack.c.l.b16 %v2613
  %v2653 = vunpack.c.h.b16 %v2613
  %v2654 = vunpack.c.l.b16 %v2614
  %v2655 = vunpack.c.h.b16 %v2614
  %v2656 = vunpack.c.l.b16 %v2615
  %v2657 = vunpack.c.h.b16 %v2615
  %v2658 = vunpack.c.l.b16 %v2616
  %v2659 = vunpack.c.h.b16 %v2616
  %v2660 = vunpack.c.l.b16 %v2617
  %v2661 = vunpack.c.h.b16 %v2617
  %v2662 = vunpack.c.l.b16 %v2618
  %v2663 = vunpack.c.h.b16 %v2618
  %v2664 = vunpack.c.l.b16 %v2619
  %v2665 = vunpack.c.h.b16 %v2619
  %v2666 = vunpack.c.l.b16 %v2620
  %v2667 = vunpack.c.h.b16 %v2620
  %v2668 = vunpack.c.l.b16 %v2621
  %v2669 = vunpack.c.h.b16 %v2621
  %v2670 = vpack.c.b16 %v2654, %v2638
  %v2671 = vpack.c.b16 %v2655, %v2639
  %v2672 = vpack.c.b16 %v2656, %v2640
  %v2673 = vpack.c.b16 %v2657, %v2641
  %v2674 = vpack.c.b16 %v2658, %v2642
  %v2675 = vpack.c.b16 %v2659, %v2643
  %v2676 = vpack.c.b16 %v2660, %v2644
  %v2677 = vpack.c.b16 %v2661, %v2645
  %v2678 = vpack.c.b16 %v2662, %v2646
  %v2679 = vpack.c.b16 %v2663, %v2647
  %v2680 = vpack.c.b16 %v2664, %v2648
  %v2681 = vpack.c.b16 %v2665, %v2649
  %v2682 = vpack.c.b16 %v2666, %v2650
  %v2683 = vpack.c.b16 %v2667, %v2651
  %v2684 = vpack.c.b16 %v2668, %v2652
  %v2685 = vpack.c.b16 %v2669, %v2653
  %v2703 = vsel %vm86, %v686, 0
  %2705 = vmatpush.bf16.msra.mxu0 0
  %2706 = vmatpush.bf16.msra.mxu0 0
  %2707 = vmatpush.bf16.msra.mxu0 0
  %2708 = vmatpush.bf16.msra.mxu0 0
  %2709 = vmatpush.bf16.msra.mxu0 0
  %2710 = vmatpush.bf16.msra.mxu0 0
  %2711 = vmatpush.bf16.msra.mxu0 0
  %2712 = vmatpush.bf16.msra.mxu0 %v2670
  %2713 = vmatmul.bf16.gmra.mxu0 %v2703
  %v2714 = vpop.f32.mrf.mxu0
  %v2715 = vadd.f32 0.0, %v2714
  %v2716 = vpop.f32.mrf.mxu0
  %2717 = vdwg.mxu0
  %2718 = vmatpush.bf16.msra.mxu0 0
  %2719 = vmatpush.bf16.msra.mxu0 0
  %2720 = vmatpush.bf16.msra.mxu0 0
  %2721 = vmatpush.bf16.msra.mxu0 0
  %2722 = vmatpush.bf16.msra.mxu0 0
  %2723 = vmatpush.bf16.msra.mxu0 0
  %2724 = vmatpush.bf16.msra.mxu0 0
  %2725 = vmatpush.bf16.msra.mxu0 %v2671
  %2726 = vmatmul.bf16.gmra.mxu0 %v2703
  %v2727 = vpop.f32.mrf.mxu0
  %v2728 = vadd.f32 0.0, %v2727
  %v2729 = vpop.f32.mrf.mxu0
  %2730 = vdwg.mxu0
  %2731 = vmatpush.bf16.msra.mxu0 0
  %2732 = vmatpush.bf16.msra.mxu0 0
  %2733 = vmatpush.bf16.msra.mxu0 0
  %2734 = vmatpush.bf16.msra.mxu0 0
  %2735 = vmatpush.bf16.msra.mxu0 0
  %2736 = vmatpush.bf16.msra.mxu0 0
  %2737 = vmatpush.bf16.msra.mxu0 0
  %2738 = vmatpush.bf16.msra.mxu0 %v2672
  %2739 = vmatmul.bf16.gmra.mxu0 %v2703
  %v2740 = vpop.f32.mrf.mxu0
  %v2741 = vadd.f32 0.0, %v2740
  %v2742 = vpop.f32.mrf.mxu0
  %2743 = vdwg.mxu0
  %2744 = vmatpush.bf16.msra.mxu0 0
  %2745 = vmatpush.bf16.msra.mxu0 0
  %2746 = vmatpush.bf16.msra.mxu0 0
  %2747 = vmatpush.bf16.msra.mxu0 0
  %2748 = vmatpush.bf16.msra.mxu0 0
  %2749 = vmatpush.bf16.msra.mxu0 0
  %2750 = vmatpush.bf16.msra.mxu0 0
  %2751 = vmatpush.bf16.msra.mxu0 %v2673
  %2752 = vmatmul.bf16.gmra.mxu0 %v2703
  %v2753 = vpop.f32.mrf.mxu0
  %v2754 = vadd.f32 0.0, %v2753
  %v2755 = vpop.f32.mrf.mxu0
  %2756 = vdwg.mxu0
  %2757 = vmatpush.bf16.msra.mxu0 0
  %2758 = vmatpush.bf16.msra.mxu0 0
  %2759 = vmatpush.bf16.msra.mxu0 0
  %2760 = vmatpush.bf16.msra.mxu0 0
  %2761 = vmatpush.bf16.msra.mxu0 0
  %2762 = vmatpush.bf16.msra.mxu0 0
  %2763 = vmatpush.bf16.msra.mxu0 0
  %2764 = vmatpush.bf16.msra.mxu0 %v2674
  %2765 = vmatmul.bf16.gmra.mxu0 %v2703
  %v2766 = vpop.f32.mrf.mxu0
  %v2767 = vadd.f32 0.0, %v2766
  %v2768 = vpop.f32.mrf.mxu0
  %2769 = vdwg.mxu0
  %2770 = vmatpush.bf16.msra.mxu0 0
  %2771 = vmatpush.bf16.msra.mxu0 0
  %2772 = vmatpush.bf16.msra.mxu0 0
  %2773 = vmatpush.bf16.msra.mxu0 0
  %2774 = vmatpush.bf16.msra.mxu0 0
  %2775 = vmatpush.bf16.msra.mxu0 0
  %2776 = vmatpush.bf16.msra.mxu0 0
  %2777 = vmatpush.bf16.msra.mxu0 %v2675
  %2778 = vmatmul.bf16.gmra.mxu0 %v2703
  %v2779 = vpop.f32.mrf.mxu0
  %v2780 = vadd.f32 0.0, %v2779
  %v2781 = vpop.f32.mrf.mxu0
  %2782 = vdwg.mxu0
  %2783 = vmatpush.bf16.msra.mxu0 0
  %2784 = vmatpush.bf16.msra.mxu0 0
  %2785 = vmatpush.bf16.msra.mxu0 0
  %2786 = vmatpush.bf16.msra.mxu0 0
  %2787 = vmatpush.bf16.msra.mxu0 0
  %2788 = vmatpush.bf16.msra.mxu0 0
  %2789 = vmatpush.bf16.msra.mxu0 0
  %2790 = vmatpush.bf16.msra.mxu0 %v2676
  %2791 = vmatmul.bf16.gmra.mxu0 %v2703
  %v2792 = vpop.f32.mrf.mxu0
  %v2793 = vadd.f32 0.0, %v2792
  %v2794 = vpop.f32.mrf.mxu0
  %2795 = vdwg.mxu0
  %2796 = vmatpush.bf16.msra.mxu0 0
  %2797 = vmatpush.bf16.msra.mxu0 0
  %2798 = vmatpush.bf16.msra.mxu0 0
  %2799 = vmatpush.bf16.msra.mxu0 0
  %2800 = vmatpush.bf16.msra.mxu0 0
  %2801 = vmatpush.bf16.msra.mxu0 0
  %2802 = vmatpush.bf16.msra.mxu0 0
  %2803 = vmatpush.bf16.msra.mxu0 %v2677
  %2804 = vmatmul.bf16.gmra.mxu0 %v2703
  %v2805 = vpop.f32.mrf.mxu0
  %v2806 = vadd.f32 0.0, %v2805
  %v2807 = vpop.f32.mrf.mxu0
  %2808 = vdwg.mxu0
  %2809 = vmatpush.bf16.msra.mxu0 0
  %2810 = vmatpush.bf16.msra.mxu0 0
  %2811 = vmatpush.bf16.msra.mxu0 0
  %2812 = vmatpush.bf16.msra.mxu0 0
  %2813 = vmatpush.bf16.msra.mxu0 0
  %2814 = vmatpush.bf16.msra.mxu0 0
  %2815 = vmatpush.bf16.msra.mxu0 0
  %2816 = vmatpush.bf16.msra.mxu0 %v2678
  %2817 = vmatmul.bf16.gmra.mxu0 %v2703
  %v2818 = vpop.f32.mrf.mxu0
  %v2819 = vadd.f32 0.0, %v2818
  %v2820 = vpop.f32.mrf.mxu0
  %2821 = vdwg.mxu0
  %2822 = vmatpush.bf16.msra.mxu0 0
  %2823 = vmatpush.bf16.msra.mxu0 0
  %2824 = vmatpush.bf16.msra.mxu0 0
  %2825 = vmatpush.bf16.msra.mxu0 0
  %2826 = vmatpush.bf16.msra.mxu0 0
  %2827 = vmatpush.bf16.msra.mxu0 0
  %2828 = vmatpush.bf16.msra.mxu0 0
  %2829 = vmatpush.bf16.msra.mxu0 %v2679
  %2830 = vmatmul.bf16.gmra.mxu0 %v2703
  %v2831 = vpop.f32.mrf.mxu0
  %v2832 = vadd.f32 0.0, %v2831
  %v2833 = vpop.f32.mrf.mxu0
  %2834 = vdwg.mxu0
  %2835 = vmatpush.bf16.msra.mxu0 0
  %2836 = vmatpush.bf16.msra.mxu0 0
  %2837 = vmatpush.bf16.msra.mxu0 0
  %2838 = vmatpush.bf16.msra.mxu0 0
  %2839 = vmatpush.bf16.msra.mxu0 0
  %2840 = vmatpush.bf16.msra.mxu0 0
  %2841 = vmatpush.bf16.msra.mxu0 0
  %2842 = vmatpush.bf16.msra.mxu0 %v2680
  %2843 = vmatmul.bf16.gmra.mxu0 %v2703
  %v2844 = vpop.f32.mrf.mxu0
  %v2845 = vadd.f32 0.0, %v2844
  %v2846 = vpop.f32.mrf.mxu0
  %2847 = vdwg.mxu0
  %2848 = vmatpush.bf16.msra.mxu0 0
  %2849 = vmatpush.bf16.msra.mxu0 0
  %2850 = vmatpush.bf16.msra.mxu0 0
  %2851 = vmatpush.bf16.msra.mxu0 0
  %2852 = vmatpush.bf16.msra.mxu0 0
  %2853 = vmatpush.bf16.msra.mxu0 0
  %2854 = vmatpush.bf16.msra.mxu0 0
  %2855 = vmatpush.bf16.msra.mxu0 %v2681
  %2856 = vmatmul.bf16.gmra.mxu0 %v2703
  %v2857 = vpop.f32.mrf.mxu0
  %v2858 = vadd.f32 0.0, %v2857
  %v2859 = vpop.f32.mrf.mxu0
  %2860 = vdwg.mxu0
  %2861 = vmatpush.bf16.msra.mxu0 0
  %2862 = vmatpush.bf16.msra.mxu0 0
  %2863 = vmatpush.bf16.msra.mxu0 0
  %2864 = vmatpush.bf16.msra.mxu0 0
  %2865 = vmatpush.bf16.msra.mxu0 0
  %2866 = vmatpush.bf16.msra.mxu0 0
  %2867 = vmatpush.bf16.msra.mxu0 0
  %2868 = vmatpush.bf16.msra.mxu0 %v2682
  %2869 = vmatmul.bf16.gmra.mxu0 %v2703
  %v2870 = vpop.f32.mrf.mxu0
  %v2871 = vadd.f32 0.0, %v2870
  %v2872 = vpop.f32.mrf.mxu0
  %2873 = vdwg.mxu0
  %2874 = vmatpush.bf16.msra.mxu0 0
  %2875 = vmatpush.bf16.msra.mxu0 0
  %2876 = vmatpush.bf16.msra.mxu0 0
  %2877 = vmatpush.bf16.msra.mxu0 0
  %2878 = vmatpush.bf16.msra.mxu0 0
  %2879 = vmatpush.bf16.msra.mxu0 0
  %2880 = vmatpush.bf16.msra.mxu0 0
  %2881 = vmatpush.bf16.msra.mxu0 %v2683
  %2882 = vmatmul.bf16.gmra.mxu0 %v2703
  %v2883 = vpop.f32.mrf.mxu0
  %v2884 = vadd.f32 0.0, %v2883
  %v2885 = vpop.f32.mrf.mxu0
  %2886 = vdwg.mxu0
  %2887 = vmatpush.bf16.msra.mxu0 0
  %2888 = vmatpush.bf16.msra.mxu0 0
  %2889 = vmatpush.bf16.msra.mxu0 0
  %2890 = vmatpush.bf16.msra.mxu0 0
  %2891 = vmatpush.bf16.msra.mxu0 0
  %2892 = vmatpush.bf16.msra.mxu0 0
  %2893 = vmatpush.bf16.msra.mxu0 0
  %2894 = vmatpush.bf16.msra.mxu0 %v2684
  %2895 = vmatmul.bf16.gmra.mxu0 %v2703
  %v2896 = vpop.f32.mrf.mxu0
  %v2897 = vadd.f32 0.0, %v2896
  %v2898 = vpop.f32.mrf.mxu0
  %2899 = vdwg.mxu0
  %2900 = vmatpush.bf16.msra.mxu0 0
  %2901 = vmatpush.bf16.msra.mxu0 0
  %2902 = vmatpush.bf16.msra.mxu0 0
  %2903 = vmatpush.bf16.msra.mxu0 0
  %2904 = vmatpush.bf16.msra.mxu0 0
  %2905 = vmatpush.bf16.msra.mxu0 0
  %2906 = vmatpush.bf16.msra.mxu0 0
  %2907 = vmatpush.bf16.msra.mxu0 %v2685
  %2908 = vmatmul.bf16.gmra.mxu0 %v2703
  %v2909 = vpop.f32.mrf.mxu0
  %v2910 = vadd.f32 0.0, %v2909
  %v2911 = vpop.f32.mrf.mxu0
  %2912 = vdwg.mxu0
  %v2913 = vadd.f32 %v2590, %v2715
  %v2914 = vadd.f32 %v2591, %v2728
  %v2915 = vadd.f32 %v2592, %v2741
  %v2916 = vadd.f32 %v2593, %v2754
  %v2917 = vadd.f32 %v2594, %v2767
  %v2918 = vadd.f32 %v2595, %v2780
  %v2919 = vadd.f32 %v2596, %v2793
  %v2920 = vadd.f32 %v2597, %v2806
  %v2921 = vadd.f32 %v2598, %v2819
  %v2922 = vadd.f32 %v2599, %v2832
  %v2923 = vadd.f32 %v2600, %v2845
  %v2924 = vadd.f32 %v2601, %v2858
  %v2925 = vadd.f32 %v2602, %v2871
  %v2926 = vadd.f32 %v2603, %v2884
  %v2927 = vadd.f32 %v2604, %v2897
  %v2928 = vadd.f32 %v2605, %v2910
  %v2929 = vld [vmem:[#allocation2 + $0x380] sm:$0xff]
  %v2930 = vld [vmem:[#allocation2 + $0x388] sm:$0xff]
  %v2931 = vld [vmem:[#allocation2 + $0x390] sm:$0xff]
  %v2932 = vld [vmem:[#allocation2 + $0x398] sm:$0xff]
  %v2933 = vld [vmem:[#allocation2 + $0x3a0] sm:$0xff]
  %v2934 = vld [vmem:[#allocation2 + $0x3a8] sm:$0xff]
  %v2935 = vld [vmem:[#allocation2 + $0x3b0] sm:$0xff]
  %v2936 = vld [vmem:[#allocation2 + $0x3b8] sm:$0xff]
  %v2937 = vld [vmem:[#allocation2 + $0x3c0] sm:$0xff]
  %v2938 = vld [vmem:[#allocation2 + $0x3c8] sm:$0xff]
  %v2939 = vld [vmem:[#allocation2 + $0x3d0] sm:$0xff]
  %v2940 = vld [vmem:[#allocation2 + $0x3d8] sm:$0xff]
  %v2941 = vld [vmem:[#allocation2 + $0x3e0] sm:$0xff]
  %v2942 = vld [vmem:[#allocation2 + $0x3e8] sm:$0xff]
  %v2943 = vld [vmem:[#allocation2 + $0x3f0] sm:$0xff]
  %v2944 = vld [vmem:[#allocation2 + $0x3f8] sm:$0xff]
  %v2961 = vunpack.c.l.b16 %v2929
  %v2962 = vunpack.c.h.b16 %v2929
  %v2963 = vunpack.c.l.b16 %v2930
  %v2964 = vunpack.c.h.b16 %v2930
  %v2965 = vunpack.c.l.b16 %v2931
  %v2966 = vunpack.c.h.b16 %v2931
  %v2967 = vunpack.c.l.b16 %v2932
  %v2968 = vunpack.c.h.b16 %v2932
  %v2969 = vunpack.c.l.b16 %v2933
  %v2970 = vunpack.c.h.b16 %v2933
  %v2971 = vunpack.c.l.b16 %v2934
  %v2972 = vunpack.c.h.b16 %v2934
  %v2973 = vunpack.c.l.b16 %v2935
  %v2974 = vunpack.c.h.b16 %v2935
  %v2975 = vunpack.c.l.b16 %v2936
  %v2976 = vunpack.c.h.b16 %v2936
  %v2977 = vunpack.c.l.b16 %v2937
  %v2978 = vunpack.c.h.b16 %v2937
  %v2979 = vunpack.c.l.b16 %v2938
  %v2980 = vunpack.c.h.b16 %v2938
  %v2981 = vunpack.c.l.b16 %v2939
  %v2982 = vunpack.c.h.b16 %v2939
  %v2983 = vunpack.c.l.b16 %v2940
  %v2984 = vunpack.c.h.b16 %v2940
  %v2985 = vunpack.c.l.b16 %v2941
  %v2986 = vunpack.c.h.b16 %v2941
  %v2987 = vunpack.c.l.b16 %v2942
  %v2988 = vunpack.c.h.b16 %v2942
  %v2989 = vunpack.c.l.b16 %v2943
  %v2990 = vunpack.c.h.b16 %v2943
  %v2991 = vunpack.c.l.b16 %v2944
  %v2992 = vunpack.c.h.b16 %v2944
  %v2993 = vpack.c.b16 %v2977, %v2961
  %v2994 = vpack.c.b16 %v2978, %v2962
  %v2995 = vpack.c.b16 %v2979, %v2963
  %v2996 = vpack.c.b16 %v2980, %v2964
  %v2997 = vpack.c.b16 %v2981, %v2965
  %v2998 = vpack.c.b16 %v2982, %v2966
  %v2999 = vpack.c.b16 %v2983, %v2967
  %v3000 = vpack.c.b16 %v2984, %v2968
  %v3001 = vpack.c.b16 %v2985, %v2969
  %v3002 = vpack.c.b16 %v2986, %v2970
  %v3003 = vpack.c.b16 %v2987, %v2971
  %v3004 = vpack.c.b16 %v2988, %v2972
  %v3005 = vpack.c.b16 %v2989, %v2973
  %v3006 = vpack.c.b16 %v2990, %v2974
  %v3007 = vpack.c.b16 %v2991, %v2975
  %v3008 = vpack.c.b16 %v2992, %v2976
  %v3026 = vsel %vm86, %v687, 0
  %3028 = vmatpush.bf16.msra.mxu0 0
  %3029 = vmatpush.bf16.msra.mxu0 0
  %3030 = vmatpush.bf16.msra.mxu0 0
  %3031 = vmatpush.bf16.msra.mxu0 0
  %3032 = vmatpush.bf16.msra.mxu0 0
  %3033 = vmatpush.bf16.msra.mxu0 0
  %3034 = vmatpush.bf16.msra.mxu0 0
  %3035 = vmatpush.bf16.msra.mxu0 %v2993
  %3036 = vmatmul.bf16.gmra.mxu0 %v3026
  %v3037 = vpop.f32.mrf.mxu0
  %v3038 = vadd.f32 0.0, %v3037
  %v3039 = vpop.f32.mrf.mxu0
  %3040 = vdwg.mxu0
  %3041 = vmatpush.bf16.msra.mxu0 0
  %3042 = vmatpush.bf16.msra.mxu0 0
  %3043 = vmatpush.bf16.msra.mxu0 0
  %3044 = vmatpush.bf16.msra.mxu0 0
  %3045 = vmatpush.bf16.msra.mxu0 0
  %3046 = vmatpush.bf16.msra.mxu0 0
  %3047 = vmatpush.bf16.msra.mxu0 0
  %3048 = vmatpush.bf16.msra.mxu0 %v2994
  %3049 = vmatmul.bf16.gmra.mxu0 %v3026
  %v3050 = vpop.f32.mrf.mxu0
  %v3051 = vadd.f32 0.0, %v3050
  %v3052 = vpop.f32.mrf.mxu0
  %3053 = vdwg.mxu0
  %3054 = vmatpush.bf16.msra.mxu0 0
  %3055 = vmatpush.bf16.msra.mxu0 0
  %3056 = vmatpush.bf16.msra.mxu0 0
  %3057 = vmatpush.bf16.msra.mxu0 0
  %3058 = vmatpush.bf16.msra.mxu0 0
  %3059 = vmatpush.bf16.msra.mxu0 0
  %3060 = vmatpush.bf16.msra.mxu0 0
  %3061 = vmatpush.bf16.msra.mxu0 %v2995
  %3062 = vmatmul.bf16.gmra.mxu0 %v3026
  %v3063 = vpop.f32.mrf.mxu0
  %v3064 = vadd.f32 0.0, %v3063
  %v3065 = vpop.f32.mrf.mxu0
  %3066 = vdwg.mxu0
  %3067 = vmatpush.bf16.msra.mxu0 0
  %3068 = vmatpush.bf16.msra.mxu0 0
  %3069 = vmatpush.bf16.msra.mxu0 0
  %3070 = vmatpush.bf16.msra.mxu0 0
  %3071 = vmatpush.bf16.msra.mxu0 0
  %3072 = vmatpush.bf16.msra.mxu0 0
  %3073 = vmatpush.bf16.msra.mxu0 0
  %3074 = vmatpush.bf16.msra.mxu0 %v2996
  %3075 = vmatmul.bf16.gmra.mxu0 %v3026
  %v3076 = vpop.f32.mrf.mxu0
  %v3077 = vadd.f32 0.0, %v3076
  %v3078 = vpop.f32.mrf.mxu0
  %3079 = vdwg.mxu0
  %3080 = vmatpush.bf16.msra.mxu0 0
  %3081 = vmatpush.bf16.msra.mxu0 0
  %3082 = vmatpush.bf16.msra.mxu0 0
  %3083 = vmatpush.bf16.msra.mxu0 0
  %3084 = vmatpush.bf16.msra.mxu0 0
  %3085 = vmatpush.bf16.msra.mxu0 0
  %3086 = vmatpush.bf16.msra.mxu0 0
  %3087 = vmatpush.bf16.msra.mxu0 %v2997
  %3088 = vmatmul.bf16.gmra.mxu0 %v3026
  %v3089 = vpop.f32.mrf.mxu0
  %v3090 = vadd.f32 0.0, %v3089
  %v3091 = vpop.f32.mrf.mxu0
  %3092 = vdwg.mxu0
  %3093 = vmatpush.bf16.msra.mxu0 0
  %3094 = vmatpush.bf16.msra.mxu0 0
  %3095 = vmatpush.bf16.msra.mxu0 0
  %3096 = vmatpush.bf16.msra.mxu0 0
  %3097 = vmatpush.bf16.msra.mxu0 0
  %3098 = vmatpush.bf16.msra.mxu0 0
  %3099 = vmatpush.bf16.msra.mxu0 0
  %3100 = vmatpush.bf16.msra.mxu0 %v2998
  %3101 = vmatmul.bf16.gmra.mxu0 %v3026
  %v3102 = vpop.f32.mrf.mxu0
  %v3103 = vadd.f32 0.0, %v3102
  %v3104 = vpop.f32.mrf.mxu0
  %3105 = vdwg.mxu0
  %3106 = vmatpush.bf16.msra.mxu0 0
  %3107 = vmatpush.bf16.msra.mxu0 0
  %3108 = vmatpush.bf16.msra.mxu0 0
  %3109 = vmatpush.bf16.msra.mxu0 0
  %3110 = vmatpush.bf16.msra.mxu0 0
  %3111 = vmatpush.bf16.msra.mxu0 0
  %3112 = vmatpush.bf16.msra.mxu0 0
  %3113 = vmatpush.bf16.msra.mxu0 %v2999
  %3114 = vmatmul.bf16.gmra.mxu0 %v3026
  %v3115 = vpop.f32.mrf.mxu0
  %v3116 = vadd.f32 0.0, %v3115
  %v3117 = vpop.f32.mrf.mxu0
  %3118 = vdwg.mxu0
  %3119 = vmatpush.bf16.msra.mxu0 0
  %3120 = vmatpush.bf16.msra.mxu0 0
  %3121 = vmatpush.bf16.msra.mxu0 0
  %3122 = vmatpush.bf16.msra.mxu0 0
  %3123 = vmatpush.bf16.msra.mxu0 0
  %3124 = vmatpush.bf16.msra.mxu0 0
  %3125 = vmatpush.bf16.msra.mxu0 0
  %3126 = vmatpush.bf16.msra.mxu0 %v3000
  %3127 = vmatmul.bf16.gmra.mxu0 %v3026
  %v3128 = vpop.f32.mrf.mxu0
  %v3129 = vadd.f32 0.0, %v3128
  %v3130 = vpop.f32.mrf.mxu0
  %3131 = vdwg.mxu0
  %3132 = vmatpush.bf16.msra.mxu0 0
  %3133 = vmatpush.bf16.msra.mxu0 0
  %3134 = vmatpush.bf16.msra.mxu0 0
  %3135 = vmatpush.bf16.msra.mxu0 0
  %3136 = vmatpush.bf16.msra.mxu0 0
  %3137 = vmatpush.bf16.msra.mxu0 0
  %3138 = vmatpush.bf16.msra.mxu0 0
  %3139 = vmatpush.bf16.msra.mxu0 %v3001
  %3140 = vmatmul.bf16.gmra.mxu0 %v3026
  %v3141 = vpop.f32.mrf.mxu0
  %v3142 = vadd.f32 0.0, %v3141
  %v3143 = vpop.f32.mrf.mxu0
  %3144 = vdwg.mxu0
  %3145 = vmatpush.bf16.msra.mxu0 0
  %3146 = vmatpush.bf16.msra.mxu0 0
  %3147 = vmatpush.bf16.msra.mxu0 0
  %3148 = vmatpush.bf16.msra.mxu0 0
  %3149 = vmatpush.bf16.msra.mxu0 0
  %3150 = vmatpush.bf16.msra.mxu0 0
  %3151 = vmatpush.bf16.msra.mxu0 0
  %3152 = vmatpush.bf16.msra.mxu0 %v3002
  %3153 = vmatmul.bf16.gmra.mxu0 %v3026
  %v3154 = vpop.f32.mrf.mxu0
  %v3155 = vadd.f32 0.0, %v3154
  %v3156 = vpop.f32.mrf.mxu0
  %3157 = vdwg.mxu0
  %3158 = vmatpush.bf16.msra.mxu0 0
  %3159 = vmatpush.bf16.msra.mxu0 0
  %3160 = vmatpush.bf16.msra.mxu0 0
  %3161 = vmatpush.bf16.msra.mxu0 0
  %3162 = vmatpush.bf16.msra.mxu0 0
  %3163 = vmatpush.bf16.msra.mxu0 0
  %3164 = vmatpush.bf16.msra.mxu0 0
  %3165 = vmatpush.bf16.msra.mxu0 %v3003
  %3166 = vmatmul.bf16.gmra.mxu0 %v3026
  %v3167 = vpop.f32.mrf.mxu0
  %v3168 = vadd.f32 0.0, %v3167
  %v3169 = vpop.f32.mrf.mxu0
  %3170 = vdwg.mxu0
  %3171 = vmatpush.bf16.msra.mxu0 0
  %3172 = vmatpush.bf16.msra.mxu0 0
  %3173 = vmatpush.bf16.msra.mxu0 0
  %3174 = vmatpush.bf16.msra.mxu0 0
  %3175 = vmatpush.bf16.msra.mxu0 0
  %3176 = vmatpush.bf16.msra.mxu0 0
  %3177 = vmatpush.bf16.msra.mxu0 0
  %3178 = vmatpush.bf16.msra.mxu0 %v3004
  %3179 = vmatmul.bf16.gmra.mxu0 %v3026
  %v3180 = vpop.f32.mrf.mxu0
  %v3181 = vadd.f32 0.0, %v3180
  %v3182 = vpop.f32.mrf.mxu0
  %3183 = vdwg.mxu0
  %3184 = vmatpush.bf16.msra.mxu0 0
  %3185 = vmatpush.bf16.msra.mxu0 0
  %3186 = vmatpush.bf16.msra.mxu0 0
  %3187 = vmatpush.bf16.msra.mxu0 0
  %3188 = vmatpush.bf16.msra.mxu0 0
  %3189 = vmatpush.bf16.msra.mxu0 0
  %3190 = vmatpush.bf16.msra.mxu0 0
  %3191 = vmatpush.bf16.msra.mxu0 %v3005
  %3192 = vmatmul.bf16.gmra.mxu0 %v3026
  %v3193 = vpop.f32.mrf.mxu0
  %v3194 = vadd.f32 0.0, %v3193
  %v3195 = vpop.f32.mrf.mxu0
  %3196 = vdwg.mxu0
  %3197 = vmatpush.bf16.msra.mxu0 0
  %3198 = vmatpush.bf16.msra.mxu0 0
  %3199 = vmatpush.bf16.msra.mxu0 0
  %3200 = vmatpush.bf16.msra.mxu0 0
  %3201 = vmatpush.bf16.msra.mxu0 0
  %3202 = vmatpush.bf16.msra.mxu0 0
  %3203 = vmatpush.bf16.msra.mxu0 0
  %3204 = vmatpush.bf16.msra.mxu0 %v3006
  %3205 = vmatmul.bf16.gmra.mxu0 %v3026
  %v3206 = vpop.f32.mrf.mxu0
  %v3207 = vadd.f32 0.0, %v3206
  %v3208 = vpop.f32.mrf.mxu0
  %3209 = vdwg.mxu0
  %3210 = vmatpush.bf16.msra.mxu0 0
  %3211 = vmatpush.bf16.msra.mxu0 0
  %3212 = vmatpush.bf16.msra.mxu0 0
  %3213 = vmatpush.bf16.msra.mxu0 0
  %3214 = vmatpush.bf16.msra.mxu0 0
  %3215 = vmatpush.bf16.msra.mxu0 0
  %3216 = vmatpush.bf16.msra.mxu0 0
  %3217 = vmatpush.bf16.msra.mxu0 %v3007
  %3218 = vmatmul.bf16.gmra.mxu0 %v3026
  %v3219 = vpop.f32.mrf.mxu0
  %v3220 = vadd.f32 0.0, %v3219
  %v3221 = vpop.f32.mrf.mxu0
  %3222 = vdwg.mxu0
  %3223 = vmatpush.bf16.msra.mxu0 0
  %3224 = vmatpush.bf16.msra.mxu0 0
  %3225 = vmatpush.bf16.msra.mxu0 0
  %3226 = vmatpush.bf16.msra.mxu0 0
  %3227 = vmatpush.bf16.msra.mxu0 0
  %3228 = vmatpush.bf16.msra.mxu0 0
  %3229 = vmatpush.bf16.msra.mxu0 0
  %3230 = vmatpush.bf16.msra.mxu0 %v3008
  %3231 = vmatmul.bf16.gmra.mxu0 %v3026
  %v3232 = vpop.f32.mrf.mxu0
  %v3233 = vadd.f32 0.0, %v3232
  %v3234 = vpop.f32.mrf.mxu0
  %3235 = vdwg.mxu0
  %v3236 = vadd.f32 %v2913, %v3038
  %v3237 = vadd.f32 %v2914, %v3051
  %v3238 = vadd.f32 %v2915, %v3064
  %v3239 = vadd.f32 %v2916, %v3077
  %v3240 = vadd.f32 %v2917, %v3090
  %v3241 = vadd.f32 %v2918, %v3103
  %v3242 = vadd.f32 %v2919, %v3116
  %v3243 = vadd.f32 %v2920, %v3129
  %v3244 = vadd.f32 %v2921, %v3142
  %v3245 = vadd.f32 %v2922, %v3155
  %v3246 = vadd.f32 %v2923, %v3168
  %v3247 = vadd.f32 %v2924, %v3181
  %v3248 = vadd.f32 %v2925, %v3194
  %v3249 = vadd.f32 %v2926, %v3207
  %v3250 = vadd.f32 %v2927, %v3220
  %v3251 = vadd.f32 %v2928, %v3233
  %v3252 = vld [vmem:[#allocation2 + $0x400] sm:$0xff]
  %v3253 = vld [vmem:[#allocation2 + $0x408] sm:$0xff]
  %v3254 = vld [vmem:[#allocation2 + $0x410] sm:$0xff]
  %v3255 = vld [vmem:[#allocation2 + $0x418] sm:$0xff]
  %v3256 = vld [vmem:[#allocation2 + $0x420] sm:$0xff]
  %v3257 = vld [vmem:[#allocation2 + $0x428] sm:$0xff]
  %v3258 = vld [vmem:[#allocation2 + $0x430] sm:$0xff]
  %v3259 = vld [vmem:[#allocation2 + $0x438] sm:$0xff]
  %v3260 = vld [vmem:[#allocation2 + $0x440] sm:$0xff]
  %v3261 = vld [vmem:[#allocation2 + $0x448] sm:$0xff]
  %v3262 = vld [vmem:[#allocation2 + $0x450] sm:$0xff]
  %v3263 = vld [vmem:[#allocation2 + $0x458] sm:$0xff]
  %v3264 = vld [vmem:[#allocation2 + $0x460] sm:$0xff]
  %v3265 = vld [vmem:[#allocation2 + $0x468] sm:$0xff]
  %v3266 = vld [vmem:[#allocation2 + $0x470] sm:$0xff]
  %v3267 = vld [vmem:[#allocation2 + $0x478] sm:$0xff]
  %v3284 = vunpack.c.l.b16 %v3252
  %v3285 = vunpack.c.h.b16 %v3252
  %v3286 = vunpack.c.l.b16 %v3253
  %v3287 = vunpack.c.h.b16 %v3253
  %v3288 = vunpack.c.l.b16 %v3254
  %v3289 = vunpack.c.h.b16 %v3254
  %v3290 = vunpack.c.l.b16 %v3255
  %v3291 = vunpack.c.h.b16 %v3255
  %v3292 = vunpack.c.l.b16 %v3256
  %v3293 = vunpack.c.h.b16 %v3256
  %v3294 = vunpack.c.l.b16 %v3257
  %v3295 = vunpack.c.h.b16 %v3257
  %v3296 = vunpack.c.l.b16 %v3258
  %v3297 = vunpack.c.h.b16 %v3258
  %v3298 = vunpack.c.l.b16 %v3259
  %v3299 = vunpack.c.h.b16 %v3259
  %v3300 = vunpack.c.l.b16 %v3260
  %v3301 = vunpack.c.h.b16 %v3260
  %v3302 = vunpack.c.l.b16 %v3261
  %v3303 = vunpack.c.h.b16 %v3261
  %v3304 = vunpack.c.l.b16 %v3262
  %v3305 = vunpack.c.h.b16 %v3262
  %v3306 = vunpack.c.l.b16 %v3263
  %v3307 = vunpack.c.h.b16 %v3263
  %v3308 = vunpack.c.l.b16 %v3264
  %v3309 = vunpack.c.h.b16 %v3264
  %v3310 = vunpack.c.l.b16 %v3265
  %v3311 = vunpack.c.h.b16 %v3265
  %v3312 = vunpack.c.l.b16 %v3266
  %v3313 = vunpack.c.h.b16 %v3266
  %v3314 = vunpack.c.l.b16 %v3267
  %v3315 = vunpack.c.h.b16 %v3267
  %v3316 = vpack.c.b16 %v3300, %v3284
  %v3317 = vpack.c.b16 %v3301, %v3285
  %v3318 = vpack.c.b16 %v3302, %v3286
  %v3319 = vpack.c.b16 %v3303, %v3287
  %v3320 = vpack.c.b16 %v3304, %v3288
  %v3321 = vpack.c.b16 %v3305, %v3289
  %v3322 = vpack.c.b16 %v3306, %v3290
  %v3323 = vpack.c.b16 %v3307, %v3291
  %v3324 = vpack.c.b16 %v3308, %v3292
  %v3325 = vpack.c.b16 %v3309, %v3293
  %v3326 = vpack.c.b16 %v3310, %v3294
  %v3327 = vpack.c.b16 %v3311, %v3295
  %v3328 = vpack.c.b16 %v3312, %v3296
  %v3329 = vpack.c.b16 %v3313, %v3297
  %v3330 = vpack.c.b16 %v3314, %v3298
  %v3331 = vpack.c.b16 %v3315, %v3299
  %v3349 = vsel %vm86, %v688, 0
  %3351 = vmatpush.bf16.msra.mxu0 0
  %3352 = vmatpush.bf16.msra.mxu0 0
  %3353 = vmatpush.bf16.msra.mxu0 0
  %3354 = vmatpush.bf16.msra.mxu0 0
  %3355 = vmatpush.bf16.msra.mxu0 0
  %3356 = vmatpush.bf16.msra.mxu0 0
  %3357 = vmatpush.bf16.msra.mxu0 0
  %3358 = vmatpush.bf16.msra.mxu0 %v3316
  %3359 = vmatmul.bf16.gmra.mxu0 %v3349
  %v3360 = vpop.f32.mrf.mxu0
  %v3361 = vadd.f32 0.0, %v3360
  %v3362 = vpop.f32.mrf.mxu0
  %3363 = vdwg.mxu0
  %3364 = vmatpush.bf16.msra.mxu0 0
  %3365 = vmatpush.bf16.msra.mxu0 0
  %3366 = vmatpush.bf16.msra.mxu0 0
  %3367 = vmatpush.bf16.msra.mxu0 0
  %3368 = vmatpush.bf16.msra.mxu0 0
  %3369 = vmatpush.bf16.msra.mxu0 0
  %3370 = vmatpush.bf16.msra.mxu0 0
  %3371 = vmatpush.bf16.msra.mxu0 %v3317
  %3372 = vmatmul.bf16.gmra.mxu0 %v3349
  %v3373 = vpop.f32.mrf.mxu0
  %v3374 = vadd.f32 0.0, %v3373
  %v3375 = vpop.f32.mrf.mxu0
  %3376 = vdwg.mxu0
  %3377 = vmatpush.bf16.msra.mxu0 0
  %3378 = vmatpush.bf16.msra.mxu0 0
  %3379 = vmatpush.bf16.msra.mxu0 0
  %3380 = vmatpush.bf16.msra.mxu0 0
  %3381 = vmatpush.bf16.msra.mxu0 0
  %3382 = vmatpush.bf16.msra.mxu0 0
  %3383 = vmatpush.bf16.msra.mxu0 0
  %3384 = vmatpush.bf16.msra.mxu0 %v3318
  %3385 = vmatmul.bf16.gmra.mxu0 %v3349
  %v3386 = vpop.f32.mrf.mxu0
  %v3387 = vadd.f32 0.0, %v3386
  %v3388 = vpop.f32.mrf.mxu0
  %3389 = vdwg.mxu0
  %3390 = vmatpush.bf16.msra.mxu0 0
  %3391 = vmatpush.bf16.msra.mxu0 0
  %3392 = vmatpush.bf16.msra.mxu0 0
  %3393 = vmatpush.bf16.msra.mxu0 0
  %3394 = vmatpush.bf16.msra.mxu0 0
  %3395 = vmatpush.bf16.msra.mxu0 0
  %3396 = vmatpush.bf16.msra.mxu0 0
  %3397 = vmatpush.bf16.msra.mxu0 %v3319
  %3398 = vmatmul.bf16.gmra.mxu0 %v3349
  %v3399 = vpop.f32.mrf.mxu0
  %v3400 = vadd.f32 0.0, %v3399
  %v3401 = vpop.f32.mrf.mxu0
  %3402 = vdwg.mxu0
  %3403 = vmatpush.bf16.msra.mxu0 0
  %3404 = vmatpush.bf16.msra.mxu0 0
  %3405 = vmatpush.bf16.msra.mxu0 0
  %3406 = vmatpush.bf16.msra.mxu0 0
  %3407 = vmatpush.bf16.msra.mxu0 0
  %3408 = vmatpush.bf16.msra.mxu0 0
  %3409 = vmatpush.bf16.msra.mxu0 0
  %3410 = vmatpush.bf16.msra.mxu0 %v3320
  %3411 = vmatmul.bf16.gmra.mxu0 %v3349
  %v3412 = vpop.f32.mrf.mxu0
  %v3413 = vadd.f32 0.0, %v3412
  %v3414 = vpop.f32.mrf.mxu0
  %3415 = vdwg.mxu0
  %3416 = vmatpush.bf16.msra.mxu0 0
  %3417 = vmatpush.bf16.msra.mxu0 0
  %3418 = vmatpush.bf16.msra.mxu0 0
  %3419 = vmatpush.bf16.msra.mxu0 0
  %3420 = vmatpush.bf16.msra.mxu0 0
  %3421 = vmatpush.bf16.msra.mxu0 0
  %3422 = vmatpush.bf16.msra.mxu0 0
  %3423 = vmatpush.bf16.msra.mxu0 %v3321
  %3424 = vmatmul.bf16.gmra.mxu0 %v3349
  %v3425 = vpop.f32.mrf.mxu0
  %v3426 = vadd.f32 0.0, %v3425
  %v3427 = vpop.f32.mrf.mxu0
  %3428 = vdwg.mxu0
  %3429 = vmatpush.bf16.msra.mxu0 0
  %3430 = vmatpush.bf16.msra.mxu0 0
  %3431 = vmatpush.bf16.msra.mxu0 0
  %3432 = vmatpush.bf16.msra.mxu0 0
  %3433 = vmatpush.bf16.msra.mxu0 0
  %3434 = vmatpush.bf16.msra.mxu0 0
  %3435 = vmatpush.bf16.msra.mxu0 0
  %3436 = vmatpush.bf16.msra.mxu0 %v3322
  %3437 = vmatmul.bf16.gmra.mxu0 %v3349
  %v3438 = vpop.f32.mrf.mxu0
  %v3439 = vadd.f32 0.0, %v3438
  %v3440 = vpop.f32.mrf.mxu0
  %3441 = vdwg.mxu0
  %3442 = vmatpush.bf16.msra.mxu0 0
  %3443 = vmatpush.bf16.msra.mxu0 0
  %3444 = vmatpush.bf16.msra.mxu0 0
  %3445 = vmatpush.bf16.msra.mxu0 0
  %3446 = vmatpush.bf16.msra.mxu0 0
  %3447 = vmatpush.bf16.msra.mxu0 0
  %3448 = vmatpush.bf16.msra.mxu0 0
  %3449 = vmatpush.bf16.msra.mxu0 %v3323
  %3450 = vmatmul.bf16.gmra.mxu0 %v3349
  %v3451 = vpop.f32.mrf.mxu0
  %v3452 = vadd.f32 0.0, %v3451
  %v3453 = vpop.f32.mrf.mxu0
  %3454 = vdwg.mxu0
  %3455 = vmatpush.bf16.msra.mxu0 0
  %3456 = vmatpush.bf16.msra.mxu0 0
  %3457 = vmatpush.bf16.msra.mxu0 0
  %3458 = vmatpush.bf16.msra.mxu0 0
  %3459 = vmatpush.bf16.msra.mxu0 0
  %3460 = vmatpush.bf16.msra.mxu0 0
  %3461 = vmatpush.bf16.msra.mxu0 0
  %3462 = vmatpush.bf16.msra.mxu0 %v3324
  %3463 = vmatmul.bf16.gmra.mxu0 %v3349
  %v3464 = vpop.f32.mrf.mxu0
  %v3465 = vadd.f32 0.0, %v3464
  %v3466 = vpop.f32.mrf.mxu0
  %3467 = vdwg.mxu0
  %3468 = vmatpush.bf16.msra.mxu0 0
  %3469 = vmatpush.bf16.msra.mxu0 0
  %3470 = vmatpush.bf16.msra.mxu0 0
  %3471 = vmatpush.bf16.msra.mxu0 0
  %3472 = vmatpush.bf16.msra.mxu0 0
  %3473 = vmatpush.bf16.msra.mxu0 0
  %3474 = vmatpush.bf16.msra.mxu0 0
  %3475 = vmatpush.bf16.msra.mxu0 %v3325
  %3476 = vmatmul.bf16.gmra.mxu0 %v3349
  %v3477 = vpop.f32.mrf.mxu0
  %v3478 = vadd.f32 0.0, %v3477
  %v3479 = vpop.f32.mrf.mxu0
  %3480 = vdwg.mxu0
  %3481 = vmatpush.bf16.msra.mxu0 0
  %3482 = vmatpush.bf16.msra.mxu0 0
  %3483 = vmatpush.bf16.msra.mxu0 0
  %3484 = vmatpush.bf16.msra.mxu0 0
  %3485 = vmatpush.bf16.msra.mxu0 0
  %3486 = vmatpush.bf16.msra.mxu0 0
  %3487 = vmatpush.bf16.msra.mxu0 0
  %3488 = vmatpush.bf16.msra.mxu0 %v3326
  %3489 = vmatmul.bf16.gmra.mxu0 %v3349
  %v3490 = vpop.f32.mrf.mxu0
  %v3491 = vadd.f32 0.0, %v3490
  %v3492 = vpop.f32.mrf.mxu0
  %3493 = vdwg.mxu0
  %3494 = vmatpush.bf16.msra.mxu0 0
  %3495 = vmatpush.bf16.msra.mxu0 0
  %3496 = vmatpush.bf16.msra.mxu0 0
  %3497 = vmatpush.bf16.msra.mxu0 0
  %3498 = vmatpush.bf16.msra.mxu0 0
  %3499 = vmatpush.bf16.msra.mxu0 0
  %3500 = vmatpush.bf16.msra.mxu0 0
  %3501 = vmatpush.bf16.msra.mxu0 %v3327
  %3502 = vmatmul.bf16.gmra.mxu0 %v3349
  %v3503 = vpop.f32.mrf.mxu0
  %v3504 = vadd.f32 0.0, %v3503
  %v3505 = vpop.f32.mrf.mxu0
  %3506 = vdwg.mxu0
  %3507 = vmatpush.bf16.msra.mxu0 0
  %3508 = vmatpush.bf16.msra.mxu0 0
  %3509 = vmatpush.bf16.msra.mxu0 0
  %3510 = vmatpush.bf16.msra.mxu0 0
  %3511 = vmatpush.bf16.msra.mxu0 0
  %3512 = vmatpush.bf16.msra.mxu0 0
  %3513 = vmatpush.bf16.msra.mxu0 0
  %3514 = vmatpush.bf16.msra.mxu0 %v3328
  %3515 = vmatmul.bf16.gmra.mxu0 %v3349
  %v3516 = vpop.f32.mrf.mxu0
  %v3517 = vadd.f32 0.0, %v3516
  %v3518 = vpop.f32.mrf.mxu0
  %3519 = vdwg.mxu0
  %3520 = vmatpush.bf16.msra.mxu0 0
  %3521 = vmatpush.bf16.msra.mxu0 0
  %3522 = vmatpush.bf16.msra.mxu0 0
  %3523 = vmatpush.bf16.msra.mxu0 0
  %3524 = vmatpush.bf16.msra.mxu0 0
  %3525 = vmatpush.bf16.msra.mxu0 0
  %3526 = vmatpush.bf16.msra.mxu0 0
  %3527 = vmatpush.bf16.msra.mxu0 %v3329
  %3528 = vmatmul.bf16.gmra.mxu0 %v3349
  %v3529 = vpop.f32.mrf.mxu0
  %v3530 = vadd.f32 0.0, %v3529
  %v3531 = vpop.f32.mrf.mxu0
  %3532 = vdwg.mxu0
  %3533 = vmatpush.bf16.msra.mxu0 0
  %3534 = vmatpush.bf16.msra.mxu0 0
  %3535 = vmatpush.bf16.msra.mxu0 0
  %3536 = vmatpush.bf16.msra.mxu0 0
  %3537 = vmatpush.bf16.msra.mxu0 0
  %3538 = vmatpush.bf16.msra.mxu0 0
  %3539 = vmatpush.bf16.msra.mxu0 0
  %3540 = vmatpush.bf16.msra.mxu0 %v3330
  %3541 = vmatmul.bf16.gmra.mxu0 %v3349
  %v3542 = vpop.f32.mrf.mxu0
  %v3543 = vadd.f32 0.0, %v3542
  %v3544 = vpop.f32.mrf.mxu0
  %3545 = vdwg.mxu0
  %3546 = vmatpush.bf16.msra.mxu0 0
  %3547 = vmatpush.bf16.msra.mxu0 0
  %3548 = vmatpush.bf16.msra.mxu0 0
  %3549 = vmatpush.bf16.msra.mxu0 0
  %3550 = vmatpush.bf16.msra.mxu0 0
  %3551 = vmatpush.bf16.msra.mxu0 0
  %3552 = vmatpush.bf16.msra.mxu0 0
  %3553 = vmatpush.bf16.msra.mxu0 %v3331
  %3554 = vmatmul.bf16.gmra.mxu0 %v3349
  %v3555 = vpop.f32.mrf.mxu0
  %v3556 = vadd.f32 0.0, %v3555
  %v3557 = vpop.f32.mrf.mxu0
  %3558 = vdwg.mxu0
  %v3559 = vadd.f32 %v3236, %v3361
  %v3560 = vadd.f32 %v3237, %v3374
  %v3561 = vadd.f32 %v3238, %v3387
  %v3562 = vadd.f32 %v3239, %v3400
  %v3563 = vadd.f32 %v3240, %v3413
  %v3564 = vadd.f32 %v3241, %v3426
  %v3565 = vadd.f32 %v3242, %v3439
  %v3566 = vadd.f32 %v3243, %v3452
  %v3567 = vadd.f32 %v3244, %v3465
  %v3568 = vadd.f32 %v3245, %v3478
  %v3569 = vadd.f32 %v3246, %v3491
  %v3570 = vadd.f32 %v3247, %v3504
  %v3571 = vadd.f32 %v3248, %v3517
  %v3572 = vadd.f32 %v3249, %v3530
  %v3573 = vadd.f32 %v3250, %v3543
  %v3574 = vadd.f32 %v3251, %v3556
  %v3575 = vld [vmem:[#allocation2 + $0x480] sm:$0xff]
  %v3576 = vld [vmem:[#allocation2 + $0x488] sm:$0xff]
  %v3577 = vld [vmem:[#allocation2 + $0x490] sm:$0xff]
  %v3578 = vld [vmem:[#allocation2 + $0x498] sm:$0xff]
  %v3579 = vld [vmem:[#allocation2 + $0x4a0] sm:$0xff]
  %v3580 = vld [vmem:[#allocation2 + $0x4a8] sm:$0xff]
  %v3581 = vld [vmem:[#allocation2 + $0x4b0] sm:$0xff]
  %v3582 = vld [vmem:[#allocation2 + $0x4b8] sm:$0xff]
  %v3583 = vld [vmem:[#allocation2 + $0x4c0] sm:$0xff]
  %v3584 = vld [vmem:[#allocation2 + $0x4c8] sm:$0xff]
  %v3585 = vld [vmem:[#allocation2 + $0x4d0] sm:$0xff]
  %v3586 = vld [vmem:[#allocation2 + $0x4d8] sm:$0xff]
  %v3587 = vld [vmem:[#allocation2 + $0x4e0] sm:$0xff]
  %v3588 = vld [vmem:[#allocation2 + $0x4e8] sm:$0xff]
  %v3589 = vld [vmem:[#allocation2 + $0x4f0] sm:$0xff]
  %v3590 = vld [vmem:[#allocation2 + $0x4f8] sm:$0xff]
  %v3607 = vunpack.c.l.b16 %v3575
  %v3608 = vunpack.c.h.b16 %v3575
  %v3609 = vunpack.c.l.b16 %v3576
  %v3610 = vunpack.c.h.b16 %v3576
  %v3611 = vunpack.c.l.b16 %v3577
  %v3612 = vunpack.c.h.b16 %v3577
  %v3613 = vunpack.c.l.b16 %v3578
  %v3614 = vunpack.c.h.b16 %v3578
  %v3615 = vunpack.c.l.b16 %v3579
  %v3616 = vunpack.c.h.b16 %v3579
  %v3617 = vunpack.c.l.b16 %v3580
  %v3618 = vunpack.c.h.b16 %v3580
  %v3619 = vunpack.c.l.b16 %v3581
  %v3620 = vunpack.c.h.b16 %v3581
  %v3621 = vunpack.c.l.b16 %v3582
  %v3622 = vunpack.c.h.b16 %v3582
  %v3623 = vunpack.c.l.b16 %v3583
  %v3624 = vunpack.c.h.b16 %v3583
  %v3625 = vunpack.c.l.b16 %v3584
  %v3626 = vunpack.c.h.b16 %v3584
  %v3627 = vunpack.c.l.b16 %v3585
  %v3628 = vunpack.c.h.b16 %v3585
  %v3629 = vunpack.c.l.b16 %v3586
  %v3630 = vunpack.c.h.b16 %v3586
  %v3631 = vunpack.c.l.b16 %v3587
  %v3632 = vunpack.c.h.b16 %v3587
  %v3633 = vunpack.c.l.b16 %v3588
  %v3634 = vunpack.c.h.b16 %v3588
  %v3635 = vunpack.c.l.b16 %v3589
  %v3636 = vunpack.c.h.b16 %v3589
  %v3637 = vunpack.c.l.b16 %v3590
  %v3638 = vunpack.c.h.b16 %v3590
  %v3639 = vpack.c.b16 %v3623, %v3607
  %v3640 = vpack.c.b16 %v3624, %v3608
  %v3641 = vpack.c.b16 %v3625, %v3609
  %v3642 = vpack.c.b16 %v3626, %v3610
  %v3643 = vpack.c.b16 %v3627, %v3611
  %v3644 = vpack.c.b16 %v3628, %v3612
  %v3645 = vpack.c.b16 %v3629, %v3613
  %v3646 = vpack.c.b16 %v3630, %v3614
  %v3647 = vpack.c.b16 %v3631, %v3615
  %v3648 = vpack.c.b16 %v3632, %v3616
  %v3649 = vpack.c.b16 %v3633, %v3617
  %v3650 = vpack.c.b16 %v3634, %v3618
  %v3651 = vpack.c.b16 %v3635, %v3619
  %v3652 = vpack.c.b16 %v3636, %v3620
  %v3653 = vpack.c.b16 %v3637, %v3621
  %v3654 = vpack.c.b16 %v3638, %v3622
  %v3672 = vsel %vm86, %v689, 0
  %3674 = vmatpush.bf16.msra.mxu0 0
  %3675 = vmatpush.bf16.msra.mxu0 0
  %3676 = vmatpush.bf16.msra.mxu0 0
  %3677 = vmatpush.bf16.msra.mxu0 0
  %3678 = vmatpush.bf16.msra.mxu0 0
  %3679 = vmatpush.bf16.msra.mxu0 0
  %3680 = vmatpush.bf16.msra.mxu0 0
  %3681 = vmatpush.bf16.msra.mxu0 %v3639
  %3682 = vmatmul.bf16.gmra.mxu0 %v3672
  %v3683 = vpop.f32.mrf.mxu0
  %v3684 = vadd.f32 0.0, %v3683
  %v3685 = vpop.f32.mrf.mxu0
  %3686 = vdwg.mxu0
  %3687 = vmatpush.bf16.msra.mxu0 0
  %3688 = vmatpush.bf16.msra.mxu0 0
  %3689 = vmatpush.bf16.msra.mxu0 0
  %3690 = vmatpush.bf16.msra.mxu0 0
  %3691 = vmatpush.bf16.msra.mxu0 0
  %3692 = vmatpush.bf16.msra.mxu0 0
  %3693 = vmatpush.bf16.msra.mxu0 0
  %3694 = vmatpush.bf16.msra.mxu0 %v3640
  %3695 = vmatmul.bf16.gmra.mxu0 %v3672
  %v3696 = vpop.f32.mrf.mxu0
  %v3697 = vadd.f32 0.0, %v3696
  %v3698 = vpop.f32.mrf.mxu0
  %3699 = vdwg.mxu0
  %3700 = vmatpush.bf16.msra.mxu0 0
  %3701 = vmatpush.bf16.msra.mxu0 0
  %3702 = vmatpush.bf16.msra.mxu0 0
  %3703 = vmatpush.bf16.msra.mxu0 0
  %3704 = vmatpush.bf16.msra.mxu0 0
  %3705 = vmatpush.bf16.msra.mxu0 0
  %3706 = vmatpush.bf16.msra.mxu0 0
  %3707 = vmatpush.bf16.msra.mxu0 %v3641
  %3708 = vmatmul.bf16.gmra.mxu0 %v3672
  %v3709 = vpop.f32.mrf.mxu0
  %v3710 = vadd.f32 0.0, %v3709
  %v3711 = vpop.f32.mrf.mxu0
  %3712 = vdwg.mxu0
  %3713 = vmatpush.bf16.msra.mxu0 0
  %3714 = vmatpush.bf16.msra.mxu0 0
  %3715 = vmatpush.bf16.msra.mxu0 0
  %3716 = vmatpush.bf16.msra.mxu0 0
  %3717 = vmatpush.bf16.msra.mxu0 0
  %3718 = vmatpush.bf16.msra.mxu0 0
  %3719 = vmatpush.bf16.msra.mxu0 0
  %3720 = vmatpush.bf16.msra.mxu0 %v3642
  %3721 = vmatmul.bf16.gmra.mxu0 %v3672
  %v3722 = vpop.f32.mrf.mxu0
  %v3723 = vadd.f32 0.0, %v3722
  %v3724 = vpop.f32.mrf.mxu0
  %3725 = vdwg.mxu0
  %3726 = vmatpush.bf16.msra.mxu0 0
  %3727 = vmatpush.bf16.msra.mxu0 0
  %3728 = vmatpush.bf16.msra.mxu0 0
  %3729 = vmatpush.bf16.msra.mxu0 0
  %3730 = vmatpush.bf16.msra.mxu0 0
  %3731 = vmatpush.bf16.msra.mxu0 0
  %3732 = vmatpush.bf16.msra.mxu0 0
  %3733 = vmatpush.bf16.msra.mxu0 %v3643
  %3734 = vmatmul.bf16.gmra.mxu0 %v3672
  %v3735 = vpop.f32.mrf.mxu0
  %v3736 = vadd.f32 0.0, %v3735
  %v3737 = vpop.f32.mrf.mxu0
  %3738 = vdwg.mxu0
  %3739 = vmatpush.bf16.msra.mxu0 0
  %3740 = vmatpush.bf16.msra.mxu0 0
  %3741 = vmatpush.bf16.msra.mxu0 0
  %3742 = vmatpush.bf16.msra.mxu0 0
  %3743 = vmatpush.bf16.msra.mxu0 0
  %3744 = vmatpush.bf16.msra.mxu0 0
  %3745 = vmatpush.bf16.msra.mxu0 0
  %3746 = vmatpush.bf16.msra.mxu0 %v3644
  %3747 = vmatmul.bf16.gmra.mxu0 %v3672
  %v3748 = vpop.f32.mrf.mxu0
  %v3749 = vadd.f32 0.0, %v3748
  %v3750 = vpop.f32.mrf.mxu0
  %3751 = vdwg.mxu0
  %3752 = vmatpush.bf16.msra.mxu0 0
  %3753 = vmatpush.bf16.msra.mxu0 0
  %3754 = vmatpush.bf16.msra.mxu0 0
  %3755 = vmatpush.bf16.msra.mxu0 0
  %3756 = vmatpush.bf16.msra.mxu0 0
  %3757 = vmatpush.bf16.msra.mxu0 0
  %3758 = vmatpush.bf16.msra.mxu0 0
  %3759 = vmatpush.bf16.msra.mxu0 %v3645
  %3760 = vmatmul.bf16.gmra.mxu0 %v3672
  %v3761 = vpop.f32.mrf.mxu0
  %v3762 = vadd.f32 0.0, %v3761
  %v3763 = vpop.f32.mrf.mxu0
  %3764 = vdwg.mxu0
  %3765 = vmatpush.bf16.msra.mxu0 0
  %3766 = vmatpush.bf16.msra.mxu0 0
  %3767 = vmatpush.bf16.msra.mxu0 0
  %3768 = vmatpush.bf16.msra.mxu0 0
  %3769 = vmatpush.bf16.msra.mxu0 0
  %3770 = vmatpush.bf16.msra.mxu0 0
  %3771 = vmatpush.bf16.msra.mxu0 0
  %3772 = vmatpush.bf16.msra.mxu0 %v3646
  %3773 = vmatmul.bf16.gmra.mxu0 %v3672
  %v3774 = vpop.f32.mrf.mxu0
  %v3775 = vadd.f32 0.0, %v3774
  %v3776 = vpop.f32.mrf.mxu0
  %3777 = vdwg.mxu0
  %3778 = vmatpush.bf16.msra.mxu0 0
  %3779 = vmatpush.bf16.msra.mxu0 0
  %3780 = vmatpush.bf16.msra.mxu0 0
  %3781 = vmatpush.bf16.msra.mxu0 0
  %3782 = vmatpush.bf16.msra.mxu0 0
  %3783 = vmatpush.bf16.msra.mxu0 0
  %3784 = vmatpush.bf16.msra.mxu0 0
  %3785 = vmatpush.bf16.msra.mxu0 %v3647
  %3786 = vmatmul.bf16.gmra.mxu0 %v3672
  %v3787 = vpop.f32.mrf.mxu0
  %v3788 = vadd.f32 0.0, %v3787
  %v3789 = vpop.f32.mrf.mxu0
  %3790 = vdwg.mxu0
  %3791 = vmatpush.bf16.msra.mxu0 0
  %3792 = vmatpush.bf16.msra.mxu0 0
  %3793 = vmatpush.bf16.msra.mxu0 0
  %3794 = vmatpush.bf16.msra.mxu0 0
  %3795 = vmatpush.bf16.msra.mxu0 0
  %3796 = vmatpush.bf16.msra.mxu0 0
  %3797 = vmatpush.bf16.msra.mxu0 0
  %3798 = vmatpush.bf16.msra.mxu0 %v3648
  %3799 = vmatmul.bf16.gmra.mxu0 %v3672
  %v3800 = vpop.f32.mrf.mxu0
  %v3801 = vadd.f32 0.0, %v3800
  %v3802 = vpop.f32.mrf.mxu0
  %3803 = vdwg.mxu0
  %3804 = vmatpush.bf16.msra.mxu0 0
  %3805 = vmatpush.bf16.msra.mxu0 0
  %3806 = vmatpush.bf16.msra.mxu0 0
  %3807 = vmatpush.bf16.msra.mxu0 0
  %3808 = vmatpush.bf16.msra.mxu0 0
  %3809 = vmatpush.bf16.msra.mxu0 0
  %3810 = vmatpush.bf16.msra.mxu0 0
  %3811 = vmatpush.bf16.msra.mxu0 %v3649
  %3812 = vmatmul.bf16.gmra.mxu0 %v3672
  %v3813 = vpop.f32.mrf.mxu0
  %v3814 = vadd.f32 0.0, %v3813
  %v3815 = vpop.f32.mrf.mxu0
  %3816 = vdwg.mxu0
  %3817 = vmatpush.bf16.msra.mxu0 0
  %3818 = vmatpush.bf16.msra.mxu0 0
  %3819 = vmatpush.bf16.msra.mxu0 0
  %3820 = vmatpush.bf16.msra.mxu0 0
  %3821 = vmatpush.bf16.msra.mxu0 0
  %3822 = vmatpush.bf16.msra.mxu0 0
  %3823 = vmatpush.bf16.msra.mxu0 0
  %3824 = vmatpush.bf16.msra.mxu0 %v3650
  %3825 = vmatmul.bf16.gmra.mxu0 %v3672
  %v3826 = vpop.f32.mrf.mxu0
  %v3827 = vadd.f32 0.0, %v3826
  %v3828 = vpop.f32.mrf.mxu0
  %3829 = vdwg.mxu0
  %3830 = vmatpush.bf16.msra.mxu0 0
  %3831 = vmatpush.bf16.msra.mxu0 0
  %3832 = vmatpush.bf16.msra.mxu0 0
  %3833 = vmatpush.bf16.msra.mxu0 0
  %3834 = vmatpush.bf16.msra.mxu0 0
  %3835 = vmatpush.bf16.msra.mxu0 0
  %3836 = vmatpush.bf16.msra.mxu0 0
  %3837 = vmatpush.bf16.msra.mxu0 %v3651
  %3838 = vmatmul.bf16.gmra.mxu0 %v3672
  %v3839 = vpop.f32.mrf.mxu0
  %v3840 = vadd.f32 0.0, %v3839
  %v3841 = vpop.f32.mrf.mxu0
  %3842 = vdwg.mxu0
  %3843 = vmatpush.bf16.msra.mxu0 0
  %3844 = vmatpush.bf16.msra.mxu0 0
  %3845 = vmatpush.bf16.msra.mxu0 0
  %3846 = vmatpush.bf16.msra.mxu0 0
  %3847 = vmatpush.bf16.msra.mxu0 0
  %3848 = vmatpush.bf16.msra.mxu0 0
  %3849 = vmatpush.bf16.msra.mxu0 0
  %3850 = vmatpush.bf16.msra.mxu0 %v3652
  %3851 = vmatmul.bf16.gmra.mxu0 %v3672
  %v3852 = vpop.f32.mrf.mxu0
  %v3853 = vadd.f32 0.0, %v3852
  %v3854 = vpop.f32.mrf.mxu0
  %3855 = vdwg.mxu0
  %3856 = vmatpush.bf16.msra.mxu0 0
  %3857 = vmatpush.bf16.msra.mxu0 0
  %3858 = vmatpush.bf16.msra.mxu0 0
  %3859 = vmatpush.bf16.msra.mxu0 0
  %3860 = vmatpush.bf16.msra.mxu0 0
  %3861 = vmatpush.bf16.msra.mxu0 0
  %3862 = vmatpush.bf16.msra.mxu0 0
  %3863 = vmatpush.bf16.msra.mxu0 %v3653
  %3864 = vmatmul.bf16.gmra.mxu0 %v3672
  %v3865 = vpop.f32.mrf.mxu0
  %v3866 = vadd.f32 0.0, %v3865
  %v3867 = vpop.f32.mrf.mxu0
  %3868 = vdwg.mxu0
  %3869 = vmatpush.bf16.msra.mxu0 0
  %3870 = vmatpush.bf16.msra.mxu0 0
  %3871 = vmatpush.bf16.msra.mxu0 0
  %3872 = vmatpush.bf16.msra.mxu0 0
  %3873 = vmatpush.bf16.msra.mxu0 0
  %3874 = vmatpush.bf16.msra.mxu0 0
  %3875 = vmatpush.bf16.msra.mxu0 0
  %3876 = vmatpush.bf16.msra.mxu0 %v3654
  %3877 = vmatmul.bf16.gmra.mxu0 %v3672
  %v3878 = vpop.f32.mrf.mxu0
  %v3879 = vadd.f32 0.0, %v3878
  %v3880 = vpop.f32.mrf.mxu0
  %3881 = vdwg.mxu0
  %v3882 = vadd.f32 %v3559, %v3684
  %v3883 = vadd.f32 %v3560, %v3697
  %v3884 = vadd.f32 %v3561, %v3710
  %v3885 = vadd.f32 %v3562, %v3723
  %v3886 = vadd.f32 %v3563, %v3736
  %v3887 = vadd.f32 %v3564, %v3749
  %v3888 = vadd.f32 %v3565, %v3762
  %v3889 = vadd.f32 %v3566, %v3775
  %v3890 = vadd.f32 %v3567, %v3788
  %v3891 = vadd.f32 %v3568, %v3801
  %v3892 = vadd.f32 %v3569, %v3814
  %v3893 = vadd.f32 %v3570, %v3827
  %v3894 = vadd.f32 %v3571, %v3840
  %v3895 = vadd.f32 %v3572, %v3853
  %v3896 = vadd.f32 %v3573, %v3866
  %v3897 = vadd.f32 %v3574, %v3879
  %v3898 = vld [vmem:[#allocation2 + $0x500] sm:$0xff]
  %v3899 = vld [vmem:[#allocation2 + $0x508] sm:$0xff]
  %v3900 = vld [vmem:[#allocation2 + $0x510] sm:$0xff]
  %v3901 = vld [vmem:[#allocation2 + $0x518] sm:$0xff]
  %v3902 = vld [vmem:[#allocation2 + $0x520] sm:$0xff]
  %v3903 = vld [vmem:[#allocation2 + $0x528] sm:$0xff]
  %v3904 = vld [vmem:[#allocation2 + $0x530] sm:$0xff]
  %v3905 = vld [vmem:[#allocation2 + $0x538] sm:$0xff]
  %v3906 = vld [vmem:[#allocation2 + $0x540] sm:$0xff]
  %v3907 = vld [vmem:[#allocation2 + $0x548] sm:$0xff]
  %v3908 = vld [vmem:[#allocation2 + $0x550] sm:$0xff]
  %v3909 = vld [vmem:[#allocation2 + $0x558] sm:$0xff]
  %v3910 = vld [vmem:[#allocation2 + $0x560] sm:$0xff]
  %v3911 = vld [vmem:[#allocation2 + $0x568] sm:$0xff]
  %v3912 = vld [vmem:[#allocation2 + $0x570] sm:$0xff]
  %v3913 = vld [vmem:[#allocation2 + $0x578] sm:$0xff]
  %v3930 = vunpack.c.l.b16 %v3898
  %v3931 = vunpack.c.h.b16 %v3898
  %v3932 = vunpack.c.l.b16 %v3899
  %v3933 = vunpack.c.h.b16 %v3899
  %v3934 = vunpack.c.l.b16 %v3900
  %v3935 = vunpack.c.h.b16 %v3900
  %v3936 = vunpack.c.l.b16 %v3901
  %v3937 = vunpack.c.h.b16 %v3901
  %v3938 = vunpack.c.l.b16 %v3902
  %v3939 = vunpack.c.h.b16 %v3902
  %v3940 = vunpack.c.l.b16 %v3903
  %v3941 = vunpack.c.h.b16 %v3903
  %v3942 = vunpack.c.l.b16 %v3904
  %v3943 = vunpack.c.h.b16 %v3904
  %v3944 = vunpack.c.l.b16 %v3905
  %v3945 = vunpack.c.h.b16 %v3905
  %v3946 = vunpack.c.l.b16 %v3906
  %v3947 = vunpack.c.h.b16 %v3906
  %v3948 = vunpack.c.l.b16 %v3907
  %v3949 = vunpack.c.h.b16 %v3907
  %v3950 = vunpack.c.l.b16 %v3908
  %v3951 = vunpack.c.h.b16 %v3908
  %v3952 = vunpack.c.l.b16 %v3909
  %v3953 = vunpack.c.h.b16 %v3909
  %v3954 = vunpack.c.l.b16 %v3910
  %v3955 = vunpack.c.h.b16 %v3910
  %v3956 = vunpack.c.l.b16 %v3911
  %v3957 = vunpack.c.h.b16 %v3911
  %v3958 = vunpack.c.l.b16 %v3912
  %v3959 = vunpack.c.h.b16 %v3912
  %v3960 = vunpack.c.l.b16 %v3913
  %v3961 = vunpack.c.h.b16 %v3913
  %v3962 = vpack.c.b16 %v3946, %v3930
  %v3963 = vpack.c.b16 %v3947, %v3931
  %v3964 = vpack.c.b16 %v3948, %v3932
  %v3965 = vpack.c.b16 %v3949, %v3933
  %v3966 = vpack.c.b16 %v3950, %v3934
  %v3967 = vpack.c.b16 %v3951, %v3935
  %v3968 = vpack.c.b16 %v3952, %v3936
  %v3969 = vpack.c.b16 %v3953, %v3937
  %v3970 = vpack.c.b16 %v3954, %v3938
  %v3971 = vpack.c.b16 %v3955, %v3939
  %v3972 = vpack.c.b16 %v3956, %v3940
  %v3973 = vpack.c.b16 %v3957, %v3941
  %v3974 = vpack.c.b16 %v3958, %v3942
  %v3975 = vpack.c.b16 %v3959, %v3943
  %v3976 = vpack.c.b16 %v3960, %v3944
  %v3977 = vpack.c.b16 %v3961, %v3945
  %v3995 = vsel %vm86, %v690, 0
  %3997 = vmatpush.bf16.msra.mxu0 0
  %3998 = vmatpush.bf16.msra.mxu0 0
  %3999 = vmatpush.bf16.msra.mxu0 0
  %4000 = vmatpush.bf16.msra.mxu0 0
  %4001 = vmatpush.bf16.msra.mxu0 0
  %4002 = vmatpush.bf16.msra.mxu0 0
  %4003 = vmatpush.bf16.msra.mxu0 0
  %4004 = vmatpush.bf16.msra.mxu0 %v3962
  %4005 = vmatmul.bf16.gmra.mxu0 %v3995
  %v4006 = vpop.f32.mrf.mxu0
  %v4007 = vadd.f32 0.0, %v4006
  %v4008 = vpop.f32.mrf.mxu0
  %4009 = vdwg.mxu0
  %4010 = vmatpush.bf16.msra.mxu0 0
  %4011 = vmatpush.bf16.msra.mxu0 0
  %4012 = vmatpush.bf16.msra.mxu0 0
  %4013 = vmatpush.bf16.msra.mxu0 0
  %4014 = vmatpush.bf16.msra.mxu0 0
  %4015 = vmatpush.bf16.msra.mxu0 0
  %4016 = vmatpush.bf16.msra.mxu0 0
  %4017 = vmatpush.bf16.msra.mxu0 %v3963
  %4018 = vmatmul.bf16.gmra.mxu0 %v3995
  %v4019 = vpop.f32.mrf.mxu0
  %v4020 = vadd.f32 0.0, %v4019
  %v4021 = vpop.f32.mrf.mxu0
  %4022 = vdwg.mxu0
  %4023 = vmatpush.bf16.msra.mxu0 0
  %4024 = vmatpush.bf16.msra.mxu0 0
  %4025 = vmatpush.bf16.msra.mxu0 0
  %4026 = vmatpush.bf16.msra.mxu0 0
  %4027 = vmatpush.bf16.msra.mxu0 0
  %4028 = vmatpush.bf16.msra.mxu0 0
  %4029 = vmatpush.bf16.msra.mxu0 0
  %4030 = vmatpush.bf16.msra.mxu0 %v3964
  %4031 = vmatmul.bf16.gmra.mxu0 %v3995
  %v4032 = vpop.f32.mrf.mxu0
  %v4033 = vadd.f32 0.0, %v4032
  %v4034 = vpop.f32.mrf.mxu0
  %4035 = vdwg.mxu0
  %4036 = vmatpush.bf16.msra.mxu0 0
  %4037 = vmatpush.bf16.msra.mxu0 0
  %4038 = vmatpush.bf16.msra.mxu0 0
  %4039 = vmatpush.bf16.msra.mxu0 0
  %4040 = vmatpush.bf16.msra.mxu0 0
  %4041 = vmatpush.bf16.msra.mxu0 0
  %4042 = vmatpush.bf16.msra.mxu0 0
  %4043 = vmatpush.bf16.msra.mxu0 %v3965
  %4044 = vmatmul.bf16.gmra.mxu0 %v3995
  %v4045 = vpop.f32.mrf.mxu0
  %v4046 = vadd.f32 0.0, %v4045
  %v4047 = vpop.f32.mrf.mxu0
  %4048 = vdwg.mxu0
  %4049 = vmatpush.bf16.msra.mxu0 0
  %4050 = vmatpush.bf16.msra.mxu0 0
  %4051 = vmatpush.bf16.msra.mxu0 0
  %4052 = vmatpush.bf16.msra.mxu0 0
  %4053 = vmatpush.bf16.msra.mxu0 0
  %4054 = vmatpush.bf16.msra.mxu0 0
  %4055 = vmatpush.bf16.msra.mxu0 0
  %4056 = vmatpush.bf16.msra.mxu0 %v3966
  %4057 = vmatmul.bf16.gmra.mxu0 %v3995
  %v4058 = vpop.f32.mrf.mxu0
  %v4059 = vadd.f32 0.0, %v4058
  %v4060 = vpop.f32.mrf.mxu0
  %4061 = vdwg.mxu0
  %4062 = vmatpush.bf16.msra.mxu0 0
  %4063 = vmatpush.bf16.msra.mxu0 0
  %4064 = vmatpush.bf16.msra.mxu0 0
  %4065 = vmatpush.bf16.msra.mxu0 0
  %4066 = vmatpush.bf16.msra.mxu0 0
  %4067 = vmatpush.bf16.msra.mxu0 0
  %4068 = vmatpush.bf16.msra.mxu0 0
  %4069 = vmatpush.bf16.msra.mxu0 %v3967
  %4070 = vmatmul.bf16.gmra.mxu0 %v3995
  %v4071 = vpop.f32.mrf.mxu0
  %v4072 = vadd.f32 0.0, %v4071
  %v4073 = vpop.f32.mrf.mxu0
  %4074 = vdwg.mxu0
  %4075 = vmatpush.bf16.msra.mxu0 0
  %4076 = vmatpush.bf16.msra.mxu0 0
  %4077 = vmatpush.bf16.msra.mxu0 0
  %4078 = vmatpush.bf16.msra.mxu0 0
  %4079 = vmatpush.bf16.msra.mxu0 0
  %4080 = vmatpush.bf16.msra.mxu0 0
  %4081 = vmatpush.bf16.msra.mxu0 0
  %4082 = vmatpush.bf16.msra.mxu0 %v3968
  %4083 = vmatmul.bf16.gmra.mxu0 %v3995
  %v4084 = vpop.f32.mrf.mxu0
  %v4085 = vadd.f32 0.0, %v4084
  %v4086 = vpop.f32.mrf.mxu0
  %4087 = vdwg.mxu0
  %4088 = vmatpush.bf16.msra.mxu0 0
  %4089 = vmatpush.bf16.msra.mxu0 0
  %4090 = vmatpush.bf16.msra.mxu0 0
  %4091 = vmatpush.bf16.msra.mxu0 0
  %4092 = vmatpush.bf16.msra.mxu0 0
  %4093 = vmatpush.bf16.msra.mxu0 0
  %4094 = vmatpush.bf16.msra.mxu0 0
  %4095 = vmatpush.bf16.msra.mxu0 %v3969
  %4096 = vmatmul.bf16.gmra.mxu0 %v3995
  %v4097 = vpop.f32.mrf.mxu0
  %v4098 = vadd.f32 0.0, %v4097
  %v4099 = vpop.f32.mrf.mxu0
  %4100 = vdwg.mxu0
  %4101 = vmatpush.bf16.msra.mxu0 0
  %4102 = vmatpush.bf16.msra.mxu0 0
  %4103 = vmatpush.bf16.msra.mxu0 0
  %4104 = vmatpush.bf16.msra.mxu0 0
  %4105 = vmatpush.bf16.msra.mxu0 0
  %4106 = vmatpush.bf16.msra.mxu0 0
  %4107 = vmatpush.bf16.msra.mxu0 0
  %4108 = vmatpush.bf16.msra.mxu0 %v3970
  %4109 = vmatmul.bf16.gmra.mxu0 %v3995
  %v4110 = vpop.f32.mrf.mxu0
  %v4111 = vadd.f32 0.0, %v4110
  %v4112 = vpop.f32.mrf.mxu0
  %4113 = vdwg.mxu0
  %4114 = vmatpush.bf16.msra.mxu0 0
  %4115 = vmatpush.bf16.msra.mxu0 0
  %4116 = vmatpush.bf16.msra.mxu0 0
  %4117 = vmatpush.bf16.msra.mxu0 0
  %4118 = vmatpush.bf16.msra.mxu0 0
  %4119 = vmatpush.bf16.msra.mxu0 0
  %4120 = vmatpush.bf16.msra.mxu0 0
  %4121 = vmatpush.bf16.msra.mxu0 %v3971
  %4122 = vmatmul.bf16.gmra.mxu0 %v3995
  %v4123 = vpop.f32.mrf.mxu0
  %v4124 = vadd.f32 0.0, %v4123
  %v4125 = vpop.f32.mrf.mxu0
  %4126 = vdwg.mxu0
  %4127 = vmatpush.bf16.msra.mxu0 0
  %4128 = vmatpush.bf16.msra.mxu0 0
  %4129 = vmatpush.bf16.msra.mxu0 0
  %4130 = vmatpush.bf16.msra.mxu0 0
  %4131 = vmatpush.bf16.msra.mxu0 0
  %4132 = vmatpush.bf16.msra.mxu0 0
  %4133 = vmatpush.bf16.msra.mxu0 0
  %4134 = vmatpush.bf16.msra.mxu0 %v3972
  %4135 = vmatmul.bf16.gmra.mxu0 %v3995
  %v4136 = vpop.f32.mrf.mxu0
  %v4137 = vadd.f32 0.0, %v4136
  %v4138 = vpop.f32.mrf.mxu0
  %4139 = vdwg.mxu0
  %4140 = vmatpush.bf16.msra.mxu0 0
  %4141 = vmatpush.bf16.msra.mxu0 0
  %4142 = vmatpush.bf16.msra.mxu0 0
  %4143 = vmatpush.bf16.msra.mxu0 0
  %4144 = vmatpush.bf16.msra.mxu0 0
  %4145 = vmatpush.bf16.msra.mxu0 0
  %4146 = vmatpush.bf16.msra.mxu0 0
  %4147 = vmatpush.bf16.msra.mxu0 %v3973
  %4148 = vmatmul.bf16.gmra.mxu0 %v3995
  %v4149 = vpop.f32.mrf.mxu0
  %v4150 = vadd.f32 0.0, %v4149
  %v4151 = vpop.f32.mrf.mxu0
  %4152 = vdwg.mxu0
  %4153 = vmatpush.bf16.msra.mxu0 0
  %4154 = vmatpush.bf16.msra.mxu0 0
  %4155 = vmatpush.bf16.msra.mxu0 0
  %4156 = vmatpush.bf16.msra.mxu0 0
  %4157 = vmatpush.bf16.msra.mxu0 0
  %4158 = vmatpush.bf16.msra.mxu0 0
  %4159 = vmatpush.bf16.msra.mxu0 0
  %4160 = vmatpush.bf16.msra.mxu0 %v3974
  %4161 = vmatmul.bf16.gmra.mxu0 %v3995
  %v4162 = vpop.f32.mrf.mxu0
  %v4163 = vadd.f32 0.0, %v4162
  %v4164 = vpop.f32.mrf.mxu0
  %4165 = vdwg.mxu0
  %4166 = vmatpush.bf16.msra.mxu0 0
  %4167 = vmatpush.bf16.msra.mxu0 0
  %4168 = vmatpush.bf16.msra.mxu0 0
  %4169 = vmatpush.bf16.msra.mxu0 0
  %4170 = vmatpush.bf16.msra.mxu0 0
  %4171 = vmatpush.bf16.msra.mxu0 0
  %4172 = vmatpush.bf16.msra.mxu0 0
  %4173 = vmatpush.bf16.msra.mxu0 %v3975
  %4174 = vmatmul.bf16.gmra.mxu0 %v3995
  %v4175 = vpop.f32.mrf.mxu0
  %v4176 = vadd.f32 0.0, %v4175
  %v4177 = vpop.f32.mrf.mxu0
  %4178 = vdwg.mxu0
  %4179 = vmatpush.bf16.msra.mxu0 0
  %4180 = vmatpush.bf16.msra.mxu0 0
  %4181 = vmatpush.bf16.msra.mxu0 0
  %4182 = vmatpush.bf16.msra.mxu0 0
  %4183 = vmatpush.bf16.msra.mxu0 0
  %4184 = vmatpush.bf16.msra.mxu0 0
  %4185 = vmatpush.bf16.msra.mxu0 0
  %4186 = vmatpush.bf16.msra.mxu0 %v3976
  %4187 = vmatmul.bf16.gmra.mxu0 %v3995
  %v4188 = vpop.f32.mrf.mxu0
  %v4189 = vadd.f32 0.0, %v4188
  %v4190 = vpop.f32.mrf.mxu0
  %4191 = vdwg.mxu0
  %4192 = vmatpush.bf16.msra.mxu0 0
  %4193 = vmatpush.bf16.msra.mxu0 0
  %4194 = vmatpush.bf16.msra.mxu0 0
  %4195 = vmatpush.bf16.msra.mxu0 0
  %4196 = vmatpush.bf16.msra.mxu0 0
  %4197 = vmatpush.bf16.msra.mxu0 0
  %4198 = vmatpush.bf16.msra.mxu0 0
  %4199 = vmatpush.bf16.msra.mxu0 %v3977
  %4200 = vmatmul.bf16.gmra.mxu0 %v3995
  %v4201 = vpop.f32.mrf.mxu0
  %v4202 = vadd.f32 0.0, %v4201
  %v4203 = vpop.f32.mrf.mxu0
  %4204 = vdwg.mxu0
  %v4205 = vadd.f32 %v3882, %v4007
  %v4206 = vadd.f32 %v3883, %v4020
  %v4207 = vadd.f32 %v3884, %v4033
  %v4208 = vadd.f32 %v3885, %v4046
  %v4209 = vadd.f32 %v3886, %v4059
  %v4210 = vadd.f32 %v3887, %v4072
  %v4211 = vadd.f32 %v3888, %v4085
  %v4212 = vadd.f32 %v3889, %v4098
  %v4213 = vadd.f32 %v3890, %v4111
  %v4214 = vadd.f32 %v3891, %v4124
  %v4215 = vadd.f32 %v3892, %v4137
  %v4216 = vadd.f32 %v3893, %v4150
  %v4217 = vadd.f32 %v3894, %v4163
  %v4218 = vadd.f32 %v3895, %v4176
  %v4219 = vadd.f32 %v3896, %v4189
  %v4220 = vadd.f32 %v3897, %v4202
  %v4221 = vld [vmem:[#allocation2 + $0x580] sm:$0xff]
  %v4222 = vld [vmem:[#allocation2 + $0x588] sm:$0xff]
  %v4223 = vld [vmem:[#allocation2 + $0x590] sm:$0xff]
  %v4224 = vld [vmem:[#allocation2 + $0x598] sm:$0xff]
  %v4225 = vld [vmem:[#allocation2 + $0x5a0] sm:$0xff]
  %v4226 = vld [vmem:[#allocation2 + $0x5a8] sm:$0xff]
  %v4227 = vld [vmem:[#allocation2 + $0x5b0] sm:$0xff]
  %v4228 = vld [vmem:[#allocation2 + $0x5b8] sm:$0xff]
  %v4229 = vld [vmem:[#allocation2 + $0x5c0] sm:$0xff]
  %v4230 = vld [vmem:[#allocation2 + $0x5c8] sm:$0xff]
  %v4231 = vld [vmem:[#allocation2 + $0x5d0] sm:$0xff]
  %v4232 = vld [vmem:[#allocation2 + $0x5d8] sm:$0xff]
  %v4233 = vld [vmem:[#allocation2 + $0x5e0] sm:$0xff]
  %v4234 = vld [vmem:[#allocation2 + $0x5e8] sm:$0xff]
  %v4235 = vld [vmem:[#allocation2 + $0x5f0] sm:$0xff]
  %v4236 = vld [vmem:[#allocation2 + $0x5f8] sm:$0xff]
  %v4253 = vunpack.c.l.b16 %v4221
  %v4254 = vunpack.c.h.b16 %v4221
  %v4255 = vunpack.c.l.b16 %v4222
  %v4256 = vunpack.c.h.b16 %v4222
  %v4257 = vunpack.c.l.b16 %v4223
  %v4258 = vunpack.c.h.b16 %v4223
  %v4259 = vunpack.c.l.b16 %v4224
  %v4260 = vunpack.c.h.b16 %v4224
  %v4261 = vunpack.c.l.b16 %v4225
  %v4262 = vunpack.c.h.b16 %v4225
  %v4263 = vunpack.c.l.b16 %v4226
  %v4264 = vunpack.c.h.b16 %v4226
  %v4265 = vunpack.c.l.b16 %v4227
  %v4266 = vunpack.c.h.b16 %v4227
  %v4267 = vunpack.c.l.b16 %v4228
  %v4268 = vunpack.c.h.b16 %v4228
  %v4269 = vunpack.c.l.b16 %v4229
  %v4270 = vunpack.c.h.b16 %v4229
  %v4271 = vunpack.c.l.b16 %v4230
  %v4272 = vunpack.c.h.b16 %v4230
  %v4273 = vunpack.c.l.b16 %v4231
  %v4274 = vunpack.c.h.b16 %v4231
  %v4275 = vunpack.c.l.b16 %v4232
  %v4276 = vunpack.c.h.b16 %v4232
  %v4277 = vunpack.c.l.b16 %v4233
  %v4278 = vunpack.c.h.b16 %v4233
  %v4279 = vunpack.c.l.b16 %v4234
  %v4280 = vunpack.c.h.b16 %v4234
  %v4281 = vunpack.c.l.b16 %v4235
  %v4282 = vunpack.c.h.b16 %v4235
  %v4283 = vunpack.c.l.b16 %v4236
  %v4284 = vunpack.c.h.b16 %v4236
  %v4285 = vpack.c.b16 %v4269, %v4253
  %v4286 = vpack.c.b16 %v4270, %v4254
  %v4287 = vpack.c.b16 %v4271, %v4255
  %v4288 = vpack.c.b16 %v4272, %v4256
  %v4289 = vpack.c.b16 %v4273, %v4257
  %v4290 = vpack.c.b16 %v4274, %v4258
  %v4291 = vpack.c.b16 %v4275, %v4259
  %v4292 = vpack.c.b16 %v4276, %v4260
  %v4293 = vpack.c.b16 %v4277, %v4261
  %v4294 = vpack.c.b16 %v4278, %v4262
  %v4295 = vpack.c.b16 %v4279, %v4263
  %v4296 = vpack.c.b16 %v4280, %v4264
  %v4297 = vpack.c.b16 %v4281, %v4265
  %v4298 = vpack.c.b16 %v4282, %v4266
  %v4299 = vpack.c.b16 %v4283, %v4267
  %v4300 = vpack.c.b16 %v4284, %v4268
  %v4318 = vsel %vm86, %v691, 0
  %4320 = vmatpush.bf16.msra.mxu0 0
  %4321 = vmatpush.bf16.msra.mxu0 0
  %4322 = vmatpush.bf16.msra.mxu0 0
  %4323 = vmatpush.bf16.msra.mxu0 0
  %4324 = vmatpush.bf16.msra.mxu0 0
  %4325 = vmatpush.bf16.msra.mxu0 0
  %4326 = vmatpush.bf16.msra.mxu0 0
  %4327 = vmatpush.bf16.msra.mxu0 %v4285
  %4328 = vmatmul.bf16.gmra.mxu0 %v4318
  %v4329 = vpop.f32.mrf.mxu0
  %v4330 = vadd.f32 0.0, %v4329
  %v4331 = vpop.f32.mrf.mxu0
  %4332 = vdwg.mxu0
  %4333 = vmatpush.bf16.msra.mxu0 0
  %4334 = vmatpush.bf16.msra.mxu0 0
  %4335 = vmatpush.bf16.msra.mxu0 0
  %4336 = vmatpush.bf16.msra.mxu0 0
  %4337 = vmatpush.bf16.msra.mxu0 0
  %4338 = vmatpush.bf16.msra.mxu0 0
  %4339 = vmatpush.bf16.msra.mxu0 0
  %4340 = vmatpush.bf16.msra.mxu0 %v4286
  %4341 = vmatmul.bf16.gmra.mxu0 %v4318
  %v4342 = vpop.f32.mrf.mxu0
  %v4343 = vadd.f32 0.0, %v4342
  %v4344 = vpop.f32.mrf.mxu0
  %4345 = vdwg.mxu0
  %4346 = vmatpush.bf16.msra.mxu0 0
  %4347 = vmatpush.bf16.msra.mxu0 0
  %4348 = vmatpush.bf16.msra.mxu0 0
  %4349 = vmatpush.bf16.msra.mxu0 0
  %4350 = vmatpush.bf16.msra.mxu0 0
  %4351 = vmatpush.bf16.msra.mxu0 0
  %4352 = vmatpush.bf16.msra.mxu0 0
  %4353 = vmatpush.bf16.msra.mxu0 %v4287
  %4354 = vmatmul.bf16.gmra.mxu0 %v4318
  %v4355 = vpop.f32.mrf.mxu0
  %v4356 = vadd.f32 0.0, %v4355
  %v4357 = vpop.f32.mrf.mxu0
  %4358 = vdwg.mxu0
  %4359 = vmatpush.bf16.msra.mxu0 0
  %4360 = vmatpush.bf16.msra.mxu0 0
  %4361 = vmatpush.bf16.msra.mxu0 0
  %4362 = vmatpush.bf16.msra.mxu0 0
  %4363 = vmatpush.bf16.msra.mxu0 0
  %4364 = vmatpush.bf16.msra.mxu0 0
  %4365 = vmatpush.bf16.msra.mxu0 0
  %4366 = vmatpush.bf16.msra.mxu0 %v4288
  %4367 = vmatmul.bf16.gmra.mxu0 %v4318
  %v4368 = vpop.f32.mrf.mxu0
  %v4369 = vadd.f32 0.0, %v4368
  %v4370 = vpop.f32.mrf.mxu0
  %4371 = vdwg.mxu0
  %4372 = vmatpush.bf16.msra.mxu0 0
  %4373 = vmatpush.bf16.msra.mxu0 0
  %4374 = vmatpush.bf16.msra.mxu0 0
  %4375 = vmatpush.bf16.msra.mxu0 0
  %4376 = vmatpush.bf16.msra.mxu0 0
  %4377 = vmatpush.bf16.msra.mxu0 0
  %4378 = vmatpush.bf16.msra.mxu0 0
  %4379 = vmatpush.bf16.msra.mxu0 %v4289
  %4380 = vmatmul.bf16.gmra.mxu0 %v4318
  %v4381 = vpop.f32.mrf.mxu0
  %v4382 = vadd.f32 0.0, %v4381
  %v4383 = vpop.f32.mrf.mxu0
  %4384 = vdwg.mxu0
  %4385 = vmatpush.bf16.msra.mxu0 0
  %4386 = vmatpush.bf16.msra.mxu0 0
  %4387 = vmatpush.bf16.msra.mxu0 0
  %4388 = vmatpush.bf16.msra.mxu0 0
  %4389 = vmatpush.bf16.msra.mxu0 0
  %4390 = vmatpush.bf16.msra.mxu0 0
  %4391 = vmatpush.bf16.msra.mxu0 0
  %4392 = vmatpush.bf16.msra.mxu0 %v4290
  %4393 = vmatmul.bf16.gmra.mxu0 %v4318
  %v4394 = vpop.f32.mrf.mxu0
  %v4395 = vadd.f32 0.0, %v4394
  %v4396 = vpop.f32.mrf.mxu0
  %4397 = vdwg.mxu0
  %4398 = vmatpush.bf16.msra.mxu0 0
  %4399 = vmatpush.bf16.msra.mxu0 0
  %4400 = vmatpush.bf16.msra.mxu0 0
  %4401 = vmatpush.bf16.msra.mxu0 0
  %4402 = vmatpush.bf16.msra.mxu0 0
  %4403 = vmatpush.bf16.msra.mxu0 0
  %4404 = vmatpush.bf16.msra.mxu0 0
  %4405 = vmatpush.bf16.msra.mxu0 %v4291
  %4406 = vmatmul.bf16.gmra.mxu0 %v4318
  %v4407 = vpop.f32.mrf.mxu0
  %v4408 = vadd.f32 0.0, %v4407
  %v4409 = vpop.f32.mrf.mxu0
  %4410 = vdwg.mxu0
  %4411 = vmatpush.bf16.msra.mxu0 0
  %4412 = vmatpush.bf16.msra.mxu0 0
  %4413 = vmatpush.bf16.msra.mxu0 0
  %4414 = vmatpush.bf16.msra.mxu0 0
  %4415 = vmatpush.bf16.msra.mxu0 0
  %4416 = vmatpush.bf16.msra.mxu0 0
  %4417 = vmatpush.bf16.msra.mxu0 0
  %4418 = vmatpush.bf16.msra.mxu0 %v4292
  %4419 = vmatmul.bf16.gmra.mxu0 %v4318
  %v4420 = vpop.f32.mrf.mxu0
  %v4421 = vadd.f32 0.0, %v4420
  %v4422 = vpop.f32.mrf.mxu0
  %4423 = vdwg.mxu0
  %4424 = vmatpush.bf16.msra.mxu0 0
  %4425 = vmatpush.bf16.msra.mxu0 0
  %4426 = vmatpush.bf16.msra.mxu0 0
  %4427 = vmatpush.bf16.msra.mxu0 0
  %4428 = vmatpush.bf16.msra.mxu0 0
  %4429 = vmatpush.bf16.msra.mxu0 0
  %4430 = vmatpush.bf16.msra.mxu0 0
  %4431 = vmatpush.bf16.msra.mxu0 %v4293
  %4432 = vmatmul.bf16.gmra.mxu0 %v4318
  %v4433 = vpop.f32.mrf.mxu0
  %v4434 = vadd.f32 0.0, %v4433
  %v4435 = vpop.f32.mrf.mxu0
  %4436 = vdwg.mxu0
  %4437 = vmatpush.bf16.msra.mxu0 0
  %4438 = vmatpush.bf16.msra.mxu0 0
  %4439 = vmatpush.bf16.msra.mxu0 0
  %4440 = vmatpush.bf16.msra.mxu0 0
  %4441 = vmatpush.bf16.msra.mxu0 0
  %4442 = vmatpush.bf16.msra.mxu0 0
  %4443 = vmatpush.bf16.msra.mxu0 0
  %4444 = vmatpush.bf16.msra.mxu0 %v4294
  %4445 = vmatmul.bf16.gmra.mxu0 %v4318
  %v4446 = vpop.f32.mrf.mxu0
  %v4447 = vadd.f32 0.0, %v4446
  %v4448 = vpop.f32.mrf.mxu0
  %4449 = vdwg.mxu0
  %4450 = vmatpush.bf16.msra.mxu0 0
  %4451 = vmatpush.bf16.msra.mxu0 0
  %4452 = vmatpush.bf16.msra.mxu0 0
  %4453 = vmatpush.bf16.msra.mxu0 0
  %4454 = vmatpush.bf16.msra.mxu0 0
  %4455 = vmatpush.bf16.msra.mxu0 0
  %4456 = vmatpush.bf16.msra.mxu0 0
  %4457 = vmatpush.bf16.msra.mxu0 %v4295
  %4458 = vmatmul.bf16.gmra.mxu0 %v4318
  %v4459 = vpop.f32.mrf.mxu0
  %v4460 = vadd.f32 0.0, %v4459
  %v4461 = vpop.f32.mrf.mxu0
  %4462 = vdwg.mxu0
  %4463 = vmatpush.bf16.msra.mxu0 0
  %4464 = vmatpush.bf16.msra.mxu0 0
  %4465 = vmatpush.bf16.msra.mxu0 0
  %4466 = vmatpush.bf16.msra.mxu0 0
  %4467 = vmatpush.bf16.msra.mxu0 0
  %4468 = vmatpush.bf16.msra.mxu0 0
  %4469 = vmatpush.bf16.msra.mxu0 0
  %4470 = vmatpush.bf16.msra.mxu0 %v4296
  %4471 = vmatmul.bf16.gmra.mxu0 %v4318
  %v4472 = vpop.f32.mrf.mxu0
  %v4473 = vadd.f32 0.0, %v4472
  %v4474 = vpop.f32.mrf.mxu0
  %4475 = vdwg.mxu0
  %4476 = vmatpush.bf16.msra.mxu0 0
  %4477 = vmatpush.bf16.msra.mxu0 0
  %4478 = vmatpush.bf16.msra.mxu0 0
  %4479 = vmatpush.bf16.msra.mxu0 0
  %4480 = vmatpush.bf16.msra.mxu0 0
  %4481 = vmatpush.bf16.msra.mxu0 0
  %4482 = vmatpush.bf16.msra.mxu0 0
  %4483 = vmatpush.bf16.msra.mxu0 %v4297
  %4484 = vmatmul.bf16.gmra.mxu0 %v4318
  %v4485 = vpop.f32.mrf.mxu0
  %v4486 = vadd.f32 0.0, %v4485
  %v4487 = vpop.f32.mrf.mxu0
  %4488 = vdwg.mxu0
  %4489 = vmatpush.bf16.msra.mxu0 0
  %4490 = vmatpush.bf16.msra.mxu0 0
  %4491 = vmatpush.bf16.msra.mxu0 0
  %4492 = vmatpush.bf16.msra.mxu0 0
  %4493 = vmatpush.bf16.msra.mxu0 0
  %4494 = vmatpush.bf16.msra.mxu0 0
  %4495 = vmatpush.bf16.msra.mxu0 0
  %4496 = vmatpush.bf16.msra.mxu0 %v4298
  %4497 = vmatmul.bf16.gmra.mxu0 %v4318
  %v4498 = vpop.f32.mrf.mxu0
  %v4499 = vadd.f32 0.0, %v4498
  %v4500 = vpop.f32.mrf.mxu0
  %4501 = vdwg.mxu0
  %4502 = vmatpush.bf16.msra.mxu0 0
  %4503 = vmatpush.bf16.msra.mxu0 0
  %4504 = vmatpush.bf16.msra.mxu0 0
  %4505 = vmatpush.bf16.msra.mxu0 0
  %4506 = vmatpush.bf16.msra.mxu0 0
  %4507 = vmatpush.bf16.msra.mxu0 0
  %4508 = vmatpush.bf16.msra.mxu0 0
  %4509 = vmatpush.bf16.msra.mxu0 %v4299
  %4510 = vmatmul.bf16.gmra.mxu0 %v4318
  %v4511 = vpop.f32.mrf.mxu0
  %v4512 = vadd.f32 0.0, %v4511
  %v4513 = vpop.f32.mrf.mxu0
  %4514 = vdwg.mxu0
  %4515 = vmatpush.bf16.msra.mxu0 0
  %4516 = vmatpush.bf16.msra.mxu0 0
  %4517 = vmatpush.bf16.msra.mxu0 0
  %4518 = vmatpush.bf16.msra.mxu0 0
  %4519 = vmatpush.bf16.msra.mxu0 0
  %4520 = vmatpush.bf16.msra.mxu0 0
  %4521 = vmatpush.bf16.msra.mxu0 0
  %4522 = vmatpush.bf16.msra.mxu0 %v4300
  %4523 = vmatmul.bf16.gmra.mxu0 %v4318
  %v4524 = vpop.f32.mrf.mxu0
  %v4525 = vadd.f32 0.0, %v4524
  %v4526 = vpop.f32.mrf.mxu0
  %4527 = vdwg.mxu0
  %v4528 = vadd.f32 %v4205, %v4330
  %v4529 = vadd.f32 %v4206, %v4343
  %v4530 = vadd.f32 %v4207, %v4356
  %v4531 = vadd.f32 %v4208, %v4369
  %v4532 = vadd.f32 %v4209, %v4382
  %v4533 = vadd.f32 %v4210, %v4395
  %v4534 = vadd.f32 %v4211, %v4408
  %v4535 = vadd.f32 %v4212, %v4421
  %v4536 = vadd.f32 %v4213, %v4434
  %v4537 = vadd.f32 %v4214, %v4447
  %v4538 = vadd.f32 %v4215, %v4460
  %v4539 = vadd.f32 %v4216, %v4473
  %v4540 = vadd.f32 %v4217, %v4486
  %v4541 = vadd.f32 %v4218, %v4499
  %v4542 = vadd.f32 %v4219, %v4512
  %v4543 = vadd.f32 %v4220, %v4525
  %v4544 = vld [vmem:[#allocation2 + $0x600] sm:$0xff]
  %v4545 = vld [vmem:[#allocation2 + $0x608] sm:$0xff]
  %v4546 = vld [vmem:[#allocation2 + $0x610] sm:$0xff]
  %v4547 = vld [vmem:[#allocation2 + $0x618] sm:$0xff]
  %v4548 = vld [vmem:[#allocation2 + $0x620] sm:$0xff]
  %v4549 = vld [vmem:[#allocation2 + $0x628] sm:$0xff]
  %v4550 = vld [vmem:[#allocation2 + $0x630] sm:$0xff]
  %v4551 = vld [vmem:[#allocation2 + $0x638] sm:$0xff]
  %v4552 = vld [vmem:[#allocation2 + $0x640] sm:$0xff]
  %v4553 = vld [vmem:[#allocation2 + $0x648] sm:$0xff]
  %v4554 = vld [vmem:[#allocation2 + $0x650] sm:$0xff]
  %v4555 = vld [vmem:[#allocation2 + $0x658] sm:$0xff]
  %v4556 = vld [vmem:[#allocation2 + $0x660] sm:$0xff]
  %v4557 = vld [vmem:[#allocation2 + $0x668] sm:$0xff]
  %v4558 = vld [vmem:[#allocation2 + $0x670] sm:$0xff]
  %v4559 = vld [vmem:[#allocation2 + $0x678] sm:$0xff]
  %v4576 = vunpack.c.l.b16 %v4544
  %v4577 = vunpack.c.h.b16 %v4544
  %v4578 = vunpack.c.l.b16 %v4545
  %v4579 = vunpack.c.h.b16 %v4545
  %v4580 = vunpack.c.l.b16 %v4546
  %v4581 = vunpack.c.h.b16 %v4546
  %v4582 = vunpack.c.l.b16 %v4547
  %v4583 = vunpack.c.h.b16 %v4547
  %v4584 = vunpack.c.l.b16 %v4548
  %v4585 = vunpack.c.h.b16 %v4548
  %v4586 = vunpack.c.l.b16 %v4549
  %v4587 = vunpack.c.h.b16 %v4549
  %v4588 = vunpack.c.l.b16 %v4550
  %v4589 = vunpack.c.h.b16 %v4550
  %v4590 = vunpack.c.l.b16 %v4551
  %v4591 = vunpack.c.h.b16 %v4551
  %v4592 = vunpack.c.l.b16 %v4552
  %v4593 = vunpack.c.h.b16 %v4552
  %v4594 = vunpack.c.l.b16 %v4553
  %v4595 = vunpack.c.h.b16 %v4553
  %v4596 = vunpack.c.l.b16 %v4554
  %v4597 = vunpack.c.h.b16 %v4554
  %v4598 = vunpack.c.l.b16 %v4555
  %v4599 = vunpack.c.h.b16 %v4555
  %v4600 = vunpack.c.l.b16 %v4556
  %v4601 = vunpack.c.h.b16 %v4556
  %v4602 = vunpack.c.l.b16 %v4557
  %v4603 = vunpack.c.h.b16 %v4557
  %v4604 = vunpack.c.l.b16 %v4558
  %v4605 = vunpack.c.h.b16 %v4558
  %v4606 = vunpack.c.l.b16 %v4559
  %v4607 = vunpack.c.h.b16 %v4559
  %v4608 = vpack.c.b16 %v4592, %v4576
  %v4609 = vpack.c.b16 %v4593, %v4577
  %v4610 = vpack.c.b16 %v4594, %v4578
  %v4611 = vpack.c.b16 %v4595, %v4579
  %v4612 = vpack.c.b16 %v4596, %v4580
  %v4613 = vpack.c.b16 %v4597, %v4581
  %v4614 = vpack.c.b16 %v4598, %v4582
  %v4615 = vpack.c.b16 %v4599, %v4583
  %v4616 = vpack.c.b16 %v4600, %v4584
  %v4617 = vpack.c.b16 %v4601, %v4585
  %v4618 = vpack.c.b16 %v4602, %v4586
  %v4619 = vpack.c.b16 %v4603, %v4587
  %v4620 = vpack.c.b16 %v4604, %v4588
  %v4621 = vpack.c.b16 %v4605, %v4589
  %v4622 = vpack.c.b16 %v4606, %v4590
  %v4623 = vpack.c.b16 %v4607, %v4591
  %v4641 = vsel %vm86, %v692, 0
  %4643 = vmatpush.bf16.msra.mxu0 0
  %4644 = vmatpush.bf16.msra.mxu0 0
  %4645 = vmatpush.bf16.msra.mxu0 0
  %4646 = vmatpush.bf16.msra.mxu0 0
  %4647 = vmatpush.bf16.msra.mxu0 0
  %4648 = vmatpush.bf16.msra.mxu0 0
  %4649 = vmatpush.bf16.msra.mxu0 0
  %4650 = vmatpush.bf16.msra.mxu0 %v4608
  %4651 = vmatmul.bf16.gmra.mxu0 %v4641
  %v4652 = vpop.f32.mrf.mxu0
  %v4653 = vadd.f32 0.0, %v4652
  %v4654 = vpop.f32.mrf.mxu0
  %4655 = vdwg.mxu0
  %4656 = vmatpush.bf16.msra.mxu0 0
  %4657 = vmatpush.bf16.msra.mxu0 0
  %4658 = vmatpush.bf16.msra.mxu0 0
  %4659 = vmatpush.bf16.msra.mxu0 0
  %4660 = vmatpush.bf16.msra.mxu0 0
  %4661 = vmatpush.bf16.msra.mxu0 0
  %4662 = vmatpush.bf16.msra.mxu0 0
  %4663 = vmatpush.bf16.msra.mxu0 %v4609
  %4664 = vmatmul.bf16.gmra.mxu0 %v4641
  %v4665 = vpop.f32.mrf.mxu0
  %v4666 = vadd.f32 0.0, %v4665
  %v4667 = vpop.f32.mrf.mxu0
  %4668 = vdwg.mxu0
  %4669 = vmatpush.bf16.msra.mxu0 0
  %4670 = vmatpush.bf16.msra.mxu0 0
  %4671 = vmatpush.bf16.msra.mxu0 0
  %4672 = vmatpush.bf16.msra.mxu0 0
  %4673 = vmatpush.bf16.msra.mxu0 0
  %4674 = vmatpush.bf16.msra.mxu0 0
  %4675 = vmatpush.bf16.msra.mxu0 0
  %4676 = vmatpush.bf16.msra.mxu0 %v4610
  %4677 = vmatmul.bf16.gmra.mxu0 %v4641
  %v4678 = vpop.f32.mrf.mxu0
  %v4679 = vadd.f32 0.0, %v4678
  %v4680 = vpop.f32.mrf.mxu0
  %4681 = vdwg.mxu0
  %4682 = vmatpush.bf16.msra.mxu0 0
  %4683 = vmatpush.bf16.msra.mxu0 0
  %4684 = vmatpush.bf16.msra.mxu0 0
  %4685 = vmatpush.bf16.msra.mxu0 0
  %4686 = vmatpush.bf16.msra.mxu0 0
  %4687 = vmatpush.bf16.msra.mxu0 0
  %4688 = vmatpush.bf16.msra.mxu0 0
  %4689 = vmatpush.bf16.msra.mxu0 %v4611
  %4690 = vmatmul.bf16.gmra.mxu0 %v4641
  %v4691 = vpop.f32.mrf.mxu0
  %v4692 = vadd.f32 0.0, %v4691
  %v4693 = vpop.f32.mrf.mxu0
  %4694 = vdwg.mxu0
  %4695 = vmatpush.bf16.msra.mxu0 0
  %4696 = vmatpush.bf16.msra.mxu0 0
  %4697 = vmatpush.bf16.msra.mxu0 0
  %4698 = vmatpush.bf16.msra.mxu0 0
  %4699 = vmatpush.bf16.msra.mxu0 0
  %4700 = vmatpush.bf16.msra.mxu0 0
  %4701 = vmatpush.bf16.msra.mxu0 0
  %4702 = vmatpush.bf16.msra.mxu0 %v4612
  %4703 = vmatmul.bf16.gmra.mxu0 %v4641
  %v4704 = vpop.f32.mrf.mxu0
  %v4705 = vadd.f32 0.0, %v4704
  %v4706 = vpop.f32.mrf.mxu0
  %4707 = vdwg.mxu0
  %4708 = vmatpush.bf16.msra.mxu0 0
  %4709 = vmatpush.bf16.msra.mxu0 0
  %4710 = vmatpush.bf16.msra.mxu0 0
  %4711 = vmatpush.bf16.msra.mxu0 0
  %4712 = vmatpush.bf16.msra.mxu0 0
  %4713 = vmatpush.bf16.msra.mxu0 0
  %4714 = vmatpush.bf16.msra.mxu0 0
  %4715 = vmatpush.bf16.msra.mxu0 %v4613
  %4716 = vmatmul.bf16.gmra.mxu0 %v4641
  %v4717 = vpop.f32.mrf.mxu0
  %v4718 = vadd.f32 0.0, %v4717
  %v4719 = vpop.f32.mrf.mxu0
  %4720 = vdwg.mxu0
  %4721 = vmatpush.bf16.msra.mxu0 0
  %4722 = vmatpush.bf16.msra.mxu0 0
  %4723 = vmatpush.bf16.msra.mxu0 0
  %4724 = vmatpush.bf16.msra.mxu0 0
  %4725 = vmatpush.bf16.msra.mxu0 0
  %4726 = vmatpush.bf16.msra.mxu0 0
  %4727 = vmatpush.bf16.msra.mxu0 0
  %4728 = vmatpush.bf16.msra.mxu0 %v4614
  %4729 = vmatmul.bf16.gmra.mxu0 %v4641
  %v4730 = vpop.f32.mrf.mxu0
  %v4731 = vadd.f32 0.0, %v4730
  %v4732 = vpop.f32.mrf.mxu0
  %4733 = vdwg.mxu0
  %4734 = vmatpush.bf16.msra.mxu0 0
  %4735 = vmatpush.bf16.msra.mxu0 0
  %4736 = vmatpush.bf16.msra.mxu0 0
  %4737 = vmatpush.bf16.msra.mxu0 0
  %4738 = vmatpush.bf16.msra.mxu0 0
  %4739 = vmatpush.bf16.msra.mxu0 0
  %4740 = vmatpush.bf16.msra.mxu0 0
  %4741 = vmatpush.bf16.msra.mxu0 %v4615
  %4742 = vmatmul.bf16.gmra.mxu0 %v4641
  %v4743 = vpop.f32.mrf.mxu0
  %v4744 = vadd.f32 0.0, %v4743
  %v4745 = vpop.f32.mrf.mxu0
  %4746 = vdwg.mxu0
  %4747 = vmatpush.bf16.msra.mxu0 0
  %4748 = vmatpush.bf16.msra.mxu0 0
  %4749 = vmatpush.bf16.msra.mxu0 0
  %4750 = vmatpush.bf16.msra.mxu0 0
  %4751 = vmatpush.bf16.msra.mxu0 0
  %4752 = vmatpush.bf16.msra.mxu0 0
  %4753 = vmatpush.bf16.msra.mxu0 0
  %4754 = vmatpush.bf16.msra.mxu0 %v4616
  %4755 = vmatmul.bf16.gmra.mxu0 %v4641
  %v4756 = vpop.f32.mrf.mxu0
  %v4757 = vadd.f32 0.0, %v4756
  %v4758 = vpop.f32.mrf.mxu0
  %4759 = vdwg.mxu0
  %4760 = vmatpush.bf16.msra.mxu0 0
  %4761 = vmatpush.bf16.msra.mxu0 0
  %4762 = vmatpush.bf16.msra.mxu0 0
  %4763 = vmatpush.bf16.msra.mxu0 0
  %4764 = vmatpush.bf16.msra.mxu0 0
  %4765 = vmatpush.bf16.msra.mxu0 0
  %4766 = vmatpush.bf16.msra.mxu0 0
  %4767 = vmatpush.bf16.msra.mxu0 %v4617
  %4768 = vmatmul.bf16.gmra.mxu0 %v4641
  %v4769 = vpop.f32.mrf.mxu0
  %v4770 = vadd.f32 0.0, %v4769
  %v4771 = vpop.f32.mrf.mxu0
  %4772 = vdwg.mxu0
  %4773 = vmatpush.bf16.msra.mxu0 0
  %4774 = vmatpush.bf16.msra.mxu0 0
  %4775 = vmatpush.bf16.msra.mxu0 0
  %4776 = vmatpush.bf16.msra.mxu0 0
  %4777 = vmatpush.bf16.msra.mxu0 0
  %4778 = vmatpush.bf16.msra.mxu0 0
  %4779 = vmatpush.bf16.msra.mxu0 0
  %4780 = vmatpush.bf16.msra.mxu0 %v4618
  %4781 = vmatmul.bf16.gmra.mxu0 %v4641
  %v4782 = vpop.f32.mrf.mxu0
  %v4783 = vadd.f32 0.0, %v4782
  %v4784 = vpop.f32.mrf.mxu0
  %4785 = vdwg.mxu0
  %4786 = vmatpush.bf16.msra.mxu0 0
  %4787 = vmatpush.bf16.msra.mxu0 0
  %4788 = vmatpush.bf16.msra.mxu0 0
  %4789 = vmatpush.bf16.msra.mxu0 0
  %4790 = vmatpush.bf16.msra.mxu0 0
  %4791 = vmatpush.bf16.msra.mxu0 0
  %4792 = vmatpush.bf16.msra.mxu0 0
  %4793 = vmatpush.bf16.msra.mxu0 %v4619
  %4794 = vmatmul.bf16.gmra.mxu0 %v4641
  %v4795 = vpop.f32.mrf.mxu0
  %v4796 = vadd.f32 0.0, %v4795
  %v4797 = vpop.f32.mrf.mxu0
  %4798 = vdwg.mxu0
  %4799 = vmatpush.bf16.msra.mxu0 0
  %4800 = vmatpush.bf16.msra.mxu0 0
  %4801 = vmatpush.bf16.msra.mxu0 0
  %4802 = vmatpush.bf16.msra.mxu0 0
  %4803 = vmatpush.bf16.msra.mxu0 0
  %4804 = vmatpush.bf16.msra.mxu0 0
  %4805 = vmatpush.bf16.msra.mxu0 0
  %4806 = vmatpush.bf16.msra.mxu0 %v4620
  %4807 = vmatmul.bf16.gmra.mxu0 %v4641
  %v4808 = vpop.f32.mrf.mxu0
  %v4809 = vadd.f32 0.0, %v4808
  %v4810 = vpop.f32.mrf.mxu0
  %4811 = vdwg.mxu0
  %4812 = vmatpush.bf16.msra.mxu0 0
  %4813 = vmatpush.bf16.msra.mxu0 0
  %4814 = vmatpush.bf16.msra.mxu0 0
  %4815 = vmatpush.bf16.msra.mxu0 0
  %4816 = vmatpush.bf16.msra.mxu0 0
  %4817 = vmatpush.bf16.msra.mxu0 0
  %4818 = vmatpush.bf16.msra.mxu0 0
  %4819 = vmatpush.bf16.msra.mxu0 %v4621
  %4820 = vmatmul.bf16.gmra.mxu0 %v4641
  %v4821 = vpop.f32.mrf.mxu0
  %v4822 = vadd.f32 0.0, %v4821
  %v4823 = vpop.f32.mrf.mxu0
  %4824 = vdwg.mxu0
  %4825 = vmatpush.bf16.msra.mxu0 0
  %4826 = vmatpush.bf16.msra.mxu0 0
  %4827 = vmatpush.bf16.msra.mxu0 0
  %4828 = vmatpush.bf16.msra.mxu0 0
  %4829 = vmatpush.bf16.msra.mxu0 0
  %4830 = vmatpush.bf16.msra.mxu0 0
  %4831 = vmatpush.bf16.msra.mxu0 0
  %4832 = vmatpush.bf16.msra.mxu0 %v4622
  %4833 = vmatmul.bf16.gmra.mxu0 %v4641
  %v4834 = vpop.f32.mrf.mxu0
  %v4835 = vadd.f32 0.0, %v4834
  %v4836 = vpop.f32.mrf.mxu0
  %4837 = vdwg.mxu0
  %4838 = vmatpush.bf16.msra.mxu0 0
  %4839 = vmatpush.bf16.msra.mxu0 0
  %4840 = vmatpush.bf16.msra.mxu0 0
  %4841 = vmatpush.bf16.msra.mxu0 0
  %4842 = vmatpush.bf16.msra.mxu0 0
  %4843 = vmatpush.bf16.msra.mxu0 0
  %4844 = vmatpush.bf16.msra.mxu0 0
  %4845 = vmatpush.bf16.msra.mxu0 %v4623
  %4846 = vmatmul.bf16.gmra.mxu0 %v4641
  %v4847 = vpop.f32.mrf.mxu0
  %v4848 = vadd.f32 0.0, %v4847
  %v4849 = vpop.f32.mrf.mxu0
  %4850 = vdwg.mxu0
  %v4851 = vadd.f32 %v4528, %v4653
  %v4852 = vadd.f32 %v4529, %v4666
  %v4853 = vadd.f32 %v4530, %v4679
  %v4854 = vadd.f32 %v4531, %v4692
  %v4855 = vadd.f32 %v4532, %v4705
  %v4856 = vadd.f32 %v4533, %v4718
  %v4857 = vadd.f32 %v4534, %v4731
  %v4858 = vadd.f32 %v4535, %v4744
  %v4859 = vadd.f32 %v4536, %v4757
  %v4860 = vadd.f32 %v4537, %v4770
  %v4861 = vadd.f32 %v4538, %v4783
  %v4862 = vadd.f32 %v4539, %v4796
  %v4863 = vadd.f32 %v4540, %v4809
  %v4864 = vadd.f32 %v4541, %v4822
  %v4865 = vadd.f32 %v4542, %v4835
  %v4866 = vadd.f32 %v4543, %v4848
  %v4867 = vld [vmem:[#allocation2 + $0x680] sm:$0xff]
  %v4868 = vld [vmem:[#allocation2 + $0x688] sm:$0xff]
  %v4869 = vld [vmem:[#allocation2 + $0x690] sm:$0xff]
  %v4870 = vld [vmem:[#allocation2 + $0x698] sm:$0xff]
  %v4871 = vld [vmem:[#allocation2 + $0x6a0] sm:$0xff]
  %v4872 = vld [vmem:[#allocation2 + $0x6a8] sm:$0xff]
  %v4873 = vld [vmem:[#allocation2 + $0x6b0] sm:$0xff]
  %v4874 = vld [vmem:[#allocation2 + $0x6b8] sm:$0xff]
  %v4875 = vld [vmem:[#allocation2 + $0x6c0] sm:$0xff]
  %v4876 = vld [vmem:[#allocation2 + $0x6c8] sm:$0xff]
  %v4877 = vld [vmem:[#allocation2 + $0x6d0] sm:$0xff]
  %v4878 = vld [vmem:[#allocation2 + $0x6d8] sm:$0xff]
  %v4879 = vld [vmem:[#allocation2 + $0x6e0] sm:$0xff]
  %v4880 = vld [vmem:[#allocation2 + $0x6e8] sm:$0xff]
  %v4881 = vld [vmem:[#allocation2 + $0x6f0] sm:$0xff]
  %v4882 = vld [vmem:[#allocation2 + $0x6f8] sm:$0xff]
  %v4899 = vunpack.c.l.b16 %v4867
  %v4900 = vunpack.c.h.b16 %v4867
  %v4901 = vunpack.c.l.b16 %v4868
  %v4902 = vunpack.c.h.b16 %v4868
  %v4903 = vunpack.c.l.b16 %v4869
  %v4904 = vunpack.c.h.b16 %v4869
  %v4905 = vunpack.c.l.b16 %v4870
  %v4906 = vunpack.c.h.b16 %v4870
  %v4907 = vunpack.c.l.b16 %v4871
  %v4908 = vunpack.c.h.b16 %v4871
  %v4909 = vunpack.c.l.b16 %v4872
  %v4910 = vunpack.c.h.b16 %v4872
  %v4911 = vunpack.c.l.b16 %v4873
  %v4912 = vunpack.c.h.b16 %v4873
  %v4913 = vunpack.c.l.b16 %v4874
  %v4914 = vunpack.c.h.b16 %v4874
  %v4915 = vunpack.c.l.b16 %v4875
  %v4916 = vunpack.c.h.b16 %v4875
  %v4917 = vunpack.c.l.b16 %v4876
  %v4918 = vunpack.c.h.b16 %v4876
  %v4919 = vunpack.c.l.b16 %v4877
  %v4920 = vunpack.c.h.b16 %v4877
  %v4921 = vunpack.c.l.b16 %v4878
  %v4922 = vunpack.c.h.b16 %v4878
  %v4923 = vunpack.c.l.b16 %v4879
  %v4924 = vunpack.c.h.b16 %v4879
  %v4925 = vunpack.c.l.b16 %v4880
  %v4926 = vunpack.c.h.b16 %v4880
  %v4927 = vunpack.c.l.b16 %v4881
  %v4928 = vunpack.c.h.b16 %v4881
  %v4929 = vunpack.c.l.b16 %v4882
  %v4930 = vunpack.c.h.b16 %v4882
  %v4931 = vpack.c.b16 %v4915, %v4899
  %v4932 = vpack.c.b16 %v4916, %v4900
  %v4933 = vpack.c.b16 %v4917, %v4901
  %v4934 = vpack.c.b16 %v4918, %v4902
  %v4935 = vpack.c.b16 %v4919, %v4903
  %v4936 = vpack.c.b16 %v4920, %v4904
  %v4937 = vpack.c.b16 %v4921, %v4905
  %v4938 = vpack.c.b16 %v4922, %v4906
  %v4939 = vpack.c.b16 %v4923, %v4907
  %v4940 = vpack.c.b16 %v4924, %v4908
  %v4941 = vpack.c.b16 %v4925, %v4909
  %v4942 = vpack.c.b16 %v4926, %v4910
  %v4943 = vpack.c.b16 %v4927, %v4911
  %v4944 = vpack.c.b16 %v4928, %v4912
  %v4945 = vpack.c.b16 %v4929, %v4913
  %v4946 = vpack.c.b16 %v4930, %v4914
  %v4964 = vsel %vm86, %v693, 0
  %4966 = vmatpush.bf16.msra.mxu0 0
  %4967 = vmatpush.bf16.msra.mxu0 0
  %4968 = vmatpush.bf16.msra.mxu0 0
  %4969 = vmatpush.bf16.msra.mxu0 0
  %4970 = vmatpush.bf16.msra.mxu0 0
  %4971 = vmatpush.bf16.msra.mxu0 0
  %4972 = vmatpush.bf16.msra.mxu0 0
  %4973 = vmatpush.bf16.msra.mxu0 %v4931
  %4974 = vmatmul.bf16.gmra.mxu0 %v4964
  %v4975 = vpop.f32.mrf.mxu0
  %v4976 = vadd.f32 0.0, %v4975
  %v4977 = vpop.f32.mrf.mxu0
  %4978 = vdwg.mxu0
  %4979 = vmatpush.bf16.msra.mxu0 0
  %4980 = vmatpush.bf16.msra.mxu0 0
  %4981 = vmatpush.bf16.msra.mxu0 0
  %4982 = vmatpush.bf16.msra.mxu0 0
  %4983 = vmatpush.bf16.msra.mxu0 0
  %4984 = vmatpush.bf16.msra.mxu0 0
  %4985 = vmatpush.bf16.msra.mxu0 0
  %4986 = vmatpush.bf16.msra.mxu0 %v4932
  %4987 = vmatmul.bf16.gmra.mxu0 %v4964
  %v4988 = vpop.f32.mrf.mxu0
  %v4989 = vadd.f32 0.0, %v4988
  %v4990 = vpop.f32.mrf.mxu0
  %4991 = vdwg.mxu0
  %4992 = vmatpush.bf16.msra.mxu0 0
  %4993 = vmatpush.bf16.msra.mxu0 0
  %4994 = vmatpush.bf16.msra.mxu0 0
  %4995 = vmatpush.bf16.msra.mxu0 0
  %4996 = vmatpush.bf16.msra.mxu0 0
  %4997 = vmatpush.bf16.msra.mxu0 0
  %4998 = vmatpush.bf16.msra.mxu0 0
  %4999 = vmatpush.bf16.msra.mxu0 %v4933
  %5000 = vmatmul.bf16.gmra.mxu0 %v4964
  %v5001 = vpop.f32.mrf.mxu0
  %v5002 = vadd.f32 0.0, %v5001
  %v5003 = vpop.f32.mrf.mxu0
  %5004 = vdwg.mxu0
  %5005 = vmatpush.bf16.msra.mxu0 0
  %5006 = vmatpush.bf16.msra.mxu0 0
  %5007 = vmatpush.bf16.msra.mxu0 0
  %5008 = vmatpush.bf16.msra.mxu0 0
  %5009 = vmatpush.bf16.msra.mxu0 0
  %5010 = vmatpush.bf16.msra.mxu0 0
  %5011 = vmatpush.bf16.msra.mxu0 0
  %5012 = vmatpush.bf16.msra.mxu0 %v4934
  %5013 = vmatmul.bf16.gmra.mxu0 %v4964
  %v5014 = vpop.f32.mrf.mxu0
  %v5015 = vadd.f32 0.0, %v5014
  %v5016 = vpop.f32.mrf.mxu0
  %5017 = vdwg.mxu0
  %5018 = vmatpush.bf16.msra.mxu0 0
  %5019 = vmatpush.bf16.msra.mxu0 0
  %5020 = vmatpush.bf16.msra.mxu0 0
  %5021 = vmatpush.bf16.msra.mxu0 0
  %5022 = vmatpush.bf16.msra.mxu0 0
  %5023 = vmatpush.bf16.msra.mxu0 0
  %5024 = vmatpush.bf16.msra.mxu0 0
  %5025 = vmatpush.bf16.msra.mxu0 %v4935
  %5026 = vmatmul.bf16.gmra.mxu0 %v4964
  %v5027 = vpop.f32.mrf.mxu0
  %v5028 = vadd.f32 0.0, %v5027
  %v5029 = vpop.f32.mrf.mxu0
  %5030 = vdwg.mxu0
  %5031 = vmatpush.bf16.msra.mxu0 0
  %5032 = vmatpush.bf16.msra.mxu0 0
  %5033 = vmatpush.bf16.msra.mxu0 0
  %5034 = vmatpush.bf16.msra.mxu0 0
  %5035 = vmatpush.bf16.msra.mxu0 0
  %5036 = vmatpush.bf16.msra.mxu0 0
  %5037 = vmatpush.bf16.msra.mxu0 0
  %5038 = vmatpush.bf16.msra.mxu0 %v4936
  %5039 = vmatmul.bf16.gmra.mxu0 %v4964
  %v5040 = vpop.f32.mrf.mxu0
  %v5041 = vadd.f32 0.0, %v5040
  %v5042 = vpop.f32.mrf.mxu0
  %5043 = vdwg.mxu0
  %5044 = vmatpush.bf16.msra.mxu0 0
  %5045 = vmatpush.bf16.msra.mxu0 0
  %5046 = vmatpush.bf16.msra.mxu0 0
  %5047 = vmatpush.bf16.msra.mxu0 0
  %5048 = vmatpush.bf16.msra.mxu0 0
  %5049 = vmatpush.bf16.msra.mxu0 0
  %5050 = vmatpush.bf16.msra.mxu0 0
  %5051 = vmatpush.bf16.msra.mxu0 %v4937
  %5052 = vmatmul.bf16.gmra.mxu0 %v4964
  %v5053 = vpop.f32.mrf.mxu0
  %v5054 = vadd.f32 0.0, %v5053
  %v5055 = vpop.f32.mrf.mxu0
  %5056 = vdwg.mxu0
  %5057 = vmatpush.bf16.msra.mxu0 0
  %5058 = vmatpush.bf16.msra.mxu0 0
  %5059 = vmatpush.bf16.msra.mxu0 0
  %5060 = vmatpush.bf16.msra.mxu0 0
  %5061 = vmatpush.bf16.msra.mxu0 0
  %5062 = vmatpush.bf16.msra.mxu0 0
  %5063 = vmatpush.bf16.msra.mxu0 0
  %5064 = vmatpush.bf16.msra.mxu0 %v4938
  %5065 = vmatmul.bf16.gmra.mxu0 %v4964
  %v5066 = vpop.f32.mrf.mxu0
  %v5067 = vadd.f32 0.0, %v5066
  %v5068 = vpop.f32.mrf.mxu0
  %5069 = vdwg.mxu0
  %5070 = vmatpush.bf16.msra.mxu0 0
  %5071 = vmatpush.bf16.msra.mxu0 0
  %5072 = vmatpush.bf16.msra.mxu0 0
  %5073 = vmatpush.bf16.msra.mxu0 0
  %5074 = vmatpush.bf16.msra.mxu0 0
  %5075 = vmatpush.bf16.msra.mxu0 0
  %5076 = vmatpush.bf16.msra.mxu0 0
  %5077 = vmatpush.bf16.msra.mxu0 %v4939
  %5078 = vmatmul.bf16.gmra.mxu0 %v4964
  %v5079 = vpop.f32.mrf.mxu0
  %v5080 = vadd.f32 0.0, %v5079
  %v5081 = vpop.f32.mrf.mxu0
  %5082 = vdwg.mxu0
  %5083 = vmatpush.bf16.msra.mxu0 0
  %5084 = vmatpush.bf16.msra.mxu0 0
  %5085 = vmatpush.bf16.msra.mxu0 0
  %5086 = vmatpush.bf16.msra.mxu0 0
  %5087 = vmatpush.bf16.msra.mxu0 0
  %5088 = vmatpush.bf16.msra.mxu0 0
  %5089 = vmatpush.bf16.msra.mxu0 0
  %5090 = vmatpush.bf16.msra.mxu0 %v4940
  %5091 = vmatmul.bf16.gmra.mxu0 %v4964
  %v5092 = vpop.f32.mrf.mxu0
  %v5093 = vadd.f32 0.0, %v5092
  %v5094 = vpop.f32.mrf.mxu0
  %5095 = vdwg.mxu0
  %5096 = vmatpush.bf16.msra.mxu0 0
  %5097 = vmatpush.bf16.msra.mxu0 0
  %5098 = vmatpush.bf16.msra.mxu0 0
  %5099 = vmatpush.bf16.msra.mxu0 0
  %5100 = vmatpush.bf16.msra.mxu0 0
  %5101 = vmatpush.bf16.msra.mxu0 0
  %5102 = vmatpush.bf16.msra.mxu0 0
  %5103 = vmatpush.bf16.msra.mxu0 %v4941
  %5104 = vmatmul.bf16.gmra.mxu0 %v4964
  %v5105 = vpop.f32.mrf.mxu0
  %v5106 = vadd.f32 0.0, %v5105
  %v5107 = vpop.f32.mrf.mxu0
  %5108 = vdwg.mxu0
  %5109 = vmatpush.bf16.msra.mxu0 0
  %5110 = vmatpush.bf16.msra.mxu0 0
  %5111 = vmatpush.bf16.msra.mxu0 0
  %5112 = vmatpush.bf16.msra.mxu0 0
  %5113 = vmatpush.bf16.msra.mxu0 0
  %5114 = vmatpush.bf16.msra.mxu0 0
  %5115 = vmatpush.bf16.msra.mxu0 0
  %5116 = vmatpush.bf16.msra.mxu0 %v4942
  %5117 = vmatmul.bf16.gmra.mxu0 %v4964
  %v5118 = vpop.f32.mrf.mxu0
  %v5119 = vadd.f32 0.0, %v5118
  %v5120 = vpop.f32.mrf.mxu0
  %5121 = vdwg.mxu0
  %5122 = vmatpush.bf16.msra.mxu0 0
  %5123 = vmatpush.bf16.msra.mxu0 0
  %5124 = vmatpush.bf16.msra.mxu0 0
  %5125 = vmatpush.bf16.msra.mxu0 0
  %5126 = vmatpush.bf16.msra.mxu0 0
  %5127 = vmatpush.bf16.msra.mxu0 0
  %5128 = vmatpush.bf16.msra.mxu0 0
  %5129 = vmatpush.bf16.msra.mxu0 %v4943
  %5130 = vmatmul.bf16.gmra.mxu0 %v4964
  %v5131 = vpop.f32.mrf.mxu0
  %v5132 = vadd.f32 0.0, %v5131
  %v5133 = vpop.f32.mrf.mxu0
  %5134 = vdwg.mxu0
  %5135 = vmatpush.bf16.msra.mxu0 0
  %5136 = vmatpush.bf16.msra.mxu0 0
  %5137 = vmatpush.bf16.msra.mxu0 0
  %5138 = vmatpush.bf16.msra.mxu0 0
  %5139 = vmatpush.bf16.msra.mxu0 0
  %5140 = vmatpush.bf16.msra.mxu0 0
  %5141 = vmatpush.bf16.msra.mxu0 0
  %5142 = vmatpush.bf16.msra.mxu0 %v4944
  %5143 = vmatmul.bf16.gmra.mxu0 %v4964
  %v5144 = vpop.f32.mrf.mxu0
  %v5145 = vadd.f32 0.0, %v5144
  %v5146 = vpop.f32.mrf.mxu0
  %5147 = vdwg.mxu0
  %5148 = vmatpush.bf16.msra.mxu0 0
  %5149 = vmatpush.bf16.msra.mxu0 0
  %5150 = vmatpush.bf16.msra.mxu0 0
  %5151 = vmatpush.bf16.msra.mxu0 0
  %5152 = vmatpush.bf16.msra.mxu0 0
  %5153 = vmatpush.bf16.msra.mxu0 0
  %5154 = vmatpush.bf16.msra.mxu0 0
  %5155 = vmatpush.bf16.msra.mxu0 %v4945
  %5156 = vmatmul.bf16.gmra.mxu0 %v4964
  %v5157 = vpop.f32.mrf.mxu0
  %v5158 = vadd.f32 0.0, %v5157
  %v5159 = vpop.f32.mrf.mxu0
  %5160 = vdwg.mxu0
  %5161 = vmatpush.bf16.msra.mxu0 0
  %5162 = vmatpush.bf16.msra.mxu0 0
  %5163 = vmatpush.bf16.msra.mxu0 0
  %5164 = vmatpush.bf16.msra.mxu0 0
  %5165 = vmatpush.bf16.msra.mxu0 0
  %5166 = vmatpush.bf16.msra.mxu0 0
  %5167 = vmatpush.bf16.msra.mxu0 0
  %5168 = vmatpush.bf16.msra.mxu0 %v4946
  %5169 = vmatmul.bf16.gmra.mxu0 %v4964
  %v5170 = vpop.f32.mrf.mxu0
  %v5171 = vadd.f32 0.0, %v5170
  %v5172 = vpop.f32.mrf.mxu0
  %5173 = vdwg.mxu0
  %v5174 = vadd.f32 %v4851, %v4976
  %v5175 = vadd.f32 %v4852, %v4989
  %v5176 = vadd.f32 %v4853, %v5002
  %v5177 = vadd.f32 %v4854, %v5015
  %v5178 = vadd.f32 %v4855, %v5028
  %v5179 = vadd.f32 %v4856, %v5041
  %v5180 = vadd.f32 %v4857, %v5054
  %v5181 = vadd.f32 %v4858, %v5067
  %v5182 = vadd.f32 %v4859, %v5080
  %v5183 = vadd.f32 %v4860, %v5093
  %v5184 = vadd.f32 %v4861, %v5106
  %v5185 = vadd.f32 %v4862, %v5119
  %v5186 = vadd.f32 %v4863, %v5132
  %v5187 = vadd.f32 %v4864, %v5145
  %v5188 = vadd.f32 %v4865, %v5158
  %v5189 = vadd.f32 %v4866, %v5171
  %v5190 = vld [vmem:[#allocation2 + $0x700] sm:$0xff]
  %v5191 = vld [vmem:[#allocation2 + $0x708] sm:$0xff]
  %v5192 = vld [vmem:[#allocation2 + $0x710] sm:$0xff]
  %v5193 = vld [vmem:[#allocation2 + $0x718] sm:$0xff]
  %v5194 = vld [vmem:[#allocation2 + $0x720] sm:$0xff]
  %v5195 = vld [vmem:[#allocation2 + $0x728] sm:$0xff]
  %v5196 = vld [vmem:[#allocation2 + $0x730] sm:$0xff]
  %v5197 = vld [vmem:[#allocation2 + $0x738] sm:$0xff]
  %v5198 = vld [vmem:[#allocation2 + $0x740] sm:$0xff]
  %v5199 = vld [vmem:[#allocation2 + $0x748] sm:$0xff]
  %v5200 = vld [vmem:[#allocation2 + $0x750] sm:$0xff]
  %v5201 = vld [vmem:[#allocation2 + $0x758] sm:$0xff]
  %v5202 = vld [vmem:[#allocation2 + $0x760] sm:$0xff]
  %v5203 = vld [vmem:[#allocation2 + $0x768] sm:$0xff]
  %v5204 = vld [vmem:[#allocation2 + $0x770] sm:$0xff]
  %v5205 = vld [vmem:[#allocation2 + $0x778] sm:$0xff]
  %v5222 = vunpack.c.l.b16 %v5190
  %v5223 = vunpack.c.h.b16 %v5190
  %v5224 = vunpack.c.l.b16 %v5191
  %v5225 = vunpack.c.h.b16 %v5191
  %v5226 = vunpack.c.l.b16 %v5192
  %v5227 = vunpack.c.h.b16 %v5192
  %v5228 = vunpack.c.l.b16 %v5193
  %v5229 = vunpack.c.h.b16 %v5193
  %v5230 = vunpack.c.l.b16 %v5194
  %v5231 = vunpack.c.h.b16 %v5194
  %v5232 = vunpack.c.l.b16 %v5195
  %v5233 = vunpack.c.h.b16 %v5195
  %v5234 = vunpack.c.l.b16 %v5196
  %v5235 = vunpack.c.h.b16 %v5196
  %v5236 = vunpack.c.l.b16 %v5197
  %v5237 = vunpack.c.h.b16 %v5197
  %v5238 = vunpack.c.l.b16 %v5198
  %v5239 = vunpack.c.h.b16 %v5198
  %v5240 = vunpack.c.l.b16 %v5199
  %v5241 = vunpack.c.h.b16 %v5199
  %v5242 = vunpack.c.l.b16 %v5200
  %v5243 = vunpack.c.h.b16 %v5200
  %v5244 = vunpack.c.l.b16 %v5201
  %v5245 = vunpack.c.h.b16 %v5201
  %v5246 = vunpack.c.l.b16 %v5202
  %v5247 = vunpack.c.h.b16 %v5202
  %v5248 = vunpack.c.l.b16 %v5203
  %v5249 = vunpack.c.h.b16 %v5203
  %v5250 = vunpack.c.l.b16 %v5204
  %v5251 = vunpack.c.h.b16 %v5204
  %v5252 = vunpack.c.l.b16 %v5205
  %v5253 = vunpack.c.h.b16 %v5205
  %v5254 = vpack.c.b16 %v5238, %v5222
  %v5255 = vpack.c.b16 %v5239, %v5223
  %v5256 = vpack.c.b16 %v5240, %v5224
  %v5257 = vpack.c.b16 %v5241, %v5225
  %v5258 = vpack.c.b16 %v5242, %v5226
  %v5259 = vpack.c.b16 %v5243, %v5227
  %v5260 = vpack.c.b16 %v5244, %v5228
  %v5261 = vpack.c.b16 %v5245, %v5229
  %v5262 = vpack.c.b16 %v5246, %v5230
  %v5263 = vpack.c.b16 %v5247, %v5231
  %v5264 = vpack.c.b16 %v5248, %v5232
  %v5265 = vpack.c.b16 %v5249, %v5233
  %v5266 = vpack.c.b16 %v5250, %v5234
  %v5267 = vpack.c.b16 %v5251, %v5235
  %v5268 = vpack.c.b16 %v5252, %v5236
  %v5269 = vpack.c.b16 %v5253, %v5237
  %v5287 = vsel %vm86, %v694, 0
  %5289 = vmatpush.bf16.msra.mxu0 0
  %5290 = vmatpush.bf16.msra.mxu0 0
  %5291 = vmatpush.bf16.msra.mxu0 0
  %5292 = vmatpush.bf16.msra.mxu0 0
  %5293 = vmatpush.bf16.msra.mxu0 0
  %5294 = vmatpush.bf16.msra.mxu0 0
  %5295 = vmatpush.bf16.msra.mxu0 0
  %5296 = vmatpush.bf16.msra.mxu0 %v5254
  %5297 = vmatmul.bf16.gmra.mxu0 %v5287
  %v5298 = vpop.f32.mrf.mxu0
  %v5299 = vadd.f32 0.0, %v5298
  %v5300 = vpop.f32.mrf.mxu0
  %5301 = vdwg.mxu0
  %5302 = vmatpush.bf16.msra.mxu0 0
  %5303 = vmatpush.bf16.msra.mxu0 0
  %5304 = vmatpush.bf16.msra.mxu0 0
  %5305 = vmatpush.bf16.msra.mxu0 0
  %5306 = vmatpush.bf16.msra.mxu0 0
  %5307 = vmatpush.bf16.msra.mxu0 0
  %5308 = vmatpush.bf16.msra.mxu0 0
  %5309 = vmatpush.bf16.msra.mxu0 %v5255
  %5310 = vmatmul.bf16.gmra.mxu0 %v5287
  %v5311 = vpop.f32.mrf.mxu0
  %v5312 = vadd.f32 0.0, %v5311
  %v5313 = vpop.f32.mrf.mxu0
  %5314 = vdwg.mxu0
  %5315 = vmatpush.bf16.msra.mxu0 0
  %5316 = vmatpush.bf16.msra.mxu0 0
  %5317 = vmatpush.bf16.msra.mxu0 0
  %5318 = vmatpush.bf16.msra.mxu0 0
  %5319 = vmatpush.bf16.msra.mxu0 0
  %5320 = vmatpush.bf16.msra.mxu0 0
  %5321 = vmatpush.bf16.msra.mxu0 0
  %5322 = vmatpush.bf16.msra.mxu0 %v5256
  %5323 = vmatmul.bf16.gmra.mxu0 %v5287
  %v5324 = vpop.f32.mrf.mxu0
  %v5325 = vadd.f32 0.0, %v5324
  %v5326 = vpop.f32.mrf.mxu0
  %5327 = vdwg.mxu0
  %5328 = vmatpush.bf16.msra.mxu0 0
  %5329 = vmatpush.bf16.msra.mxu0 0
  %5330 = vmatpush.bf16.msra.mxu0 0
  %5331 = vmatpush.bf16.msra.mxu0 0
  %5332 = vmatpush.bf16.msra.mxu0 0
  %5333 = vmatpush.bf16.msra.mxu0 0
  %5334 = vmatpush.bf16.msra.mxu0 0
  %5335 = vmatpush.bf16.msra.mxu0 %v5257
  %5336 = vmatmul.bf16.gmra.mxu0 %v5287
  %v5337 = vpop.f32.mrf.mxu0
  %v5338 = vadd.f32 0.0, %v5337
  %v5339 = vpop.f32.mrf.mxu0
  %5340 = vdwg.mxu0
  %5341 = vmatpush.bf16.msra.mxu0 0
  %5342 = vmatpush.bf16.msra.mxu0 0
  %5343 = vmatpush.bf16.msra.mxu0 0
  %5344 = vmatpush.bf16.msra.mxu0 0
  %5345 = vmatpush.bf16.msra.mxu0 0
  %5346 = vmatpush.bf16.msra.mxu0 0
  %5347 = vmatpush.bf16.msra.mxu0 0
  %5348 = vmatpush.bf16.msra.mxu0 %v5258
  %5349 = vmatmul.bf16.gmra.mxu0 %v5287
  %v5350 = vpop.f32.mrf.mxu0
  %v5351 = vadd.f32 0.0, %v5350
  %v5352 = vpop.f32.mrf.mxu0
  %5353 = vdwg.mxu0
  %5354 = vmatpush.bf16.msra.mxu0 0
  %5355 = vmatpush.bf16.msra.mxu0 0
  %5356 = vmatpush.bf16.msra.mxu0 0
  %5357 = vmatpush.bf16.msra.mxu0 0
  %5358 = vmatpush.bf16.msra.mxu0 0
  %5359 = vmatpush.bf16.msra.mxu0 0
  %5360 = vmatpush.bf16.msra.mxu0 0
  %5361 = vmatpush.bf16.msra.mxu0 %v5259
  %5362 = vmatmul.bf16.gmra.mxu0 %v5287
  %v5363 = vpop.f32.mrf.mxu0
  %v5364 = vadd.f32 0.0, %v5363
  %v5365 = vpop.f32.mrf.mxu0
  %5366 = vdwg.mxu0
  %5367 = vmatpush.bf16.msra.mxu0 0
  %5368 = vmatpush.bf16.msra.mxu0 0
  %5369 = vmatpush.bf16.msra.mxu0 0
  %5370 = vmatpush.bf16.msra.mxu0 0
  %5371 = vmatpush.bf16.msra.mxu0 0
  %5372 = vmatpush.bf16.msra.mxu0 0
  %5373 = vmatpush.bf16.msra.mxu0 0
  %5374 = vmatpush.bf16.msra.mxu0 %v5260
  %5375 = vmatmul.bf16.gmra.mxu0 %v5287
  %v5376 = vpop.f32.mrf.mxu0
  %v5377 = vadd.f32 0.0, %v5376
  %v5378 = vpop.f32.mrf.mxu0
  %5379 = vdwg.mxu0
  %5380 = vmatpush.bf16.msra.mxu0 0
  %5381 = vmatpush.bf16.msra.mxu0 0
  %5382 = vmatpush.bf16.msra.mxu0 0
  %5383 = vmatpush.bf16.msra.mxu0 0
  %5384 = vmatpush.bf16.msra.mxu0 0
  %5385 = vmatpush.bf16.msra.mxu0 0
  %5386 = vmatpush.bf16.msra.mxu0 0
  %5387 = vmatpush.bf16.msra.mxu0 %v5261
  %5388 = vmatmul.bf16.gmra.mxu0 %v5287
  %v5389 = vpop.f32.mrf.mxu0
  %v5390 = vadd.f32 0.0, %v5389
  %v5391 = vpop.f32.mrf.mxu0
  %5392 = vdwg.mxu0
  %5393 = vmatpush.bf16.msra.mxu0 0
  %5394 = vmatpush.bf16.msra.mxu0 0
  %5395 = vmatpush.bf16.msra.mxu0 0
  %5396 = vmatpush.bf16.msra.mxu0 0
  %5397 = vmatpush.bf16.msra.mxu0 0
  %5398 = vmatpush.bf16.msra.mxu0 0
  %5399 = vmatpush.bf16.msra.mxu0 0
  %5400 = vmatpush.bf16.msra.mxu0 %v5262
  %5401 = vmatmul.bf16.gmra.mxu0 %v5287
  %v5402 = vpop.f32.mrf.mxu0
  %v5403 = vadd.f32 0.0, %v5402
  %v5404 = vpop.f32.mrf.mxu0
  %5405 = vdwg.mxu0
  %5406 = vmatpush.bf16.msra.mxu0 0
  %5407 = vmatpush.bf16.msra.mxu0 0
  %5408 = vmatpush.bf16.msra.mxu0 0
  %5409 = vmatpush.bf16.msra.mxu0 0
  %5410 = vmatpush.bf16.msra.mxu0 0
  %5411 = vmatpush.bf16.msra.mxu0 0
  %5412 = vmatpush.bf16.msra.mxu0 0
  %5413 = vmatpush.bf16.msra.mxu0 %v5263
  %5414 = vmatmul.bf16.gmra.mxu0 %v5287
  %v5415 = vpop.f32.mrf.mxu0
  %v5416 = vadd.f32 0.0, %v5415
  %v5417 = vpop.f32.mrf.mxu0
  %5418 = vdwg.mxu0
  %5419 = vmatpush.bf16.msra.mxu0 0
  %5420 = vmatpush.bf16.msra.mxu0 0
  %5421 = vmatpush.bf16.msra.mxu0 0
  %5422 = vmatpush.bf16.msra.mxu0 0
  %5423 = vmatpush.bf16.msra.mxu0 0
  %5424 = vmatpush.bf16.msra.mxu0 0
  %5425 = vmatpush.bf16.msra.mxu0 0
  %5426 = vmatpush.bf16.msra.mxu0 %v5264
  %5427 = vmatmul.bf16.gmra.mxu0 %v5287
  %v5428 = vpop.f32.mrf.mxu0
  %v5429 = vadd.f32 0.0, %v5428
  %v5430 = vpop.f32.mrf.mxu0
  %5431 = vdwg.mxu0
  %5432 = vmatpush.bf16.msra.mxu0 0
  %5433 = vmatpush.bf16.msra.mxu0 0
  %5434 = vmatpush.bf16.msra.mxu0 0
  %5435 = vmatpush.bf16.msra.mxu0 0
  %5436 = vmatpush.bf16.msra.mxu0 0
  %5437 = vmatpush.bf16.msra.mxu0 0
  %5438 = vmatpush.bf16.msra.mxu0 0
  %5439 = vmatpush.bf16.msra.mxu0 %v5265
  %5440 = vmatmul.bf16.gmra.mxu0 %v5287
  %v5441 = vpop.f32.mrf.mxu0
  %v5442 = vadd.f32 0.0, %v5441
  %v5443 = vpop.f32.mrf.mxu0
  %5444 = vdwg.mxu0
  %5445 = vmatpush.bf16.msra.mxu0 0
  %5446 = vmatpush.bf16.msra.mxu0 0
  %5447 = vmatpush.bf16.msra.mxu0 0
  %5448 = vmatpush.bf16.msra.mxu0 0
  %5449 = vmatpush.bf16.msra.mxu0 0
  %5450 = vmatpush.bf16.msra.mxu0 0
  %5451 = vmatpush.bf16.msra.mxu0 0
  %5452 = vmatpush.bf16.msra.mxu0 %v5266
  %5453 = vmatmul.bf16.gmra.mxu0 %v5287
  %v5454 = vpop.f32.mrf.mxu0
  %v5455 = vadd.f32 0.0, %v5454
  %v5456 = vpop.f32.mrf.mxu0
  %5457 = vdwg.mxu0
  %5458 = vmatpush.bf16.msra.mxu0 0
  %5459 = vmatpush.bf16.msra.mxu0 0
  %5460 = vmatpush.bf16.msra.mxu0 0
  %5461 = vmatpush.bf16.msra.mxu0 0
  %5462 = vmatpush.bf16.msra.mxu0 0
  %5463 = vmatpush.bf16.msra.mxu0 0
  %5464 = vmatpush.bf16.msra.mxu0 0
  %5465 = vmatpush.bf16.msra.mxu0 %v5267
  %5466 = vmatmul.bf16.gmra.mxu0 %v5287
  %v5467 = vpop.f32.mrf.mxu0
  %v5468 = vadd.f32 0.0, %v5467
  %v5469 = vpop.f32.mrf.mxu0
  %5470 = vdwg.mxu0
  %5471 = vmatpush.bf16.msra.mxu0 0
  %5472 = vmatpush.bf16.msra.mxu0 0
  %5473 = vmatpush.bf16.msra.mxu0 0
  %5474 = vmatpush.bf16.msra.mxu0 0
  %5475 = vmatpush.bf16.msra.mxu0 0
  %5476 = vmatpush.bf16.msra.mxu0 0
  %5477 = vmatpush.bf16.msra.mxu0 0
  %5478 = vmatpush.bf16.msra.mxu0 %v5268
  %5479 = vmatmul.bf16.gmra.mxu0 %v5287
  %v5480 = vpop.f32.mrf.mxu0
  %v5481 = vadd.f32 0.0, %v5480
  %v5482 = vpop.f32.mrf.mxu0
  %5483 = vdwg.mxu0
  %5484 = vmatpush.bf16.msra.mxu0 0
  %5485 = vmatpush.bf16.msra.mxu0 0
  %5486 = vmatpush.bf16.msra.mxu0 0
  %5487 = vmatpush.bf16.msra.mxu0 0
  %5488 = vmatpush.bf16.msra.mxu0 0
  %5489 = vmatpush.bf16.msra.mxu0 0
  %5490 = vmatpush.bf16.msra.mxu0 0
  %5491 = vmatpush.bf16.msra.mxu0 %v5269
  %5492 = vmatmul.bf16.gmra.mxu0 %v5287
  %v5493 = vpop.f32.mrf.mxu0
  %v5494 = vadd.f32 0.0, %v5493
  %v5495 = vpop.f32.mrf.mxu0
  %5496 = vdwg.mxu0
  %v5497 = vadd.f32 %v5174, %v5299
  %v5498 = vadd.f32 %v5175, %v5312
  %v5499 = vadd.f32 %v5176, %v5325
  %v5500 = vadd.f32 %v5177, %v5338
  %v5501 = vadd.f32 %v5178, %v5351
  %v5502 = vadd.f32 %v5179, %v5364
  %v5503 = vadd.f32 %v5180, %v5377
  %v5504 = vadd.f32 %v5181, %v5390
  %v5505 = vadd.f32 %v5182, %v5403
  %v5506 = vadd.f32 %v5183, %v5416
  %v5507 = vadd.f32 %v5184, %v5429
  %v5508 = vadd.f32 %v5185, %v5442
  %v5509 = vadd.f32 %v5186, %v5455
  %v5510 = vadd.f32 %v5187, %v5468
  %v5511 = vadd.f32 %v5188, %v5481
  %v5512 = vadd.f32 %v5189, %v5494
  %v5513 = vld [vmem:[#allocation2 + $0x780] sm:$0xff]
  %v5514 = vld [vmem:[#allocation2 + $0x788] sm:$0xff]
  %v5515 = vld [vmem:[#allocation2 + $0x790] sm:$0xff]
  %v5516 = vld [vmem:[#allocation2 + $0x798] sm:$0xff]
  %v5517 = vld [vmem:[#allocation2 + $0x7a0] sm:$0xff]
  %v5518 = vld [vmem:[#allocation2 + $0x7a8] sm:$0xff]
  %v5519 = vld [vmem:[#allocation2 + $0x7b0] sm:$0xff]
  %v5520 = vld [vmem:[#allocation2 + $0x7b8] sm:$0xff]
  %v5521 = vld [vmem:[#allocation2 + $0x7c0] sm:$0xff]
  %v5522 = vld [vmem:[#allocation2 + $0x7c8] sm:$0xff]
  %v5523 = vld [vmem:[#allocation2 + $0x7d0] sm:$0xff]
  %v5524 = vld [vmem:[#allocation2 + $0x7d8] sm:$0xff]
  %v5525 = vld [vmem:[#allocation2 + $0x7e0] sm:$0xff]
  %v5526 = vld [vmem:[#allocation2 + $0x7e8] sm:$0xff]
  %v5527 = vld [vmem:[#allocation2 + $0x7f0] sm:$0xff]
  %v5528 = vld [vmem:[#allocation2 + $0x7f8] sm:$0xff]
  %v5545 = vunpack.c.l.b16 %v5513
  %v5546 = vunpack.c.h.b16 %v5513
  %v5547 = vunpack.c.l.b16 %v5514
  %v5548 = vunpack.c.h.b16 %v5514
  %v5549 = vunpack.c.l.b16 %v5515
  %v5550 = vunpack.c.h.b16 %v5515
  %v5551 = vunpack.c.l.b16 %v5516
  %v5552 = vunpack.c.h.b16 %v5516
  %v5553 = vunpack.c.l.b16 %v5517
  %v5554 = vunpack.c.h.b16 %v5517
  %v5555 = vunpack.c.l.b16 %v5518
  %v5556 = vunpack.c.h.b16 %v5518
  %v5557 = vunpack.c.l.b16 %v5519
  %v5558 = vunpack.c.h.b16 %v5519
  %v5559 = vunpack.c.l.b16 %v5520
  %v5560 = vunpack.c.h.b16 %v5520
  %v5561 = vunpack.c.l.b16 %v5521
  %v5562 = vunpack.c.h.b16 %v5521
  %v5563 = vunpack.c.l.b16 %v5522
  %v5564 = vunpack.c.h.b16 %v5522
  %v5565 = vunpack.c.l.b16 %v5523
  %v5566 = vunpack.c.h.b16 %v5523
  %v5567 = vunpack.c.l.b16 %v5524
  %v5568 = vunpack.c.h.b16 %v5524
  %v5569 = vunpack.c.l.b16 %v5525
  %v5570 = vunpack.c.h.b16 %v5525
  %v5571 = vunpack.c.l.b16 %v5526
  %v5572 = vunpack.c.h.b16 %v5526
  %v5573 = vunpack.c.l.b16 %v5527
  %v5574 = vunpack.c.h.b16 %v5527
  %v5575 = vunpack.c.l.b16 %v5528
  %v5576 = vunpack.c.h.b16 %v5528
  %v5577 = vpack.c.b16 %v5561, %v5545
  %v5578 = vpack.c.b16 %v5562, %v5546
  %v5579 = vpack.c.b16 %v5563, %v5547
  %v5580 = vpack.c.b16 %v5564, %v5548
  %v5581 = vpack.c.b16 %v5565, %v5549
  %v5582 = vpack.c.b16 %v5566, %v5550
  %v5583 = vpack.c.b16 %v5567, %v5551
  %v5584 = vpack.c.b16 %v5568, %v5552
  %v5585 = vpack.c.b16 %v5569, %v5553
  %v5586 = vpack.c.b16 %v5570, %v5554
  %v5587 = vpack.c.b16 %v5571, %v5555
  %v5588 = vpack.c.b16 %v5572, %v5556
  %v5589 = vpack.c.b16 %v5573, %v5557
  %v5590 = vpack.c.b16 %v5574, %v5558
  %v5591 = vpack.c.b16 %v5575, %v5559
  %v5592 = vpack.c.b16 %v5576, %v5560
  %v5610 = vsel %vm86, %v695, 0
  %5612 = vmatpush.bf16.msra.mxu0 0
  %5613 = vmatpush.bf16.msra.mxu0 0
  %5614 = vmatpush.bf16.msra.mxu0 0
  %5615 = vmatpush.bf16.msra.mxu0 0
  %5616 = vmatpush.bf16.msra.mxu0 0
  %5617 = vmatpush.bf16.msra.mxu0 0
  %5618 = vmatpush.bf16.msra.mxu0 0
  %5619 = vmatpush.bf16.msra.mxu0 %v5577
  %5620 = vmatmul.bf16.gmra.mxu0 %v5610
  %v5621 = vpop.f32.mrf.mxu0
  %v5622 = vadd.f32 0.0, %v5621
  %v5623 = vpop.f32.mrf.mxu0
  %5624 = vdwg.mxu0
  %5625 = vmatpush.bf16.msra.mxu0 0
  %5626 = vmatpush.bf16.msra.mxu0 0
  %5627 = vmatpush.bf16.msra.mxu0 0
  %5628 = vmatpush.bf16.msra.mxu0 0
  %5629 = vmatpush.bf16.msra.mxu0 0
  %5630 = vmatpush.bf16.msra.mxu0 0
  %5631 = vmatpush.bf16.msra.mxu0 0
  %5632 = vmatpush.bf16.msra.mxu0 %v5578
  %5633 = vmatmul.bf16.gmra.mxu0 %v5610
  %v5634 = vpop.f32.mrf.mxu0
  %v5635 = vadd.f32 0.0, %v5634
  %v5636 = vpop.f32.mrf.mxu0
  %5637 = vdwg.mxu0
  %5638 = vmatpush.bf16.msra.mxu0 0
  %5639 = vmatpush.bf16.msra.mxu0 0
  %5640 = vmatpush.bf16.msra.mxu0 0
  %5641 = vmatpush.bf16.msra.mxu0 0
  %5642 = vmatpush.bf16.msra.mxu0 0
  %5643 = vmatpush.bf16.msra.mxu0 0
  %5644 = vmatpush.bf16.msra.mxu0 0
  %5645 = vmatpush.bf16.msra.mxu0 %v5579
  %5646 = vmatmul.bf16.gmra.mxu0 %v5610
  %v5647 = vpop.f32.mrf.mxu0
  %v5648 = vadd.f32 0.0, %v5647
  %v5649 = vpop.f32.mrf.mxu0
  %5650 = vdwg.mxu0
  %5651 = vmatpush.bf16.msra.mxu0 0
  %5652 = vmatpush.bf16.msra.mxu0 0
  %5653 = vmatpush.bf16.msra.mxu0 0
  %5654 = vmatpush.bf16.msra.mxu0 0
  %5655 = vmatpush.bf16.msra.mxu0 0
  %5656 = vmatpush.bf16.msra.mxu0 0
  %5657 = vmatpush.bf16.msra.mxu0 0
  %5658 = vmatpush.bf16.msra.mxu0 %v5580
  %5659 = vmatmul.bf16.gmra.mxu0 %v5610
  %v5660 = vpop.f32.mrf.mxu0
  %v5661 = vadd.f32 0.0, %v5660
  %v5662 = vpop.f32.mrf.mxu0
  %5663 = vdwg.mxu0
  %5664 = vmatpush.bf16.msra.mxu0 0
  %5665 = vmatpush.bf16.msra.mxu0 0
  %5666 = vmatpush.bf16.msra.mxu0 0
  %5667 = vmatpush.bf16.msra.mxu0 0
  %5668 = vmatpush.bf16.msra.mxu0 0
  %5669 = vmatpush.bf16.msra.mxu0 0
  %5670 = vmatpush.bf16.msra.mxu0 0
  %5671 = vmatpush.bf16.msra.mxu0 %v5581
  %5672 = vmatmul.bf16.gmra.mxu0 %v5610
  %v5673 = vpop.f32.mrf.mxu0
  %v5674 = vadd.f32 0.0, %v5673
  %v5675 = vpop.f32.mrf.mxu0
  %5676 = vdwg.mxu0
  %5677 = vmatpush.bf16.msra.mxu0 0
  %5678 = vmatpush.bf16.msra.mxu0 0
  %5679 = vmatpush.bf16.msra.mxu0 0
  %5680 = vmatpush.bf16.msra.mxu0 0
  %5681 = vmatpush.bf16.msra.mxu0 0
  %5682 = vmatpush.bf16.msra.mxu0 0
  %5683 = vmatpush.bf16.msra.mxu0 0
  %5684 = vmatpush.bf16.msra.mxu0 %v5582
  %5685 = vmatmul.bf16.gmra.mxu0 %v5610
  %v5686 = vpop.f32.mrf.mxu0
  %v5687 = vadd.f32 0.0, %v5686
  %v5688 = vpop.f32.mrf.mxu0
  %5689 = vdwg.mxu0
  %5690 = vmatpush.bf16.msra.mxu0 0
  %5691 = vmatpush.bf16.msra.mxu0 0
  %5692 = vmatpush.bf16.msra.mxu0 0
  %5693 = vmatpush.bf16.msra.mxu0 0
  %5694 = vmatpush.bf16.msra.mxu0 0
  %5695 = vmatpush.bf16.msra.mxu0 0
  %5696 = vmatpush.bf16.msra.mxu0 0
  %5697 = vmatpush.bf16.msra.mxu0 %v5583
  %5698 = vmatmul.bf16.gmra.mxu0 %v5610
  %v5699 = vpop.f32.mrf.mxu0
  %v5700 = vadd.f32 0.0, %v5699
  %v5701 = vpop.f32.mrf.mxu0
  %5702 = vdwg.mxu0
  %5703 = vmatpush.bf16.msra.mxu0 0
  %5704 = vmatpush.bf16.msra.mxu0 0
  %5705 = vmatpush.bf16.msra.mxu0 0
  %5706 = vmatpush.bf16.msra.mxu0 0
  %5707 = vmatpush.bf16.msra.mxu0 0
  %5708 = vmatpush.bf16.msra.mxu0 0
  %5709 = vmatpush.bf16.msra.mxu0 0
  %5710 = vmatpush.bf16.msra.mxu0 %v5584
  %5711 = vmatmul.bf16.gmra.mxu0 %v5610
  %v5712 = vpop.f32.mrf.mxu0
  %v5713 = vadd.f32 0.0, %v5712
  %v5714 = vpop.f32.mrf.mxu0
  %5715 = vdwg.mxu0
  %5716 = vmatpush.bf16.msra.mxu0 0
  %5717 = vmatpush.bf16.msra.mxu0 0
  %5718 = vmatpush.bf16.msra.mxu0 0
  %5719 = vmatpush.bf16.msra.mxu0 0
  %5720 = vmatpush.bf16.msra.mxu0 0
  %5721 = vmatpush.bf16.msra.mxu0 0
  %5722 = vmatpush.bf16.msra.mxu0 0
  %5723 = vmatpush.bf16.msra.mxu0 %v5585
  %5724 = vmatmul.bf16.gmra.mxu0 %v5610
  %v5725 = vpop.f32.mrf.mxu0
  %v5726 = vadd.f32 0.0, %v5725
  %v5727 = vpop.f32.mrf.mxu0
  %5728 = vdwg.mxu0
  %5729 = vmatpush.bf16.msra.mxu0 0
  %5730 = vmatpush.bf16.msra.mxu0 0
  %5731 = vmatpush.bf16.msra.mxu0 0
  %5732 = vmatpush.bf16.msra.mxu0 0
  %5733 = vmatpush.bf16.msra.mxu0 0
  %5734 = vmatpush.bf16.msra.mxu0 0
  %5735 = vmatpush.bf16.msra.mxu0 0
  %5736 = vmatpush.bf16.msra.mxu0 %v5586
  %5737 = vmatmul.bf16.gmra.mxu0 %v5610
  %v5738 = vpop.f32.mrf.mxu0
  %v5739 = vadd.f32 0.0, %v5738
  %v5740 = vpop.f32.mrf.mxu0
  %5741 = vdwg.mxu0
  %5742 = vmatpush.bf16.msra.mxu0 0
  %5743 = vmatpush.bf16.msra.mxu0 0
  %5744 = vmatpush.bf16.msra.mxu0 0
  %5745 = vmatpush.bf16.msra.mxu0 0
  %5746 = vmatpush.bf16.msra.mxu0 0
  %5747 = vmatpush.bf16.msra.mxu0 0
  %5748 = vmatpush.bf16.msra.mxu0 0
  %5749 = vmatpush.bf16.msra.mxu0 %v5587
  %5750 = vmatmul.bf16.gmra.mxu0 %v5610
  %v5751 = vpop.f32.mrf.mxu0
  %v5752 = vadd.f32 0.0, %v5751
  %v5753 = vpop.f32.mrf.mxu0
  %5754 = vdwg.mxu0
  %5755 = vmatpush.bf16.msra.mxu0 0
  %5756 = vmatpush.bf16.msra.mxu0 0
  %5757 = vmatpush.bf16.msra.mxu0 0
  %5758 = vmatpush.bf16.msra.mxu0 0
  %5759 = vmatpush.bf16.msra.mxu0 0
  %5760 = vmatpush.bf16.msra.mxu0 0
  %5761 = vmatpush.bf16.msra.mxu0 0
  %5762 = vmatpush.bf16.msra.mxu0 %v5588
  %5763 = vmatmul.bf16.gmra.mxu0 %v5610
  %v5764 = vpop.f32.mrf.mxu0
  %v5765 = vadd.f32 0.0, %v5764
  %v5766 = vpop.f32.mrf.mxu0
  %5767 = vdwg.mxu0
  %5768 = vmatpush.bf16.msra.mxu0 0
  %5769 = vmatpush.bf16.msra.mxu0 0
  %5770 = vmatpush.bf16.msra.mxu0 0
  %5771 = vmatpush.bf16.msra.mxu0 0
  %5772 = vmatpush.bf16.msra.mxu0 0
  %5773 = vmatpush.bf16.msra.mxu0 0
  %5774 = vmatpush.bf16.msra.mxu0 0
  %5775 = vmatpush.bf16.msra.mxu0 %v5589
  %5776 = vmatmul.bf16.gmra.mxu0 %v5610
  %v5777 = vpop.f32.mrf.mxu0
  %v5778 = vadd.f32 0.0, %v5777
  %v5779 = vpop.f32.mrf.mxu0
  %5780 = vdwg.mxu0
  %5781 = vmatpush.bf16.msra.mxu0 0
  %5782 = vmatpush.bf16.msra.mxu0 0
  %5783 = vmatpush.bf16.msra.mxu0 0
  %5784 = vmatpush.bf16.msra.mxu0 0
  %5785 = vmatpush.bf16.msra.mxu0 0
  %5786 = vmatpush.bf16.msra.mxu0 0
  %5787 = vmatpush.bf16.msra.mxu0 0
  %5788 = vmatpush.bf16.msra.mxu0 %v5590
  %5789 = vmatmul.bf16.gmra.mxu0 %v5610
  %v5790 = vpop.f32.mrf.mxu0
  %v5791 = vadd.f32 0.0, %v5790
  %v5792 = vpop.f32.mrf.mxu0
  %5793 = vdwg.mxu0
  %5794 = vmatpush.bf16.msra.mxu0 0
  %5795 = vmatpush.bf16.msra.mxu0 0
  %5796 = vmatpush.bf16.msra.mxu0 0
  %5797 = vmatpush.bf16.msra.mxu0 0
  %5798 = vmatpush.bf16.msra.mxu0 0
  %5799 = vmatpush.bf16.msra.mxu0 0
  %5800 = vmatpush.bf16.msra.mxu0 0
  %5801 = vmatpush.bf16.msra.mxu0 %v5591
  %5802 = vmatmul.bf16.gmra.mxu0 %v5610
  %v5803 = vpop.f32.mrf.mxu0
  %v5804 = vadd.f32 0.0, %v5803
  %v5805 = vpop.f32.mrf.mxu0
  %5806 = vdwg.mxu0
  %5807 = vmatpush.bf16.msra.mxu0 0
  %5808 = vmatpush.bf16.msra.mxu0 0
  %5809 = vmatpush.bf16.msra.mxu0 0
  %5810 = vmatpush.bf16.msra.mxu0 0
  %5811 = vmatpush.bf16.msra.mxu0 0
  %5812 = vmatpush.bf16.msra.mxu0 0
  %5813 = vmatpush.bf16.msra.mxu0 0
  %5814 = vmatpush.bf16.msra.mxu0 %v5592
  %5815 = vmatmul.bf16.gmra.mxu0 %v5610
  %v5816 = vpop.f32.mrf.mxu0
  %v5817 = vadd.f32 0.0, %v5816
  %v5818 = vpop.f32.mrf.mxu0
  %5819 = vdwg.mxu0
  %v5820 = vadd.f32 %v5497, %v5622
  %v5821 = vadd.f32 %v5498, %v5635
  %v5822 = vadd.f32 %v5499, %v5648
  %v5823 = vadd.f32 %v5500, %v5661
  %v5824 = vadd.f32 %v5501, %v5674
  %v5825 = vadd.f32 %v5502, %v5687
  %v5826 = vadd.f32 %v5503, %v5700
  %v5827 = vadd.f32 %v5504, %v5713
  %v5828 = vadd.f32 %v5505, %v5726
  %v5829 = vadd.f32 %v5506, %v5739
  %v5830 = vadd.f32 %v5507, %v5752
  %v5831 = vadd.f32 %v5508, %v5765
  %v5832 = vadd.f32 %v5509, %v5778
  %v5833 = vadd.f32 %v5510, %v5791
  %v5834 = vadd.f32 %v5511, %v5804
  %v5835 = vadd.f32 %v5512, %v5817
  %v5836 = vmax.f32 %v5820, 0.0
  %v5837 = vmax.f32 %v5821, 0.0
  %v5838 = vmax.f32 %v5822, 0.0
  %v5839 = vmax.f32 %v5823, 0.0
  %v5840 = vmax.f32 %v5824, 0.0
  %v5841 = vmax.f32 %v5825, 0.0
  %v5842 = vmax.f32 %v5826, 0.0
  %v5843 = vmax.f32 %v5827, 0.0
  %v5844 = vmax.f32 %v5828, 0.0
  %v5845 = vmax.f32 %v5829, 0.0
  %v5846 = vmax.f32 %v5830, 0.0
  %v5847 = vmax.f32 %v5831, 0.0
  %v5848 = vmax.f32 %v5832, 0.0
  %v5849 = vmax.f32 %v5833, 0.0
  %v5850 = vmax.f32 %v5834, 0.0
  %v5851 = vmax.f32 %v5835, 0.0
  %v5852 = vpack.c.bf16 %v5836, %v5836
  %v5853 = vpack.c.bf16 %v5837, %v5837
  %v5854 = vpack.c.bf16 %v5838, %v5838
  %v5855 = vpack.c.bf16 %v5839, %v5839
  %v5856 = vpack.c.bf16 %v5840, %v5840
  %v5857 = vpack.c.bf16 %v5841, %v5841
  %v5858 = vpack.c.bf16 %v5842, %v5842
  %v5859 = vpack.c.bf16 %v5843, %v5843
  %v5860 = vpack.c.bf16 %v5844, %v5844
  %v5861 = vpack.c.bf16 %v5845, %v5845
  %v5862 = vpack.c.bf16 %v5846, %v5846
  %v5863 = vpack.c.bf16 %v5847, %v5847
  %v5864 = vpack.c.bf16 %v5848, %v5848
  %v5865 = vpack.c.bf16 %v5849, %v5849
  %v5866 = vpack.c.bf16 %v5850, %v5850
  %v5867 = vpack.c.bf16 %v5851, %v5851
  %v5868 = vld [vmem:[%s2] sm:$0xf]
  %v5869 = vld [vmem:[%s2 + $0x4] sm:$0xf]
  %v5870 = vld [vmem:[%s2 + $0x8] sm:$0xf]
  %v5871 = vld [vmem:[%s2 + $0xc] sm:$0xf]
  %v5872 = vld [vmem:[%s2 + $0x10] sm:$0xf]
  %v5873 = vld [vmem:[%s2 + $0x14] sm:$0xf]
  %v5874 = vld [vmem:[%s2 + $0x18] sm:$0xf]
  %v5875 = vld [vmem:[%s2 + $0x1c] sm:$0xf]
  %v5876 = vld [vmem:[%s2 + $0x20] sm:$0xf]
  %v5877 = vld [vmem:[%s2 + $0x24] sm:$0xf]
  %v5878 = vld [vmem:[%s2 + $0x28] sm:$0xf]
  %v5879 = vld [vmem:[%s2 + $0x2c] sm:$0xf]
  %v5880 = vld [vmem:[%s2 + $0x30] sm:$0xf]
  %v5881 = vld [vmem:[%s2 + $0x34] sm:$0xf]
  %v5882 = vld [vmem:[%s2 + $0x38] sm:$0xf]
  %v5883 = vld [vmem:[%s2 + $0x3c] sm:$0xf]
  %v5884 = vld [vmem:[%s2 + $0x40] sm:$0xf]
  %v5885 = vld [vmem:[%s2 + $0x44] sm:$0xf]
  %v5886 = vld [vmem:[%s2 + $0x48] sm:$0xf]
  %v5887 = vld [vmem:[%s2 + $0x4c] sm:$0xf]
  %v5888 = vld [vmem:[%s2 + $0x50] sm:$0xf]
  %v5889 = vld [vmem:[%s2 + $0x54] sm:$0xf]
  %v5890 = vld [vmem:[%s2 + $0x58] sm:$0xf]
  %v5891 = vld [vmem:[%s2 + $0x5c] sm:$0xf]
  %v5892 = vld [vmem:[%s2 + $0x60] sm:$0xf]
  %v5893 = vld [vmem:[%s2 + $0x64] sm:$0xf]
  %v5894 = vld [vmem:[%s2 + $0x68] sm:$0xf]
  %v5895 = vld [vmem:[%s2 + $0x6c] sm:$0xf]
  %v5896 = vld [vmem:[%s2 + $0x70] sm:$0xf]
  %v5897 = vld [vmem:[%s2 + $0x74] sm:$0xf]
  %v5898 = vld [vmem:[%s2 + $0x78] sm:$0xf]
  %v5899 = vld [vmem:[%s2 + $0x7c] sm:$0xf]
  %v5900 = vld [vmem:[%s2 + $0x80] sm:$0xf]
  %v5901 = vld [vmem:[%s2 + $0x84] sm:$0xf]
  %v5902 = vld [vmem:[%s2 + $0x88] sm:$0xf]
  %v5903 = vld [vmem:[%s2 + $0x8c] sm:$0xf]
  %v5904 = vld [vmem:[%s2 + $0x90] sm:$0xf]
  %v5905 = vld [vmem:[%s2 + $0x94] sm:$0xf]
  %v5906 = vld [vmem:[%s2 + $0x98] sm:$0xf]
  %v5907 = vld [vmem:[%s2 + $0x9c] sm:$0xf]
  %v5908 = vld [vmem:[%s2 + $0xa0] sm:$0xf]
  %v5909 = vld [vmem:[%s2 + $0xa4] sm:$0xf]
  %v5910 = vld [vmem:[%s2 + $0xa8] sm:$0xf]
  %v5911 = vld [vmem:[%s2 + $0xac] sm:$0xf]
  %v5912 = vld [vmem:[%s2 + $0xb0] sm:$0xf]
  %v5913 = vld [vmem:[%s2 + $0xb4] sm:$0xf]
  %v5914 = vld [vmem:[%s2 + $0xb8] sm:$0xf]
  %v5915 = vld [vmem:[%s2 + $0xbc] sm:$0xf]
  %v5916 = vld [vmem:[%s2 + $0xc0] sm:$0xf]
  %v5917 = vld [vmem:[%s2 + $0xc4] sm:$0xf]
  %v5918 = vld [vmem:[%s2 + $0xc8] sm:$0xf]
  %v5919 = vld [vmem:[%s2 + $0xcc] sm:$0xf]
  %v5920 = vld [vmem:[%s2 + $0xd0] sm:$0xf]
  %v5921 = vld [vmem:[%s2 + $0xd4] sm:$0xf]
  %v5922 = vld [vmem:[%s2 + $0xd8] sm:$0xf]
  %v5923 = vld [vmem:[%s2 + $0xdc] sm:$0xf]
  %v5924 = vld [vmem:[%s2 + $0xe0] sm:$0xf]
  %v5925 = vld [vmem:[%s2 + $0xe4] sm:$0xf]
  %v5926 = vld [vmem:[%s2 + $0xe8] sm:$0xf]
  %v5927 = vld [vmem:[%s2 + $0xec] sm:$0xf]
  %v5928 = vld [vmem:[%s2 + $0xf0] sm:$0xf]
  %v5929 = vld [vmem:[%s2 + $0xf4] sm:$0xf]
  %v5930 = vld [vmem:[%s2 + $0xf8] sm:$0xf]
  %v5931 = vld [vmem:[%s2 + $0xfc] sm:$0xf]
  %v5932 = vld [vmem:[%s2 + $0x100] sm:$0xf]
  %v5933 = vld [vmem:[%s2 + $0x104] sm:$0xf]
  %v5934 = vld [vmem:[%s2 + $0x108] sm:$0xf]
  %v5935 = vld [vmem:[%s2 + $0x10c] sm:$0xf]
  %v5936 = vld [vmem:[%s2 + $0x110] sm:$0xf]
  %v5937 = vld [vmem:[%s2 + $0x114] sm:$0xf]
  %v5938 = vld [vmem:[%s2 + $0x118] sm:$0xf]
  %v5939 = vld [vmem:[%s2 + $0x11c] sm:$0xf]
  %v5940 = vld [vmem:[%s2 + $0x120] sm:$0xf]
  %v5941 = vld [vmem:[%s2 + $0x124] sm:$0xf]
  %v5942 = vld [vmem:[%s2 + $0x128] sm:$0xf]
  %v5943 = vld [vmem:[%s2 + $0x12c] sm:$0xf]
  %v5944 = vld [vmem:[%s2 + $0x130] sm:$0xf]
  %v5945 = vld [vmem:[%s2 + $0x134] sm:$0xf]
  %v5946 = vld [vmem:[%s2 + $0x138] sm:$0xf]
  %v5947 = vld [vmem:[%s2 + $0x13c] sm:$0xf]
  %v5948 = vld [vmem:[%s2 + $0x140] sm:$0xf]
  %v5949 = vld [vmem:[%s2 + $0x144] sm:$0xf]
  %v5950 = vld [vmem:[%s2 + $0x148] sm:$0xf]
  %v5951 = vld [vmem:[%s2 + $0x14c] sm:$0xf]
  %v5952 = vld [vmem:[%s2 + $0x150] sm:$0xf]
  %v5953 = vld [vmem:[%s2 + $0x154] sm:$0xf]
  %v5954 = vld [vmem:[%s2 + $0x158] sm:$0xf]
  %v5955 = vld [vmem:[%s2 + $0x15c] sm:$0xf]
  %v5956 = vld [vmem:[%s2 + $0x160] sm:$0xf]
  %v5957 = vld [vmem:[%s2 + $0x164] sm:$0xf]
  %v5958 = vld [vmem:[%s2 + $0x168] sm:$0xf]
  %v5959 = vld [vmem:[%s2 + $0x16c] sm:$0xf]
  %v5960 = vld [vmem:[%s2 + $0x170] sm:$0xf]
  %v5961 = vld [vmem:[%s2 + $0x174] sm:$0xf]
  %v5962 = vld [vmem:[%s2 + $0x178] sm:$0xf]
  %v5963 = vld [vmem:[%s2 + $0x17c] sm:$0xf]
  %v5964 = vld [vmem:[%s2 + $0x180] sm:$0xf]
  %v5965 = vld [vmem:[%s2 + $0x184] sm:$0xf]
  %v5966 = vld [vmem:[%s2 + $0x188] sm:$0xf]
  %v5967 = vld [vmem:[%s2 + $0x18c] sm:$0xf]
  %v5968 = vld [vmem:[%s2 + $0x190] sm:$0xf]
  %v5969 = vld [vmem:[%s2 + $0x194] sm:$0xf]
  %v5970 = vld [vmem:[%s2 + $0x198] sm:$0xf]
  %v5971 = vld [vmem:[%s2 + $0x19c] sm:$0xf]
  %v5972 = vld [vmem:[%s2 + $0x1a0] sm:$0xf]
  %v5973 = vld [vmem:[%s2 + $0x1a4] sm:$0xf]
  %v5974 = vld [vmem:[%s2 + $0x1a8] sm:$0xf]
  %v5975 = vld [vmem:[%s2 + $0x1ac] sm:$0xf]
  %v5976 = vld [vmem:[%s2 + $0x1b0] sm:$0xf]
  %v5977 = vld [vmem:[%s2 + $0x1b4] sm:$0xf]
  %v5978 = vld [vmem:[%s2 + $0x1b8] sm:$0xf]
  %v5979 = vld [vmem:[%s2 + $0x1bc] sm:$0xf]
  %v5980 = vld [vmem:[%s2 + $0x1c0] sm:$0xf]
  %v5981 = vld [vmem:[%s2 + $0x1c4] sm:$0xf]
  %v5982 = vld [vmem:[%s2 + $0x1c8] sm:$0xf]
  %v5983 = vld [vmem:[%s2 + $0x1cc] sm:$0xf]
  %v5984 = vld [vmem:[%s2 + $0x1d0] sm:$0xf]
  %v5985 = vld [vmem:[%s2 + $0x1d4] sm:$0xf]
  %v5986 = vld [vmem:[%s2 + $0x1d8] sm:$0xf]
  %v5987 = vld [vmem:[%s2 + $0x1dc] sm:$0xf]
  %v5988 = vld [vmem:[%s2 + $0x1e0] sm:$0xf]
  %v5989 = vld [vmem:[%s2 + $0x1e4] sm:$0xf]
  %v5990 = vld [vmem:[%s2 + $0x1e8] sm:$0xf]
  %v5991 = vld [vmem:[%s2 + $0x1ec] sm:$0xf]
  %v5992 = vld [vmem:[%s2 + $0x1f0] sm:$0xf]
  %v5993 = vld [vmem:[%s2 + $0x1f4] sm:$0xf]
  %v5994 = vld [vmem:[%s2 + $0x1f8] sm:$0xf]
  %v5995 = vld [vmem:[%s2 + $0x1fc] sm:$0xf]
  %v5996 = vld [vmem:[%s2 + $0x200] sm:$0xf]
  %v5997 = vld [vmem:[%s2 + $0x204] sm:$0xf]
  %v5998 = vld [vmem:[%s2 + $0x208] sm:$0xf]
  %v5999 = vld [vmem:[%s2 + $0x20c] sm:$0xf]
  %v6000 = vld [vmem:[%s2 + $0x210] sm:$0xf]
  %v6001 = vld [vmem:[%s2 + $0x214] sm:$0xf]
  %v6002 = vld [vmem:[%s2 + $0x218] sm:$0xf]
  %v6003 = vld [vmem:[%s2 + $0x21c] sm:$0xf]
  %v6004 = vld [vmem:[%s2 + $0x220] sm:$0xf]
  %v6005 = vld [vmem:[%s2 + $0x224] sm:$0xf]
  %v6006 = vld [vmem:[%s2 + $0x228] sm:$0xf]
  %v6007 = vld [vmem:[%s2 + $0x22c] sm:$0xf]
  %v6008 = vld [vmem:[%s2 + $0x230] sm:$0xf]
  %v6009 = vld [vmem:[%s2 + $0x234] sm:$0xf]
  %v6010 = vld [vmem:[%s2 + $0x238] sm:$0xf]
  %v6011 = vld [vmem:[%s2 + $0x23c] sm:$0xf]
  %v6012 = vld [vmem:[%s2 + $0x240] sm:$0xf]
  %v6013 = vld [vmem:[%s2 + $0x244] sm:$0xf]
  %v6014 = vld [vmem:[%s2 + $0x248] sm:$0xf]
  %v6015 = vld [vmem:[%s2 + $0x24c] sm:$0xf]
  %v6016 = vld [vmem:[%s2 + $0x250] sm:$0xf]
  %v6017 = vld [vmem:[%s2 + $0x254] sm:$0xf]
  %v6018 = vld [vmem:[%s2 + $0x258] sm:$0xf]
  %v6019 = vld [vmem:[%s2 + $0x25c] sm:$0xf]
  %v6020 = vld [vmem:[%s2 + $0x260] sm:$0xf]
  %v6021 = vld [vmem:[%s2 + $0x264] sm:$0xf]
  %v6022 = vld [vmem:[%s2 + $0x268] sm:$0xf]
  %v6023 = vld [vmem:[%s2 + $0x26c] sm:$0xf]
  %v6024 = vld [vmem:[%s2 + $0x270] sm:$0xf]
  %v6025 = vld [vmem:[%s2 + $0x274] sm:$0xf]
  %v6026 = vld [vmem:[%s2 + $0x278] sm:$0xf]
  %v6027 = vld [vmem:[%s2 + $0x27c] sm:$0xf]
  %v6028 = vld [vmem:[%s2 + $0x280] sm:$0xf]
  %v6029 = vld [vmem:[%s2 + $0x284] sm:$0xf]
  %v6030 = vld [vmem:[%s2 + $0x288] sm:$0xf]
  %v6031 = vld [vmem:[%s2 + $0x28c] sm:$0xf]
  %v6032 = vld [vmem:[%s2 + $0x290] sm:$0xf]
  %v6033 = vld [vmem:[%s2 + $0x294] sm:$0xf]
  %v6034 = vld [vmem:[%s2 + $0x298] sm:$0xf]
  %v6035 = vld [vmem:[%s2 + $0x29c] sm:$0xf]
  %v6036 = vld [vmem:[%s2 + $0x2a0] sm:$0xf]
  %v6037 = vld [vmem:[%s2 + $0x2a4] sm:$0xf]
  %v6038 = vld [vmem:[%s2 + $0x2a8] sm:$0xf]
  %v6039 = vld [vmem:[%s2 + $0x2ac] sm:$0xf]
  %v6040 = vld [vmem:[%s2 + $0x2b0] sm:$0xf]
  %v6041 = vld [vmem:[%s2 + $0x2b4] sm:$0xf]
  %v6042 = vld [vmem:[%s2 + $0x2b8] sm:$0xf]
  %v6043 = vld [vmem:[%s2 + $0x2bc] sm:$0xf]
  %v6044 = vld [vmem:[%s2 + $0x2c0] sm:$0xf]
  %v6045 = vld [vmem:[%s2 + $0x2c4] sm:$0xf]
  %v6046 = vld [vmem:[%s2 + $0x2c8] sm:$0xf]
  %v6047 = vld [vmem:[%s2 + $0x2cc] sm:$0xf]
  %v6048 = vld [vmem:[%s2 + $0x2d0] sm:$0xf]
  %v6049 = vld [vmem:[%s2 + $0x2d4] sm:$0xf]
  %v6050 = vld [vmem:[%s2 + $0x2d8] sm:$0xf]
  %v6051 = vld [vmem:[%s2 + $0x2dc] sm:$0xf]
  %v6052 = vld [vmem:[%s2 + $0x2e0] sm:$0xf]
  %v6053 = vld [vmem:[%s2 + $0x2e4] sm:$0xf]
  %v6054 = vld [vmem:[%s2 + $0x2e8] sm:$0xf]
  %v6055 = vld [vmem:[%s2 + $0x2ec] sm:$0xf]
  %v6056 = vld [vmem:[%s2 + $0x2f0] sm:$0xf]
  %v6057 = vld [vmem:[%s2 + $0x2f4] sm:$0xf]
  %v6058 = vld [vmem:[%s2 + $0x2f8] sm:$0xf]
  %v6059 = vld [vmem:[%s2 + $0x2fc] sm:$0xf]
  %v6060 = vld [vmem:[%s2 + $0x300] sm:$0xf]
  %v6061 = vld [vmem:[%s2 + $0x304] sm:$0xf]
  %v6062 = vld [vmem:[%s2 + $0x308] sm:$0xf]
  %v6063 = vld [vmem:[%s2 + $0x30c] sm:$0xf]
  %v6064 = vld [vmem:[%s2 + $0x310] sm:$0xf]
  %v6065 = vld [vmem:[%s2 + $0x314] sm:$0xf]
  %v6066 = vld [vmem:[%s2 + $0x318] sm:$0xf]
  %v6067 = vld [vmem:[%s2 + $0x31c] sm:$0xf]
  %v6068 = vld [vmem:[%s2 + $0x320] sm:$0xf]
  %v6069 = vld [vmem:[%s2 + $0x324] sm:$0xf]
  %v6070 = vld [vmem:[%s2 + $0x328] sm:$0xf]
  %v6071 = vld [vmem:[%s2 + $0x32c] sm:$0xf]
  %v6072 = vld [vmem:[%s2 + $0x330] sm:$0xf]
  %v6073 = vld [vmem:[%s2 + $0x334] sm:$0xf]
  %v6074 = vld [vmem:[%s2 + $0x338] sm:$0xf]
  %v6075 = vld [vmem:[%s2 + $0x33c] sm:$0xf]
  %v6076 = vld [vmem:[%s2 + $0x340] sm:$0xf]
  %v6077 = vld [vmem:[%s2 + $0x344] sm:$0xf]
  %v6078 = vld [vmem:[%s2 + $0x348] sm:$0xf]
  %v6079 = vld [vmem:[%s2 + $0x34c] sm:$0xf]
  %v6080 = vld [vmem:[%s2 + $0x350] sm:$0xf]
  %v6081 = vld [vmem:[%s2 + $0x354] sm:$0xf]
  %v6082 = vld [vmem:[%s2 + $0x358] sm:$0xf]
  %v6083 = vld [vmem:[%s2 + $0x35c] sm:$0xf]
  %v6084 = vld [vmem:[%s2 + $0x360] sm:$0xf]
  %v6085 = vld [vmem:[%s2 + $0x364] sm:$0xf]
  %v6086 = vld [vmem:[%s2 + $0x368] sm:$0xf]
  %v6087 = vld [vmem:[%s2 + $0x36c] sm:$0xf]
  %v6088 = vld [vmem:[%s2 + $0x370] sm:$0xf]
  %v6089 = vld [vmem:[%s2 + $0x374] sm:$0xf]
  %v6090 = vld [vmem:[%s2 + $0x378] sm:$0xf]
  %v6091 = vld [vmem:[%s2 + $0x37c] sm:$0xf]
  %v6092 = vld [vmem:[%s2 + $0x380] sm:$0xf]
  %v6093 = vld [vmem:[%s2 + $0x384] sm:$0xf]
  %v6094 = vld [vmem:[%s2 + $0x388] sm:$0xf]
  %v6095 = vld [vmem:[%s2 + $0x38c] sm:$0xf]
  %v6096 = vld [vmem:[%s2 + $0x390] sm:$0xf]
  %v6097 = vld [vmem:[%s2 + $0x394] sm:$0xf]
  %v6098 = vld [vmem:[%s2 + $0x398] sm:$0xf]
  %v6099 = vld [vmem:[%s2 + $0x39c] sm:$0xf]
  %v6100 = vld [vmem:[%s2 + $0x3a0] sm:$0xf]
  %v6101 = vld [vmem:[%s2 + $0x3a4] sm:$0xf]
  %v6102 = vld [vmem:[%s2 + $0x3a8] sm:$0xf]
  %v6103 = vld [vmem:[%s2 + $0x3ac] sm:$0xf]
  %v6104 = vld [vmem:[%s2 + $0x3b0] sm:$0xf]
  %v6105 = vld [vmem:[%s2 + $0x3b4] sm:$0xf]
  %v6106 = vld [vmem:[%s2 + $0x3b8] sm:$0xf]
  %v6107 = vld [vmem:[%s2 + $0x3bc] sm:$0xf]
  %v6108 = vld [vmem:[%s2 + $0x3c0] sm:$0xf]
  %v6109 = vld [vmem:[%s2 + $0x3c4] sm:$0xf]
  %v6110 = vld [vmem:[%s2 + $0x3c8] sm:$0xf]
  %v6111 = vld [vmem:[%s2 + $0x3cc] sm:$0xf]
  %v6112 = vld [vmem:[%s2 + $0x3d0] sm:$0xf]
  %v6113 = vld [vmem:[%s2 + $0x3d4] sm:$0xf]
  %v6114 = vld [vmem:[%s2 + $0x3d8] sm:$0xf]
  %v6115 = vld [vmem:[%s2 + $0x3dc] sm:$0xf]
  %v6116 = vld [vmem:[%s2 + $0x3e0] sm:$0xf]
  %v6117 = vld [vmem:[%s2 + $0x3e4] sm:$0xf]
  %v6118 = vld [vmem:[%s2 + $0x3e8] sm:$0xf]
  %v6119 = vld [vmem:[%s2 + $0x3ec] sm:$0xf]
  %v6120 = vld [vmem:[%s2 + $0x3f0] sm:$0xf]
  %v6121 = vld [vmem:[%s2 + $0x3f4] sm:$0xf]
  %v6122 = vld [vmem:[%s2 + $0x3f8] sm:$0xf]
  %v6123 = vld [vmem:[%s2 + $0x3fc] sm:$0xf]
  %v6380 = vunpack.c.l.b16 %v5868
  %v6381 = vunpack.c.l.b16 %v5869
  %v6382 = vunpack.c.l.b16 %v5870
  %v6383 = vunpack.c.l.b16 %v5871
  %v6384 = vunpack.c.l.b16 %v5872
  %v6385 = vunpack.c.l.b16 %v5873
  %v6386 = vunpack.c.l.b16 %v5874
  %v6387 = vunpack.c.l.b16 %v5875
  %v6388 = vunpack.c.l.b16 %v5876
  %v6389 = vunpack.c.l.b16 %v5877
  %v6390 = vunpack.c.l.b16 %v5878
  %v6391 = vunpack.c.l.b16 %v5879
  %v6392 = vunpack.c.l.b16 %v5880
  %v6393 = vunpack.c.l.b16 %v5881
  %v6394 = vunpack.c.l.b16 %v5882
  %v6395 = vunpack.c.l.b16 %v5883
  %v6396 = vunpack.c.l.b16 %v5884
  %v6397 = vunpack.c.l.b16 %v5885
  %v6398 = vunpack.c.l.b16 %v5886
  %v6399 = vunpack.c.l.b16 %v5887
  %v6400 = vunpack.c.l.b16 %v5888
  %v6401 = vunpack.c.l.b16 %v5889
  %v6402 = vunpack.c.l.b16 %v5890
  %v6403 = vunpack.c.l.b16 %v5891
  %v6404 = vunpack.c.l.b16 %v5892
  %v6405 = vunpack.c.l.b16 %v5893
  %v6406 = vunpack.c.l.b16 %v5894
  %v6407 = vunpack.c.l.b16 %v5895
  %v6408 = vunpack.c.l.b16 %v5896
  %v6409 = vunpack.c.l.b16 %v5897
  %v6410 = vunpack.c.l.b16 %v5898
  %v6411 = vunpack.c.l.b16 %v5899
  %v6412 = vunpack.c.l.b16 %v5900
  %v6413 = vunpack.c.l.b16 %v5901
  %v6414 = vunpack.c.l.b16 %v5902
  %v6415 = vunpack.c.l.b16 %v5903
  %v6416 = vunpack.c.l.b16 %v5904
  %v6417 = vunpack.c.l.b16 %v5905
  %v6418 = vunpack.c.l.b16 %v5906
  %v6419 = vunpack.c.l.b16 %v5907
  %v6420 = vunpack.c.l.b16 %v5908
  %v6421 = vunpack.c.l.b16 %v5909
  %v6422 = vunpack.c.l.b16 %v5910
  %v6423 = vunpack.c.l.b16 %v5911
  %v6424 = vunpack.c.l.b16 %v5912
  %v6425 = vunpack.c.l.b16 %v5913
  %v6426 = vunpack.c.l.b16 %v5914
  %v6427 = vunpack.c.l.b16 %v5915
  %v6428 = vunpack.c.l.b16 %v5916
  %v6429 = vunpack.c.l.b16 %v5917
  %v6430 = vunpack.c.l.b16 %v5918
  %v6431 = vunpack.c.l.b16 %v5919
  %v6432 = vunpack.c.l.b16 %v5920
  %v6433 = vunpack.c.l.b16 %v5921
  %v6434 = vunpack.c.l.b16 %v5922
  %v6435 = vunpack.c.l.b16 %v5923
  %v6436 = vunpack.c.l.b16 %v5924
  %v6437 = vunpack.c.l.b16 %v5925
  %v6438 = vunpack.c.l.b16 %v5926
  %v6439 = vunpack.c.l.b16 %v5927
  %v6440 = vunpack.c.l.b16 %v5928
  %v6441 = vunpack.c.l.b16 %v5929
  %v6442 = vunpack.c.l.b16 %v5930
  %v6443 = vunpack.c.l.b16 %v5931
  %v6444 = vunpack.c.l.b16 %v5932
  %v6445 = vunpack.c.l.b16 %v5933
  %v6446 = vunpack.c.l.b16 %v5934
  %v6447 = vunpack.c.l.b16 %v5935
  %v6448 = vunpack.c.l.b16 %v5936
  %v6449 = vunpack.c.l.b16 %v5937
  %v6450 = vunpack.c.l.b16 %v5938
  %v6451 = vunpack.c.l.b16 %v5939
  %v6452 = vunpack.c.l.b16 %v5940
  %v6453 = vunpack.c.l.b16 %v5941
  %v6454 = vunpack.c.l.b16 %v5942
  %v6455 = vunpack.c.l.b16 %v5943
  %v6456 = vunpack.c.l.b16 %v5944
  %v6457 = vunpack.c.l.b16 %v5945
  %v6458 = vunpack.c.l.b16 %v5946
  %v6459 = vunpack.c.l.b16 %v5947
  %v6460 = vunpack.c.l.b16 %v5948
  %v6461 = vunpack.c.l.b16 %v5949
  %v6462 = vunpack.c.l.b16 %v5950
  %v6463 = vunpack.c.l.b16 %v5951
  %v6464 = vunpack.c.l.b16 %v5952
  %v6465 = vunpack.c.l.b16 %v5953
  %v6466 = vunpack.c.l.b16 %v5954
  %v6467 = vunpack.c.l.b16 %v5955
  %v6468 = vunpack.c.l.b16 %v5956
  %v6469 = vunpack.c.l.b16 %v5957
  %v6470 = vunpack.c.l.b16 %v5958
  %v6471 = vunpack.c.l.b16 %v5959
  %v6472 = vunpack.c.l.b16 %v5960
  %v6473 = vunpack.c.l.b16 %v5961
  %v6474 = vunpack.c.l.b16 %v5962
  %v6475 = vunpack.c.l.b16 %v5963
  %v6476 = vunpack.c.l.b16 %v5964
  %v6477 = vunpack.c.l.b16 %v5965
  %v6478 = vunpack.c.l.b16 %v5966
  %v6479 = vunpack.c.l.b16 %v5967
  %v6480 = vunpack.c.l.b16 %v5968
  %v6481 = vunpack.c.l.b16 %v5969
  %v6482 = vunpack.c.l.b16 %v5970
  %v6483 = vunpack.c.l.b16 %v5971
  %v6484 = vunpack.c.l.b16 %v5972
  %v6485 = vunpack.c.l.b16 %v5973
  %v6486 = vunpack.c.l.b16 %v5974
  %v6487 = vunpack.c.l.b16 %v5975
  %v6488 = vunpack.c.l.b16 %v5976
  %v6489 = vunpack.c.l.b16 %v5977
  %v6490 = vunpack.c.l.b16 %v5978
  %v6491 = vunpack.c.l.b16 %v5979
  %v6492 = vunpack.c.l.b16 %v5980
  %v6493 = vunpack.c.l.b16 %v5981
  %v6494 = vunpack.c.l.b16 %v5982
  %v6495 = vunpack.c.l.b16 %v5983
  %v6496 = vunpack.c.l.b16 %v5984
  %v6497 = vunpack.c.l.b16 %v5985
  %v6498 = vunpack.c.l.b16 %v5986
  %v6499 = vunpack.c.l.b16 %v5987
  %v6500 = vunpack.c.l.b16 %v5988
  %v6501 = vunpack.c.l.b16 %v5989
  %v6502 = vunpack.c.l.b16 %v5990
  %v6503 = vunpack.c.l.b16 %v5991
  %v6504 = vunpack.c.l.b16 %v5992
  %v6505 = vunpack.c.l.b16 %v5993
  %v6506 = vunpack.c.l.b16 %v5994
  %v6507 = vunpack.c.l.b16 %v5995
  %v6508 = vunpack.c.l.b16 %v5996
  %v6509 = vunpack.c.l.b16 %v5997
  %v6510 = vunpack.c.l.b16 %v5998
  %v6511 = vunpack.c.l.b16 %v5999
  %v6512 = vunpack.c.l.b16 %v6000
  %v6513 = vunpack.c.l.b16 %v6001
  %v6514 = vunpack.c.l.b16 %v6002
  %v6515 = vunpack.c.l.b16 %v6003
  %v6516 = vunpack.c.l.b16 %v6004
  %v6517 = vunpack.c.l.b16 %v6005
  %v6518 = vunpack.c.l.b16 %v6006
  %v6519 = vunpack.c.l.b16 %v6007
  %v6520 = vunpack.c.l.b16 %v6008
  %v6521 = vunpack.c.l.b16 %v6009
  %v6522 = vunpack.c.l.b16 %v6010
  %v6523 = vunpack.c.l.b16 %v6011
  %v6524 = vunpack.c.l.b16 %v6012
  %v6525 = vunpack.c.l.b16 %v6013
  %v6526 = vunpack.c.l.b16 %v6014
  %v6527 = vunpack.c.l.b16 %v6015
  %v6528 = vunpack.c.l.b16 %v6016
  %v6529 = vunpack.c.l.b16 %v6017
  %v6530 = vunpack.c.l.b16 %v6018
  %v6531 = vunpack.c.l.b16 %v6019
  %v6532 = vunpack.c.l.b16 %v6020
  %v6533 = vunpack.c.l.b16 %v6021
  %v6534 = vunpack.c.l.b16 %v6022
  %v6535 = vunpack.c.l.b16 %v6023
  %v6536 = vunpack.c.l.b16 %v6024
  %v6537 = vunpack.c.l.b16 %v6025
  %v6538 = vunpack.c.l.b16 %v6026
  %v6539 = vunpack.c.l.b16 %v6027
  %v6540 = vunpack.c.l.b16 %v6028
  %v6541 = vunpack.c.l.b16 %v6029
  %v6542 = vunpack.c.l.b16 %v6030
  %v6543 = vunpack.c.l.b16 %v6031
  %v6544 = vunpack.c.l.b16 %v6032
  %v6545 = vunpack.c.l.b16 %v6033
  %v6546 = vunpack.c.l.b16 %v6034
  %v6547 = vunpack.c.l.b16 %v6035
  %v6548 = vunpack.c.l.b16 %v6036
  %v6549 = vunpack.c.l.b16 %v6037
  %v6550 = vunpack.c.l.b16 %v6038
  %v6551 = vunpack.c.l.b16 %v6039
  %v6552 = vunpack.c.l.b16 %v6040
  %v6553 = vunpack.c.l.b16 %v6041
  %v6554 = vunpack.c.l.b16 %v6042
  %v6555 = vunpack.c.l.b16 %v6043
  %v6556 = vunpack.c.l.b16 %v6044
  %v6557 = vunpack.c.l.b16 %v6045
  %v6558 = vunpack.c.l.b16 %v6046
  %v6559 = vunpack.c.l.b16 %v6047
  %v6560 = vunpack.c.l.b16 %v6048
  %v6561 = vunpack.c.l.b16 %v6049
  %v6562 = vunpack.c.l.b16 %v6050
  %v6563 = vunpack.c.l.b16 %v6051
  %v6564 = vunpack.c.l.b16 %v6052
  %v6565 = vunpack.c.l.b16 %v6053
  %v6566 = vunpack.c.l.b16 %v6054
  %v6567 = vunpack.c.l.b16 %v6055
  %v6568 = vunpack.c.l.b16 %v6056
  %v6569 = vunpack.c.l.b16 %v6057
  %v6570 = vunpack.c.l.b16 %v6058
  %v6571 = vunpack.c.l.b16 %v6059
  %v6572 = vunpack.c.l.b16 %v6060
  %v6573 = vunpack.c.l.b16 %v6061
  %v6574 = vunpack.c.l.b16 %v6062
  %v6575 = vunpack.c.l.b16 %v6063
  %v6576 = vunpack.c.l.b16 %v6064
  %v6577 = vunpack.c.l.b16 %v6065
  %v6578 = vunpack.c.l.b16 %v6066
  %v6579 = vunpack.c.l.b16 %v6067
  %v6580 = vunpack.c.l.b16 %v6068
  %v6581 = vunpack.c.l.b16 %v6069
  %v6582 = vunpack.c.l.b16 %v6070
  %v6583 = vunpack.c.l.b16 %v6071
  %v6584 = vunpack.c.l.b16 %v6072
  %v6585 = vunpack.c.l.b16 %v6073
  %v6586 = vunpack.c.l.b16 %v6074
  %v6587 = vunpack.c.l.b16 %v6075
  %v6588 = vunpack.c.l.b16 %v6076
  %v6589 = vunpack.c.l.b16 %v6077
  %v6590 = vunpack.c.l.b16 %v6078
  %v6591 = vunpack.c.l.b16 %v6079
  %v6592 = vunpack.c.l.b16 %v6080
  %v6593 = vunpack.c.l.b16 %v6081
  %v6594 = vunpack.c.l.b16 %v6082
  %v6595 = vunpack.c.l.b16 %v6083
  %v6596 = vunpack.c.l.b16 %v6084
  %v6597 = vunpack.c.l.b16 %v6085
  %v6598 = vunpack.c.l.b16 %v6086
  %v6599 = vunpack.c.l.b16 %v6087
  %v6600 = vunpack.c.l.b16 %v6088
  %v6601 = vunpack.c.l.b16 %v6089
  %v6602 = vunpack.c.l.b16 %v6090
  %v6603 = vunpack.c.l.b16 %v6091
  %v6604 = vunpack.c.l.b16 %v6092
  %v6605 = vunpack.c.l.b16 %v6093
  %v6606 = vunpack.c.l.b16 %v6094
  %v6607 = vunpack.c.l.b16 %v6095
  %v6608 = vunpack.c.l.b16 %v6096
  %v6609 = vunpack.c.l.b16 %v6097
  %v6610 = vunpack.c.l.b16 %v6098
  %v6611 = vunpack.c.l.b16 %v6099
  %v6612 = vunpack.c.l.b16 %v6100
  %v6613 = vunpack.c.l.b16 %v6101
  %v6614 = vunpack.c.l.b16 %v6102
  %v6615 = vunpack.c.l.b16 %v6103
  %v6616 = vunpack.c.l.b16 %v6104
  %v6617 = vunpack.c.l.b16 %v6105
  %v6618 = vunpack.c.l.b16 %v6106
  %v6619 = vunpack.c.l.b16 %v6107
  %v6620 = vunpack.c.l.b16 %v6108
  %v6621 = vunpack.c.l.b16 %v6109
  %v6622 = vunpack.c.l.b16 %v6110
  %v6623 = vunpack.c.l.b16 %v6111
  %v6624 = vunpack.c.l.b16 %v6112
  %v6625 = vunpack.c.l.b16 %v6113
  %v6626 = vunpack.c.l.b16 %v6114
  %v6627 = vunpack.c.l.b16 %v6115
  %v6628 = vunpack.c.l.b16 %v6116
  %v6629 = vunpack.c.l.b16 %v6117
  %v6630 = vunpack.c.l.b16 %v6118
  %v6631 = vunpack.c.l.b16 %v6119
  %v6632 = vunpack.c.l.b16 %v6120
  %v6633 = vunpack.c.l.b16 %v6121
  %v6634 = vunpack.c.l.b16 %v6122
  %v6635 = vunpack.c.l.b16 %v6123
  %v6636 = vpack.c.b16 %v6381, %v6380
  %v6637 = vpack.c.b16 %v6383, %v6382
  %v6638 = vpack.c.b16 %v6385, %v6384
  %v6639 = vpack.c.b16 %v6387, %v6386
  %v6640 = vpack.c.b16 %v6389, %v6388
  %v6641 = vpack.c.b16 %v6391, %v6390
  %v6642 = vpack.c.b16 %v6393, %v6392
  %v6643 = vpack.c.b16 %v6395, %v6394
  %v6644 = vpack.c.b16 %v6397, %v6396
  %v6645 = vpack.c.b16 %v6399, %v6398
  %v6646 = vpack.c.b16 %v6401, %v6400
  %v6647 = vpack.c.b16 %v6403, %v6402
  %v6648 = vpack.c.b16 %v6405, %v6404
  %v6649 = vpack.c.b16 %v6407, %v6406
  %v6650 = vpack.c.b16 %v6409, %v6408
  %v6651 = vpack.c.b16 %v6411, %v6410
  %v6652 = vpack.c.b16 %v6413, %v6412
  %v6653 = vpack.c.b16 %v6415, %v6414
  %v6654 = vpack.c.b16 %v6417, %v6416
  %v6655 = vpack.c.b16 %v6419, %v6418
  %v6656 = vpack.c.b16 %v6421, %v6420
  %v6657 = vpack.c.b16 %v6423, %v6422
  %v6658 = vpack.c.b16 %v6425, %v6424
  %v6659 = vpack.c.b16 %v6427, %v6426
  %v6660 = vpack.c.b16 %v6429, %v6428
  %v6661 = vpack.c.b16 %v6431, %v6430
  %v6662 = vpack.c.b16 %v6433, %v6432
  %v6663 = vpack.c.b16 %v6435, %v6434
  %v6664 = vpack.c.b16 %v6437, %v6436
  %v6665 = vpack.c.b16 %v6439, %v6438
  %v6666 = vpack.c.b16 %v6441, %v6440
  %v6667 = vpack.c.b16 %v6443, %v6442
  %v6668 = vpack.c.b16 %v6445, %v6444
  %v6669 = vpack.c.b16 %v6447, %v6446
  %v6670 = vpack.c.b16 %v6449, %v6448
  %v6671 = vpack.c.b16 %v6451, %v6450
  %v6672 = vpack.c.b16 %v6453, %v6452
  %v6673 = vpack.c.b16 %v6455, %v6454
  %v6674 = vpack.c.b16 %v6457, %v6456
  %v6675 = vpack.c.b16 %v6459, %v6458
  %v6676 = vpack.c.b16 %v6461, %v6460
  %v6677 = vpack.c.b16 %v6463, %v6462
  %v6678 = vpack.c.b16 %v6465, %v6464
  %v6679 = vpack.c.b16 %v6467, %v6466
  %v6680 = vpack.c.b16 %v6469, %v6468
  %v6681 = vpack.c.b16 %v6471, %v6470
  %v6682 = vpack.c.b16 %v6473, %v6472
  %v6683 = vpack.c.b16 %v6475, %v6474
  %v6684 = vpack.c.b16 %v6477, %v6476
  %v6685 = vpack.c.b16 %v6479, %v6478
  %v6686 = vpack.c.b16 %v6481, %v6480
  %v6687 = vpack.c.b16 %v6483, %v6482
  %v6688 = vpack.c.b16 %v6485, %v6484
  %v6689 = vpack.c.b16 %v6487, %v6486
  %v6690 = vpack.c.b16 %v6489, %v6488
  %v6691 = vpack.c.b16 %v6491, %v6490
  %v6692 = vpack.c.b16 %v6493, %v6492
  %v6693 = vpack.c.b16 %v6495, %v6494
  %v6694 = vpack.c.b16 %v6497, %v6496
  %v6695 = vpack.c.b16 %v6499, %v6498
  %v6696 = vpack.c.b16 %v6501, %v6500
  %v6697 = vpack.c.b16 %v6503, %v6502
  %v6698 = vpack.c.b16 %v6505, %v6504
  %v6699 = vpack.c.b16 %v6507, %v6506
  %v6700 = vpack.c.b16 %v6509, %v6508
  %v6701 = vpack.c.b16 %v6511, %v6510
  %v6702 = vpack.c.b16 %v6513, %v6512
  %v6703 = vpack.c.b16 %v6515, %v6514
  %v6704 = vpack.c.b16 %v6517, %v6516
  %v6705 = vpack.c.b16 %v6519, %v6518
  %v6706 = vpack.c.b16 %v6521, %v6520
  %v6707 = vpack.c.b16 %v6523, %v6522
  %v6708 = vpack.c.b16 %v6525, %v6524
  %v6709 = vpack.c.b16 %v6527, %v6526
  %v6710 = vpack.c.b16 %v6529, %v6528
  %v6711 = vpack.c.b16 %v6531, %v6530
  %v6712 = vpack.c.b16 %v6533, %v6532
  %v6713 = vpack.c.b16 %v6535, %v6534
  %v6714 = vpack.c.b16 %v6537, %v6536
  %v6715 = vpack.c.b16 %v6539, %v6538
  %v6716 = vpack.c.b16 %v6541, %v6540
  %v6717 = vpack.c.b16 %v6543, %v6542
  %v6718 = vpack.c.b16 %v6545, %v6544
  %v6719 = vpack.c.b16 %v6547, %v6546
  %v6720 = vpack.c.b16 %v6549, %v6548
  %v6721 = vpack.c.b16 %v6551, %v6550
  %v6722 = vpack.c.b16 %v6553, %v6552
  %v6723 = vpack.c.b16 %v6555, %v6554
  %v6724 = vpack.c.b16 %v6557, %v6556
  %v6725 = vpack.c.b16 %v6559, %v6558
  %v6726 = vpack.c.b16 %v6561, %v6560
  %v6727 = vpack.c.b16 %v6563, %v6562
  %v6728 = vpack.c.b16 %v6565, %v6564
  %v6729 = vpack.c.b16 %v6567, %v6566
  %v6730 = vpack.c.b16 %v6569, %v6568
  %v6731 = vpack.c.b16 %v6571, %v6570
  %v6732 = vpack.c.b16 %v6573, %v6572
  %v6733 = vpack.c.b16 %v6575, %v6574
  %v6734 = vpack.c.b16 %v6577, %v6576
  %v6735 = vpack.c.b16 %v6579, %v6578
  %v6736 = vpack.c.b16 %v6581, %v6580
  %v6737 = vpack.c.b16 %v6583, %v6582
  %v6738 = vpack.c.b16 %v6585, %v6584
  %v6739 = vpack.c.b16 %v6587, %v6586
  %v6740 = vpack.c.b16 %v6589, %v6588
  %v6741 = vpack.c.b16 %v6591, %v6590
  %v6742 = vpack.c.b16 %v6593, %v6592
  %v6743 = vpack.c.b16 %v6595, %v6594
  %v6744 = vpack.c.b16 %v6597, %v6596
  %v6745 = vpack.c.b16 %v6599, %v6598
  %v6746 = vpack.c.b16 %v6601, %v6600
  %v6747 = vpack.c.b16 %v6603, %v6602
  %v6748 = vpack.c.b16 %v6605, %v6604
  %v6749 = vpack.c.b16 %v6607, %v6606
  %v6750 = vpack.c.b16 %v6609, %v6608
  %v6751 = vpack.c.b16 %v6611, %v6610
  %v6752 = vpack.c.b16 %v6613, %v6612
  %v6753 = vpack.c.b16 %v6615, %v6614
  %v6754 = vpack.c.b16 %v6617, %v6616
  %v6755 = vpack.c.b16 %v6619, %v6618
  %v6756 = vpack.c.b16 %v6621, %v6620
  %v6757 = vpack.c.b16 %v6623, %v6622
  %v6758 = vpack.c.b16 %v6625, %v6624
  %v6759 = vpack.c.b16 %v6627, %v6626
  %v6760 = vpack.c.b16 %v6629, %v6628
  %v6761 = vpack.c.b16 %v6631, %v6630
  %v6762 = vpack.c.b16 %v6633, %v6632
  %v6763 = vpack.c.b16 %v6635, %v6634
  %6892 = vmatpush.bf16.msra.mxu0 %v6643
  %6893 = vmatpush.bf16.msra.mxu0 %v6642
  %6894 = vmatpush.bf16.msra.mxu0 %v6641
  %6895 = vmatpush.bf16.msra.mxu0 %v6640
  %6896 = vmatpush.bf16.msra.mxu0 %v6639
  %6897 = vmatpush.bf16.msra.mxu0 %v6638
  %6898 = vmatpush.bf16.msra.mxu0 %v6637
  %6899 = vmatpush.bf16.msra.mxu0 %v6636
  %6900 = vmatmul.bf16.gmra.mxu0 %v5852
  %v6901 = vpop.f32.mrf.mxu0
  %v6902 = vadd.f32 0.0, %v6901
  %v6903 = vpop.f32.mrf.mxu0
  %6904 = vdwg.mxu0
  %6905 = vmatpush.bf16.msra.mxu0 %v6651
  %6906 = vmatpush.bf16.msra.mxu0 %v6650
  %6907 = vmatpush.bf16.msra.mxu0 %v6649
  %6908 = vmatpush.bf16.msra.mxu0 %v6648
  %6909 = vmatpush.bf16.msra.mxu0 %v6647
  %6910 = vmatpush.bf16.msra.mxu0 %v6646
  %6911 = vmatpush.bf16.msra.mxu0 %v6645
  %6912 = vmatpush.bf16.msra.mxu0 %v6644
  %6913 = vmatmul.bf16.gmra.mxu0 %v5853
  %v6914 = vpop.f32.mrf.mxu0
  %v6915 = vadd.f32 %v6902, %v6914
  %v6916 = vpop.f32.mrf.mxu0
  %6917 = vdwg.mxu0
  %6918 = vmatpush.bf16.msra.mxu0 %v6659
  %6919 = vmatpush.bf16.msra.mxu0 %v6658
  %6920 = vmatpush.bf16.msra.mxu0 %v6657
  %6921 = vmatpush.bf16.msra.mxu0 %v6656
  %6922 = vmatpush.bf16.msra.mxu0 %v6655
  %6923 = vmatpush.bf16.msra.mxu0 %v6654
  %6924 = vmatpush.bf16.msra.mxu0 %v6653
  %6925 = vmatpush.bf16.msra.mxu0 %v6652
  %6926 = vmatmul.bf16.gmra.mxu0 %v5854
  %v6927 = vpop.f32.mrf.mxu0
  %v6928 = vadd.f32 %v6915, %v6927
  %v6929 = vpop.f32.mrf.mxu0
  %6930 = vdwg.mxu0
  %6931 = vmatpush.bf16.msra.mxu0 %v6667
  %6932 = vmatpush.bf16.msra.mxu0 %v6666
  %6933 = vmatpush.bf16.msra.mxu0 %v6665
  %6934 = vmatpush.bf16.msra.mxu0 %v6664
  %6935 = vmatpush.bf16.msra.mxu0 %v6663
  %6936 = vmatpush.bf16.msra.mxu0 %v6662
  %6937 = vmatpush.bf16.msra.mxu0 %v6661
  %6938 = vmatpush.bf16.msra.mxu0 %v6660
  %6939 = vmatmul.bf16.gmra.mxu0 %v5855
  %v6940 = vpop.f32.mrf.mxu0
  %v6941 = vadd.f32 %v6928, %v6940
  %v6942 = vpop.f32.mrf.mxu0
  %6943 = vdwg.mxu0
  %6944 = vmatpush.bf16.msra.mxu0 %v6675
  %6945 = vmatpush.bf16.msra.mxu0 %v6674
  %6946 = vmatpush.bf16.msra.mxu0 %v6673
  %6947 = vmatpush.bf16.msra.mxu0 %v6672
  %6948 = vmatpush.bf16.msra.mxu0 %v6671
  %6949 = vmatpush.bf16.msra.mxu0 %v6670
  %6950 = vmatpush.bf16.msra.mxu0 %v6669
  %6951 = vmatpush.bf16.msra.mxu0 %v6668
  %6952 = vmatmul.bf16.gmra.mxu0 %v5856
  %v6953 = vpop.f32.mrf.mxu0
  %v6954 = vadd.f32 %v6941, %v6953
  %v6955 = vpop.f32.mrf.mxu0
  %6956 = vdwg.mxu0
  %6957 = vmatpush.bf16.msra.mxu0 %v6683
  %6958 = vmatpush.bf16.msra.mxu0 %v6682
  %6959 = vmatpush.bf16.msra.mxu0 %v6681
  %6960 = vmatpush.bf16.msra.mxu0 %v6680
  %6961 = vmatpush.bf16.msra.mxu0 %v6679
  %6962 = vmatpush.bf16.msra.mxu0 %v6678
  %6963 = vmatpush.bf16.msra.mxu0 %v6677
  %6964 = vmatpush.bf16.msra.mxu0 %v6676
  %6965 = vmatmul.bf16.gmra.mxu0 %v5857
  %v6966 = vpop.f32.mrf.mxu0
  %v6967 = vadd.f32 %v6954, %v6966
  %v6968 = vpop.f32.mrf.mxu0
  %6969 = vdwg.mxu0
  %6970 = vmatpush.bf16.msra.mxu0 %v6691
  %6971 = vmatpush.bf16.msra.mxu0 %v6690
  %6972 = vmatpush.bf16.msra.mxu0 %v6689
  %6973 = vmatpush.bf16.msra.mxu0 %v6688
  %6974 = vmatpush.bf16.msra.mxu0 %v6687
  %6975 = vmatpush.bf16.msra.mxu0 %v6686
  %6976 = vmatpush.bf16.msra.mxu0 %v6685
  %6977 = vmatpush.bf16.msra.mxu0 %v6684
  %6978 = vmatmul.bf16.gmra.mxu0 %v5858
  %v6979 = vpop.f32.mrf.mxu0
  %v6980 = vadd.f32 %v6967, %v6979
  %v6981 = vpop.f32.mrf.mxu0
  %6982 = vdwg.mxu0
  %6983 = vmatpush.bf16.msra.mxu0 %v6699
  %6984 = vmatpush.bf16.msra.mxu0 %v6698
  %6985 = vmatpush.bf16.msra.mxu0 %v6697
  %6986 = vmatpush.bf16.msra.mxu0 %v6696
  %6987 = vmatpush.bf16.msra.mxu0 %v6695
  %6988 = vmatpush.bf16.msra.mxu0 %v6694
  %6989 = vmatpush.bf16.msra.mxu0 %v6693
  %6990 = vmatpush.bf16.msra.mxu0 %v6692
  %6991 = vmatmul.bf16.gmra.mxu0 %v5859
  %v6992 = vpop.f32.mrf.mxu0
  %v6993 = vadd.f32 %v6980, %v6992
  %v6994 = vpop.f32.mrf.mxu0
  %6995 = vdwg.mxu0
  %6996 = vmatpush.bf16.msra.mxu0 %v6707
  %6997 = vmatpush.bf16.msra.mxu0 %v6706
  %6998 = vmatpush.bf16.msra.mxu0 %v6705
  %6999 = vmatpush.bf16.msra.mxu0 %v6704
  %7000 = vmatpush.bf16.msra.mxu0 %v6703
  %7001 = vmatpush.bf16.msra.mxu0 %v6702
  %7002 = vmatpush.bf16.msra.mxu0 %v6701
  %7003 = vmatpush.bf16.msra.mxu0 %v6700
  %7004 = vmatmul.bf16.gmra.mxu0 %v5860
  %v7005 = vpop.f32.mrf.mxu0
  %v7006 = vadd.f32 %v6993, %v7005
  %v7007 = vpop.f32.mrf.mxu0
  %7008 = vdwg.mxu0
  %7009 = vmatpush.bf16.msra.mxu0 %v6715
  %7010 = vmatpush.bf16.msra.mxu0 %v6714
  %7011 = vmatpush.bf16.msra.mxu0 %v6713
  %7012 = vmatpush.bf16.msra.mxu0 %v6712
  %7013 = vmatpush.bf16.msra.mxu0 %v6711
  %7014 = vmatpush.bf16.msra.mxu0 %v6710
  %7015 = vmatpush.bf16.msra.mxu0 %v6709
  %7016 = vmatpush.bf16.msra.mxu0 %v6708
  %7017 = vmatmul.bf16.gmra.mxu0 %v5861
  %v7018 = vpop.f32.mrf.mxu0
  %v7019 = vadd.f32 %v7006, %v7018
  %v7020 = vpop.f32.mrf.mxu0
  %7021 = vdwg.mxu0
  %7022 = vmatpush.bf16.msra.mxu0 %v6723
  %7023 = vmatpush.bf16.msra.mxu0 %v6722
  %7024 = vmatpush.bf16.msra.mxu0 %v6721
  %7025 = vmatpush.bf16.msra.mxu0 %v6720
  %7026 = vmatpush.bf16.msra.mxu0 %v6719
  %7027 = vmatpush.bf16.msra.mxu0 %v6718
  %7028 = vmatpush.bf16.msra.mxu0 %v6717
  %7029 = vmatpush.bf16.msra.mxu0 %v6716
  %7030 = vmatmul.bf16.gmra.mxu0 %v5862
  %v7031 = vpop.f32.mrf.mxu0
  %v7032 = vadd.f32 %v7019, %v7031
  %v7033 = vpop.f32.mrf.mxu0
  %7034 = vdwg.mxu0
  %7035 = vmatpush.bf16.msra.mxu0 %v6731
  %7036 = vmatpush.bf16.msra.mxu0 %v6730
  %7037 = vmatpush.bf16.msra.mxu0 %v6729
  %7038 = vmatpush.bf16.msra.mxu0 %v6728
  %7039 = vmatpush.bf16.msra.mxu0 %v6727
  %7040 = vmatpush.bf16.msra.mxu0 %v6726
  %7041 = vmatpush.bf16.msra.mxu0 %v6725
  %7042 = vmatpush.bf16.msra.mxu0 %v6724
  %7043 = vmatmul.bf16.gmra.mxu0 %v5863
  %v7044 = vpop.f32.mrf.mxu0
  %v7045 = vadd.f32 %v7032, %v7044
  %v7046 = vpop.f32.mrf.mxu0
  %7047 = vdwg.mxu0
  %7048 = vmatpush.bf16.msra.mxu0 %v6739
  %7049 = vmatpush.bf16.msra.mxu0 %v6738
  %7050 = vmatpush.bf16.msra.mxu0 %v6737
  %7051 = vmatpush.bf16.msra.mxu0 %v6736
  %7052 = vmatpush.bf16.msra.mxu0 %v6735
  %7053 = vmatpush.bf16.msra.mxu0 %v6734
  %7054 = vmatpush.bf16.msra.mxu0 %v6733
  %7055 = vmatpush.bf16.msra.mxu0 %v6732
  %7056 = vmatmul.bf16.gmra.mxu0 %v5864
  %v7057 = vpop.f32.mrf.mxu0
  %v7058 = vadd.f32 %v7045, %v7057
  %v7059 = vpop.f32.mrf.mxu0
  %7060 = vdwg.mxu0
  %7061 = vmatpush.bf16.msra.mxu0 %v6747
  %7062 = vmatpush.bf16.msra.mxu0 %v6746
  %7063 = vmatpush.bf16.msra.mxu0 %v6745
  %7064 = vmatpush.bf16.msra.mxu0 %v6744
  %7065 = vmatpush.bf16.msra.mxu0 %v6743
  %7066 = vmatpush.bf16.msra.mxu0 %v6742
  %7067 = vmatpush.bf16.msra.mxu0 %v6741
  %7068 = vmatpush.bf16.msra.mxu0 %v6740
  %7069 = vmatmul.bf16.gmra.mxu0 %v5865
  %v7070 = vpop.f32.mrf.mxu0
  %v7071 = vadd.f32 %v7058, %v7070
  %v7072 = vpop.f32.mrf.mxu0
  %7073 = vdwg.mxu0
  %7074 = vmatpush.bf16.msra.mxu0 %v6755
  %7075 = vmatpush.bf16.msra.mxu0 %v6754
  %7076 = vmatpush.bf16.msra.mxu0 %v6753
  %7077 = vmatpush.bf16.msra.mxu0 %v6752
  %7078 = vmatpush.bf16.msra.mxu0 %v6751
  %7079 = vmatpush.bf16.msra.mxu0 %v6750
  %7080 = vmatpush.bf16.msra.mxu0 %v6749
  %7081 = vmatpush.bf16.msra.mxu0 %v6748
  %7082 = vmatmul.bf16.gmra.mxu0 %v5866
  %v7083 = vpop.f32.mrf.mxu0
  %v7084 = vadd.f32 %v7071, %v7083
  %v7085 = vpop.f32.mrf.mxu0
  %7086 = vdwg.mxu0
  %7087 = vmatpush.bf16.msra.mxu0 %v6763
  %7088 = vmatpush.bf16.msra.mxu0 %v6762
  %7089 = vmatpush.bf16.msra.mxu0 %v6761
  %7090 = vmatpush.bf16.msra.mxu0 %v6760
  %7091 = vmatpush.bf16.msra.mxu0 %v6759
  %7092 = vmatpush.bf16.msra.mxu0 %v6758
  %7093 = vmatpush.bf16.msra.mxu0 %v6757
  %7094 = vmatpush.bf16.msra.mxu0 %v6756
  %7095 = vmatmul.bf16.gmra.mxu0 %v5867
  %v7096 = vpop.f32.mrf.mxu0
  %v7097 = vadd.f32 %v7084, %v7096
  %v7098 = vpop.f32.mrf.mxu0
  %7099 = vdwg.mxu0
  %v7100 = vpack.c.bf16 %v7097, %v7097
  %v7101 = vld [vmem:[%s3] sm:$0xff]
  %v7102 = vld [vmem:[%s3 + $0x8] sm:$0xff]
  %v7103 = vld [vmem:[%s3 + $0x10] sm:$0xff]
  %v7104 = vld [vmem:[%s3 + $0x18] sm:$0xff]
  %v7105 = vld [vmem:[%s3 + $0x20] sm:$0xff]
  %v7106 = vld [vmem:[%s3 + $0x28] sm:$0xff]
  %v7107 = vld [vmem:[%s3 + $0x30] sm:$0xff]
  %v7108 = vld [vmem:[%s3 + $0x38] sm:$0xff]
  %v7109 = vld [vmem:[%s3 + $0x40] sm:$0xff]
  %v7110 = vld [vmem:[%s3 + $0x48] sm:$0xff]
  %v7111 = vld [vmem:[%s3 + $0x50] sm:$0xff]
  %v7112 = vld [vmem:[%s3 + $0x58] sm:$0xff]
  %v7113 = vld [vmem:[%s3 + $0x60] sm:$0xff]
  %v7114 = vld [vmem:[%s3 + $0x68] sm:$0xff]
  %v7115 = vld [vmem:[%s3 + $0x70] sm:$0xff]
  %v7116 = vld [vmem:[%s3 + $0x78] sm:$0xff]
  %v7117 = vld [vmem:[%s4] sm:$0xff]
  %v7119 = vperm.slane %v7117, 0
  %v7120 = vperm.slane %v7117, 1
  %v7121 = vperm.slane %v7117, 2
  %v7122 = vperm.slane %v7117, 3
  %v7123 = vperm.slane %v7117, 4
  %v7124 = vperm.slane %v7117, 5
  %v7125 = vperm.slane %v7117, 6
  %v7126 = vperm.slane %v7117, 7
  %v7151 = vunpack.c.l.b16 %v7101
  %v7152 = vunpack.c.h.b16 %v7101
  %v7153 = vunpack.c.l.b16 %v7102
  %v7154 = vunpack.c.h.b16 %v7102
  %v7155 = vunpack.c.l.b16 %v7103
  %v7156 = vunpack.c.h.b16 %v7103
  %v7157 = vunpack.c.l.b16 %v7104
  %v7158 = vunpack.c.h.b16 %v7104
  %v7159 = vunpack.c.l.b16 %v7105
  %v7160 = vunpack.c.h.b16 %v7105
  %v7161 = vunpack.c.l.b16 %v7106
  %v7162 = vunpack.c.h.b16 %v7106
  %v7163 = vunpack.c.l.b16 %v7107
  %v7164 = vunpack.c.h.b16 %v7107
  %v7165 = vunpack.c.l.b16 %v7108
  %v7166 = vunpack.c.h.b16 %v7108
  %v7167 = vunpack.c.l.b16 %v7109
  %v7168 = vunpack.c.h.b16 %v7109
  %v7169 = vunpack.c.l.b16 %v7110
  %v7170 = vunpack.c.h.b16 %v7110
  %v7171 = vunpack.c.l.b16 %v7111
  %v7172 = vunpack.c.h.b16 %v7111
  %v7173 = vunpack.c.l.b16 %v7112
  %v7174 = vunpack.c.h.b16 %v7112
  %v7175 = vunpack.c.l.b16 %v7113
  %v7176 = vunpack.c.h.b16 %v7113
  %v7177 = vunpack.c.l.b16 %v7114
  %v7178 = vunpack.c.h.b16 %v7114
  %v7179 = vunpack.c.l.b16 %v7115
  %v7180 = vunpack.c.h.b16 %v7115
  %v7181 = vunpack.c.l.b16 %v7116
  %v7182 = vunpack.c.h.b16 %v7116
  %v7183 = vpack.c.b16 %v7159, %v7151
  %v7184 = vpack.c.b16 %v7160, %v7152
  %v7185 = vpack.c.b16 %v7161, %v7153
  %v7186 = vpack.c.b16 %v7162, %v7154
  %v7187 = vpack.c.b16 %v7163, %v7155
  %v7188 = vpack.c.b16 %v7164, %v7156
  %v7189 = vpack.c.b16 %v7165, %v7157
  %v7190 = vpack.c.b16 %v7166, %v7158
  %v7191 = vpack.c.b16 %v7175, %v7167
  %v7192 = vpack.c.b16 %v7176, %v7168
  %v7193 = vpack.c.b16 %v7177, %v7169
  %v7194 = vpack.c.b16 %v7178, %v7170
  %v7195 = vpack.c.b16 %v7179, %v7171
  %v7196 = vpack.c.b16 %v7180, %v7172
  %v7197 = vpack.c.b16 %v7181, %v7173
  %v7198 = vpack.c.b16 %v7182, %v7174
  %vm7215 = vcmask 261120
  %v7217 = vsel %vm7215, %v7100, 0
  %7219 = vmatpush.bf16.msra.mxu0 0
  %7220 = vmatpush.bf16.msra.mxu0 0
  %7221 = vmatpush.bf16.msra.mxu0 0
  %7222 = vmatpush.bf16.msra.mxu0 0
  %7223 = vmatpush.bf16.msra.mxu0 0
  %7224 = vmatpush.bf16.msra.mxu0 0
  %7225 = vmatpush.bf16.msra.mxu0 %v7191
  %7226 = vmatpush.bf16.msra.mxu0 %v7183
  %7227 = vmatmul.bf16.gmra.mxu0 %v7217
  %v7228 = vpop.f32.mrf.mxu0
  %v7229 = vadd.f32 %v7119, %v7228
  %v7230 = vpop.f32.mrf.mxu0
  %7231 = vdwg.mxu0
  %7232 = vmatpush.bf16.msra.mxu0 0
  %7233 = vmatpush.bf16.msra.mxu0 0
  %7234 = vmatpush.bf16.msra.mxu0 0
  %7235 = vmatpush.bf16.msra.mxu0 0
  %7236 = vmatpush.bf16.msra.mxu0 0
  %7237 = vmatpush.bf16.msra.mxu0 0
  %7238 = vmatpush.bf16.msra.mxu0 %v7192
  %7239 = vmatpush.bf16.msra.mxu0 %v7184
  %7240 = vmatmul.bf16.gmra.mxu0 %v7217
  %v7241 = vpop.f32.mrf.mxu0
  %v7242 = vadd.f32 %v7120, %v7241
  %v7243 = vpop.f32.mrf.mxu0
  %7244 = vdwg.mxu0
  %7245 = vmatpush.bf16.msra.mxu0 0
  %7246 = vmatpush.bf16.msra.mxu0 0
  %7247 = vmatpush.bf16.msra.mxu0 0
  %7248 = vmatpush.bf16.msra.mxu0 0
  %7249 = vmatpush.bf16.msra.mxu0 0
  %7250 = vmatpush.bf16.msra.mxu0 0
  %7251 = vmatpush.bf16.msra.mxu0 %v7193
  %7252 = vmatpush.bf16.msra.mxu0 %v7185
  %7253 = vmatmul.bf16.gmra.mxu0 %v7217
  %v7254 = vpop.f32.mrf.mxu0
  %v7255 = vadd.f32 %v7121, %v7254
  %v7256 = vpop.f32.mrf.mxu0
  %7257 = vdwg.mxu0
  %7258 = vmatpush.bf16.msra.mxu0 0
  %7259 = vmatpush.bf16.msra.mxu0 0
  %7260 = vmatpush.bf16.msra.mxu0 0
  %7261 = vmatpush.bf16.msra.mxu0 0
  %7262 = vmatpush.bf16.msra.mxu0 0
  %7263 = vmatpush.bf16.msra.mxu0 0
  %7264 = vmatpush.bf16.msra.mxu0 %v7194
  %7265 = vmatpush.bf16.msra.mxu0 %v7186
  %7266 = vmatmul.bf16.gmra.mxu0 %v7217
  %v7267 = vpop.f32.mrf.mxu0
  %v7268 = vadd.f32 %v7122, %v7267
  %v7269 = vpop.f32.mrf.mxu0
  %7270 = vdwg.mxu0
  %7271 = vmatpush.bf16.msra.mxu0 0
  %7272 = vmatpush.bf16.msra.mxu0 0
  %7273 = vmatpush.bf16.msra.mxu0 0
  %7274 = vmatpush.bf16.msra.mxu0 0
  %7275 = vmatpush.bf16.msra.mxu0 0
  %7276 = vmatpush.bf16.msra.mxu0 0
  %7277 = vmatpush.bf16.msra.mxu0 %v7195
  %7278 = vmatpush.bf16.msra.mxu0 %v7187
  %7279 = vmatmul.bf16.gmra.mxu0 %v7217
  %v7280 = vpop.f32.mrf.mxu0
  %v7281 = vadd.f32 %v7123, %v7280
  %v7282 = vpop.f32.mrf.mxu0
  %7283 = vdwg.mxu0
  %7284 = vmatpush.bf16.msra.mxu0 0
  %7285 = vmatpush.bf16.msra.mxu0 0
  %7286 = vmatpush.bf16.msra.mxu0 0
  %7287 = vmatpush.bf16.msra.mxu0 0
  %7288 = vmatpush.bf16.msra.mxu0 0
  %7289 = vmatpush.bf16.msra.mxu0 0
  %7290 = vmatpush.bf16.msra.mxu0 %v7196
  %7291 = vmatpush.bf16.msra.mxu0 %v7188
  %7292 = vmatmul.bf16.gmra.mxu0 %v7217
  %v7293 = vpop.f32.mrf.mxu0
  %v7294 = vadd.f32 %v7124, %v7293
  %v7295 = vpop.f32.mrf.mxu0
  %7296 = vdwg.mxu0
  %7297 = vmatpush.bf16.msra.mxu0 0
  %7298 = vmatpush.bf16.msra.mxu0 0
  %7299 = vmatpush.bf16.msra.mxu0 0
  %7300 = vmatpush.bf16.msra.mxu0 0
  %7301 = vmatpush.bf16.msra.mxu0 0
  %7302 = vmatpush.bf16.msra.mxu0 0
  %7303 = vmatpush.bf16.msra.mxu0 %v7197
  %7304 = vmatpush.bf16.msra.mxu0 %v7189
  %7305 = vmatmul.bf16.gmra.mxu0 %v7217
  %v7306 = vpop.f32.mrf.mxu0
  %v7307 = vadd.f32 %v7125, %v7306
  %v7308 = vpop.f32.mrf.mxu0
  %7309 = vdwg.mxu0
  %7310 = vmatpush.bf16.msra.mxu0 0
  %7311 = vmatpush.bf16.msra.mxu0 0
  %7312 = vmatpush.bf16.msra.mxu0 0
  %7313 = vmatpush.bf16.msra.mxu0 0
  %7314 = vmatpush.bf16.msra.mxu0 0
  %7315 = vmatpush.bf16.msra.mxu0 0
  %7316 = vmatpush.bf16.msra.mxu0 %v7198
  %7317 = vmatpush.bf16.msra.mxu0 %v7190
  %7318 = vmatmul.bf16.gmra.mxu0 %v7217
  %v7319 = vpop.f32.mrf.mxu0
  %v7320 = vadd.f32 %v7126, %v7319
  %v7321 = vpop.f32.mrf.mxu0
  %7322 = vdwg.mxu0
  %v7323 = vpack.c.bf16 %v7229, %v7229
  %v7324 = vpack.c.bf16 %v7242, %v7242
  %v7325 = vpack.c.bf16 %v7255, %v7255
  %v7326 = vpack.c.bf16 %v7268, %v7268
  %v7327 = vpack.c.bf16 %v7281, %v7281
  %v7328 = vpack.c.bf16 %v7294, %v7294
  %v7329 = vpack.c.bf16 %v7307, %v7307
  %v7330 = vpack.c.bf16 %v7320, %v7320
  %s7331 = smul.u32 4, 128
  %s7332 = smul.u32 %s7331, 4
  %s7333 = sshll.u32 %s7332, 4
  %7334 = dma.done %s56, %s7333
  %v7335 = vld [vmem:[#allocation3] sm:$0xff]
  %v7336 = vld [vmem:[#allocation3 + $0x8] sm:$0xff]
  %v7337 = vld [vmem:[#allocation3 + $0x10] sm:$0xff]
  %v7338 = vld [vmem:[#allocation3 + $0x18] sm:$0xff]
  %v7339 = vld [vmem:[#allocation3 + $0x20] sm:$0xff]
  %v7340 = vld [vmem:[#allocation3 + $0x28] sm:$0xff]
  %v7341 = vld [vmem:[#allocation3 + $0x30] sm:$0xff]
  %v7342 = vld [vmem:[#allocation3 + $0x38] sm:$0xff]
  %v7343 = vld [vmem:[#allocation3 + $0x40] sm:$0xff]
  %v7344 = vld [vmem:[#allocation3 + $0x48] sm:$0xff]
  %v7345 = vld [vmem:[#allocation3 + $0x50] sm:$0xff]
  %v7346 = vld [vmem:[#allocation3 + $0x58] sm:$0xff]
  %v7347 = vld [vmem:[#allocation3 + $0x60] sm:$0xff]
  %v7348 = vld [vmem:[#allocation3 + $0x68] sm:$0xff]
  %v7349 = vld [vmem:[#allocation3 + $0x70] sm:$0xff]
  %v7350 = vld [vmem:[#allocation3 + $0x78] sm:$0xff]
  %v7351 = vld [vmem:[#allocation3 + $0x80] sm:$0xff]
  %v7352 = vld [vmem:[#allocation3 + $0x88] sm:$0xff]
  %v7353 = vld [vmem:[#allocation3 + $0x90] sm:$0xff]
  %v7354 = vld [vmem:[#allocation3 + $0x98] sm:$0xff]
  %v7355 = vld [vmem:[#allocation3 + $0xa0] sm:$0xff]
  %v7356 = vld [vmem:[#allocation3 + $0xa8] sm:$0xff]
  %v7357 = vld [vmem:[#allocation3 + $0xb0] sm:$0xff]
  %v7358 = vld [vmem:[#allocation3 + $0xb8] sm:$0xff]
  %v7359 = vld [vmem:[#allocation3 + $0xc0] sm:$0xff]
  %v7360 = vld [vmem:[#allocation3 + $0xc8] sm:$0xff]
  %v7361 = vld [vmem:[#allocation3 + $0xd0] sm:$0xff]
  %v7362 = vld [vmem:[#allocation3 + $0xd8] sm:$0xff]
  %v7363 = vld [vmem:[#allocation3 + $0xe0] sm:$0xff]
  %v7364 = vld [vmem:[#allocation3 + $0xe8] sm:$0xff]
  %v7365 = vld [vmem:[#allocation3 + $0xf0] sm:$0xff]
  %v7366 = vld [vmem:[#allocation3 + $0xf8] sm:$0xff]
  %v7367 = vld [vmem:[#allocation3 + $0x100] sm:$0xff]
  %v7368 = vld [vmem:[#allocation3 + $0x108] sm:$0xff]
  %v7369 = vld [vmem:[#allocation3 + $0x110] sm:$0xff]
  %v7370 = vld [vmem:[#allocation3 + $0x118] sm:$0xff]
  %v7371 = vld [vmem:[#allocation3 + $0x120] sm:$0xff]
  %v7372 = vld [vmem:[#allocation3 + $0x128] sm:$0xff]
  %v7373 = vld [vmem:[#allocation3 + $0x130] sm:$0xff]
  %v7374 = vld [vmem:[#allocation3 + $0x138] sm:$0xff]
  %v7375 = vld [vmem:[#allocation3 + $0x140] sm:$0xff]
  %v7376 = vld [vmem:[#allocation3 + $0x148] sm:$0xff]
  %v7377 = vld [vmem:[#allocation3 + $0x150] sm:$0xff]
  %v7378 = vld [vmem:[#allocation3 + $0x158] sm:$0xff]
  %v7379 = vld [vmem:[#allocation3 + $0x160] sm:$0xff]
  %v7380 = vld [vmem:[#allocation3 + $0x168] sm:$0xff]
  %v7381 = vld [vmem:[#allocation3 + $0x170] sm:$0xff]
  %v7382 = vld [vmem:[#allocation3 + $0x178] sm:$0xff]
  %v7383 = vld [vmem:[#allocation3 + $0x180] sm:$0xff]
  %v7384 = vld [vmem:[#allocation3 + $0x188] sm:$0xff]
  %v7385 = vld [vmem:[#allocation3 + $0x190] sm:$0xff]
  %v7386 = vld [vmem:[#allocation3 + $0x198] sm:$0xff]
  %v7387 = vld [vmem:[#allocation3 + $0x1a0] sm:$0xff]
  %v7388 = vld [vmem:[#allocation3 + $0x1a8] sm:$0xff]
  %v7389 = vld [vmem:[#allocation3 + $0x1b0] sm:$0xff]
  %v7390 = vld [vmem:[#allocation3 + $0x1b8] sm:$0xff]
  %v7391 = vld [vmem:[#allocation3 + $0x1c0] sm:$0xff]
  %v7392 = vld [vmem:[#allocation3 + $0x1c8] sm:$0xff]
  %v7393 = vld [vmem:[#allocation3 + $0x1d0] sm:$0xff]
  %v7394 = vld [vmem:[#allocation3 + $0x1d8] sm:$0xff]
  %v7395 = vld [vmem:[#allocation3 + $0x1e0] sm:$0xff]
  %v7396 = vld [vmem:[#allocation3 + $0x1e8] sm:$0xff]
  %v7397 = vld [vmem:[#allocation3 + $0x1f0] sm:$0xff]
  %v7398 = vld [vmem:[#allocation3 + $0x1f8] sm:$0xff]
  %v7399 = vld [vmem:[#allocation3 + $0x200] sm:$0xff]
  %v7400 = vld [vmem:[#allocation3 + $0x208] sm:$0xff]
  %v7401 = vld [vmem:[#allocation3 + $0x210] sm:$0xff]
  %v7402 = vld [vmem:[#allocation3 + $0x218] sm:$0xff]
  %v7403 = vld [vmem:[#allocation3 + $0x220] sm:$0xff]
  %v7404 = vld [vmem:[#allocation3 + $0x228] sm:$0xff]
  %v7405 = vld [vmem:[#allocation3 + $0x230] sm:$0xff]
  %v7406 = vld [vmem:[#allocation3 + $0x238] sm:$0xff]
  %v7407 = vld [vmem:[#allocation3 + $0x240] sm:$0xff]
  %v7408 = vld [vmem:[#allocation3 + $0x248] sm:$0xff]
  %v7409 = vld [vmem:[#allocation3 + $0x250] sm:$0xff]
  %v7410 = vld [vmem:[#allocation3 + $0x258] sm:$0xff]
  %v7411 = vld [vmem:[#allocation3 + $0x260] sm:$0xff]
  %v7412 = vld [vmem:[#allocation3 + $0x268] sm:$0xff]
  %v7413 = vld [vmem:[#allocation3 + $0x270] sm:$0xff]
  %v7414 = vld [vmem:[#allocation3 + $0x278] sm:$0xff]
  %v7415 = vld [vmem:[#allocation3 + $0x280] sm:$0xff]
  %v7416 = vld [vmem:[#allocation3 + $0x288] sm:$0xff]
  %v7417 = vld [vmem:[#allocation3 + $0x290] sm:$0xff]
  %v7418 = vld [vmem:[#allocation3 + $0x298] sm:$0xff]
  %v7419 = vld [vmem:[#allocation3 + $0x2a0] sm:$0xff]
  %v7420 = vld [vmem:[#allocation3 + $0x2a8] sm:$0xff]
  %v7421 = vld [vmem:[#allocation3 + $0x2b0] sm:$0xff]
  %v7422 = vld [vmem:[#allocation3 + $0x2b8] sm:$0xff]
  %v7423 = vld [vmem:[#allocation3 + $0x2c0] sm:$0xff]
  %v7424 = vld [vmem:[#allocation3 + $0x2c8] sm:$0xff]
  %v7425 = vld [vmem:[#allocation3 + $0x2d0] sm:$0xff]
  %v7426 = vld [vmem:[#allocation3 + $0x2d8] sm:$0xff]
  %v7427 = vld [vmem:[#allocation3 + $0x2e0] sm:$0xff]
  %v7428 = vld [vmem:[#allocation3 + $0x2e8] sm:$0xff]
  %v7429 = vld [vmem:[#allocation3 + $0x2f0] sm:$0xff]
  %v7430 = vld [vmem:[#allocation3 + $0x2f8] sm:$0xff]
  %v7431 = vld [vmem:[#allocation3 + $0x300] sm:$0xff]
  %v7432 = vld [vmem:[#allocation3 + $0x308] sm:$0xff]
  %v7433 = vld [vmem:[#allocation3 + $0x310] sm:$0xff]
  %v7434 = vld [vmem:[#allocation3 + $0x318] sm:$0xff]
  %v7435 = vld [vmem:[#allocation3 + $0x320] sm:$0xff]
  %v7436 = vld [vmem:[#allocation3 + $0x328] sm:$0xff]
  %v7437 = vld [vmem:[#allocation3 + $0x330] sm:$0xff]
  %v7438 = vld [vmem:[#allocation3 + $0x338] sm:$0xff]
  %v7439 = vld [vmem:[#allocation3 + $0x340] sm:$0xff]
  %v7440 = vld [vmem:[#allocation3 + $0x348] sm:$0xff]
  %v7441 = vld [vmem:[#allocation3 + $0x350] sm:$0xff]
  %v7442 = vld [vmem:[#allocation3 + $0x358] sm:$0xff]
  %v7443 = vld [vmem:[#allocation3 + $0x360] sm:$0xff]
  %v7444 = vld [vmem:[#allocation3 + $0x368] sm:$0xff]
  %v7445 = vld [vmem:[#allocation3 + $0x370] sm:$0xff]
  %v7446 = vld [vmem:[#allocation3 + $0x378] sm:$0xff]
  %v7447 = vld [vmem:[#allocation3 + $0x380] sm:$0xff]
  %v7448 = vld [vmem:[#allocation3 + $0x388] sm:$0xff]
  %v7449 = vld [vmem:[#allocation3 + $0x390] sm:$0xff]
  %v7450 = vld [vmem:[#allocation3 + $0x398] sm:$0xff]
  %v7451 = vld [vmem:[#allocation3 + $0x3a0] sm:$0xff]
  %v7452 = vld [vmem:[#allocation3 + $0x3a8] sm:$0xff]
  %v7453 = vld [vmem:[#allocation3 + $0x3b0] sm:$0xff]
  %v7454 = vld [vmem:[#allocation3 + $0x3b8] sm:$0xff]
  %v7455 = vld [vmem:[#allocation3 + $0x3c0] sm:$0xff]
  %v7456 = vld [vmem:[#allocation3 + $0x3c8] sm:$0xff]
  %v7457 = vld [vmem:[#allocation3 + $0x3d0] sm:$0xff]
  %v7458 = vld [vmem:[#allocation3 + $0x3d8] sm:$0xff]
  %v7459 = vld [vmem:[#allocation3 + $0x3e0] sm:$0xff]
  %v7460 = vld [vmem:[#allocation3 + $0x3e8] sm:$0xff]
  %v7461 = vld [vmem:[#allocation3 + $0x3f0] sm:$0xff]
  %v7462 = vld [vmem:[#allocation3 + $0x3f8] sm:$0xff]
  %v7463 = vld [vmem:[#allocation3 + $0x400] sm:$0xff]
  %v7464 = vld [vmem:[#allocation3 + $0x408] sm:$0xff]
  %v7465 = vld [vmem:[#allocation3 + $0x410] sm:$0xff]
  %v7466 = vld [vmem:[#allocation3 + $0x418] sm:$0xff]
  %v7467 = vld [vmem:[#allocation3 + $0x420] sm:$0xff]
  %v7468 = vld [vmem:[#allocation3 + $0x428] sm:$0xff]
  %v7469 = vld [vmem:[#allocation3 + $0x430] sm:$0xff]
  %v7470 = vld [vmem:[#allocation3 + $0x438] sm:$0xff]
  %v7471 = vld [vmem:[#allocation3 + $0x440] sm:$0xff]
  %v7472 = vld [vmem:[#allocation3 + $0x448] sm:$0xff]
  %v7473 = vld [vmem:[#allocation3 + $0x450] sm:$0xff]
  %v7474 = vld [vmem:[#allocation3 + $0x458] sm:$0xff]
  %v7475 = vld [vmem:[#allocation3 + $0x460] sm:$0xff]
  %v7476 = vld [vmem:[#allocation3 + $0x468] sm:$0xff]
  %v7477 = vld [vmem:[#allocation3 + $0x470] sm:$0xff]
  %v7478 = vld [vmem:[#allocation3 + $0x478] sm:$0xff]
  %v7479 = vld [vmem:[#allocation3 + $0x480] sm:$0xff]
  %v7480 = vld [vmem:[#allocation3 + $0x488] sm:$0xff]
  %v7481 = vld [vmem:[#allocation3 + $0x490] sm:$0xff]
  %v7482 = vld [vmem:[#allocation3 + $0x498] sm:$0xff]
  %v7483 = vld [vmem:[#allocation3 + $0x4a0] sm:$0xff]
  %v7484 = vld [vmem:[#allocation3 + $0x4a8] sm:$0xff]
  %v7485 = vld [vmem:[#allocation3 + $0x4b0] sm:$0xff]
  %v7486 = vld [vmem:[#allocation3 + $0x4b8] sm:$0xff]
  %v7487 = vld [vmem:[#allocation3 + $0x4c0] sm:$0xff]
  %v7488 = vld [vmem:[#allocation3 + $0x4c8] sm:$0xff]
  %v7489 = vld [vmem:[#allocation3 + $0x4d0] sm:$0xff]
  %v7490 = vld [vmem:[#allocation3 + $0x4d8] sm:$0xff]
  %v7491 = vld [vmem:[#allocation3 + $0x4e0] sm:$0xff]
  %v7492 = vld [vmem:[#allocation3 + $0x4e8] sm:$0xff]
  %v7493 = vld [vmem:[#allocation3 + $0x4f0] sm:$0xff]
  %v7494 = vld [vmem:[#allocation3 + $0x4f8] sm:$0xff]
  %v7495 = vld [vmem:[#allocation3 + $0x500] sm:$0xff]
  %v7496 = vld [vmem:[#allocation3 + $0x508] sm:$0xff]
  %v7497 = vld [vmem:[#allocation3 + $0x510] sm:$0xff]
  %v7498 = vld [vmem:[#allocation3 + $0x518] sm:$0xff]
  %v7499 = vld [vmem:[#allocation3 + $0x520] sm:$0xff]
  %v7500 = vld [vmem:[#allocation3 + $0x528] sm:$0xff]
  %v7501 = vld [vmem:[#allocation3 + $0x530] sm:$0xff]
  %v7502 = vld [vmem:[#allocation3 + $0x538] sm:$0xff]
  %v7503 = vld [vmem:[#allocation3 + $0x540] sm:$0xff]
  %v7504 = vld [vmem:[#allocation3 + $0x548] sm:$0xff]
  %v7505 = vld [vmem:[#allocation3 + $0x550] sm:$0xff]
  %v7506 = vld [vmem:[#allocation3 + $0x558] sm:$0xff]
  %v7507 = vld [vmem:[#allocation3 + $0x560] sm:$0xff]
  %v7508 = vld [vmem:[#allocation3 + $0x568] sm:$0xff]
  %v7509 = vld [vmem:[#allocation3 + $0x570] sm:$0xff]
  %v7510 = vld [vmem:[#allocation3 + $0x578] sm:$0xff]
  %v7511 = vld [vmem:[#allocation3 + $0x580] sm:$0xff]
  %v7512 = vld [vmem:[#allocation3 + $0x588] sm:$0xff]
  %v7513 = vld [vmem:[#allocation3 + $0x590] sm:$0xff]
  %v7514 = vld [vmem:[#allocation3 + $0x598] sm:$0xff]
  %v7515 = vld [vmem:[#allocation3 + $0x5a0] sm:$0xff]
  %v7516 = vld [vmem:[#allocation3 + $0x5a8] sm:$0xff]
  %v7517 = vld [vmem:[#allocation3 + $0x5b0] sm:$0xff]
  %v7518 = vld [vmem:[#allocation3 + $0x5b8] sm:$0xff]
  %v7519 = vld [vmem:[#allocation3 + $0x5c0] sm:$0xff]
  %v7520 = vld [vmem:[#allocation3 + $0x5c8] sm:$0xff]
  %v7521 = vld [vmem:[#allocation3 + $0x5d0] sm:$0xff]
  %v7522 = vld [vmem:[#allocation3 + $0x5d8] sm:$0xff]
  %v7523 = vld [vmem:[#allocation3 + $0x5e0] sm:$0xff]
  %v7524 = vld [vmem:[#allocation3 + $0x5e8] sm:$0xff]
  %v7525 = vld [vmem:[#allocation3 + $0x5f0] sm:$0xff]
  %v7526 = vld [vmem:[#allocation3 + $0x5f8] sm:$0xff]
  %v7527 = vld [vmem:[#allocation3 + $0x600] sm:$0xff]
  %v7528 = vld [vmem:[#allocation3 + $0x608] sm:$0xff]
  %v7529 = vld [vmem:[#allocation3 + $0x610] sm:$0xff]
  %v7530 = vld [vmem:[#allocation3 + $0x618] sm:$0xff]
  %v7531 = vld [vmem:[#allocation3 + $0x620] sm:$0xff]
  %v7532 = vld [vmem:[#allocation3 + $0x628] sm:$0xff]
  %v7533 = vld [vmem:[#allocation3 + $0x630] sm:$0xff]
  %v7534 = vld [vmem:[#allocation3 + $0x638] sm:$0xff]
  %v7535 = vld [vmem:[#allocation3 + $0x640] sm:$0xff]
  %v7536 = vld [vmem:[#allocation3 + $0x648] sm:$0xff]
  %v7537 = vld [vmem:[#allocation3 + $0x650] sm:$0xff]
  %v7538 = vld [vmem:[#allocation3 + $0x658] sm:$0xff]
  %v7539 = vld [vmem:[#allocation3 + $0x660] sm:$0xff]
  %v7540 = vld [vmem:[#allocation3 + $0x668] sm:$0xff]
  %v7541 = vld [vmem:[#allocation3 + $0x670] sm:$0xff]
  %v7542 = vld [vmem:[#allocation3 + $0x678] sm:$0xff]
  %v7543 = vld [vmem:[#allocation3 + $0x680] sm:$0xff]
  %v7544 = vld [vmem:[#allocation3 + $0x688] sm:$0xff]
  %v7545 = vld [vmem:[#allocation3 + $0x690] sm:$0xff]
  %v7546 = vld [vmem:[#allocation3 + $0x698] sm:$0xff]
  %v7547 = vld [vmem:[#allocation3 + $0x6a0] sm:$0xff]
  %v7548 = vld [vmem:[#allocation3 + $0x6a8] sm:$0xff]
  %v7549 = vld [vmem:[#allocation3 + $0x6b0] sm:$0xff]
  %v7550 = vld [vmem:[#allocation3 + $0x6b8] sm:$0xff]
  %v7551 = vld [vmem:[#allocation3 + $0x6c0] sm:$0xff]
  %v7552 = vld [vmem:[#allocation3 + $0x6c8] sm:$0xff]
  %v7553 = vld [vmem:[#allocation3 + $0x6d0] sm:$0xff]
  %v7554 = vld [vmem:[#allocation3 + $0x6d8] sm:$0xff]
  %v7555 = vld [vmem:[#allocation3 + $0x6e0] sm:$0xff]
  %v7556 = vld [vmem:[#allocation3 + $0x6e8] sm:$0xff]
  %v7557 = vld [vmem:[#allocation3 + $0x6f0] sm:$0xff]
  %v7558 = vld [vmem:[#allocation3 + $0x6f8] sm:$0xff]
  %v7559 = vld [vmem:[#allocation3 + $0x700] sm:$0xff]
  %v7560 = vld [vmem:[#allocation3 + $0x708] sm:$0xff]
  %v7561 = vld [vmem:[#allocation3 + $0x710] sm:$0xff]
  %v7562 = vld [vmem:[#allocation3 + $0x718] sm:$0xff]
  %v7563 = vld [vmem:[#allocation3 + $0x720] sm:$0xff]
  %v7564 = vld [vmem:[#allocation3 + $0x728] sm:$0xff]
  %v7565 = vld [vmem:[#allocation3 + $0x730] sm:$0xff]
  %v7566 = vld [vmem:[#allocation3 + $0x738] sm:$0xff]
  %v7567 = vld [vmem:[#allocation3 + $0x740] sm:$0xff]
  %v7568 = vld [vmem:[#allocation3 + $0x748] sm:$0xff]
  %v7569 = vld [vmem:[#allocation3 + $0x750] sm:$0xff]
  %v7570 = vld [vmem:[#allocation3 + $0x758] sm:$0xff]
  %v7571 = vld [vmem:[#allocation3 + $0x760] sm:$0xff]
  %v7572 = vld [vmem:[#allocation3 + $0x768] sm:$0xff]
  %v7573 = vld [vmem:[#allocation3 + $0x770] sm:$0xff]
  %v7574 = vld [vmem:[#allocation3 + $0x778] sm:$0xff]
  %v7575 = vld [vmem:[#allocation3 + $0x780] sm:$0xff]
  %v7576 = vld [vmem:[#allocation3 + $0x788] sm:$0xff]
  %v7577 = vld [vmem:[#allocation3 + $0x790] sm:$0xff]
  %v7578 = vld [vmem:[#allocation3 + $0x798] sm:$0xff]
  %v7579 = vld [vmem:[#allocation3 + $0x7a0] sm:$0xff]
  %v7580 = vld [vmem:[#allocation3 + $0x7a8] sm:$0xff]
  %v7581 = vld [vmem:[#allocation3 + $0x7b0] sm:$0xff]
  %v7582 = vld [vmem:[#allocation3 + $0x7b8] sm:$0xff]
  %v7583 = vld [vmem:[#allocation3 + $0x7c0] sm:$0xff]
  %v7584 = vld [vmem:[#allocation3 + $0x7c8] sm:$0xff]
  %v7585 = vld [vmem:[#allocation3 + $0x7d0] sm:$0xff]
  %v7586 = vld [vmem:[#allocation3 + $0x7d8] sm:$0xff]
  %v7587 = vld [vmem:[#allocation3 + $0x7e0] sm:$0xff]
  %v7588 = vld [vmem:[#allocation3 + $0x7e8] sm:$0xff]
  %v7589 = vld [vmem:[#allocation3 + $0x7f0] sm:$0xff]
  %v7590 = vld [vmem:[#allocation3 + $0x7f8] sm:$0xff]
  %v7591 = vld [vmem:[%s6] sm:$0xf]
  %v7593 = vperm.slane %v7591, 0
  %v7594 = vperm.slane %v7591, 1
  %v7595 = vperm.slane %v7591, 2
  %v7596 = vperm.slane %v7591, 3
  %v7857 = vunpack.c.l.b16 %v7335
  %v7858 = vunpack.c.h.b16 %v7335
  %v7859 = vunpack.c.l.b16 %v7336
  %v7860 = vunpack.c.h.b16 %v7336
  %v7861 = vunpack.c.l.b16 %v7337
  %v7862 = vunpack.c.h.b16 %v7337
  %v7863 = vunpack.c.l.b16 %v7338
  %v7864 = vunpack.c.h.b16 %v7338
  %v7865 = vunpack.c.l.b16 %v7339
  %v7866 = vunpack.c.h.b16 %v7339
  %v7867 = vunpack.c.l.b16 %v7340
  %v7868 = vunpack.c.h.b16 %v7340
  %v7869 = vunpack.c.l.b16 %v7341
  %v7870 = vunpack.c.h.b16 %v7341
  %v7871 = vunpack.c.l.b16 %v7342
  %v7872 = vunpack.c.h.b16 %v7342
  %v7873 = vunpack.c.l.b16 %v7343
  %v7874 = vunpack.c.h.b16 %v7343
  %v7875 = vunpack.c.l.b16 %v7344
  %v7876 = vunpack.c.h.b16 %v7344
  %v7877 = vunpack.c.l.b16 %v7345
  %v7878 = vunpack.c.h.b16 %v7345
  %v7879 = vunpack.c.l.b16 %v7346
  %v7880 = vunpack.c.h.b16 %v7346
  %v7881 = vunpack.c.l.b16 %v7347
  %v7882 = vunpack.c.h.b16 %v7347
  %v7883 = vunpack.c.l.b16 %v7348
  %v7884 = vunpack.c.h.b16 %v7348
  %v7885 = vunpack.c.l.b16 %v7349
  %v7886 = vunpack.c.h.b16 %v7349
  %v7887 = vunpack.c.l.b16 %v7350
  %v7888 = vunpack.c.h.b16 %v7350
  %v7889 = vunpack.c.l.b16 %v7351
  %v7890 = vunpack.c.h.b16 %v7351
  %v7891 = vunpack.c.l.b16 %v7352
  %v7892 = vunpack.c.h.b16 %v7352
  %v7893 = vunpack.c.l.b16 %v7353
  %v7894 = vunpack.c.h.b16 %v7353
  %v7895 = vunpack.c.l.b16 %v7354
  %v7896 = vunpack.c.h.b16 %v7354
  %v7897 = vunpack.c.l.b16 %v7355
  %v7898 = vunpack.c.h.b16 %v7355
  %v7899 = vunpack.c.l.b16 %v7356
  %v7900 = vunpack.c.h.b16 %v7356
  %v7901 = vunpack.c.l.b16 %v7357
  %v7902 = vunpack.c.h.b16 %v7357
  %v7903 = vunpack.c.l.b16 %v7358
  %v7904 = vunpack.c.h.b16 %v7358
  %v7905 = vunpack.c.l.b16 %v7359
  %v7906 = vunpack.c.h.b16 %v7359
  %v7907 = vunpack.c.l.b16 %v7360
  %v7908 = vunpack.c.h.b16 %v7360
  %v7909 = vunpack.c.l.b16 %v7361
  %v7910 = vunpack.c.h.b16 %v7361
  %v7911 = vunpack.c.l.b16 %v7362
  %v7912 = vunpack.c.h.b16 %v7362
  %v7913 = vunpack.c.l.b16 %v7363
  %v7914 = vunpack.c.h.b16 %v7363
  %v7915 = vunpack.c.l.b16 %v7364
  %v7916 = vunpack.c.h.b16 %v7364
  %v7917 = vunpack.c.l.b16 %v7365
  %v7918 = vunpack.c.h.b16 %v7365
  %v7919 = vunpack.c.l.b16 %v7366
  %v7920 = vunpack.c.h.b16 %v7366
  %v7921 = vunpack.c.l.b16 %v7367
  %v7922 = vunpack.c.h.b16 %v7367
  %v7923 = vunpack.c.l.b16 %v7368
  %v7924 = vunpack.c.h.b16 %v7368
  %v7925 = vunpack.c.l.b16 %v7369
  %v7926 = vunpack.c.h.b16 %v7369
  %v7927 = vunpack.c.l.b16 %v7370
  %v7928 = vunpack.c.h.b16 %v7370
  %v7929 = vunpack.c.l.b16 %v7371
  %v7930 = vunpack.c.h.b16 %v7371
  %v7931 = vunpack.c.l.b16 %v7372
  %v7932 = vunpack.c.h.b16 %v7372
  %v7933 = vunpack.c.l.b16 %v7373
  %v7934 = vunpack.c.h.b16 %v7373
  %v7935 = vunpack.c.l.b16 %v7374
  %v7936 = vunpack.c.h.b16 %v7374
  %v7937 = vunpack.c.l.b16 %v7375
  %v7938 = vunpack.c.h.b16 %v7375
  %v7939 = vunpack.c.l.b16 %v7376
  %v7940 = vunpack.c.h.b16 %v7376
  %v7941 = vunpack.c.l.b16 %v7377
  %v7942 = vunpack.c.h.b16 %v7377
  %v7943 = vunpack.c.l.b16 %v7378
  %v7944 = vunpack.c.h.b16 %v7378
  %v7945 = vunpack.c.l.b16 %v7379
  %v7946 = vunpack.c.h.b16 %v7379
  %v7947 = vunpack.c.l.b16 %v7380
  %v7948 = vunpack.c.h.b16 %v7380
  %v7949 = vunpack.c.l.b16 %v7381
  %v7950 = vunpack.c.h.b16 %v7381
  %v7951 = vunpack.c.l.b16 %v7382
  %v7952 = vunpack.c.h.b16 %v7382
  %v7953 = vunpack.c.l.b16 %v7383
  %v7954 = vunpack.c.h.b16 %v7383
  %v7955 = vunpack.c.l.b16 %v7384
  %v7956 = vunpack.c.h.b16 %v7384
  %v7957 = vunpack.c.l.b16 %v7385
  %v7958 = vunpack.c.h.b16 %v7385
  %v7959 = vunpack.c.l.b16 %v7386
  %v7960 = vunpack.c.h.b16 %v7386
  %v7961 = vunpack.c.l.b16 %v7387
  %v7962 = vunpack.c.h.b16 %v7387
  %v7963 = vunpack.c.l.b16 %v7388
  %v7964 = vunpack.c.h.b16 %v7388
  %v7965 = vunpack.c.l.b16 %v7389
  %v7966 = vunpack.c.h.b16 %v7389
  %v7967 = vunpack.c.l.b16 %v7390
  %v7968 = vunpack.c.h.b16 %v7390
  %v7969 = vunpack.c.l.b16 %v7391
  %v7970 = vunpack.c.h.b16 %v7391
  %v7971 = vunpack.c.l.b16 %v7392
  %v7972 = vunpack.c.h.b16 %v7392
  %v7973 = vunpack.c.l.b16 %v7393
  %v7974 = vunpack.c.h.b16 %v7393
  %v7975 = vunpack.c.l.b16 %v7394
  %v7976 = vunpack.c.h.b16 %v7394
  %v7977 = vunpack.c.l.b16 %v7395
  %v7978 = vunpack.c.h.b16 %v7395
  %v7979 = vunpack.c.l.b16 %v7396
  %v7980 = vunpack.c.h.b16 %v7396
  %v7981 = vunpack.c.l.b16 %v7397
  %v7982 = vunpack.c.h.b16 %v7397
  %v7983 = vunpack.c.l.b16 %v7398
  %v7984 = vunpack.c.h.b16 %v7398
  %v7985 = vunpack.c.l.b16 %v7399
  %v7986 = vunpack.c.h.b16 %v7399
  %v7987 = vunpack.c.l.b16 %v7400
  %v7988 = vunpack.c.h.b16 %v7400
  %v7989 = vunpack.c.l.b16 %v7401
  %v7990 = vunpack.c.h.b16 %v7401
  %v7991 = vunpack.c.l.b16 %v7402
  %v7992 = vunpack.c.h.b16 %v7402
  %v7993 = vunpack.c.l.b16 %v7403
  %v7994 = vunpack.c.h.b16 %v7403
  %v7995 = vunpack.c.l.b16 %v7404
  %v7996 = vunpack.c.h.b16 %v7404
  %v7997 = vunpack.c.l.b16 %v7405
  %v7998 = vunpack.c.h.b16 %v7405
  %v7999 = vunpack.c.l.b16 %v7406
  %v8000 = vunpack.c.h.b16 %v7406
  %v8001 = vunpack.c.l.b16 %v7407
  %v8002 = vunpack.c.h.b16 %v7407
  %v8003 = vunpack.c.l.b16 %v7408
  %v8004 = vunpack.c.h.b16 %v7408
  %v8005 = vunpack.c.l.b16 %v7409
  %v8006 = vunpack.c.h.b16 %v7409
  %v8007 = vunpack.c.l.b16 %v7410
  %v8008 = vunpack.c.h.b16 %v7410
  %v8009 = vunpack.c.l.b16 %v7411
  %v8010 = vunpack.c.h.b16 %v7411
  %v8011 = vunpack.c.l.b16 %v7412
  %v8012 = vunpack.c.h.b16 %v7412
  %v8013 = vunpack.c.l.b16 %v7413
  %v8014 = vunpack.c.h.b16 %v7413
  %v8015 = vunpack.c.l.b16 %v7414
  %v8016 = vunpack.c.h.b16 %v7414
  %v8017 = vunpack.c.l.b16 %v7415
  %v8018 = vunpack.c.h.b16 %v7415
  %v8019 = vunpack.c.l.b16 %v7416
  %v8020 = vunpack.c.h.b16 %v7416
  %v8021 = vunpack.c.l.b16 %v7417
  %v8022 = vunpack.c.h.b16 %v7417
  %v8023 = vunpack.c.l.b16 %v7418
  %v8024 = vunpack.c.h.b16 %v7418
  %v8025 = vunpack.c.l.b16 %v7419
  %v8026 = vunpack.c.h.b16 %v7419
  %v8027 = vunpack.c.l.b16 %v7420
  %v8028 = vunpack.c.h.b16 %v7420
  %v8029 = vunpack.c.l.b16 %v7421
  %v8030 = vunpack.c.h.b16 %v7421
  %v8031 = vunpack.c.l.b16 %v7422
  %v8032 = vunpack.c.h.b16 %v7422
  %v8033 = vunpack.c.l.b16 %v7423
  %v8034 = vunpack.c.h.b16 %v7423
  %v8035 = vunpack.c.l.b16 %v7424
  %v8036 = vunpack.c.h.b16 %v7424
  %v8037 = vunpack.c.l.b16 %v7425
  %v8038 = vunpack.c.h.b16 %v7425
  %v8039 = vunpack.c.l.b16 %v7426
  %v8040 = vunpack.c.h.b16 %v7426
  %v8041 = vunpack.c.l.b16 %v7427
  %v8042 = vunpack.c.h.b16 %v7427
  %v8043 = vunpack.c.l.b16 %v7428
  %v8044 = vunpack.c.h.b16 %v7428
  %v8045 = vunpack.c.l.b16 %v7429
  %v8046 = vunpack.c.h.b16 %v7429
  %v8047 = vunpack.c.l.b16 %v7430
  %v8048 = vunpack.c.h.b16 %v7430
  %v8049 = vunpack.c.l.b16 %v7431
  %v8050 = vunpack.c.h.b16 %v7431
  %v8051 = vunpack.c.l.b16 %v7432
  %v8052 = vunpack.c.h.b16 %v7432
  %v8053 = vunpack.c.l.b16 %v7433
  %v8054 = vunpack.c.h.b16 %v7433
  %v8055 = vunpack.c.l.b16 %v7434
  %v8056 = vunpack.c.h.b16 %v7434
  %v8057 = vunpack.c.l.b16 %v7435
  %v8058 = vunpack.c.h.b16 %v7435
  %v8059 = vunpack.c.l.b16 %v7436
  %v8060 = vunpack.c.h.b16 %v7436
  %v8061 = vunpack.c.l.b16 %v7437
  %v8062 = vunpack.c.h.b16 %v7437
  %v8063 = vunpack.c.l.b16 %v7438
  %v8064 = vunpack.c.h.b16 %v7438
  %v8065 = vunpack.c.l.b16 %v7439
  %v8066 = vunpack.c.h.b16 %v7439
  %v8067 = vunpack.c.l.b16 %v7440
  %v8068 = vunpack.c.h.b16 %v7440
  %v8069 = vunpack.c.l.b16 %v7441
  %v8070 = vunpack.c.h.b16 %v7441
  %v8071 = vunpack.c.l.b16 %v7442
  %v8072 = vunpack.c.h.b16 %v7442
  %v8073 = vunpack.c.l.b16 %v7443
  %v8074 = vunpack.c.h.b16 %v7443
  %v8075 = vunpack.c.l.b16 %v7444
  %v8076 = vunpack.c.h.b16 %v7444
  %v8077 = vunpack.c.l.b16 %v7445
  %v8078 = vunpack.c.h.b16 %v7445
  %v8079 = vunpack.c.l.b16 %v7446
  %v8080 = vunpack.c.h.b16 %v7446
  %v8081 = vunpack.c.l.b16 %v7447
  %v8082 = vunpack.c.h.b16 %v7447
  %v8083 = vunpack.c.l.b16 %v7448
  %v8084 = vunpack.c.h.b16 %v7448
  %v8085 = vunpack.c.l.b16 %v7449
  %v8086 = vunpack.c.h.b16 %v7449
  %v8087 = vunpack.c.l.b16 %v7450
  %v8088 = vunpack.c.h.b16 %v7450
  %v8089 = vunpack.c.l.b16 %v7451
  %v8090 = vunpack.c.h.b16 %v7451
  %v8091 = vunpack.c.l.b16 %v7452
  %v8092 = vunpack.c.h.b16 %v7452
  %v8093 = vunpack.c.l.b16 %v7453
  %v8094 = vunpack.c.h.b16 %v7453
  %v8095 = vunpack.c.l.b16 %v7454
  %v8096 = vunpack.c.h.b16 %v7454
  %v8097 = vunpack.c.l.b16 %v7455
  %v8098 = vunpack.c.h.b16 %v7455
  %v8099 = vunpack.c.l.b16 %v7456
  %v8100 = vunpack.c.h.b16 %v7456
  %v8101 = vunpack.c.l.b16 %v7457
  %v8102 = vunpack.c.h.b16 %v7457
  %v8103 = vunpack.c.l.b16 %v7458
  %v8104 = vunpack.c.h.b16 %v7458
  %v8105 = vunpack.c.l.b16 %v7459
  %v8106 = vunpack.c.h.b16 %v7459
  %v8107 = vunpack.c.l.b16 %v7460
  %v8108 = vunpack.c.h.b16 %v7460
  %v8109 = vunpack.c.l.b16 %v7461
  %v8110 = vunpack.c.h.b16 %v7461
  %v8111 = vunpack.c.l.b16 %v7462
  %v8112 = vunpack.c.h.b16 %v7462
  %v8113 = vunpack.c.l.b16 %v7463
  %v8114 = vunpack.c.h.b16 %v7463
  %v8115 = vunpack.c.l.b16 %v7464
  %v8116 = vunpack.c.h.b16 %v7464
  %v8117 = vunpack.c.l.b16 %v7465
  %v8118 = vunpack.c.h.b16 %v7465
  %v8119 = vunpack.c.l.b16 %v7466
  %v8120 = vunpack.c.h.b16 %v7466
  %v8121 = vunpack.c.l.b16 %v7467
  %v8122 = vunpack.c.h.b16 %v7467
  %v8123 = vunpack.c.l.b16 %v7468
  %v8124 = vunpack.c.h.b16 %v7468
  %v8125 = vunpack.c.l.b16 %v7469
  %v8126 = vunpack.c.h.b16 %v7469
  %v8127 = vunpack.c.l.b16 %v7470
  %v8128 = vunpack.c.h.b16 %v7470
  %v8129 = vunpack.c.l.b16 %v7471
  %v8130 = vunpack.c.h.b16 %v7471
  %v8131 = vunpack.c.l.b16 %v7472
  %v8132 = vunpack.c.h.b16 %v7472
  %v8133 = vunpack.c.l.b16 %v7473
  %v8134 = vunpack.c.h.b16 %v7473
  %v8135 = vunpack.c.l.b16 %v7474
  %v8136 = vunpack.c.h.b16 %v7474
  %v8137 = vunpack.c.l.b16 %v7475
  %v8138 = vunpack.c.h.b16 %v7475
  %v8139 = vunpack.c.l.b16 %v7476
  %v8140 = vunpack.c.h.b16 %v7476
  %v8141 = vunpack.c.l.b16 %v7477
  %v8142 = vunpack.c.h.b16 %v7477
  %v8143 = vunpack.c.l.b16 %v7478
  %v8144 = vunpack.c.h.b16 %v7478
  %v8145 = vunpack.c.l.b16 %v7479
  %v8146 = vunpack.c.h.b16 %v7479
  %v8147 = vunpack.c.l.b16 %v7480
  %v8148 = vunpack.c.h.b16 %v7480
  %v8149 = vunpack.c.l.b16 %v7481
  %v8150 = vunpack.c.h.b16 %v7481
  %v8151 = vunpack.c.l.b16 %v7482
  %v8152 = vunpack.c.h.b16 %v7482
  %v8153 = vunpack.c.l.b16 %v7483
  %v8154 = vunpack.c.h.b16 %v7483
  %v8155 = vunpack.c.l.b16 %v7484
  %v8156 = vunpack.c.h.b16 %v7484
  %v8157 = vunpack.c.l.b16 %v7485
  %v8158 = vunpack.c.h.b16 %v7485
  %v8159 = vunpack.c.l.b16 %v7486
  %v8160 = vunpack.c.h.b16 %v7486
  %v8161 = vunpack.c.l.b16 %v7487
  %v8162 = vunpack.c.h.b16 %v7487
  %v8163 = vunpack.c.l.b16 %v7488
  %v8164 = vunpack.c.h.b16 %v7488
  %v8165 = vunpack.c.l.b16 %v7489
  %v8166 = vunpack.c.h.b16 %v7489
  %v8167 = vunpack.c.l.b16 %v7490
  %v8168 = vunpack.c.h.b16 %v7490
  %v8169 = vunpack.c.l.b16 %v7491
  %v8170 = vunpack.c.h.b16 %v7491
  %v8171 = vunpack.c.l.b16 %v7492
  %v8172 = vunpack.c.h.b16 %v7492
  %v8173 = vunpack.c.l.b16 %v7493
  %v8174 = vunpack.c.h.b16 %v7493
  %v8175 = vunpack.c.l.b16 %v7494
  %v8176 = vunpack.c.h.b16 %v7494
  %v8177 = vunpack.c.l.b16 %v7495
  %v8178 = vunpack.c.h.b16 %v7495
  %v8179 = vunpack.c.l.b16 %v7496
  %v8180 = vunpack.c.h.b16 %v7496
  %v8181 = vunpack.c.l.b16 %v7497
  %v8182 = vunpack.c.h.b16 %v7497
  %v8183 = vunpack.c.l.b16 %v7498
  %v8184 = vunpack.c.h.b16 %v7498
  %v8185 = vunpack.c.l.b16 %v7499
  %v8186 = vunpack.c.h.b16 %v7499
  %v8187 = vunpack.c.l.b16 %v7500
  %v8188 = vunpack.c.h.b16 %v7500
  %v8189 = vunpack.c.l.b16 %v7501
  %v8190 = vunpack.c.h.b16 %v7501
  %v8191 = vunpack.c.l.b16 %v7502
  %v8192 = vunpack.c.h.b16 %v7502
  %v8193 = vunpack.c.l.b16 %v7503
  %v8194 = vunpack.c.h.b16 %v7503
  %v8195 = vunpack.c.l.b16 %v7504
  %v8196 = vunpack.c.h.b16 %v7504
  %v8197 = vunpack.c.l.b16 %v7505
  %v8198 = vunpack.c.h.b16 %v7505
  %v8199 = vunpack.c.l.b16 %v7506
  %v8200 = vunpack.c.h.b16 %v7506
  %v8201 = vunpack.c.l.b16 %v7507
  %v8202 = vunpack.c.h.b16 %v7507
  %v8203 = vunpack.c.l.b16 %v7508
  %v8204 = vunpack.c.h.b16 %v7508
  %v8205 = vunpack.c.l.b16 %v7509
  %v8206 = vunpack.c.h.b16 %v7509
  %v8207 = vunpack.c.l.b16 %v7510
  %v8208 = vunpack.c.h.b16 %v7510
  %v8209 = vunpack.c.l.b16 %v7511
  %v8210 = vunpack.c.h.b16 %v7511
  %v8211 = vunpack.c.l.b16 %v7512
  %v8212 = vunpack.c.h.b16 %v7512
  %v8213 = vunpack.c.l.b16 %v7513
  %v8214 = vunpack.c.h.b16 %v7513
  %v8215 = vunpack.c.l.b16 %v7514
  %v8216 = vunpack.c.h.b16 %v7514
  %v8217 = vunpack.c.l.b16 %v7515
  %v8218 = vunpack.c.h.b16 %v7515
  %v8219 = vunpack.c.l.b16 %v7516
  %v8220 = vunpack.c.h.b16 %v7516
  %v8221 = vunpack.c.l.b16 %v7517
  %v8222 = vunpack.c.h.b16 %v7517
  %v8223 = vunpack.c.l.b16 %v7518
  %v8224 = vunpack.c.h.b16 %v7518
  %v8225 = vunpack.c.l.b16 %v7519
  %v8226 = vunpack.c.h.b16 %v7519
  %v8227 = vunpack.c.l.b16 %v7520
  %v8228 = vunpack.c.h.b16 %v7520
  %v8229 = vunpack.c.l.b16 %v7521
  %v8230 = vunpack.c.h.b16 %v7521
  %v8231 = vunpack.c.l.b16 %v7522
  %v8232 = vunpack.c.h.b16 %v7522
  %v8233 = vunpack.c.l.b16 %v7523
  %v8234 = vunpack.c.h.b16 %v7523
  %v8235 = vunpack.c.l.b16 %v7524
  %v8236 = vunpack.c.h.b16 %v7524
  %v8237 = vunpack.c.l.b16 %v7525
  %v8238 = vunpack.c.h.b16 %v7525
  %v8239 = vunpack.c.l.b16 %v7526
  %v8240 = vunpack.c.h.b16 %v7526
  %v8241 = vunpack.c.l.b16 %v7527
  %v8242 = vunpack.c.h.b16 %v7527
  %v8243 = vunpack.c.l.b16 %v7528
  %v8244 = vunpack.c.h.b16 %v7528
  %v8245 = vunpack.c.l.b16 %v7529
  %v8246 = vunpack.c.h.b16 %v7529
  %v8247 = vunpack.c.l.b16 %v7530
  %v8248 = vunpack.c.h.b16 %v7530
  %v8249 = vunpack.c.l.b16 %v7531
  %v8250 = vunpack.c.h.b16 %v7531
  %v8251 = vunpack.c.l.b16 %v7532
  %v8252 = vunpack.c.h.b16 %v7532
  %v8253 = vunpack.c.l.b16 %v7533
  %v8254 = vunpack.c.h.b16 %v7533
  %v8255 = vunpack.c.l.b16 %v7534
  %v8256 = vunpack.c.h.b16 %v7534
  %v8257 = vunpack.c.l.b16 %v7535
  %v8258 = vunpack.c.h.b16 %v7535
  %v8259 = vunpack.c.l.b16 %v7536
  %v8260 = vunpack.c.h.b16 %v7536
  %v8261 = vunpack.c.l.b16 %v7537
  %v8262 = vunpack.c.h.b16 %v7537
  %v8263 = vunpack.c.l.b16 %v7538
  %v8264 = vunpack.c.h.b16 %v7538
  %v8265 = vunpack.c.l.b16 %v7539
  %v8266 = vunpack.c.h.b16 %v7539
  %v8267 = vunpack.c.l.b16 %v7540
  %v8268 = vunpack.c.h.b16 %v7540
  %v8269 = vunpack.c.l.b16 %v7541
  %v8270 = vunpack.c.h.b16 %v7541
  %v8271 = vunpack.c.l.b16 %v7542
  %v8272 = vunpack.c.h.b16 %v7542
  %v8273 = vunpack.c.l.b16 %v7543
  %v8274 = vunpack.c.h.b16 %v7543
  %v8275 = vunpack.c.l.b16 %v7544
  %v8276 = vunpack.c.h.b16 %v7544
  %v8277 = vunpack.c.l.b16 %v7545
  %v8278 = vunpack.c.h.b16 %v7545
  %v8279 = vunpack.c.l.b16 %v7546
  %v8280 = vunpack.c.h.b16 %v7546
  %v8281 = vunpack.c.l.b16 %v7547
  %v8282 = vunpack.c.h.b16 %v7547
  %v8283 = vunpack.c.l.b16 %v7548
  %v8284 = vunpack.c.h.b16 %v7548
  %v8285 = vunpack.c.l.b16 %v7549
  %v8286 = vunpack.c.h.b16 %v7549
  %v8287 = vunpack.c.l.b16 %v7550
  %v8288 = vunpack.c.h.b16 %v7550
  %v8289 = vunpack.c.l.b16 %v7551
  %v8290 = vunpack.c.h.b16 %v7551
  %v8291 = vunpack.c.l.b16 %v7552
  %v8292 = vunpack.c.h.b16 %v7552
  %v8293 = vunpack.c.l.b16 %v7553
  %v8294 = vunpack.c.h.b16 %v7553
  %v8295 = vunpack.c.l.b16 %v7554
  %v8296 = vunpack.c.h.b16 %v7554
  %v8297 = vunpack.c.l.b16 %v7555
  %v8298 = vunpack.c.h.b16 %v7555
  %v8299 = vunpack.c.l.b16 %v7556
  %v8300 = vunpack.c.h.b16 %v7556
  %v8301 = vunpack.c.l.b16 %v7557
  %v8302 = vunpack.c.h.b16 %v7557
  %v8303 = vunpack.c.l.b16 %v7558
  %v8304 = vunpack.c.h.b16 %v7558
  %v8305 = vunpack.c.l.b16 %v7559
  %v8306 = vunpack.c.h.b16 %v7559
  %v8307 = vunpack.c.l.b16 %v7560
  %v8308 = vunpack.c.h.b16 %v7560
  %v8309 = vunpack.c.l.b16 %v7561
  %v8310 = vunpack.c.h.b16 %v7561
  %v8311 = vunpack.c.l.b16 %v7562
  %v8312 = vunpack.c.h.b16 %v7562
  %v8313 = vunpack.c.l.b16 %v7563
  %v8314 = vunpack.c.h.b16 %v7563
  %v8315 = vunpack.c.l.b16 %v7564
  %v8316 = vunpack.c.h.b16 %v7564
  %v8317 = vunpack.c.l.b16 %v7565
  %v8318 = vunpack.c.h.b16 %v7565
  %v8319 = vunpack.c.l.b16 %v7566
  %v8320 = vunpack.c.h.b16 %v7566
  %v8321 = vunpack.c.l.b16 %v7567
  %v8322 = vunpack.c.h.b16 %v7567
  %v8323 = vunpack.c.l.b16 %v7568
  %v8324 = vunpack.c.h.b16 %v7568
  %v8325 = vunpack.c.l.b16 %v7569
  %v8326 = vunpack.c.h.b16 %v7569
  %v8327 = vunpack.c.l.b16 %v7570
  %v8328 = vunpack.c.h.b16 %v7570
  %v8329 = vunpack.c.l.b16 %v7571
  %v8330 = vunpack.c.h.b16 %v7571
  %v8331 = vunpack.c.l.b16 %v7572
  %v8332 = vunpack.c.h.b16 %v7572
  %v8333 = vunpack.c.l.b16 %v7573
  %v8334 = vunpack.c.h.b16 %v7573
  %v8335 = vunpack.c.l.b16 %v7574
  %v8336 = vunpack.c.h.b16 %v7574
  %v8337 = vunpack.c.l.b16 %v7575
  %v8338 = vunpack.c.h.b16 %v7575
  %v8339 = vunpack.c.l.b16 %v7576
  %v8340 = vunpack.c.h.b16 %v7576
  %v8341 = vunpack.c.l.b16 %v7577
  %v8342 = vunpack.c.h.b16 %v7577
  %v8343 = vunpack.c.l.b16 %v7578
  %v8344 = vunpack.c.h.b16 %v7578
  %v8345 = vunpack.c.l.b16 %v7579
  %v8346 = vunpack.c.h.b16 %v7579
  %v8347 = vunpack.c.l.b16 %v7580
  %v8348 = vunpack.c.h.b16 %v7580
  %v8349 = vunpack.c.l.b16 %v7581
  %v8350 = vunpack.c.h.b16 %v7581
  %v8351 = vunpack.c.l.b16 %v7582
  %v8352 = vunpack.c.h.b16 %v7582
  %v8353 = vunpack.c.l.b16 %v7583
  %v8354 = vunpack.c.h.b16 %v7583
  %v8355 = vunpack.c.l.b16 %v7584
  %v8356 = vunpack.c.h.b16 %v7584
  %v8357 = vunpack.c.l.b16 %v7585
  %v8358 = vunpack.c.h.b16 %v7585
  %v8359 = vunpack.c.l.b16 %v7586
  %v8360 = vunpack.c.h.b16 %v7586
  %v8361 = vunpack.c.l.b16 %v7587
  %v8362 = vunpack.c.h.b16 %v7587
  %v8363 = vunpack.c.l.b16 %v7588
  %v8364 = vunpack.c.h.b16 %v7588
  %v8365 = vunpack.c.l.b16 %v7589
  %v8366 = vunpack.c.h.b16 %v7589
  %v8367 = vunpack.c.l.b16 %v7590
  %v8368 = vunpack.c.h.b16 %v7590
  %v8369 = vpack.c.b16 %v7861, %v7857
  %v8370 = vpack.c.b16 %v7862, %v7858
  %v8371 = vpack.c.b16 %v7863, %v7859
  %v8372 = vpack.c.b16 %v7864, %v7860
  %v8373 = vpack.c.b16 %v7869, %v7865
  %v8374 = vpack.c.b16 %v7870, %v7866
  %v8375 = vpack.c.b16 %v7871, %v7867
  %v8376 = vpack.c.b16 %v7872, %v7868
  %v8377 = vpack.c.b16 %v7877, %v7873
  %v8378 = vpack.c.b16 %v7878, %v7874
  %v8379 = vpack.c.b16 %v7879, %v7875
  %v8380 = vpack.c.b16 %v7880, %v7876
  %v8381 = vpack.c.b16 %v7885, %v7881
  %v8382 = vpack.c.b16 %v7886, %v7882
  %v8383 = vpack.c.b16 %v7887, %v7883
  %v8384 = vpack.c.b16 %v7888, %v7884
  %v8385 = vpack.c.b16 %v7893, %v7889
  %v8386 = vpack.c.b16 %v7894, %v7890
  %v8387 = vpack.c.b16 %v7895, %v7891
  %v8388 = vpack.c.b16 %v7896, %v7892
  %v8389 = vpack.c.b16 %v7901, %v7897
  %v8390 = vpack.c.b16 %v7902, %v7898
  %v8391 = vpack.c.b16 %v7903, %v7899
  %v8392 = vpack.c.b16 %v7904, %v7900
  %v8393 = vpack.c.b16 %v7909, %v7905
  %v8394 = vpack.c.b16 %v7910, %v7906
  %v8395 = vpack.c.b16 %v7911, %v7907
  %v8396 = vpack.c.b16 %v7912, %v7908
  %v8397 = vpack.c.b16 %v7917, %v7913
  %v8398 = vpack.c.b16 %v7918, %v7914
  %v8399 = vpack.c.b16 %v7919, %v7915
  %v8400 = vpack.c.b16 %v7920, %v7916
  %v8401 = vpack.c.b16 %v7925, %v7921
  %v8402 = vpack.c.b16 %v7926, %v7922
  %v8403 = vpack.c.b16 %v7927, %v7923
  %v8404 = vpack.c.b16 %v7928, %v7924
  %v8405 = vpack.c.b16 %v7933, %v7929
  %v8406 = vpack.c.b16 %v7934, %v7930
  %v8407 = vpack.c.b16 %v7935, %v7931
  %v8408 = vpack.c.b16 %v7936, %v7932
  %v8409 = vpack.c.b16 %v7941, %v7937
  %v8410 = vpack.c.b16 %v7942, %v7938
  %v8411 = vpack.c.b16 %v7943, %v7939
  %v8412 = vpack.c.b16 %v7944, %v7940
  %v8413 = vpack.c.b16 %v7949, %v7945
  %v8414 = vpack.c.b16 %v7950, %v7946
  %v8415 = vpack.c.b16 %v7951, %v7947
  %v8416 = vpack.c.b16 %v7952, %v7948
  %v8417 = vpack.c.b16 %v7957, %v7953
  %v8418 = vpack.c.b16 %v7958, %v7954
  %v8419 = vpack.c.b16 %v7959, %v7955
  %v8420 = vpack.c.b16 %v7960, %v7956
  %v8421 = vpack.c.b16 %v7965, %v7961
  %v8422 = vpack.c.b16 %v7966, %v7962
  %v8423 = vpack.c.b16 %v7967, %v7963
  %v8424 = vpack.c.b16 %v7968, %v7964
  %v8425 = vpack.c.b16 %v7973, %v7969
  %v8426 = vpack.c.b16 %v7974, %v7970
  %v8427 = vpack.c.b16 %v7975, %v7971
  %v8428 = vpack.c.b16 %v7976, %v7972
  %v8429 = vpack.c.b16 %v7981, %v7977
  %v8430 = vpack.c.b16 %v7982, %v7978
  %v8431 = vpack.c.b16 %v7983, %v7979
  %v8432 = vpack.c.b16 %v7984, %v7980
  %v8433 = vpack.c.b16 %v7989, %v7985
  %v8434 = vpack.c.b16 %v7990, %v7986
  %v8435 = vpack.c.b16 %v7991, %v7987
  %v8436 = vpack.c.b16 %v7992, %v7988
  %v8437 = vpack.c.b16 %v7997, %v7993
  %v8438 = vpack.c.b16 %v7998, %v7994
  %v8439 = vpack.c.b16 %v7999, %v7995
  %v8440 = vpack.c.b16 %v8000, %v7996
  %v8441 = vpack.c.b16 %v8005, %v8001
  %v8442 = vpack.c.b16 %v8006, %v8002
  %v8443 = vpack.c.b16 %v8007, %v8003
  %v8444 = vpack.c.b16 %v8008, %v8004
  %v8445 = vpack.c.b16 %v8013, %v8009
  %v8446 = vpack.c.b16 %v8014, %v8010
  %v8447 = vpack.c.b16 %v8015, %v8011
  %v8448 = vpack.c.b16 %v8016, %v8012
  %v8449 = vpack.c.b16 %v8021, %v8017
  %v8450 = vpack.c.b16 %v8022, %v8018
  %v8451 = vpack.c.b16 %v8023, %v8019
  %v8452 = vpack.c.b16 %v8024, %v8020
  %v8453 = vpack.c.b16 %v8029, %v8025
  %v8454 = vpack.c.b16 %v8030, %v8026
  %v8455 = vpack.c.b16 %v8031, %v8027
  %v8456 = vpack.c.b16 %v8032, %v8028
  %v8457 = vpack.c.b16 %v8037, %v8033
  %v8458 = vpack.c.b16 %v8038, %v8034
  %v8459 = vpack.c.b16 %v8039, %v8035
  %v8460 = vpack.c.b16 %v8040, %v8036
  %v8461 = vpack.c.b16 %v8045, %v8041
  %v8462 = vpack.c.b16 %v8046, %v8042
  %v8463 = vpack.c.b16 %v8047, %v8043
  %v8464 = vpack.c.b16 %v8048, %v8044
  %v8465 = vpack.c.b16 %v8053, %v8049
  %v8466 = vpack.c.b16 %v8054, %v8050
  %v8467 = vpack.c.b16 %v8055, %v8051
  %v8468 = vpack.c.b16 %v8056, %v8052
  %v8469 = vpack.c.b16 %v8061, %v8057
  %v8470 = vpack.c.b16 %v8062, %v8058
  %v8471 = vpack.c.b16 %v8063, %v8059
  %v8472 = vpack.c.b16 %v8064, %v8060
  %v8473 = vpack.c.b16 %v8069, %v8065
  %v8474 = vpack.c.b16 %v8070, %v8066
  %v8475 = vpack.c.b16 %v8071, %v8067
  %v8476 = vpack.c.b16 %v8072, %v8068
  %v8477 = vpack.c.b16 %v8077, %v8073
  %v8478 = vpack.c.b16 %v8078, %v8074
  %v8479 = vpack.c.b16 %v8079, %v8075
  %v8480 = vpack.c.b16 %v8080, %v8076
  %v8481 = vpack.c.b16 %v8085, %v8081
  %v8482 = vpack.c.b16 %v8086, %v8082
  %v8483 = vpack.c.b16 %v8087, %v8083
  %v8484 = vpack.c.b16 %v8088, %v8084
  %v8485 = vpack.c.b16 %v8093, %v8089
  %v8486 = vpack.c.b16 %v8094, %v8090
  %v8487 = vpack.c.b16 %v8095, %v8091
  %v8488 = vpack.c.b16 %v8096, %v8092
  %v8489 = vpack.c.b16 %v8101, %v8097
  %v8490 = vpack.c.b16 %v8102, %v8098
  %v8491 = vpack.c.b16 %v8103, %v8099
  %v8492 = vpack.c.b16 %v8104, %v8100
  %v8493 = vpack.c.b16 %v8109, %v8105
  %v8494 = vpack.c.b16 %v8110, %v8106
  %v8495 = vpack.c.b16 %v8111, %v8107
  %v8496 = vpack.c.b16 %v8112, %v8108
  %v8497 = vpack.c.b16 %v8117, %v8113
  %v8498 = vpack.c.b16 %v8118, %v8114
  %v8499 = vpack.c.b16 %v8119, %v8115
  %v8500 = vpack.c.b16 %v8120, %v8116
  %v8501 = vpack.c.b16 %v8125, %v8121
  %v8502 = vpack.c.b16 %v8126, %v8122
  %v8503 = vpack.c.b16 %v8127, %v8123
  %v8504 = vpack.c.b16 %v8128, %v8124
  %v8505 = vpack.c.b16 %v8133, %v8129
  %v8506 = vpack.c.b16 %v8134, %v8130
  %v8507 = vpack.c.b16 %v8135, %v8131
  %v8508 = vpack.c.b16 %v8136, %v8132
  %v8509 = vpack.c.b16 %v8141, %v8137
  %v8510 = vpack.c.b16 %v8142, %v8138
  %v8511 = vpack.c.b16 %v8143, %v8139
  %v8512 = vpack.c.b16 %v8144, %v8140
  %v8513 = vpack.c.b16 %v8149, %v8145
  %v8514 = vpack.c.b16 %v8150, %v8146
  %v8515 = vpack.c.b16 %v8151, %v8147
  %v8516 = vpack.c.b16 %v8152, %v8148
  %v8517 = vpack.c.b16 %v8157, %v8153
  %v8518 = vpack.c.b16 %v8158, %v8154
  %v8519 = vpack.c.b16 %v8159, %v8155
  %v8520 = vpack.c.b16 %v8160, %v8156
  %v8521 = vpack.c.b16 %v8165, %v8161
  %v8522 = vpack.c.b16 %v8166, %v8162
  %v8523 = vpack.c.b16 %v8167, %v8163
  %v8524 = vpack.c.b16 %v8168, %v8164
  %v8525 = vpack.c.b16 %v8173, %v8169
  %v8526 = vpack.c.b16 %v8174, %v8170
  %v8527 = vpack.c.b16 %v8175, %v8171
  %v8528 = vpack.c.b16 %v8176, %v8172
  %v8529 = vpack.c.b16 %v8181, %v8177
  %v8530 = vpack.c.b16 %v8182, %v8178
  %v8531 = vpack.c.b16 %v8183, %v8179
  %v8532 = vpack.c.b16 %v8184, %v8180
  %v8533 = vpack.c.b16 %v8189, %v8185
  %v8534 = vpack.c.b16 %v8190, %v8186
  %v8535 = vpack.c.b16 %v8191, %v8187
  %v8536 = vpack.c.b16 %v8192, %v8188
  %v8537 = vpack.c.b16 %v8197, %v8193
  %v8538 = vpack.c.b16 %v8198, %v8194
  %v8539 = vpack.c.b16 %v8199, %v8195
  %v8540 = vpack.c.b16 %v8200, %v8196
  %v8541 = vpack.c.b16 %v8205, %v8201
  %v8542 = vpack.c.b16 %v8206, %v8202
  %v8543 = vpack.c.b16 %v8207, %v8203
  %v8544 = vpack.c.b16 %v8208, %v8204
  %v8545 = vpack.c.b16 %v8213, %v8209
  %v8546 = vpack.c.b16 %v8214, %v8210
  %v8547 = vpack.c.b16 %v8215, %v8211
  %v8548 = vpack.c.b16 %v8216, %v8212
  %v8549 = vpack.c.b16 %v8221, %v8217
  %v8550 = vpack.c.b16 %v8222, %v8218
  %v8551 = vpack.c.b16 %v8223, %v8219
  %v8552 = vpack.c.b16 %v8224, %v8220
  %v8553 = vpack.c.b16 %v8229, %v8225
  %v8554 = vpack.c.b16 %v8230, %v8226
  %v8555 = vpack.c.b16 %v8231, %v8227
  %v8556 = vpack.c.b16 %v8232, %v8228
  %v8557 = vpack.c.b16 %v8237, %v8233
  %v8558 = vpack.c.b16 %v8238, %v8234
  %v8559 = vpack.c.b16 %v8239, %v8235
  %v8560 = vpack.c.b16 %v8240, %v8236
  %v8561 = vpack.c.b16 %v8245, %v8241
  %v8562 = vpack.c.b16 %v8246, %v8242
  %v8563 = vpack.c.b16 %v8247, %v8243
  %v8564 = vpack.c.b16 %v8248, %v8244
  %v8565 = vpack.c.b16 %v8253, %v8249
  %v8566 = vpack.c.b16 %v8254, %v8250
  %v8567 = vpack.c.b16 %v8255, %v8251
  %v8568 = vpack.c.b16 %v8256, %v8252
  %v8569 = vpack.c.b16 %v8261, %v8257
  %v8570 = vpack.c.b16 %v8262, %v8258
  %v8571 = vpack.c.b16 %v8263, %v8259
  %v8572 = vpack.c.b16 %v8264, %v8260
  %v8573 = vpack.c.b16 %v8269, %v8265
  %v8574 = vpack.c.b16 %v8270, %v8266
  %v8575 = vpack.c.b16 %v8271, %v8267
  %v8576 = vpack.c.b16 %v8272, %v8268
  %v8577 = vpack.c.b16 %v8277, %v8273
  %v8578 = vpack.c.b16 %v8278, %v8274
  %v8579 = vpack.c.b16 %v8279, %v8275
  %v8580 = vpack.c.b16 %v8280, %v8276
  %v8581 = vpack.c.b16 %v8285, %v8281
  %v8582 = vpack.c.b16 %v8286, %v8282
  %v8583 = vpack.c.b16 %v8287, %v8283
  %v8584 = vpack.c.b16 %v8288, %v8284
  %v8585 = vpack.c.b16 %v8293, %v8289
  %v8586 = vpack.c.b16 %v8294, %v8290
  %v8587 = vpack.c.b16 %v8295, %v8291
  %v8588 = vpack.c.b16 %v8296, %v8292
  %v8589 = vpack.c.b16 %v8301, %v8297
  %v8590 = vpack.c.b16 %v8302, %v8298
  %v8591 = vpack.c.b16 %v8303, %v8299
  %v8592 = vpack.c.b16 %v8304, %v8300
  %v8593 = vpack.c.b16 %v8309, %v8305
  %v8594 = vpack.c.b16 %v8310, %v8306
  %v8595 = vpack.c.b16 %v8311, %v8307
  %v8596 = vpack.c.b16 %v8312, %v8308
  %v8597 = vpack.c.b16 %v8317, %v8313
  %v8598 = vpack.c.b16 %v8318, %v8314
  %v8599 = vpack.c.b16 %v8319, %v8315
  %v8600 = vpack.c.b16 %v8320, %v8316
  %v8601 = vpack.c.b16 %v8325, %v8321
  %v8602 = vpack.c.b16 %v8326, %v8322
  %v8603 = vpack.c.b16 %v8327, %v8323
  %v8604 = vpack.c.b16 %v8328, %v8324
  %v8605 = vpack.c.b16 %v8333, %v8329
  %v8606 = vpack.c.b16 %v8334, %v8330
  %v8607 = vpack.c.b16 %v8335, %v8331
  %v8608 = vpack.c.b16 %v8336, %v8332
  %v8609 = vpack.c.b16 %v8341, %v8337
  %v8610 = vpack.c.b16 %v8342, %v8338
  %v8611 = vpack.c.b16 %v8343, %v8339
  %v8612 = vpack.c.b16 %v8344, %v8340
  %v8613 = vpack.c.b16 %v8349, %v8345
  %v8614 = vpack.c.b16 %v8350, %v8346
  %v8615 = vpack.c.b16 %v8351, %v8347
  %v8616 = vpack.c.b16 %v8352, %v8348
  %v8617 = vpack.c.b16 %v8357, %v8353
  %v8618 = vpack.c.b16 %v8358, %v8354
  %v8619 = vpack.c.b16 %v8359, %v8355
  %v8620 = vpack.c.b16 %v8360, %v8356
  %v8621 = vpack.c.b16 %v8365, %v8361
  %v8622 = vpack.c.b16 %v8366, %v8362
  %v8623 = vpack.c.b16 %v8367, %v8363
  %v8624 = vpack.c.b16 %v8368, %v8364
  %8881 = vmatpush.bf16.msra.mxu0 %v8397
  %8882 = vmatpush.bf16.msra.mxu0 %v8393
  %8883 = vmatpush.bf16.msra.mxu0 %v8389
  %8884 = vmatpush.bf16.msra.mxu0 %v8385
  %8885 = vmatpush.bf16.msra.mxu0 %v8381
  %8886 = vmatpush.bf16.msra.mxu0 %v8377
  %8887 = vmatpush.bf16.msra.mxu0 %v8373
  %8888 = vmatpush.bf16.msra.mxu0 %v8369
  %8889 = vmatmul.bf16.gmra.mxu0 %v7323
  %v8890 = vpop.f32.mrf.mxu0
  %v8891 = vadd.f32 %v7593, %v8890
  %v8892 = vpop.f32.mrf.mxu0
  %8893 = vdwg.mxu0
  %8894 = vmatpush.bf16.msra.mxu0 %v8429
  %8895 = vmatpush.bf16.msra.mxu0 %v8425
  %8896 = vmatpush.bf16.msra.mxu0 %v8421
  %8897 = vmatpush.bf16.msra.mxu0 %v8417
  %8898 = vmatpush.bf16.msra.mxu0 %v8413
  %8899 = vmatpush.bf16.msra.mxu0 %v8409
  %8900 = vmatpush.bf16.msra.mxu0 %v8405
  %8901 = vmatpush.bf16.msra.mxu0 %v8401
  %8902 = vmatmul.bf16.gmra.mxu0 %v7324
  %v8903 = vpop.f32.mrf.mxu0
  %v8904 = vadd.f32 %v8891, %v8903
  %v8905 = vpop.f32.mrf.mxu0
  %8906 = vdwg.mxu0
  %8907 = vmatpush.bf16.msra.mxu0 %v8461
  %8908 = vmatpush.bf16.msra.mxu0 %v8457
  %8909 = vmatpush.bf16.msra.mxu0 %v8453
  %8910 = vmatpush.bf16.msra.mxu0 %v8449
  %8911 = vmatpush.bf16.msra.mxu0 %v8445
  %8912 = vmatpush.bf16.msra.mxu0 %v8441
  %8913 = vmatpush.bf16.msra.mxu0 %v8437
  %8914 = vmatpush.bf16.msra.mxu0 %v8433
  %8915 = vmatmul.bf16.gmra.mxu0 %v7325
  %v8916 = vpop.f32.mrf.mxu0
  %v8917 = vadd.f32 %v8904, %v8916
  %v8918 = vpop.f32.mrf.mxu0
  %8919 = vdwg.mxu0
  %8920 = vmatpush.bf16.msra.mxu0 %v8493
  %8921 = vmatpush.bf16.msra.mxu0 %v8489
  %8922 = vmatpush.bf16.msra.mxu0 %v8485
  %8923 = vmatpush.bf16.msra.mxu0 %v8481
  %8924 = vmatpush.bf16.msra.mxu0 %v8477
  %8925 = vmatpush.bf16.msra.mxu0 %v8473
  %8926 = vmatpush.bf16.msra.mxu0 %v8469
  %8927 = vmatpush.bf16.msra.mxu0 %v8465
  %8928 = vmatmul.bf16.gmra.mxu0 %v7326
  %v8929 = vpop.f32.mrf.mxu0
  %v8930 = vadd.f32 %v8917, %v8929
  %v8931 = vpop.f32.mrf.mxu0
  %8932 = vdwg.mxu0
  %8933 = vmatpush.bf16.msra.mxu0 %v8525
  %8934 = vmatpush.bf16.msra.mxu0 %v8521
  %8935 = vmatpush.bf16.msra.mxu0 %v8517
  %8936 = vmatpush.bf16.msra.mxu0 %v8513
  %8937 = vmatpush.bf16.msra.mxu0 %v8509
  %8938 = vmatpush.bf16.msra.mxu0 %v8505
  %8939 = vmatpush.bf16.msra.mxu0 %v8501
  %8940 = vmatpush.bf16.msra.mxu0 %v8497
  %8941 = vmatmul.bf16.gmra.mxu0 %v7327
  %v8942 = vpop.f32.mrf.mxu0
  %v8943 = vadd.f32 %v8930, %v8942
  %v8944 = vpop.f32.mrf.mxu0
  %8945 = vdwg.mxu0
  %8946 = vmatpush.bf16.msra.mxu0 %v8557
  %8947 = vmatpush.bf16.msra.mxu0 %v8553
  %8948 = vmatpush.bf16.msra.mxu0 %v8549
  %8949 = vmatpush.bf16.msra.mxu0 %v8545
  %8950 = vmatpush.bf16.msra.mxu0 %v8541
  %8951 = vmatpush.bf16.msra.mxu0 %v8537
  %8952 = vmatpush.bf16.msra.mxu0 %v8533
  %8953 = vmatpush.bf16.msra.mxu0 %v8529
  %8954 = vmatmul.bf16.gmra.mxu0 %v7328
  %v8955 = vpop.f32.mrf.mxu0
  %v8956 = vadd.f32 %v8943, %v8955
  %v8957 = vpop.f32.mrf.mxu0
  %8958 = vdwg.mxu0
  %8959 = vmatpush.bf16.msra.mxu0 %v8589
  %8960 = vmatpush.bf16.msra.mxu0 %v8585
  %8961 = vmatpush.bf16.msra.mxu0 %v8581
  %8962 = vmatpush.bf16.msra.mxu0 %v8577
  %8963 = vmatpush.bf16.msra.mxu0 %v8573
  %8964 = vmatpush.bf16.msra.mxu0 %v8569
  %8965 = vmatpush.bf16.msra.mxu0 %v8565
  %8966 = vmatpush.bf16.msra.mxu0 %v8561
  %8967 = vmatmul.bf16.gmra.mxu0 %v7329
  %v8968 = vpop.f32.mrf.mxu0
  %v8969 = vadd.f32 %v8956, %v8968
  %v8970 = vpop.f32.mrf.mxu0
  %8971 = vdwg.mxu0
  %8972 = vmatpush.bf16.msra.mxu0 %v8621
  %8973 = vmatpush.bf16.msra.mxu0 %v8617
  %8974 = vmatpush.bf16.msra.mxu0 %v8613
  %8975 = vmatpush.bf16.msra.mxu0 %v8609
  %8976 = vmatpush.bf16.msra.mxu0 %v8605
  %8977 = vmatpush.bf16.msra.mxu0 %v8601
  %8978 = vmatpush.bf16.msra.mxu0 %v8597
  %8979 = vmatpush.bf16.msra.mxu0 %v8593
  %8980 = vmatmul.bf16.gmra.mxu0 %v7330
  %v8981 = vpop.f32.mrf.mxu0
  %v8982 = vadd.f32 %v8969, %v8981
  %v8983 = vpop.f32.mrf.mxu0
  %8984 = vdwg.mxu0
  %8985 = vmatpush.bf16.msra.mxu0 %v8398
  %8986 = vmatpush.bf16.msra.mxu0 %v8394
  %8987 = vmatpush.bf16.msra.mxu0 %v8390
  %8988 = vmatpush.bf16.msra.mxu0 %v8386
  %8989 = vmatpush.bf16.msra.mxu0 %v8382
  %8990 = vmatpush.bf16.msra.mxu0 %v8378
  %8991 = vmatpush.bf16.msra.mxu0 %v8374
  %8992 = vmatpush.bf16.msra.mxu0 %v8370
  %8993 = vmatmul.bf16.gmra.mxu0 %v7323
  %v8994 = vpop.f32.mrf.mxu0
  %v8995 = vadd.f32 %v7594, %v8994
  %v8996 = vpop.f32.mrf.mxu0
  %8997 = vdwg.mxu0
  %8998 = vmatpush.bf16.msra.mxu0 %v8430
  %8999 = vmatpush.bf16.msra.mxu0 %v8426
  %9000 = vmatpush.bf16.msra.mxu0 %v8422
  %9001 = vmatpush.bf16.msra.mxu0 %v8418
  %9002 = vmatpush.bf16.msra.mxu0 %v8414
  %9003 = vmatpush.bf16.msra.mxu0 %v8410
  %9004 = vmatpush.bf16.msra.mxu0 %v8406
  %9005 = vmatpush.bf16.msra.mxu0 %v8402
  %9006 = vmatmul.bf16.gmra.mxu0 %v7324
  %v9007 = vpop.f32.mrf.mxu0
  %v9008 = vadd.f32 %v8995, %v9007
  %v9009 = vpop.f32.mrf.mxu0
  %9010 = vdwg.mxu0
  %9011 = vmatpush.bf16.msra.mxu0 %v8462
  %9012 = vmatpush.bf16.msra.mxu0 %v8458
  %9013 = vmatpush.bf16.msra.mxu0 %v8454
  %9014 = vmatpush.bf16.msra.mxu0 %v8450
  %9015 = vmatpush.bf16.msra.mxu0 %v8446
  %9016 = vmatpush.bf16.msra.mxu0 %v8442
  %9017 = vmatpush.bf16.msra.mxu0 %v8438
  %9018 = vmatpush.bf16.msra.mxu0 %v8434
  %9019 = vmatmul.bf16.gmra.mxu0 %v7325
  %v9020 = vpop.f32.mrf.mxu0
  %v9021 = vadd.f32 %v9008, %v9020
  %v9022 = vpop.f32.mrf.mxu0
  %9023 = vdwg.mxu0
  %9024 = vmatpush.bf16.msra.mxu0 %v8494
  %9025 = vmatpush.bf16.msra.mxu0 %v8490
  %9026 = vmatpush.bf16.msra.mxu0 %v8486
  %9027 = vmatpush.bf16.msra.mxu0 %v8482
  %9028 = vmatpush.bf16.msra.mxu0 %v8478
  %9029 = vmatpush.bf16.msra.mxu0 %v8474
  %9030 = vmatpush.bf16.msra.mxu0 %v8470
  %9031 = vmatpush.bf16.msra.mxu0 %v8466
  %9032 = vmatmul.bf16.gmra.mxu0 %v7326
  %v9033 = vpop.f32.mrf.mxu0
  %v9034 = vadd.f32 %v9021, %v9033
  %v9035 = vpop.f32.mrf.mxu0
  %9036 = vdwg.mxu0
  %9037 = vmatpush.bf16.msra.mxu0 %v8526
  %9038 = vmatpush.bf16.msra.mxu0 %v8522
  %9039 = vmatpush.bf16.msra.mxu0 %v8518
  %9040 = vmatpush.bf16.msra.mxu0 %v8514
  %9041 = vmatpush.bf16.msra.mxu0 %v8510
  %9042 = vmatpush.bf16.msra.mxu0 %v8506
  %9043 = vmatpush.bf16.msra.mxu0 %v8502
  %9044 = vmatpush.bf16.msra.mxu0 %v8498
  %9045 = vmatmul.bf16.gmra.mxu0 %v7327
  %v9046 = vpop.f32.mrf.mxu0
  %v9047 = vadd.f32 %v9034, %v9046
  %v9048 = vpop.f32.mrf.mxu0
  %9049 = vdwg.mxu0
  %9050 = vmatpush.bf16.msra.mxu0 %v8558
  %9051 = vmatpush.bf16.msra.mxu0 %v8554
  %9052 = vmatpush.bf16.msra.mxu0 %v8550
  %9053 = vmatpush.bf16.msra.mxu0 %v8546
  %9054 = vmatpush.bf16.msra.mxu0 %v8542
  %9055 = vmatpush.bf16.msra.mxu0 %v8538
  %9056 = vmatpush.bf16.msra.mxu0 %v8534
  %9057 = vmatpush.bf16.msra.mxu0 %v8530
  %9058 = vmatmul.bf16.gmra.mxu0 %v7328
  %v9059 = vpop.f32.mrf.mxu0
  %v9060 = vadd.f32 %v9047, %v9059
  %v9061 = vpop.f32.mrf.mxu0
  %9062 = vdwg.mxu0
  %9063 = vmatpush.bf16.msra.mxu0 %v8590
  %9064 = vmatpush.bf16.msra.mxu0 %v8586
  %9065 = vmatpush.bf16.msra.mxu0 %v8582
  %9066 = vmatpush.bf16.msra.mxu0 %v8578
  %9067 = vmatpush.bf16.msra.mxu0 %v8574
  %9068 = vmatpush.bf16.msra.mxu0 %v8570
  %9069 = vmatpush.bf16.msra.mxu0 %v8566
  %9070 = vmatpush.bf16.msra.mxu0 %v8562
  %9071 = vmatmul.bf16.gmra.mxu0 %v7329
  %v9072 = vpop.f32.mrf.mxu0
  %v9073 = vadd.f32 %v9060, %v9072
  %v9074 = vpop.f32.mrf.mxu0
  %9075 = vdwg.mxu0
  %9076 = vmatpush.bf16.msra.mxu0 %v8622
  %9077 = vmatpush.bf16.msra.mxu0 %v8618
  %9078 = vmatpush.bf16.msra.mxu0 %v8614
  %9079 = vmatpush.bf16.msra.mxu0 %v8610
  %9080 = vmatpush.bf16.msra.mxu0 %v8606
  %9081 = vmatpush.bf16.msra.mxu0 %v8602
  %9082 = vmatpush.bf16.msra.mxu0 %v8598
  %9083 = vmatpush.bf16.msra.mxu0 %v8594
  %9084 = vmatmul.bf16.gmra.mxu0 %v7330
  %v9085 = vpop.f32.mrf.mxu0
  %v9086 = vadd.f32 %v9073, %v9085
  %v9087 = vpop.f32.mrf.mxu0
  %9088 = vdwg.mxu0
  %9089 = vmatpush.bf16.msra.mxu0 %v8399
  %9090 = vmatpush.bf16.msra.mxu0 %v8395
  %9091 = vmatpush.bf16.msra.mxu0 %v8391
  %9092 = vmatpush.bf16.msra.mxu0 %v8387
  %9093 = vmatpush.bf16.msra.mxu0 %v8383
  %9094 = vmatpush.bf16.msra.mxu0 %v8379
  %9095 = vmatpush.bf16.msra.mxu0 %v8375
  %9096 = vmatpush.bf16.msra.mxu0 %v8371
  %9097 = vmatmul.bf16.gmra.mxu0 %v7323
  %v9098 = vpop.f32.mrf.mxu0
  %v9099 = vadd.f32 %v7595, %v9098
  %v9100 = vpop.f32.mrf.mxu0
  %9101 = vdwg.mxu0
  %9102 = vmatpush.bf16.msra.mxu0 %v8431
  %9103 = vmatpush.bf16.msra.mxu0 %v8427
  %9104 = vmatpush.bf16.msra.mxu0 %v8423
  %9105 = vmatpush.bf16.msra.mxu0 %v8419
  %9106 = vmatpush.bf16.msra.mxu0 %v8415
  %9107 = vmatpush.bf16.msra.mxu0 %v8411
  %9108 = vmatpush.bf16.msra.mxu0 %v8407
  %9109 = vmatpush.bf16.msra.mxu0 %v8403
  %9110 = vmatmul.bf16.gmra.mxu0 %v7324
  %v9111 = vpop.f32.mrf.mxu0
  %v9112 = vadd.f32 %v9099, %v9111
  %v9113 = vpop.f32.mrf.mxu0
  %9114 = vdwg.mxu0
  %9115 = vmatpush.bf16.msra.mxu0 %v8463
  %9116 = vmatpush.bf16.msra.mxu0 %v8459
  %9117 = vmatpush.bf16.msra.mxu0 %v8455
  %9118 = vmatpush.bf16.msra.mxu0 %v8451
  %9119 = vmatpush.bf16.msra.mxu0 %v8447
  %9120 = vmatpush.bf16.msra.mxu0 %v8443
  %9121 = vmatpush.bf16.msra.mxu0 %v8439
  %9122 = vmatpush.bf16.msra.mxu0 %v8435
  %9123 = vmatmul.bf16.gmra.mxu0 %v7325
  %v9124 = vpop.f32.mrf.mxu0
  %v9125 = vadd.f32 %v9112, %v9124
  %v9126 = vpop.f32.mrf.mxu0
  %9127 = vdwg.mxu0
  %9128 = vmatpush.bf16.msra.mxu0 %v8495
  %9129 = vmatpush.bf16.msra.mxu0 %v8491
  %9130 = vmatpush.bf16.msra.mxu0 %v8487
  %9131 = vmatpush.bf16.msra.mxu0 %v8483
  %9132 = vmatpush.bf16.msra.mxu0 %v8479
  %9133 = vmatpush.bf16.msra.mxu0 %v8475
  %9134 = vmatpush.bf16.msra.mxu0 %v8471
  %9135 = vmatpush.bf16.msra.mxu0 %v8467
  %9136 = vmatmul.bf16.gmra.mxu0 %v7326
  %v9137 = vpop.f32.mrf.mxu0
  %v9138 = vadd.f32 %v9125, %v9137
  %v9139 = vpop.f32.mrf.mxu0
  %9140 = vdwg.mxu0
  %9141 = vmatpush.bf16.msra.mxu0 %v8527
  %9142 = vmatpush.bf16.msra.mxu0 %v8523
  %9143 = vmatpush.bf16.msra.mxu0 %v8519
  %9144 = vmatpush.bf16.msra.mxu0 %v8515
  %9145 = vmatpush.bf16.msra.mxu0 %v8511
  %9146 = vmatpush.bf16.msra.mxu0 %v8507
  %9147 = vmatpush.bf16.msra.mxu0 %v8503
  %9148 = vmatpush.bf16.msra.mxu0 %v8499
  %9149 = vmatmul.bf16.gmra.mxu0 %v7327
  %v9150 = vpop.f32.mrf.mxu0
  %v9151 = vadd.f32 %v9138, %v9150
  %v9152 = vpop.f32.mrf.mxu0
  %9153 = vdwg.mxu0
  %9154 = vmatpush.bf16.msra.mxu0 %v8559
  %9155 = vmatpush.bf16.msra.mxu0 %v8555
  %9156 = vmatpush.bf16.msra.mxu0 %v8551
  %9157 = vmatpush.bf16.msra.mxu0 %v8547
  %9158 = vmatpush.bf16.msra.mxu0 %v8543
  %9159 = vmatpush.bf16.msra.mxu0 %v8539
  %9160 = vmatpush.bf16.msra.mxu0 %v8535
  %9161 = vmatpush.bf16.msra.mxu0 %v8531
  %9162 = vmatmul.bf16.gmra.mxu0 %v7328
  %v9163 = vpop.f32.mrf.mxu0
  %v9164 = vadd.f32 %v9151, %v9163
  %v9165 = vpop.f32.mrf.mxu0
  %9166 = vdwg.mxu0
  %9167 = vmatpush.bf16.msra.mxu0 %v8591
  %9168 = vmatpush.bf16.msra.mxu0 %v8587
  %9169 = vmatpush.bf16.msra.mxu0 %v8583
  %9170 = vmatpush.bf16.msra.mxu0 %v8579
  %9171 = vmatpush.bf16.msra.mxu0 %v8575
  %9172 = vmatpush.bf16.msra.mxu0 %v8571
  %9173 = vmatpush.bf16.msra.mxu0 %v8567
  %9174 = vmatpush.bf16.msra.mxu0 %v8563
  %9175 = vmatmul.bf16.gmra.mxu0 %v7329
  %v9176 = vpop.f32.mrf.mxu0
  %v9177 = vadd.f32 %v9164, %v9176
  %v9178 = vpop.f32.mrf.mxu0
  %9179 = vdwg.mxu0
  %9180 = vmatpush.bf16.msra.mxu0 %v8623
  %9181 = vmatpush.bf16.msra.mxu0 %v8619
  %9182 = vmatpush.bf16.msra.mxu0 %v8615
  %9183 = vmatpush.bf16.msra.mxu0 %v8611
  %9184 = vmatpush.bf16.msra.mxu0 %v8607
  %9185 = vmatpush.bf16.msra.mxu0 %v8603
  %9186 = vmatpush.bf16.msra.mxu0 %v8599
  %9187 = vmatpush.bf16.msra.mxu0 %v8595
  %9188 = vmatmul.bf16.gmra.mxu0 %v7330
  %v9189 = vpop.f32.mrf.mxu0
  %v9190 = vadd.f32 %v9177, %v9189
  %v9191 = vpop.f32.mrf.mxu0
  %9192 = vdwg.mxu0
  %9193 = vmatpush.bf16.msra.mxu0 %v8400
  %9194 = vmatpush.bf16.msra.mxu0 %v8396
  %9195 = vmatpush.bf16.msra.mxu0 %v8392
  %9196 = vmatpush.bf16.msra.mxu0 %v8388
  %9197 = vmatpush.bf16.msra.mxu0 %v8384
  %9198 = vmatpush.bf16.msra.mxu0 %v8380
  %9199 = vmatpush.bf16.msra.mxu0 %v8376
  %9200 = vmatpush.bf16.msra.mxu0 %v8372
  %9201 = vmatmul.bf16.gmra.mxu0 %v7323
  %v9202 = vpop.f32.mrf.mxu0
  %v9203 = vadd.f32 %v7596, %v9202
  %v9204 = vpop.f32.mrf.mxu0
  %9205 = vdwg.mxu0
  %9206 = vmatpush.bf16.msra.mxu0 %v8432
  %9207 = vmatpush.bf16.msra.mxu0 %v8428
  %9208 = vmatpush.bf16.msra.mxu0 %v8424
  %9209 = vmatpush.bf16.msra.mxu0 %v8420
  %9210 = vmatpush.bf16.msra.mxu0 %v8416
  %9211 = vmatpush.bf16.msra.mxu0 %v8412
  %9212 = vmatpush.bf16.msra.mxu0 %v8408
  %9213 = vmatpush.bf16.msra.mxu0 %v8404
  %9214 = vmatmul.bf16.gmra.mxu0 %v7324
  %v9215 = vpop.f32.mrf.mxu0
  %v9216 = vadd.f32 %v9203, %v9215
  %v9217 = vpop.f32.mrf.mxu0
  %9218 = vdwg.mxu0
  %9219 = vmatpush.bf16.msra.mxu0 %v8464
  %9220 = vmatpush.bf16.msra.mxu0 %v8460
  %9221 = vmatpush.bf16.msra.mxu0 %v8456
  %9222 = vmatpush.bf16.msra.mxu0 %v8452
  %9223 = vmatpush.bf16.msra.mxu0 %v8448
  %9224 = vmatpush.bf16.msra.mxu0 %v8444
  %9225 = vmatpush.bf16.msra.mxu0 %v8440
  %9226 = vmatpush.bf16.msra.mxu0 %v8436
  %9227 = vmatmul.bf16.gmra.mxu0 %v7325
  %v9228 = vpop.f32.mrf.mxu0
  %v9229 = vadd.f32 %v9216, %v9228
  %v9230 = vpop.f32.mrf.mxu0
  %9231 = vdwg.mxu0
  %9232 = vmatpush.bf16.msra.mxu0 %v8496
  %9233 = vmatpush.bf16.msra.mxu0 %v8492
  %9234 = vmatpush.bf16.msra.mxu0 %v8488
  %9235 = vmatpush.bf16.msra.mxu0 %v8484
  %9236 = vmatpush.bf16.msra.mxu0 %v8480
  %9237 = vmatpush.bf16.msra.mxu0 %v8476
  %9238 = vmatpush.bf16.msra.mxu0 %v8472
  %9239 = vmatpush.bf16.msra.mxu0 %v8468
  %9240 = vmatmul.bf16.gmra.mxu0 %v7326
  %v9241 = vpop.f32.mrf.mxu0
  %v9242 = vadd.f32 %v9229, %v9241
  %v9243 = vpop.f32.mrf.mxu0
  %9244 = vdwg.mxu0
  %9245 = vmatpush.bf16.msra.mxu0 %v8528
  %9246 = vmatpush.bf16.msra.mxu0 %v8524
  %9247 = vmatpush.bf16.msra.mxu0 %v8520
  %9248 = vmatpush.bf16.msra.mxu0 %v8516
  %9249 = vmatpush.bf16.msra.mxu0 %v8512
  %9250 = vmatpush.bf16.msra.mxu0 %v8508
  %9251 = vmatpush.bf16.msra.mxu0 %v8504
  %9252 = vmatpush.bf16.msra.mxu0 %v8500
  %9253 = vmatmul.bf16.gmra.mxu0 %v7327
  %v9254 = vpop.f32.mrf.mxu0
  %v9255 = vadd.f32 %v9242, %v9254
  %v9256 = vpop.f32.mrf.mxu0
  %9257 = vdwg.mxu0
  %9258 = vmatpush.bf16.msra.mxu0 %v8560
  %9259 = vmatpush.bf16.msra.mxu0 %v8556
  %9260 = vmatpush.bf16.msra.mxu0 %v8552
  %9261 = vmatpush.bf16.msra.mxu0 %v8548
  %9262 = vmatpush.bf16.msra.mxu0 %v8544
  %9263 = vmatpush.bf16.msra.mxu0 %v8540
  %9264 = vmatpush.bf16.msra.mxu0 %v8536
  %9265 = vmatpush.bf16.msra.mxu0 %v8532
  %9266 = vmatmul.bf16.gmra.mxu0 %v7328
  %v9267 = vpop.f32.mrf.mxu0
  %v9268 = vadd.f32 %v9255, %v9267
  %v9269 = vpop.f32.mrf.mxu0
  %9270 = vdwg.mxu0
  %9271 = vmatpush.bf16.msra.mxu0 %v8592
  %9272 = vmatpush.bf16.msra.mxu0 %v8588
  %9273 = vmatpush.bf16.msra.mxu0 %v8584
  %9274 = vmatpush.bf16.msra.mxu0 %v8580
  %9275 = vmatpush.bf16.msra.mxu0 %v8576
  %9276 = vmatpush.bf16.msra.mxu0 %v8572
  %9277 = vmatpush.bf16.msra.mxu0 %v8568
  %9278 = vmatpush.bf16.msra.mxu0 %v8564
  %9279 = vmatmul.bf16.gmra.mxu0 %v7329
  %v9280 = vpop.f32.mrf.mxu0
  %v9281 = vadd.f32 %v9268, %v9280
  %v9282 = vpop.f32.mrf.mxu0
  %9283 = vdwg.mxu0
  %9284 = vmatpush.bf16.msra.mxu0 %v8624
  %9285 = vmatpush.bf16.msra.mxu0 %v8620
  %9286 = vmatpush.bf16.msra.mxu0 %v8616
  %9287 = vmatpush.bf16.msra.mxu0 %v8612
  %9288 = vmatpush.bf16.msra.mxu0 %v8608
  %9289 = vmatpush.bf16.msra.mxu0 %v8604
  %9290 = vmatpush.bf16.msra.mxu0 %v8600
  %9291 = vmatpush.bf16.msra.mxu0 %v8596
  %9292 = vmatmul.bf16.gmra.mxu0 %v7330
  %v9293 = vpop.f32.mrf.mxu0
  %v9294 = vadd.f32 %v9281, %v9293
  %v9295 = vpop.f32.mrf.mxu0
  %9296 = vdwg.mxu0
  %v9297 = vmax.f32 %v8982, 0.0
  %v9298 = vmax.f32 %v9086, 0.0
  %v9299 = vmax.f32 %v9190, 0.0
  %v9300 = vmax.f32 %v9294, 0.0
  %v9301 = vpack.c.bf16 %v9297, %v9297
  %v9302 = vpack.c.bf16 %v9298, %v9298
  %v9303 = vpack.c.bf16 %v9299, %v9299
  %v9304 = vpack.c.bf16 %v9300, %v9300
  %v9305 = vld [vmem:[%s7] sm:$0xf]
  %v9306 = vld [vmem:[%s7 + $0x4] sm:$0xf]
  %v9307 = vld [vmem:[%s7 + $0x8] sm:$0xf]
  %v9308 = vld [vmem:[%s7 + $0xc] sm:$0xf]
  %v9309 = vld [vmem:[%s7 + $0x10] sm:$0xf]
  %v9310 = vld [vmem:[%s7 + $0x14] sm:$0xf]
  %v9311 = vld [vmem:[%s7 + $0x18] sm:$0xf]
  %v9312 = vld [vmem:[%s7 + $0x1c] sm:$0xf]
  %v9313 = vld [vmem:[%s7 + $0x20] sm:$0xf]
  %v9314 = vld [vmem:[%s7 + $0x24] sm:$0xf]
  %v9315 = vld [vmem:[%s7 + $0x28] sm:$0xf]
  %v9316 = vld [vmem:[%s7 + $0x2c] sm:$0xf]
  %v9317 = vld [vmem:[%s7 + $0x30] sm:$0xf]
  %v9318 = vld [vmem:[%s7 + $0x34] sm:$0xf]
  %v9319 = vld [vmem:[%s7 + $0x38] sm:$0xf]
  %v9320 = vld [vmem:[%s7 + $0x3c] sm:$0xf]
  %v9321 = vld [vmem:[%s7 + $0x40] sm:$0xf]
  %v9322 = vld [vmem:[%s7 + $0x44] sm:$0xf]
  %v9323 = vld [vmem:[%s7 + $0x48] sm:$0xf]
  %v9324 = vld [vmem:[%s7 + $0x4c] sm:$0xf]
  %v9325 = vld [vmem:[%s7 + $0x50] sm:$0xf]
  %v9326 = vld [vmem:[%s7 + $0x54] sm:$0xf]
  %v9327 = vld [vmem:[%s7 + $0x58] sm:$0xf]
  %v9328 = vld [vmem:[%s7 + $0x5c] sm:$0xf]
  %v9329 = vld [vmem:[%s7 + $0x60] sm:$0xf]
  %v9330 = vld [vmem:[%s7 + $0x64] sm:$0xf]
  %v9331 = vld [vmem:[%s7 + $0x68] sm:$0xf]
  %v9332 = vld [vmem:[%s7 + $0x6c] sm:$0xf]
  %v9333 = vld [vmem:[%s7 + $0x70] sm:$0xf]
  %v9334 = vld [vmem:[%s7 + $0x74] sm:$0xf]
  %v9335 = vld [vmem:[%s7 + $0x78] sm:$0xf]
  %v9336 = vld [vmem:[%s7 + $0x7c] sm:$0xf]
  %v9337 = vld [vmem:[%s7 + $0x80] sm:$0xf]
  %v9338 = vld [vmem:[%s7 + $0x84] sm:$0xf]
  %v9339 = vld [vmem:[%s7 + $0x88] sm:$0xf]
  %v9340 = vld [vmem:[%s7 + $0x8c] sm:$0xf]
  %v9341 = vld [vmem:[%s7 + $0x90] sm:$0xf]
  %v9342 = vld [vmem:[%s7 + $0x94] sm:$0xf]
  %v9343 = vld [vmem:[%s7 + $0x98] sm:$0xf]
  %v9344 = vld [vmem:[%s7 + $0x9c] sm:$0xf]
  %v9345 = vld [vmem:[%s7 + $0xa0] sm:$0xf]
  %v9346 = vld [vmem:[%s7 + $0xa4] sm:$0xf]
  %v9347 = vld [vmem:[%s7 + $0xa8] sm:$0xf]
  %v9348 = vld [vmem:[%s7 + $0xac] sm:$0xf]
  %v9349 = vld [vmem:[%s7 + $0xb0] sm:$0xf]
  %v9350 = vld [vmem:[%s7 + $0xb4] sm:$0xf]
  %v9351 = vld [vmem:[%s7 + $0xb8] sm:$0xf]
  %v9352 = vld [vmem:[%s7 + $0xbc] sm:$0xf]
  %v9353 = vld [vmem:[%s7 + $0xc0] sm:$0xf]
  %v9354 = vld [vmem:[%s7 + $0xc4] sm:$0xf]
  %v9355 = vld [vmem:[%s7 + $0xc8] sm:$0xf]
  %v9356 = vld [vmem:[%s7 + $0xcc] sm:$0xf]
  %v9357 = vld [vmem:[%s7 + $0xd0] sm:$0xf]
  %v9358 = vld [vmem:[%s7 + $0xd4] sm:$0xf]
  %v9359 = vld [vmem:[%s7 + $0xd8] sm:$0xf]
  %v9360 = vld [vmem:[%s7 + $0xdc] sm:$0xf]
  %v9361 = vld [vmem:[%s7 + $0xe0] sm:$0xf]
  %v9362 = vld [vmem:[%s7 + $0xe4] sm:$0xf]
  %v9363 = vld [vmem:[%s7 + $0xe8] sm:$0xf]
  %v9364 = vld [vmem:[%s7 + $0xec] sm:$0xf]
  %v9365 = vld [vmem:[%s7 + $0xf0] sm:$0xf]
  %v9366 = vld [vmem:[%s7 + $0xf4] sm:$0xf]
  %v9367 = vld [vmem:[%s7 + $0xf8] sm:$0xf]
  %v9368 = vld [vmem:[%s7 + $0xfc] sm:$0xf]
  %v9369 = vld [vmem:[%s8] sm:$0x1]
  %v9371 = vperm.slane %v9369, 0
  %v9437 = vunpack.c.l.b16 %v9305
  %v9438 = vunpack.c.l.b16 %v9306
  %v9439 = vunpack.c.l.b16 %v9307
  %v9440 = vunpack.c.l.b16 %v9308
  %v9441 = vunpack.c.l.b16 %v9309
  %v9442 = vunpack.c.l.b16 %v9310
  %v9443 = vunpack.c.l.b16 %v9311
  %v9444 = vunpack.c.l.b16 %v9312
  %v9445 = vunpack.c.l.b16 %v9313
  %v9446 = vunpack.c.l.b16 %v9314
  %v9447 = vunpack.c.l.b16 %v9315
  %v9448 = vunpack.c.l.b16 %v9316
  %v9449 = vunpack.c.l.b16 %v9317
  %v9450 = vunpack.c.l.b16 %v9318
  %v9451 = vunpack.c.l.b16 %v9319
  %v9452 = vunpack.c.l.b16 %v9320
  %v9453 = vunpack.c.l.b16 %v9321
  %v9454 = vunpack.c.l.b16 %v9322
  %v9455 = vunpack.c.l.b16 %v9323
  %v9456 = vunpack.c.l.b16 %v9324
  %v9457 = vunpack.c.l.b16 %v9325
  %v9458 = vunpack.c.l.b16 %v9326
  %v9459 = vunpack.c.l.b16 %v9327
  %v9460 = vunpack.c.l.b16 %v9328
  %v9461 = vunpack.c.l.b16 %v9329
  %v9462 = vunpack.c.l.b16 %v9330
  %v9463 = vunpack.c.l.b16 %v9331
  %v9464 = vunpack.c.l.b16 %v9332
  %v9465 = vunpack.c.l.b16 %v9333
  %v9466 = vunpack.c.l.b16 %v9334
  %v9467 = vunpack.c.l.b16 %v9335
  %v9468 = vunpack.c.l.b16 %v9336
  %v9469 = vunpack.c.l.b16 %v9337
  %v9470 = vunpack.c.l.b16 %v9338
  %v9471 = vunpack.c.l.b16 %v9339
  %v9472 = vunpack.c.l.b16 %v9340
  %v9473 = vunpack.c.l.b16 %v9341
  %v9474 = vunpack.c.l.b16 %v9342
  %v9475 = vunpack.c.l.b16 %v9343
  %v9476 = vunpack.c.l.b16 %v9344
  %v9477 = vunpack.c.l.b16 %v9345
  %v9478 = vunpack.c.l.b16 %v9346
  %v9479 = vunpack.c.l.b16 %v9347
  %v9480 = vunpack.c.l.b16 %v9348
  %v9481 = vunpack.c.l.b16 %v9349
  %v9482 = vunpack.c.l.b16 %v9350
  %v9483 = vunpack.c.l.b16 %v9351
  %v9484 = vunpack.c.l.b16 %v9352
  %v9485 = vunpack.c.l.b16 %v9353
  %v9486 = vunpack.c.l.b16 %v9354
  %v9487 = vunpack.c.l.b16 %v9355
  %v9488 = vunpack.c.l.b16 %v9356
  %v9489 = vunpack.c.l.b16 %v9357
  %v9490 = vunpack.c.l.b16 %v9358
  %v9491 = vunpack.c.l.b16 %v9359
  %v9492 = vunpack.c.l.b16 %v9360
  %v9493 = vunpack.c.l.b16 %v9361
  %v9494 = vunpack.c.l.b16 %v9362
  %v9495 = vunpack.c.l.b16 %v9363
  %v9496 = vunpack.c.l.b16 %v9364
  %v9497 = vunpack.c.l.b16 %v9365
  %v9498 = vunpack.c.l.b16 %v9366
  %v9499 = vunpack.c.l.b16 %v9367
  %v9500 = vunpack.c.l.b16 %v9368
  %v9501 = vpack.c.b16 %v9438, %v9437
  %v9502 = vpack.c.b16 %v9440, %v9439
  %v9503 = vpack.c.b16 %v9442, %v9441
  %v9504 = vpack.c.b16 %v9444, %v9443
  %v9505 = vpack.c.b16 %v9446, %v9445
  %v9506 = vpack.c.b16 %v9448, %v9447
  %v9507 = vpack.c.b16 %v9450, %v9449
  %v9508 = vpack.c.b16 %v9452, %v9451
  %v9509 = vpack.c.b16 %v9454, %v9453
  %v9510 = vpack.c.b16 %v9456, %v9455
  %v9511 = vpack.c.b16 %v9458, %v9457
  %v9512 = vpack.c.b16 %v9460, %v9459
  %v9513 = vpack.c.b16 %v9462, %v9461
  %v9514 = vpack.c.b16 %v9464, %v9463
  %v9515 = vpack.c.b16 %v9466, %v9465
  %v9516 = vpack.c.b16 %v9468, %v9467
  %v9517 = vpack.c.b16 %v9470, %v9469
  %v9518 = vpack.c.b16 %v9472, %v9471
  %v9519 = vpack.c.b16 %v9474, %v9473
  %v9520 = vpack.c.b16 %v9476, %v9475
  %v9521 = vpack.c.b16 %v9478, %v9477
  %v9522 = vpack.c.b16 %v9480, %v9479
  %v9523 = vpack.c.b16 %v9482, %v9481
  %v9524 = vpack.c.b16 %v9484, %v9483
  %v9525 = vpack.c.b16 %v9486, %v9485
  %v9526 = vpack.c.b16 %v9488, %v9487
  %v9527 = vpack.c.b16 %v9490, %v9489
  %v9528 = vpack.c.b16 %v9492, %v9491
  %v9529 = vpack.c.b16 %v9494, %v9493
  %v9530 = vpack.c.b16 %v9496, %v9495
  %v9531 = vpack.c.b16 %v9498, %v9497
  %v9532 = vpack.c.b16 %v9500, %v9499
  %9565 = vmatpush.bf16.msra.mxu0 %v9508
  %9566 = vmatpush.bf16.msra.mxu0 %v9507
  %9567 = vmatpush.bf16.msra.mxu0 %v9506
  %9568 = vmatpush.bf16.msra.mxu0 %v9505
  %9569 = vmatpush.bf16.msra.mxu0 %v9504
  %9570 = vmatpush.bf16.msra.mxu0 %v9503
  %9571 = vmatpush.bf16.msra.mxu0 %v9502
  %9572 = vmatpush.bf16.msra.mxu0 %v9501
  %9573 = vmatmul.bf16.gmra.mxu0 %v9301
  %v9574 = vpop.f32.mrf.mxu0
  %v9575 = vadd.f32 %v9371, %v9574
  %v9576 = vpop.f32.mrf.mxu0
  %9577 = vdwg.mxu0
  %9578 = vmatpush.bf16.msra.mxu0 %v9516
  %9579 = vmatpush.bf16.msra.mxu0 %v9515
  %9580 = vmatpush.bf16.msra.mxu0 %v9514
  %9581 = vmatpush.bf16.msra.mxu0 %v9513
  %9582 = vmatpush.bf16.msra.mxu0 %v9512
  %9583 = vmatpush.bf16.msra.mxu0 %v9511
  %9584 = vmatpush.bf16.msra.mxu0 %v9510
  %9585 = vmatpush.bf16.msra.mxu0 %v9509
  %9586 = vmatmul.bf16.gmra.mxu0 %v9302
  %v9587 = vpop.f32.mrf.mxu0
  %v9588 = vadd.f32 %v9575, %v9587
  %v9589 = vpop.f32.mrf.mxu0
  %9590 = vdwg.mxu0
  %9591 = vmatpush.bf16.msra.mxu0 %v9524
  %9592 = vmatpush.bf16.msra.mxu0 %v9523
  %9593 = vmatpush.bf16.msra.mxu0 %v9522
  %9594 = vmatpush.bf16.msra.mxu0 %v9521
  %9595 = vmatpush.bf16.msra.mxu0 %v9520
  %9596 = vmatpush.bf16.msra.mxu0 %v9519
  %9597 = vmatpush.bf16.msra.mxu0 %v9518
  %9598 = vmatpush.bf16.msra.mxu0 %v9517
  %9599 = vmatmul.bf16.gmra.mxu0 %v9303
  %v9600 = vpop.f32.mrf.mxu0
  %v9601 = vadd.f32 %v9588, %v9600
  %v9602 = vpop.f32.mrf.mxu0
  %9603 = vdwg.mxu0
  %9604 = vmatpush.bf16.msra.mxu0 %v9532
  %9605 = vmatpush.bf16.msra.mxu0 %v9531
  %9606 = vmatpush.bf16.msra.mxu0 %v9530
  %9607 = vmatpush.bf16.msra.mxu0 %v9529
  %9608 = vmatpush.bf16.msra.mxu0 %v9528
  %9609 = vmatpush.bf16.msra.mxu0 %v9527
  %9610 = vmatpush.bf16.msra.mxu0 %v9526
  %9611 = vmatpush.bf16.msra.mxu0 %v9525
  %9612 = vmatmul.bf16.gmra.mxu0 %v9304
  %v9613 = vpop.f32.mrf.mxu0
  %v9614 = vadd.f32 %v9601, %v9613
  %v9615 = vpop.f32.mrf.mxu0
  %9616 = vdwg.mxu0
  %v9617 = vmax.f32 %v9614, 0.0
  %v9618 = vpack.c.bf16 %v9617, %v9617
  %v9619 = vld [vmem:[%s9] sm:$0xf]
  %v9620 = vld [vmem:[%s9 + $0x4] sm:$0xf]
  %v9621 = vld [vmem:[%s9 + $0x8] sm:$0xf]
  %v9622 = vld [vmem:[%s9 + $0xc] sm:$0xf]
  %v9623 = vld [vmem:[%s9 + $0x10] sm:$0xf]
  %v9624 = vld [vmem:[%s9 + $0x14] sm:$0xf]
  %v9625 = vld [vmem:[%s9 + $0x18] sm:$0xf]
  %v9626 = vld [vmem:[%s9 + $0x1c] sm:$0xf]
  %v9627 = vld [vmem:[%s9 + $0x20] sm:$0xf]
  %v9628 = vld [vmem:[%s9 + $0x24] sm:$0xf]
  %v9629 = vld [vmem:[%s9 + $0x28] sm:$0xf]
  %v9630 = vld [vmem:[%s9 + $0x2c] sm:$0xf]
  %v9631 = vld [vmem:[%s9 + $0x30] sm:$0xf]
  %v9632 = vld [vmem:[%s9 + $0x34] sm:$0xf]
  %v9633 = vld [vmem:[%s9 + $0x38] sm:$0xf]
  %v9634 = vld [vmem:[%s9 + $0x3c] sm:$0xf]
  %v9635 = vld [vmem:[%s10] sm:$0x1]
  %v9637 = vperm.slane %v9635, 0
  %v9655 = vunpack.c.l.b16 %v9619
  %v9656 = vunpack.c.l.b16 %v9620
  %v9657 = vunpack.c.l.b16 %v9621
  %v9658 = vunpack.c.l.b16 %v9622
  %v9659 = vunpack.c.l.b16 %v9623
  %v9660 = vunpack.c.l.b16 %v9624
  %v9661 = vunpack.c.l.b16 %v9625
  %v9662 = vunpack.c.l.b16 %v9626
  %v9663 = vunpack.c.l.b16 %v9627
  %v9664 = vunpack.c.l.b16 %v9628
  %v9665 = vunpack.c.l.b16 %v9629
  %v9666 = vunpack.c.l.b16 %v9630
  %v9667 = vunpack.c.l.b16 %v9631
  %v9668 = vunpack.c.l.b16 %v9632
  %v9669 = vunpack.c.l.b16 %v9633
  %v9670 = vunpack.c.l.b16 %v9634
  %v9671 = vpack.c.b16 %v9656, %v9655
  %v9672 = vpack.c.b16 %v9658, %v9657
  %v9673 = vpack.c.b16 %v9660, %v9659
  %v9674 = vpack.c.b16 %v9662, %v9661
  %v9675 = vpack.c.b16 %v9664, %v9663
  %v9676 = vpack.c.b16 %v9666, %v9665
  %v9677 = vpack.c.b16 %v9668, %v9667
  %v9678 = vpack.c.b16 %v9670, %v9669
  %9687 = vmatpush.bf16.msra.mxu0 %v9678
  %9688 = vmatpush.bf16.msra.mxu0 %v9677
  %9689 = vmatpush.bf16.msra.mxu0 %v9676
  %9690 = vmatpush.bf16.msra.mxu0 %v9675
  %9691 = vmatpush.bf16.msra.mxu0 %v9674
  %9692 = vmatpush.bf16.msra.mxu0 %v9673
  %9693 = vmatpush.bf16.msra.mxu0 %v9672
  %9694 = vmatpush.bf16.msra.mxu0 %v9671
  %9695 = vmatmul.bf16.gmra.mxu0 %v9618
  %v9696 = vpop.f32.mrf.mxu0
  %v9697 = vadd.f32 %v9637, %v9696
  %v9698 = vpop.f32.mrf.mxu0
  %9699 = vdwg.mxu0
  %v9700 = vmax.f32 %v9697, 0.0
  %v9701 = vld [vmem:[%s11] sm:$0xff]
  %v9702 = vld [vmem:[%s11 + $0x8] sm:$0xff]
  %v9703 = vld [vmem:[%s11 + $0x10] sm:$0xff]
  %v9704 = vld [vmem:[%s11 + $0x18] sm:$0xff]
  %v9705 = vld [vmem:[%s11 + $0x20] sm:$0xff]
  %v9706 = vld [vmem:[%s11 + $0x28] sm:$0xff]
  %v9707 = vld [vmem:[%s11 + $0x30] sm:$0xff]
  %v9708 = vld [vmem:[%s11 + $0x38] sm:$0xff]
  %v9709 = vld [vmem:[%s12] sm:$0x1]
  %v9711 = vperm.slane %v9709, 0
  %vm9713 = vcmask 523264
  %v9715 = vsel %vm9713, %v9700, 0
  %9717 = vmatpush.msra.mxu0 0.0
  %9718 = vmatpush.msra.mxu0 0.0
  %9719 = vmatpush.msra.mxu0 0.0
  %9720 = vmatpush.msra.mxu0 0.0
  %9721 = vmatpush.msra.mxu0 0.0
  %9722 = vmatpush.msra.mxu0 0.0
  %9723 = vmatpush.msra.mxu0 0.0
  %9724 = vmatpush.msra.mxu0 0.0
  %9725 = vmatpush.msra.mxu0 %v9708
  %9726 = vmatpush.msra.mxu0 %v9707
  %9727 = vmatpush.msra.mxu0 %v9706
  %9728 = vmatpush.msra.mxu0 %v9705
  %9729 = vmatpush.msra.mxu0 %v9704
  %9730 = vmatpush.msra.mxu0 %v9703
  %9731 = vmatpush.msra.mxu0 %v9702
  %9732 = vmatpush.msra.mxu0 %v9701
  %9733 = vmatmul.f32.gmra.mxu0 %v9715
  %v9734 = vpop.f32.mrf.mxu0
  %v9735 = vadd.f32 %v9711, %v9734
  %9736 = vdwg.mxu0
  %9737 = vst [vmem:[%s13] sm:$0xff] %v9735
  %v9738 = vsub.f32 0.0, %v9735
  %v9739 = vmul.f32 %v9738, 1.442695
  %v9740 = vpow.pop %v9739
  %v9741 = vadd.f32 %v9740, 1.0
  %v9742 = vrcp.pop %v9741
  %v9743 = vmul.f32 %v9741, %v9742
  %v9744 = vsub.f32 1.0, %v9743
  %v9745 = vmul.f32 %v9742, %v9744
  %v9746 = vadd.f32 %v9742, %v9745
  %vm9747 = vweird.f32 %v9741
  %vm9748 = vweird.f32 %v9742
  %vm9749 = vmor %vm9747, %vm9748
  %v9750 = vsel %vm9749, %v9742, %v9746
  %v9751 = vand.u32 2147483647, %v9741
  %vm9752 = vcmp.eq.f32.partialorder %v9751, 8.507059e+37
  %v9753 = vand.u32 %v9741, 2147483648
  %v9754 = vor.u32 1.1754944e-38, %v9753
  %v9755 = vsel %vm9752, %v9754, %v9750
  %v9756 = vmul.f32 1.0, %v9755
  %9757 = vst [vmem:[%s14] sm:$0xff] %v9756
  // Predicated region
  $region54: #{bag_pipeline_forward.1} parent=0 // pred_check
    _
  $region55: #{bag_pipeline_forward.1} parent=0 // pred_check_branch
    %9759 = sbr.rel (0) target = $region57
  $region56: #{bag_pipeline_forward.1} parent=0 // pred_region
    _
  $region57: #{bag_pipeline_forward.1} parent=0 // pred_fallthru
    _
  // Predicated region
  $region58: #{bag_pipeline_forward.1} parent=0 // pred_check
    _
  $region59: #{bag_pipeline_forward.1} parent=0 // pred_check_branch
    %9761 = sbr.rel (0) target = $region61
  $region60: #{bag_pipeline_forward.1} parent=0 // pred_region
    _
  $region61: #{bag_pipeline_forward.1} parent=0 // pred_fallthru
    _
  // Predicated region
  $region62: #{bag_pipeline_forward.1} parent=0 // pred_check
    _
  $region63: #{bag_pipeline_forward.1} parent=0 // pred_check_branch
    %9763 = sbr.rel (0) target = $region65
  $region64: #{bag_pipeline_forward.1} parent=0 // pred_region
    _
  $region65: #{bag_pipeline_forward.1} parent=0 // pred_fallthru
    _
  // Predicated region
  $region66: #{bag_pipeline_forward.1} parent=0 // pred_check
    _
  $region67: #{bag_pipeline_forward.1} parent=0 // pred_check_branch
    %9765 = sbr.rel (0) target = $region69
  $region68: #{bag_pipeline_forward.1} parent=0 // pred_region
    _
  $region69: #{bag_pipeline_forward.1} parent=0 // pred_fallthru
    _
  %9766 = vsyncmov [#allocation4]
  %s9767 = vpop.sfrf %9766
  %p9768 = scmp.eq.s32.totalorder %s9767, 0
  %p9769 = pneg %p9768
  %9771 = shalt.err (%p9769)
  %s9772 = scalar_lea.sflag [#allocation4], 1
  %9773 = vsyncmov %s9772
  %s9774 = vpop.sfrf %9773
  %p9775 = scmp.eq.s32.totalorder %s9774, 0
  %p9776 = pneg %p9775
  %9778 = shalt.err (%p9776)

</llo_original>
